<compile_context>
chip_gen: v7x
topology: tpu7x:2x2x1
jax: 0.10.0
libtpu: 0.0.40
codegen_flags: <defaults>
</compile_context>

<pallas_src>
import jax
import jax.numpy as jnp
from jax import lax
from jax.experimental import pallas as pl
from jax.experimental.pallas import tpu as pltpu


# ----------------------------- Pallas kernel --------------------------------


def _make_kernel(L: int, B: int, T: int, HP: int):
    """Builds the kernel for a fixed (num_layers, batch, T, padded-hidden)."""
    BH = B * HP          # lanes used by one packed hidden/cell state

    def kernel(*refs):
        x_ref, h0_ref, c0_ref = refs[0], refs[1], refs[2]          # [B,T,I],[L,BH],[L,BH]
        w_refs = refs[3:3 + 3 * L]                                  # (wih, bias, whh) per layer
        fc1_w_ref, fc1_b_ref, fc2_w_ref, fc2_b_ref = refs[3 + 3 * L:7 + 3 * L]
        out_ref, hn_ref, cn_ref = refs[7 + 3 * L:10 + 3 * L]        # [1,B],[L,BH],[L,BH]
        xp_ref, seq_ref = refs[10 + 3 * L], refs[11 + 3 * L]        # [T,4BH],[T,BH] scratch

        h_last = None
        for l in range(L):
            wih_ref, bias_ref, whh_ref = w_refs[3 * l:3 * l + 3]
            whh = whh_ref[...]                                      # [BH, 4*BH]

            # ---- hoisted, bias-fused input projection (off the critical path)
            if l == 0:
                wih = wih_ref[...]                                  # [I, 4*HP]
                bias = bias_ref[...]                                # [1, 4*HP]
                for b in range(B):
                    # batch-first x, per-batch matmul; stores land time-major.
                    pb = jnp.dot(x_ref[b], wih,
                                 preferred_element_type=jnp.float32) + bias   # [T, 4*HP]
                    for g in range(4):
                        col = g * BH + b * HP
                        xp_ref[:, col:col + HP] = pb[:, g * HP:(g + 1) * HP]
            else:
                xp_ref[...] = (jnp.dot(seq_ref[...], wih_ref[...],
                                       preferred_element_type=jnp.float32)
                               + bias_ref[...])                     # [T, 4*BH]

            h0l = h0_ref[pl.ds(l, 1), :]                            # [1, BH]
            c0l = c0_ref[pl.ds(l, 1), :]

            def step(t, carry, _last=(l == L - 1), _whh=whh):
                h, c = carry
                # single recurrent matmul per step; gate order [i|f|g|o].
                gates = (jnp.dot(h, _whh, preferred_element_type=jnp.float32)
                         + xp_ref[pl.ds(t, 1), :])                  # [1, 4*BH]
                i_g = jax.nn.sigmoid(gates[:, 0 * BH:1 * BH])
                f_g = jax.nn.sigmoid(gates[:, 1 * BH:2 * BH])
                g_g = jnp.tanh(gates[:, 2 * BH:3 * BH])
                o_g = jax.nn.sigmoid(gates[:, 3 * BH:4 * BH])
                c_new = f_g * c + i_g * g_g
                h_new = o_g * jnp.tanh(c_new)
                if not _last:                    # last layer: sequence never re-read
                    seq_ref[pl.ds(t, 1), :] = h_new
                return h_new, c_new

            h_last, c_last = lax.fori_loop(0, T, step, (h0l, c0l), unroll=True)
            hn_ref[pl.ds(l, 1), :] = h_last
            cn_ref[pl.ds(l, 1), :] = c_last

        # ---- FC head: Linear -> LeakyReLU(0.01) -> Dropout(identity) -> Linear
        # TODO(synk): dropout implemented as identity (eval mode); training-mode
        #             dropout would use pltpu.prng_* primitives.
        z = jnp.dot(h_last, fc1_w_ref[...],
                    preferred_element_type=jnp.float32) + fc1_b_ref[...]
        z = jnp.where(z > 0, z, 0.01 * z)
        out_ref[...] = jnp.dot(z, fc2_w_ref[...],
                               preferred_element_type=jnp.float32) + fc2_b_ref[...]

    return kernel


@jax.jit
def _soh_forward(x, h0, c0, packed):
    """x: [B,T,I] batch-first. h0/c0: [L, B*HP] lane-packed padded states."""
    B, T, _ = x.shape
    L, BH = h0.shape
    HP = BH // B
    kernel = _make_kernel(L, B, T, HP)
    vmem = pl.BlockSpec(memory_space=pltpu.MemorySpace.VMEM)
    flat = [x.astype(jnp.float32), h0, c0, *packed]
    out, hn, cn = pl.pallas_call(
        kernel,
        out_shape=(jax.ShapeDtypeStruct((1, B), jnp.float32),
                   jax.ShapeDtypeStruct((L, BH), jnp.float32),
                   jax.ShapeDtypeStruct((L, BH), jnp.float32)),
        in_specs=[vmem] * len(flat),
        out_specs=(vmem, vmem, vmem),
        scratch_shapes=[pltpu.VMEM((T, 4 * BH), jnp.float32),   # hoisted projections
                        pltpu.VMEM((T, BH), jnp.float32)],      # inter-layer sequence
    )(*flat)
    return out[0], hn, cn


# ------------------------- stateful wrapper (glue) ---------------------------


class StatefulSOHLSTM:
    """JAX/Pallas mirror of the PyTorch StatefulSOHLSTM (inference mode)."""

    def __init__(self, input_size, hidden_size, num_layers, dropout=0.2, seed=0):
        self.input_size = input_size
        self.hidden_size = hidden_size
        self.num_layers = num_layers
        self.hidden_states = {}
        self._hp = ((hidden_size + 127) // 128) * 128   # lane-padded hidden size
        self._packed_cache = {}

        key = jax.random.PRNGKey(seed)
        k = 1.0 / jnp.sqrt(hidden_size)

        def uni(key, shape, bound):
            return jax.random.uniform(key, shape, jnp.float32, -bound, bound)

        lstm_params = []
        for l in range(num_layers):
            d_in = input_size if l == 0 else hidden_size
            key, k1, k2, k3, k4 = jax.random.split(key, 5)
            lstm_params.append((
                uni(k1, (4 * hidden_size, d_in), k),          # W_ih
                uni(k2, (4 * hidden_size, hidden_size), k),   # W_hh
                uni(k3, (4 * hidden_size,), k),               # b_ih
                uni(k4, (4 * hidden_size,), k),               # b_hh
            ))
        h2 = hidden_size // 2
        key, k1, k2, k3, k4 = jax.random.split(key, 5)
        kf1 = 1.0 / jnp.sqrt(hidden_size)
        kf2 = 1.0 / jnp.sqrt(h2)
        fc_params = (uni(k1, (h2, hidden_size), kf1), uni(k2, (h2,), kf1),
                     uni(k3, (1, h2), kf2), uni(k4, (1,), kf2))
        self.params = {"lstm": lstm_params, "fc": fc_params}

    # ---- weight preprocessing: once per batch size, out of the hot path ----
    def _pack_params(self, B):
        f32 = jnp.float32
        H, HP = self.hidden_size, self._hp
        BH = B * HP
        packed = []
        for l, (W_ih, W_hh, b_ih, b_hh) in enumerate(self.params["lstm"]):
            b_fused = (b_ih + b_hh).astype(f32)
            if l == 0:
                d_in = W_ih.shape[1]
                wih = jnp.zeros((d_in, 4 * HP), f32)           # per-gate padded
                bias = jnp.zeros((1, 4 * HP), f32)
                for g in range(4):
                    wih = wih.at[:, g * HP:g * HP + H].set(
                        W_ih[g * H:(g + 1) * H, :].T.astype(f32))
                    bias = bias.at[0, g * HP:g * HP + H].set(b_fused[g * H:(g + 1) * H])
            else:
                WT = W_ih.T.astype(f32)                        # [H, 4H]
                wih = jnp.zeros((BH, 4 * BH), f32)             # block-diag over batch
                bias = jnp.zeros((1, 4 * BH), f32)
                for b in range(B):
                    for g in range(4):
                        col = g * BH + b * HP
                        wih = wih.at[b * HP:b * HP + H, col:col + H].set(
                            WT[:, g * H:(g + 1) * H])
                        bias = bias.at[0, col:col + H].set(b_fused[g * H:(g + 1) * H])
            WhT = W_hh.T.astype(f32)                           # [H, 4H]
            whh = jnp.zeros((BH, 4 * BH), f32)                 # block-diag over batch
            for b in range(B):
                for g in range(4):
                    col = g * BH + b * HP
                    whh = whh.at[b * HP:b * HP + H, col:col + H].set(
                        WhT[:, g * H:(g + 1) * H])
            packed += [wih, bias, whh]

        W1, b1, W2, b2 = self.params["fc"]
        H2 = W1.shape[0]
        W1_bd = jnp.zeros((BH, B * H2), f32)
        b1_bd = jnp.zeros((1, B * H2), f32)
        W2_bd = jnp.zeros((B * H2, B), f32)
        for b in range(B):
            W1_bd = W1_bd.at[b * HP:b * HP + H, b * H2:(b + 1) * H2].set(W1.T.astype(f32))
            b1_bd = b1_bd.at[0, b * H2:(b + 1) * H2].set(b1.astype(f32))
            W2_bd = W2_bd.at[b * H2:(b + 1) * H2, b].set(W2[0].astype(f32))
        packed += [W1_bd, b1_bd, W2_bd, b2.reshape(1, 1).astype(f32)]
        return tuple(packed)

    def _get_packed(self, B):
        if B not in self._packed_cache:
            self._packed_cache[B] = self._pack_params(B)
        return self._packed_cache[B]

    def init_hidden(self, cell_id, batch_size):
        z = jnp.zeros((self.num_layers, batch_size * self._hp), jnp.float32)
        self.hidden_states[cell_id] = (z, z)

    def forward(self, x, cell_id):
        batch_size = x.shape[0]
        state = self.hidden_states.get(cell_id)
        if state is None or state[0].shape[1] != batch_size * self._hp:
            self.init_hidden(cell_id, batch_size)
        h0, c0 = self.hidden_states[cell_id]
        out, hn, cn = _soh_forward(x, h0, c0, self._get_packed(batch_size))
        self.hidden_states[cell_id] = (hn, cn)   # keep state in packed layout
        return out

    def unpack_state(self, cell_id):
        """Returns (hn, cn) in the PyTorch layout [L, B, H] for inspection."""
        hn_p, cn_p = self.hidden_states[cell_id]
        L, BH = hn_p.shape
        B = BH // self._hp
        H = self.hidden_size
        hn = hn_p.reshape(L, B, self._hp)[:, :, :H]
        cn = cn_p.reshape(L, B, self._hp)[:, :, :H]
        return hn, cn

    __call__ = forward


# ------------------------------ reference (JAX) -------------------------------


def reference_forward(x, h0, c0, params):
    B, T, I = x.shape
    L, _, H = h0.shape
    seq = x
    hs, cs = [], []
    for l in range(L):
        W_ih, W_hh, b_ih, b_hh = params["lstm"][l]
        h, c = h0[l], c0[l]
        outs = []
        for t in range(T):
            xt = seq[:, t, :]
            gates = xt @ W_ih.T + h @ W_hh.T + b_ih + b_hh
            i = jax.nn.sigmoid(gates[:, 0 * H:1 * H])
            f = jax.nn.sigmoid(gates[:, 1 * H:2 * H])
            g = jnp.tanh(gates[:, 2 * H:3 * H])
            o = jax.nn.sigmoid(gates[:, 3 * H:4 * H])
            c = f * c + i * g
            h = o * jnp.tanh(c)
            outs.append(h)
        seq = jnp.stack(outs, axis=1)
        hs.append(h)
        cs.append(c)
    W1, b1, W2, b2 = params["fc"]
    z = seq[:, -1, :] @ W1.T + b1
    z = jnp.where(z > 0, z, 0.01 * z)
    out = z @ W2.T + b2
    return out[:, 0], jnp.stack(hs), jnp.stack(cs)


# ---------------------------------- main -------------------------------------


if __name__ == "__main__":
    B, T, I, H, L = 2, 8, 4, 32, 2

    model = StatefulSOHLSTM(input_size=I, hidden_size=H, num_layers=L, seed=0)

    key = jax.random.PRNGKey(0)
    x = jax.random.normal(key, (B, T, I), jnp.float32)

    out = jax.block_until_ready(model(x, cell_id="cell_A"))
    hn, cn = model.unpack_state("cell_A")

    # sanity-check against a pure-JAX reference of the same math
    z0 = jnp.zeros((L, B, H), jnp.float32)
    ref_out, ref_hn, ref_cn = reference_forward(x, z0, z0, model.params)
    assert out.shape == (B,)
    assert jnp.allclose(out, ref_out, atol=1e-4, rtol=1e-4)
    assert jnp.allclose(hn, ref_hn, atol=1e-4, rtol=1e-4)
    assert jnp.allclose(cn, ref_cn, atol=1e-4, rtol=1e-4)

    # second (stateful) step with the carried hidden state also matches
    out2 = jax.block_until_ready(model(x, cell_id="cell_A"))
    ref_out2, _, _ = reference_forward(x, ref_hn, ref_cn, model.params)
    assert out2.shape == (B,)
    assert jnp.allclose(out2, ref_out2, atol=1e-4, rtol=1e-4)

    print("KERNEL_OK")
</pallas_src>

<mosaic_0001>
module attributes {stable_mosaic.version = 11 : i64} {
  func.func @kernel(%arg0: memref<2x8x4xf32, #tpu.memory_space<vmem>>, %arg1: memref<2x256xf32, #tpu.memory_space<vmem>>, %arg2: memref<2x256xf32, #tpu.memory_space<vmem>>, %arg3: memref<4x512xf32, #tpu.memory_space<vmem>>, %arg4: memref<1x512xf32, #tpu.memory_space<vmem>>, %arg5: memref<256x1024xf32, #tpu.memory_space<vmem>>, %arg6: memref<256x1024xf32, #tpu.memory_space<vmem>>, %arg7: memref<1x1024xf32, #tpu.memory_space<vmem>>, %arg8: memref<256x1024xf32, #tpu.memory_space<vmem>>, %arg9: memref<256x32xf32, #tpu.memory_space<vmem>>, %arg10: memref<1x32xf32, #tpu.memory_space<vmem>>, %arg11: memref<32x2xf32, #tpu.memory_space<vmem>>, %arg12: memref<1x1xf32, #tpu.memory_space<vmem>>, %arg13: memref<1x2xf32, #tpu.memory_space<vmem>>, %arg14: memref<2x256xf32, #tpu.memory_space<vmem>>, %arg15: memref<2x256xf32, #tpu.memory_space<vmem>>, %arg16: memref<8x1024xf32, #tpu.memory_space<vmem>>, %arg17: memref<8x256xf32, #tpu.memory_space<vmem>>) attributes {dimension_semantics = [], scalar_prefetch = 0 : i64, scratch_operands = 2 : i64, tpu.core_type = #tpu.core_type<tc>} {
    %c0 = arith.constant 0 : index
    %c0_0 = arith.constant 0 : index
    %0 = vector.load %arg5[%c0, %c0_0] : memref<256x1024xf32, #tpu.memory_space<vmem>>, vector<256x1024xf32>
    %c0_1 = arith.constant 0 : index
    %c0_2 = arith.constant 0 : index
    %1 = vector.load %arg3[%c0_1, %c0_2] : memref<4x512xf32, #tpu.memory_space<vmem>>, vector<4x512xf32>
    %c0_3 = arith.constant 0 : index
    %c0_4 = arith.constant 0 : index
    %2 = vector.load %arg4[%c0_3, %c0_4] : memref<1x512xf32, #tpu.memory_space<vmem>>, vector<1x512xf32>
    %c0_5 = arith.constant 0 : index
    %c0_6 = arith.constant 0 : index
    %c0_7 = arith.constant 0 : index
    %3 = vector.load %arg0[%c0_5, %c0_6, %c0_7] : memref<2x8x4xf32, #tpu.memory_space<vmem>>, vector<1x8x4xf32>
    %4 = vector.shape_cast %3 : vector<1x8x4xf32> to vector<8x4xf32>
    %cst = arith.constant dense<0.000000e+00> : vector<8x512xf32>
    %5 = tpu.matmul %4, %1, %cst {dimension_numbers = #tpu.dot_dimension_numbers<[1], [0], [0], [1], [0, 0, 1, 1], [], []>} : vector<8x4xf32>, vector<4x512xf32>, vector<8x512xf32> -> vector<8x512xf32>
    %6 = vector.broadcast %2 : vector<1x512xf32> to vector<8x512xf32>
    %7 = arith.addf %5, %6 : vector<8x512xf32>
    %8 = vector.extract_strided_slice %7 {offsets = [0, 0], sizes = [8, 128], strides = [1, 1]} : vector<8x512xf32> to vector<8x128xf32>
    %c0_8 = arith.constant 0 : index
    %c0_9 = arith.constant 0 : index
    %9 = vector.load %arg16[%c0_8, %c0_9] : memref<8x1024xf32, #tpu.memory_space<vmem>>, vector<8x128xf32>
    tpu.vector_store %arg16[%c0_8, %c0_9], %8 {strides = array<i32>} : memref<8x1024xf32, #tpu.memory_space<vmem>>, vector<8x128xf32>,
    %10 = vector.extract_strided_slice %7 {offsets = [0, 128], sizes = [8, 128], strides = [1, 1]} : vector<8x512xf32> to vector<8x128xf32>
    %c0_10 = arith.constant 0 : index
    %c256 = arith.constant 256 : index
    %11 = vector.load %arg16[%c0_10, %c256] : memref<8x1024xf32, #tpu.memory_space<vmem>>, vector<8x128xf32>
    tpu.vector_store %arg16[%c0_10, %c256], %10 {strides = array<i32>} : memref<8x1024xf32, #tpu.memory_space<vmem>>, vector<8x128xf32>,
    %12 = vector.extract_strided_slice %7 {offsets = [0, 256], sizes = [8, 128], strides = [1, 1]} : vector<8x512xf32> to vector<8x128xf32>
    %c0_11 = arith.constant 0 : index
    %c512 = arith.constant 512 : index
    %13 = vector.load %arg16[%c0_11, %c512] : memref<8x1024xf32, #tpu.memory_space<vmem>>, vector<8x128xf32>
    tpu.vector_store %arg16[%c0_11, %c512], %12 {strides = array<i32>} : memref<8x1024xf32, #tpu.memory_space<vmem>>, vector<8x128xf32>,
    %14 = vector.extract_strided_slice %7 {offsets = [0, 384], sizes = [8, 128], strides = [1, 1]} : vector<8x512xf32> to vector<8x128xf32>
    %c0_12 = arith.constant 0 : index
    %c768 = arith.constant 768 : index
    %15 = vector.load %arg16[%c0_12, %c768] : memref<8x1024xf32, #tpu.memory_space<vmem>>, vector<8x128xf32>
    tpu.vector_store %arg16[%c0_12, %c768], %14 {strides = array<i32>} : memref<8x1024xf32, #tpu.memory_space<vmem>>, vector<8x128xf32>,
    %c1 = arith.constant 1 : index
    %c0_13 = arith.constant 0 : index
    %c0_14 = arith.constant 0 : index
    %16 = vector.load %arg0[%c1, %c0_13, %c0_14] : memref<2x8x4xf32, #tpu.memory_space<vmem>>, vector<1x8x4xf32>
    %17 = vector.shape_cast %16 : vector<1x8x4xf32> to vector<8x4xf32>
    %cst_15 = arith.constant dense<0.000000e+00> : vector<8x512xf32>
    %18 = tpu.matmul %17, %1, %cst_15 {dimension_numbers = #tpu.dot_dimension_numbers<[1], [0], [0], [1], [0, 0, 1, 1], [], []>} : vector<8x4xf32>, vector<4x512xf32>, vector<8x512xf32> -> vector<8x512xf32>
    %19 = vector.broadcast %2 : vector<1x512xf32> to vector<8x512xf32>
    %20 = arith.addf %18, %19 : vector<8x512xf32>
    %21 = vector.extract_strided_slice %20 {offsets = [0, 0], sizes = [8, 128], strides = [1, 1]} : vector<8x512xf32> to vector<8x128xf32>
    %c0_16 = arith.constant 0 : index
    %c128 = arith.constant 128 : index
    %22 = vector.load %arg16[%c0_16, %c128] : memref<8x1024xf32, #tpu.memory_space<vmem>>, vector<8x128xf32>
    tpu.vector_store %arg16[%c0_16, %c128], %21 {strides = array<i32>} : memref<8x1024xf32, #tpu.memory_space<vmem>>, vector<8x128xf32>,
    %23 = vector.extract_strided_slice %20 {offsets = [0, 128], sizes = [8, 128], strides = [1, 1]} : vector<8x512xf32> to vector<8x128xf32>
    %c0_17 = arith.constant 0 : index
    %c384 = arith.constant 384 : index
    %24 = vector.load %arg16[%c0_17, %c384] : memref<8x1024xf32, #tpu.memory_space<vmem>>, vector<8x128xf32>
    tpu.vector_store %arg16[%c0_17, %c384], %23 {strides = array<i32>} : memref<8x1024xf32, #tpu.memory_space<vmem>>, vector<8x128xf32>,
    %25 = vector.extract_strided_slice %20 {offsets = [0, 256], sizes = [8, 128], strides = [1, 1]} : vector<8x512xf32> to vector<8x128xf32>
    %c0_18 = arith.constant 0 : index
    %c640 = arith.constant 640 : index
    %26 = vector.load %arg16[%c0_18, %c640] : memref<8x1024xf32, #tpu.memory_space<vmem>>, vector<8x128xf32>
    tpu.vector_store %arg16[%c0_18, %c640], %25 {strides = array<i32>} : memref<8x1024xf32, #tpu.memory_space<vmem>>, vector<8x128xf32>,
    %27 = vector.extract_strided_slice %20 {offsets = [0, 384], sizes = [8, 128], strides = [1, 1]} : vector<8x512xf32> to vector<8x128xf32>
    %c0_19 = arith.constant 0 : index
    %c896 = arith.constant 896 : index
    %28 = vector.load %arg16[%c0_19, %c896] : memref<8x1024xf32, #tpu.memory_space<vmem>>, vector<8x128xf32>
    tpu.vector_store %arg16[%c0_19, %c896], %27 {strides = array<i32>} : memref<8x1024xf32, #tpu.memory_space<vmem>>, vector<8x128xf32>,
    %c0_20 = arith.constant 0 : index
    %c0_21 = arith.constant 0 : index
    %29 = vector.load %arg1[%c0_20, %c0_21] : memref<2x256xf32, #tpu.memory_space<vmem>>, vector<1x256xf32>
    %c0_22 = arith.constant 0 : index
    %c0_23 = arith.constant 0 : index
    %30 = vector.load %arg2[%c0_22, %c0_23] : memref<2x256xf32, #tpu.memory_space<vmem>>, vector<1x256xf32>
    %c0_i32 = arith.constant 0 : i32
    %cst_24 = arith.constant dense<0.000000e+00> : vector<1x1024xf32>
    %31 = tpu.matmul %29, %0, %cst_24 {dimension_numbers = #tpu.dot_dimension_numbers<[1], [0], [0], [1], [0, 0, 1, 1], [], []>} : vector<1x256xf32>, vector<256x1024xf32>, vector<1x1024xf32> -> vector<1x1024xf32>
    %32 = arith.index_cast %c0_i32 : i32 to index
    %c0_25 = arith.constant 0 : index
    %33 = vector.load %arg16[%32, %c0_25] : memref<8x1024xf32, #tpu.memory_space<vmem>>, vector<1x1024xf32>
    %34 = arith.addf %31, %33 : vector<1x1024xf32>
    %35 = vector.extract_strided_slice %34 {offsets = [0, 0], sizes = [1, 256], strides = [1, 1]} : vector<1x1024xf32> to vector<1x256xf32>
    %36 = arith.negf %35 : vector<1x256xf32>
    %37 = math.exp %36 : vector<1x256xf32>
    %cst_26 = arith.constant 1.000000e+00 : f32
    %38 = vector.broadcast %cst_26 : f32 to vector<1x256xf32>
    %39 = arith.addf %38, %37 : vector<1x256xf32>
    %40 = arith.divf %38, %39 : vector<1x256xf32>
    %41 = vector.extract_strided_slice %34 {offsets = [0, 256], sizes = [1, 256], strides = [1, 1]} : vector<1x1024xf32> to vector<1x256xf32>
    %42 = arith.negf %41 : vector<1x256xf32>
    %43 = math.exp %42 : vector<1x256xf32>
    %cst_27 = arith.constant 1.000000e+00 : f32
    %44 = vector.broadcast %cst_27 : f32 to vector<1x256xf32>
    %45 = arith.addf %44, %43 : vector<1x256xf32>
    %46 = arith.divf %44, %45 : vector<1x256xf32>
    %47 = vector.extract_strided_slice %34 {offsets = [0, 512], sizes = [1, 256], strides = [1, 1]} : vector<1x1024xf32> to vector<1x256xf32>
    %48 = math.tanh %47 : vector<1x256xf32>
    %49 = vector.extract_strided_slice %34 {offsets = [0, 768], sizes = [1, 256], strides = [1, 1]} : vector<1x1024xf32> to vector<1x256xf32>
    %50 = arith.negf %49 : vector<1x256xf32>
    %51 = math.exp %50 : vector<1x256xf32>
    %cst_28 = arith.constant 1.000000e+00 : f32
    %52 = vector.broadcast %cst_28 : f32 to vector<1x256xf32>
    %53 = arith.addf %52, %51 : vector<1x256xf32>
    %54 = arith.divf %52, %53 : vector<1x256xf32>
    %55 = arith.mulf %46, %30 : vector<1x256xf32>
    %56 = arith.mulf %40, %48 : vector<1x256xf32>
    %57 = arith.addf %55, %56 : vector<1x256xf32>
    %58 = math.tanh %57 : vector<1x256xf32>
    %59 = arith.mulf %54, %58 : vector<1x256xf32>
    %60 = arith.index_cast %c0_i32 : i32 to index
    %c0_29 = arith.constant 0 : index
    %61 = vector.load %arg17[%60, %c0_29] : memref<8x256xf32, #tpu.memory_space<vmem>>, vector<1x256xf32>
    tpu.vector_store %arg17[%60, %c0_29], %59 {strides = array<i32>} : memref<8x256xf32, #tpu.memory_space<vmem>>, vector<1x256xf32>,
    %c1_i32 = arith.constant 1 : i32
    %cst_30 = arith.constant dense<0.000000e+00> : vector<1x1024xf32>
    %62 = tpu.matmul %59, %0, %cst_30 {dimension_numbers = #tpu.dot_dimension_numbers<[1], [0], [0], [1], [0, 0, 1, 1], [], []>} : vector<1x256xf32>, vector<256x1024xf32>, vector<1x1024xf32> -> vector<1x1024xf32>
    %63 = arith.index_cast %c1_i32 : i32 to index
    %c0_31 = arith.constant 0 : index
    %64 = vector.load %arg16[%63, %c0_31] : memref<8x1024xf32, #tpu.memory_space<vmem>>, vector<1x1024xf32>
    %65 = arith.addf %62, %64 : vector<1x1024xf32>
    %66 = vector.extract_strided_slice %65 {offsets = [0, 0], sizes = [1, 256], strides = [1, 1]} : vector<1x1024xf32> to vector<1x256xf32>
    %67 = arith.negf %66 : vector<1x256xf32>
    %68 = math.exp %67 : vector<1x256xf32>
    %cst_32 = arith.constant 1.000000e+00 : f32
    %69 = vector.broadcast %cst_32 : f32 to vector<1x256xf32>
    %70 = arith.addf %69, %68 : vector<1x256xf32>
    %71 = arith.divf %69, %70 : vector<1x256xf32>
    %72 = vector.extract_strided_slice %65 {offsets = [0, 256], sizes = [1, 256], strides = [1, 1]} : vector<1x1024xf32> to vector<1x256xf32>
    %73 = arith.negf %72 : vector<1x256xf32>
    %74 = math.exp %73 : vector<1x256xf32>
    %cst_33 = arith.constant 1.000000e+00 : f32
    %75 = vector.broadcast %cst_33 : f32 to vector<1x256xf32>
    %76 = arith.addf %75, %74 : vector<1x256xf32>
    %77 = arith.divf %75, %76 : vector<1x256xf32>
    %78 = vector.extract_strided_slice %65 {offsets = [0, 512], sizes = [1, 256], strides = [1, 1]} : vector<1x1024xf32> to vector<1x256xf32>
    %79 = math.tanh %78 : vector<1x256xf32>
    %80 = vector.extract_strided_slice %65 {offsets = [0, 768], sizes = [1, 256], strides = [1, 1]} : vector<1x1024xf32> to vector<1x256xf32>
    %81 = arith.negf %80 : vector<1x256xf32>
    %82 = math.exp %81 : vector<1x256xf32>
    %cst_34 = arith.constant 1.000000e+00 : f32
    %83 = vector.broadcast %cst_34 : f32 to vector<1x256xf32>
    %84 = arith.addf %83, %82 : vector<1x256xf32>
    %85 = arith.divf %83, %84 : vector<1x256xf32>
    %86 = arith.mulf %77, %57 : vector<1x256xf32>
    %87 = arith.mulf %71, %79 : vector<1x256xf32>
    %88 = arith.addf %86, %87 : vector<1x256xf32>
    %89 = math.tanh %88 : vector<1x256xf32>
    %90 = arith.mulf %85, %89 : vector<1x256xf32>
    %91 = arith.index_cast %c1_i32 : i32 to index
    %c0_35 = arith.constant 0 : index
    %92 = vector.load %arg17[%91, %c0_35] : memref<8x256xf32, #tpu.memory_space<vmem>>, vector<1x256xf32>
    tpu.vector_store %arg17[%91, %c0_35], %90 {strides = array<i32>} : memref<8x256xf32, #tpu.memory_space<vmem>>, vector<1x256xf32>,
    %c2_i32 = arith.constant 2 : i32
    %cst_36 = arith.constant dense<0.000000e+00> : vector<1x1024xf32>
    %93 = tpu.matmul %90, %0, %cst_36 {dimension_numbers = #tpu.dot_dimension_numbers<[1], [0], [0], [1], [0, 0, 1, 1], [], []>} : vector<1x256xf32>, vector<256x1024xf32>, vector<1x1024xf32> -> vector<1x1024xf32>
    %94 = arith.index_cast %c2_i32 : i32 to index
    %c0_37 = arith.constant 0 : index
    %95 = vector.load %arg16[%94, %c0_37] : memref<8x1024xf32, #tpu.memory_space<vmem>>, vector<1x1024xf32>
    %96 = arith.addf %93, %95 : vector<1x1024xf32>
    %97 = vector.extract_strided_slice %96 {offsets = [0, 0], sizes = [1, 256], strides = [1, 1]} : vector<1x1024xf32> to vector<1x256xf32>
    %98 = arith.negf %97 : vector<1x256xf32>
    %99 = math.exp %98 : vector<1x256xf32>
    %cst_38 = arith.constant 1.000000e+00 : f32
    %100 = vector.broadcast %cst_38 : f32 to vector<1x256xf32>
    %101 = arith.addf %100, %99 : vector<1x256xf32>
    %102 = arith.divf %100, %101 : vector<1x256xf32>
    %103 = vector.extract_strided_slice %96 {offsets = [0, 256], sizes = [1, 256], strides = [1, 1]} : vector<1x1024xf32> to vector<1x256xf32>
    %104 = arith.negf %103 : vector<1x256xf32>
    %105 = math.exp %104 : vector<1x256xf32>
    %cst_39 = arith.constant 1.000000e+00 : f32
    %106 = vector.broadcast %cst_39 : f32 to vector<1x256xf32>
    %107 = arith.addf %106, %105 : vector<1x256xf32>
    %108 = arith.divf %106, %107 : vector<1x256xf32>
    %109 = vector.extract_strided_slice %96 {offsets = [0, 512], sizes = [1, 256], strides = [1, 1]} : vector<1x1024xf32> to vector<1x256xf32>
    %110 = math.tanh %109 : vector<1x256xf32>
    %111 = vector.extract_strided_slice %96 {offsets = [0, 768], sizes = [1, 256], strides = [1, 1]} : vector<1x1024xf32> to vector<1x256xf32>
    %112 = arith.negf %111 : vector<1x256xf32>
    %113 = math.exp %112 : vector<1x256xf32>
    %cst_40 = arith.constant 1.000000e+00 : f32
    %114 = vector.broadcast %cst_40 : f32 to vector<1x256xf32>
    %115 = arith.addf %114, %113 : vector<1x256xf32>
    %116 = arith.divf %114, %115 : vector<1x256xf32>
    %117 = arith.mulf %108, %88 : vector<1x256xf32>
    %118 = arith.mulf %102, %110 : vector<1x256xf32>
    %119 = arith.addf %117, %118 : vector<1x256xf32>
    %120 = math.tanh %119 : vector<1x256xf32>
    %121 = arith.mulf %116, %120 : vector<1x256xf32>
    %122 = arith.index_cast %c2_i32 : i32 to index
    %c0_41 = arith.constant 0 : index
    %123 = vector.load %arg17[%122, %c0_41] : memref<8x256xf32, #tpu.memory_space<vmem>>, vector<1x256xf32>
    tpu.vector_store %arg17[%122, %c0_41], %121 {strides = array<i32>} : memref<8x256xf32, #tpu.memory_space<vmem>>, vector<1x256xf32>,
    %c3_i32 = arith.constant 3 : i32
    %cst_42 = arith.constant dense<0.000000e+00> : vector<1x1024xf32>
    %124 = tpu.matmul %121, %0, %cst_42 {dimension_numbers = #tpu.dot_dimension_numbers<[1], [0], [0], [1], [0, 0, 1, 1], [], []>} : vector<1x256xf32>, vector<256x1024xf32>, vector<1x1024xf32> -> vector<1x1024xf32>
    %125 = arith.index_cast %c3_i32 : i32 to index
    %c0_43 = arith.constant 0 : index
    %126 = vector.load %arg16[%125, %c0_43] : memref<8x1024xf32, #tpu.memory_space<vmem>>, vector<1x1024xf32>
    %127 = arith.addf %124, %126 : vector<1x1024xf32>
    %128 = vector.extract_strided_slice %127 {offsets = [0, 0], sizes = [1, 256], strides = [1, 1]} : vector<1x1024xf32> to vector<1x256xf32>
    %129 = arith.negf %128 : vector<1x256xf32>
    %130 = math.exp %129 : vector<1x256xf32>
    %cst_44 = arith.constant 1.000000e+00 : f32
    %131 = vector.broadcast %cst_44 : f32 to vector<1x256xf32>
    %132 = arith.addf %131, %130 : vector<1x256xf32>
    %133 = arith.divf %131, %132 : vector<1x256xf32>
    %134 = vector.extract_strided_slice %127 {offsets = [0, 256], sizes = [1, 256], strides = [1, 1]} : vector<1x1024xf32> to vector<1x256xf32>
    %135 = arith.negf %134 : vector<1x256xf32>
    %136 = math.exp %135 : vector<1x256xf32>
    %cst_45 = arith.constant 1.000000e+00 : f32
    %137 = vector.broadcast %cst_45 : f32 to vector<1x256xf32>
    %138 = arith.addf %137, %136 : vector<1x256xf32>
    %139 = arith.divf %137, %138 : vector<1x256xf32>
    %140 = vector.extract_strided_slice %127 {offsets = [0, 512], sizes = [1, 256], strides = [1, 1]} : vector<1x1024xf32> to vector<1x256xf32>
    %141 = math.tanh %140 : vector<1x256xf32>
    %142 = vector.extract_strided_slice %127 {offsets = [0, 768], sizes = [1, 256], strides = [1, 1]} : vector<1x1024xf32> to vector<1x256xf32>
    %143 = arith.negf %142 : vector<1x256xf32>
    %144 = math.exp %143 : vector<1x256xf32>
    %cst_46 = arith.constant 1.000000e+00 : f32
    %145 = vector.broadcast %cst_46 : f32 to vector<1x256xf32>
    %146 = arith.addf %145, %144 : vector<1x256xf32>
    %147 = arith.divf %145, %146 : vector<1x256xf32>
    %148 = arith.mulf %139, %119 : vector<1x256xf32>
    %149 = arith.mulf %133, %141 : vector<1x256xf32>
    %150 = arith.addf %148, %149 : vector<1x256xf32>
    %151 = math.tanh %150 : vector<1x256xf32>
    %152 = arith.mulf %147, %151 : vector<1x256xf32>
    %153 = arith.index_cast %c3_i32 : i32 to index
    %c0_47 = arith.constant 0 : index
    %154 = vector.load %arg17[%153, %c0_47] : memref<8x256xf32, #tpu.memory_space<vmem>>, vector<1x256xf32>
    tpu.vector_store %arg17[%153, %c0_47], %152 {strides = array<i32>} : memref<8x256xf32, #tpu.memory_space<vmem>>, vector<1x256xf32>,
    %c4_i32 = arith.constant 4 : i32
    %cst_48 = arith.constant dense<0.000000e+00> : vector<1x1024xf32>
    %155 = tpu.matmul %152, %0, %cst_48 {dimension_numbers = #tpu.dot_dimension_numbers<[1], [0], [0], [1], [0, 0, 1, 1], [], []>} : vector<1x256xf32>, vector<256x1024xf32>, vector<1x1024xf32> -> vector<1x1024xf32>
    %156 = arith.index_cast %c4_i32 : i32 to index
    %c0_49 = arith.constant 0 : index
    %157 = vector.load %arg16[%156, %c0_49] : memref<8x1024xf32, #tpu.memory_space<vmem>>, vector<1x1024xf32>
    %158 = arith.addf %155, %157 : vector<1x1024xf32>
    %159 = vector.extract_strided_slice %158 {offsets = [0, 0], sizes = [1, 256], strides = [1, 1]} : vector<1x1024xf32> to vector<1x256xf32>
    %160 = arith.negf %159 : vector<1x256xf32>
    %161 = math.exp %160 : vector<1x256xf32>
    %cst_50 = arith.constant 1.000000e+00 : f32
    %162 = vector.broadcast %cst_50 : f32 to vector<1x256xf32>
    %163 = arith.addf %162, %161 : vector<1x256xf32>
    %164 = arith.divf %162, %163 : vector<1x256xf32>
    %165 = vector.extract_strided_slice %158 {offsets = [0, 256], sizes = [1, 256], strides = [1, 1]} : vector<1x1024xf32> to vector<1x256xf32>
    %166 = arith.negf %165 : vector<1x256xf32>
    %167 = math.exp %166 : vector<1x256xf32>
    %cst_51 = arith.constant 1.000000e+00 : f32
    %168 = vector.broadcast %cst_51 : f32 to vector<1x256xf32>
    %169 = arith.addf %168, %167 : vector<1x256xf32>
    %170 = arith.divf %168, %169 : vector<1x256xf32>
    %171 = vector.extract_strided_slice %158 {offsets = [0, 512], sizes = [1, 256], strides = [1, 1]} : vector<1x1024xf32> to vector<1x256xf32>
    %172 = math.tanh %171 : vector<1x256xf32>
    %173 = vector.extract_strided_slice %158 {offsets = [0, 768], sizes = [1, 256], strides = [1, 1]} : vector<1x1024xf32> to vector<1x256xf32>
    %174 = arith.negf %173 : vector<1x256xf32>
    %175 = math.exp %174 : vector<1x256xf32>
    %cst_52 = arith.constant 1.000000e+00 : f32
    %176 = vector.broadcast %cst_52 : f32 to vector<1x256xf32>
    %177 = arith.addf %176, %175 : vector<1x256xf32>
    %178 = arith.divf %176, %177 : vector<1x256xf32>
    %179 = arith.mulf %170, %150 : vector<1x256xf32>
    %180 = arith.mulf %164, %172 : vector<1x256xf32>
    %181 = arith.addf %179, %180 : vector<1x256xf32>
    %182 = math.tanh %181 : vector<1x256xf32>
    %183 = arith.mulf %178, %182 : vector<1x256xf32>
    %184 = arith.index_cast %c4_i32 : i32 to index
    %c0_53 = arith.constant 0 : index
    %185 = vector.load %arg17[%184, %c0_53] : memref<8x256xf32, #tpu.memory_space<vmem>>, vector<1x256xf32>
    tpu.vector_store %arg17[%184, %c0_53], %183 {strides = array<i32>} : memref<8x256xf32, #tpu.memory_space<vmem>>, vector<1x256xf32>,
    %c5_i32 = arith.constant 5 : i32
    %cst_54 = arith.constant dense<0.000000e+00> : vector<1x1024xf32>
    %186 = tpu.matmul %183, %0, %cst_54 {dimension_numbers = #tpu.dot_dimension_numbers<[1], [0], [0], [1], [0, 0, 1, 1], [], []>} : vector<1x256xf32>, vector<256x1024xf32>, vector<1x1024xf32> -> vector<1x1024xf32>
    %187 = arith.index_cast %c5_i32 : i32 to index
    %c0_55 = arith.constant 0 : index
    %188 = vector.load %arg16[%187, %c0_55] : memref<8x1024xf32, #tpu.memory_space<vmem>>, vector<1x1024xf32>
    %189 = arith.addf %186, %188 : vector<1x1024xf32>
    %190 = vector.extract_strided_slice %189 {offsets = [0, 0], sizes = [1, 256], strides = [1, 1]} : vector<1x1024xf32> to vector<1x256xf32>
    %191 = arith.negf %190 : vector<1x256xf32>
    %192 = math.exp %191 : vector<1x256xf32>
    %cst_56 = arith.constant 1.000000e+00 : f32
    %193 = vector.broadcast %cst_56 : f32 to vector<1x256xf32>
    %194 = arith.addf %193, %192 : vector<1x256xf32>
    %195 = arith.divf %193, %194 : vector<1x256xf32>
    %196 = vector.extract_strided_slice %189 {offsets = [0, 256], sizes = [1, 256], strides = [1, 1]} : vector<1x1024xf32> to vector<1x256xf32>
    %197 = arith.negf %196 : vector<1x256xf32>
    %198 = math.exp %197 : vector<1x256xf32>
    %cst_57 = arith.constant 1.000000e+00 : f32
    %199 = vector.broadcast %cst_57 : f32 to vector<1x256xf32>
    %200 = arith.addf %199, %198 : vector<1x256xf32>
    %201 = arith.divf %199, %200 : vector<1x256xf32>
    %202 = vector.extract_strided_slice %189 {offsets = [0, 512], sizes = [1, 256], strides = [1, 1]} : vector<1x1024xf32> to vector<1x256xf32>
    %203 = math.tanh %202 : vector<1x256xf32>
    %204 = vector.extract_strided_slice %189 {offsets = [0, 768], sizes = [1, 256], strides = [1, 1]} : vector<1x1024xf32> to vector<1x256xf32>
    %205 = arith.negf %204 : vector<1x256xf32>
    %206 = math.exp %205 : vector<1x256xf32>
    %cst_58 = arith.constant 1.000000e+00 : f32
    %207 = vector.broadcast %cst_58 : f32 to vector<1x256xf32>
    %208 = arith.addf %207, %206 : vector<1x256xf32>
    %209 = arith.divf %207, %208 : vector<1x256xf32>
    %210 = arith.mulf %201, %181 : vector<1x256xf32>
    %211 = arith.mulf %195, %203 : vector<1x256xf32>
    %212 = arith.addf %210, %211 : vector<1x256xf32>
    %213 = math.tanh %212 : vector<1x256xf32>
    %214 = arith.mulf %209, %213 : vector<1x256xf32>
    %215 = arith.index_cast %c5_i32 : i32 to index
    %c0_59 = arith.constant 0 : index
    %216 = vector.load %arg17[%215, %c0_59] : memref<8x256xf32, #tpu.memory_space<vmem>>, vector<1x256xf32>
    tpu.vector_store %arg17[%215, %c0_59], %214 {strides = array<i32>} : memref<8x256xf32, #tpu.memory_space<vmem>>, vector<1x256xf32>,
    %c6_i32 = arith.constant 6 : i32
    %cst_60 = arith.constant dense<0.000000e+00> : vector<1x1024xf32>
    %217 = tpu.matmul %214, %0, %cst_60 {dimension_numbers = #tpu.dot_dimension_numbers<[1], [0], [0], [1], [0, 0, 1, 1], [], []>} : vector<1x256xf32>, vector<256x1024xf32>, vector<1x1024xf32> -> vector<1x1024xf32>
    %218 = arith.index_cast %c6_i32 : i32 to index
    %c0_61 = arith.constant 0 : index
    %219 = vector.load %arg16[%218, %c0_61] : memref<8x1024xf32, #tpu.memory_space<vmem>>, vector<1x1024xf32>
    %220 = arith.addf %217, %219 : vector<1x1024xf32>
    %221 = vector.extract_strided_slice %220 {offsets = [0, 0], sizes = [1, 256], strides = [1, 1]} : vector<1x1024xf32> to vector<1x256xf32>
    %222 = arith.negf %221 : vector<1x256xf32>
    %223 = math.exp %222 : vector<1x256xf32>
    %cst_62 = arith.constant 1.000000e+00 : f32
    %224 = vector.broadcast %cst_62 : f32 to vector<1x256xf32>
    %225 = arith.addf %224, %223 : vector<1x256xf32>
    %226 = arith.divf %224, %225 : vector<1x256xf32>
    %227 = vector.extract_strided_slice %220 {offsets = [0, 256], sizes = [1, 256], strides = [1, 1]} : vector<1x1024xf32> to vector<1x256xf32>
    %228 = arith.negf %227 : vector<1x256xf32>
    %229 = math.exp %228 : vector<1x256xf32>
    %cst_63 = arith.constant 1.000000e+00 : f32
    %230 = vector.broadcast %cst_63 : f32 to vector<1x256xf32>
    %231 = arith.addf %230, %229 : vector<1x256xf32>
    %232 = arith.divf %230, %231 : vector<1x256xf32>
    %233 = vector.extract_strided_slice %220 {offsets = [0, 512], sizes = [1, 256], strides = [1, 1]} : vector<1x1024xf32> to vector<1x256xf32>
    %234 = math.tanh %233 : vector<1x256xf32>
    %235 = vector.extract_strided_slice %220 {offsets = [0, 768], sizes = [1, 256], strides = [1, 1]} : vector<1x1024xf32> to vector<1x256xf32>
    %236 = arith.negf %235 : vector<1x256xf32>
    %237 = math.exp %236 : vector<1x256xf32>
    %cst_64 = arith.constant 1.000000e+00 : f32
    %238 = vector.broadcast %cst_64 : f32 to vector<1x256xf32>
    %239 = arith.addf %238, %237 : vector<1x256xf32>
    %240 = arith.divf %238, %239 : vector<1x256xf32>
    %241 = arith.mulf %232, %212 : vector<1x256xf32>
    %242 = arith.mulf %226, %234 : vector<1x256xf32>
    %243 = arith.addf %241, %242 : vector<1x256xf32>
    %244 = math.tanh %243 : vector<1x256xf32>
    %245 = arith.mulf %240, %244 : vector<1x256xf32>
    %246 = arith.index_cast %c6_i32 : i32 to index
    %c0_65 = arith.constant 0 : index
    %247 = vector.load %arg17[%246, %c0_65] : memref<8x256xf32, #tpu.memory_space<vmem>>, vector<1x256xf32>
    tpu.vector_store %arg17[%246, %c0_65], %245 {strides = array<i32>} : memref<8x256xf32, #tpu.memory_space<vmem>>, vector<1x256xf32>,
    %c7_i32 = arith.constant 7 : i32
    %cst_66 = arith.constant dense<0.000000e+00> : vector<1x1024xf32>
    %248 = tpu.matmul %245, %0, %cst_66 {dimension_numbers = #tpu.dot_dimension_numbers<[1], [0], [0], [1], [0, 0, 1, 1], [], []>} : vector<1x256xf32>, vector<256x1024xf32>, vector<1x1024xf32> -> vector<1x1024xf32>
    %249 = arith.index_cast %c7_i32 : i32 to index
    %c0_67 = arith.constant 0 : index
    %250 = vector.load %arg16[%249, %c0_67] : memref<8x1024xf32, #tpu.memory_space<vmem>>, vector<1x1024xf32>
    %251 = arith.addf %248, %250 : vector<1x1024xf32>
    %252 = vector.extract_strided_slice %251 {offsets = [0, 0], sizes = [1, 256], strides = [1, 1]} : vector<1x1024xf32> to vector<1x256xf32>
    %253 = arith.negf %252 : vector<1x256xf32>
    %254 = math.exp %253 : vector<1x256xf32>
    %cst_68 = arith.constant 1.000000e+00 : f32
    %255 = vector.broadcast %cst_68 : f32 to vector<1x256xf32>
    %256 = arith.addf %255, %254 : vector<1x256xf32>
    %257 = arith.divf %255, %256 : vector<1x256xf32>
    %258 = vector.extract_strided_slice %251 {offsets = [0, 256], sizes = [1, 256], strides = [1, 1]} : vector<1x1024xf32> to vector<1x256xf32>
    %259 = arith.negf %258 : vector<1x256xf32>
    %260 = math.exp %259 : vector<1x256xf32>
    %cst_69 = arith.constant 1.000000e+00 : f32
    %261 = vector.broadcast %cst_69 : f32 to vector<1x256xf32>
    %262 = arith.addf %261, %260 : vector<1x256xf32>
    %263 = arith.divf %261, %262 : vector<1x256xf32>
    %264 = vector.extract_strided_slice %251 {offsets = [0, 512], sizes = [1, 256], strides = [1, 1]} : vector<1x1024xf32> to vector<1x256xf32>
    %265 = math.tanh %264 : vector<1x256xf32>
    %266 = vector.extract_strided_slice %251 {offsets = [0, 768], sizes = [1, 256], strides = [1, 1]} : vector<1x1024xf32> to vector<1x256xf32>
    %267 = arith.negf %266 : vector<1x256xf32>
    %268 = math.exp %267 : vector<1x256xf32>
    %cst_70 = arith.constant 1.000000e+00 : f32
    %269 = vector.broadcast %cst_70 : f32 to vector<1x256xf32>
    %270 = arith.addf %269, %268 : vector<1x256xf32>
    %271 = arith.divf %269, %270 : vector<1x256xf32>
    %272 = arith.mulf %263, %243 : vector<1x256xf32>
    %273 = arith.mulf %257, %265 : vector<1x256xf32>
    %274 = arith.addf %272, %273 : vector<1x256xf32>
    %275 = math.tanh %274 : vector<1x256xf32>
    %276 = arith.mulf %271, %275 : vector<1x256xf32>
    %277 = arith.index_cast %c7_i32 : i32 to index
    %c0_71 = arith.constant 0 : index
    %278 = vector.load %arg17[%277, %c0_71] : memref<8x256xf32, #tpu.memory_space<vmem>>, vector<1x256xf32>
    tpu.vector_store %arg17[%277, %c0_71], %276 {strides = array<i32>} : memref<8x256xf32, #tpu.memory_space<vmem>>, vector<1x256xf32>,
    %c8_i32 = arith.constant 8 : i32
    %c0_72 = arith.constant 0 : index
    %c0_73 = arith.constant 0 : index
    %279 = vector.load %arg14[%c0_72, %c0_73] : memref<2x256xf32, #tpu.memory_space<vmem>>, vector<1x256xf32>
    tpu.vector_store %arg14[%c0_72, %c0_73], %276 {strides = array<i32>} : memref<2x256xf32, #tpu.memory_space<vmem>>, vector<1x256xf32>,
    %c0_74 = arith.constant 0 : index
    %c0_75 = arith.constant 0 : index
    %280 = vector.load %arg15[%c0_74, %c0_75] : memref<2x256xf32, #tpu.memory_space<vmem>>, vector<1x256xf32>
    tpu.vector_store %arg15[%c0_74, %c0_75], %274 {strides = array<i32>} : memref<2x256xf32, #tpu.memory_space<vmem>>, vector<1x256xf32>,
    %c0_76 = arith.constant 0 : index
    %c0_77 = arith.constant 0 : index
    %281 = vector.load %arg8[%c0_76, %c0_77] : memref<256x1024xf32, #tpu.memory_space<vmem>>, vector<256x1024xf32>
    %c0_78 = arith.constant 0 : index
    %c0_79 = arith.constant 0 : index
    %282 = vector.load %arg17[%c0_78, %c0_79] : memref<8x256xf32, #tpu.memory_space<vmem>>, vector<8x256xf32>
    %c0_80 = arith.constant 0 : index
    %c0_81 = arith.constant 0 : index
    %283 = vector.load %arg6[%c0_80, %c0_81] : memref<256x1024xf32, #tpu.memory_space<vmem>>, vector<256x1024xf32>
    %cst_82 = arith.constant dense<0.000000e+00> : vector<8x1024xf32>
    %284 = tpu.matmul %282, %283, %cst_82 {dimension_numbers = #tpu.dot_dimension_numbers<[1], [0], [0], [1], [0, 0, 1, 1], [], []>} : vector<8x256xf32>, vector<256x1024xf32>, vector<8x1024xf32> -> vector<8x1024xf32>
    %c0_83 = arith.constant 0 : index
    %c0_84 = arith.constant 0 : index
    %285 = vector.load %arg7[%c0_83, %c0_84] : memref<1x1024xf32, #tpu.memory_space<vmem>>, vector<1x1024xf32>
    %286 = vector.broadcast %285 : vector<1x1024xf32> to vector<8x1024xf32>
    %287 = arith.addf %284, %286 : vector<8x1024xf32>
    %c0_85 = arith.constant 0 : index
    %c0_86 = arith.constant 0 : index
    %288 = vector.load %arg16[%c0_85, %c0_86] : memref<8x1024xf32, #tpu.memory_space<vmem>>, vector<8x1024xf32>
    tpu.vector_store %arg16[%c0_85, %c0_86], %287 {strides = array<i32>} : memref<8x1024xf32, #tpu.memory_space<vmem>>, vector<8x1024xf32>,
    %c1_87 = arith.constant 1 : index
    %c0_88 = arith.constant 0 : index
    %289 = vector.load %arg1[%c1_87, %c0_88] : memref<2x256xf32, #tpu.memory_space<vmem>>, vector<1x256xf32>
    %c1_89 = arith.constant 1 : index
    %c0_90 = arith.constant 0 : index
    %290 = vector.load %arg2[%c1_89, %c0_90] : memref<2x256xf32, #tpu.memory_space<vmem>>, vector<1x256xf32>
    %c0_i32_91 = arith.constant 0 : i32
    %cst_92 = arith.constant dense<0.000000e+00> : vector<1x1024xf32>
    %291 = tpu.matmul %289, %281, %cst_92 {dimension_numbers = #tpu.dot_dimension_numbers<[1], [0], [0], [1], [0, 0, 1, 1], [], []>} : vector<1x256xf32>, vector<256x1024xf32>, vector<1x1024xf32> -> vector<1x1024xf32>
    %292 = arith.index_cast %c0_i32_91 : i32 to index
    %c0_93 = arith.constant 0 : index
    %293 = vector.load %arg16[%292, %c0_93] : memref<8x1024xf32, #tpu.memory_space<vmem>>, vector<1x1024xf32>
    %294 = arith.addf %291, %293 : vector<1x1024xf32>
    %295 = vector.extract_strided_slice %294 {offsets = [0, 0], sizes = [1, 256], strides = [1, 1]} : vector<1x1024xf32> to vector<1x256xf32>
    %296 = arith.negf %295 : vector<1x256xf32>
    %297 = math.exp %296 : vector<1x256xf32>
    %cst_94 = arith.constant 1.000000e+00 : f32
    %298 = vector.broadcast %cst_94 : f32 to vector<1x256xf32>
    %299 = arith.addf %298, %297 : vector<1x256xf32>
    %300 = arith.divf %298, %299 : vector<1x256xf32>
    %301 = vector.extract_strided_slice %294 {offsets = [0, 256], sizes = [1, 256], strides = [1, 1]} : vector<1x1024xf32> to vector<1x256xf32>
    %302 = arith.negf %301 : vector<1x256xf32>
    %303 = math.exp %302 : vector<1x256xf32>
    %cst_95 = arith.constant 1.000000e+00 : f32
    %304 = vector.broadcast %cst_95 : f32 to vector<1x256xf32>
    %305 = arith.addf %304, %303 : vector<1x256xf32>
    %306 = arith.divf %304, %305 : vector<1x256xf32>
    %307 = vector.extract_strided_slice %294 {offsets = [0, 512], sizes = [1, 256], strides = [1, 1]} : vector<1x1024xf32> to vector<1x256xf32>
    %308 = math.tanh %307 : vector<1x256xf32>
    %309 = vector.extract_strided_slice %294 {offsets = [0, 768], sizes = [1, 256], strides = [1, 1]} : vector<1x1024xf32> to vector<1x256xf32>
    %310 = arith.negf %309 : vector<1x256xf32>
    %311 = math.exp %310 : vector<1x256xf32>
    %cst_96 = arith.constant 1.000000e+00 : f32
    %312 = vector.broadcast %cst_96 : f32 to vector<1x256xf32>
    %313 = arith.addf %312, %311 : vector<1x256xf32>
    %314 = arith.divf %312, %313 : vector<1x256xf32>
    %315 = arith.mulf %306, %290 : vector<1x256xf32>
    %316 = arith.mulf %300, %308 : vector<1x256xf32>
    %317 = arith.addf %315, %316 : vector<1x256xf32>
    %318 = math.tanh %317 : vector<1x256xf32>
    %319 = arith.mulf %314, %318 : vector<1x256xf32>
    %c1_i32_97 = arith.constant 1 : i32
    %cst_98 = arith.constant dense<0.000000e+00> : vector<1x1024xf32>
    %320 = tpu.matmul %319, %281, %cst_98 {dimension_numbers = #tpu.dot_dimension_numbers<[1], [0], [0], [1], [0, 0, 1, 1], [], []>} : vector<1x256xf32>, vector<256x1024xf32>, vector<1x1024xf32> -> vector<1x1024xf32>
    %321 = arith.index_cast %c1_i32_97 : i32 to index
    %c0_99 = arith.constant 0 : index
    %322 = vector.load %arg16[%321, %c0_99] : memref<8x1024xf32, #tpu.memory_space<vmem>>, vector<1x1024xf32>
    %323 = arith.addf %320, %322 : vector<1x1024xf32>
    %324 = vector.extract_strided_slice %323 {offsets = [0, 0], sizes = [1, 256], strides = [1, 1]} : vector<1x1024xf32> to vector<1x256xf32>
    %325 = arith.negf %324 : vector<1x256xf32>
    %326 = math.exp %325 : vector<1x256xf32>
    %cst_100 = arith.constant 1.000000e+00 : f32
    %327 = vector.broadcast %cst_100 : f32 to vector<1x256xf32>
    %328 = arith.addf %327, %326 : vector<1x256xf32>
    %329 = arith.divf %327, %328 : vector<1x256xf32>
    %330 = vector.extract_strided_slice %323 {offsets = [0, 256], sizes = [1, 256], strides = [1, 1]} : vector<1x1024xf32> to vector<1x256xf32>
    %331 = arith.negf %330 : vector<1x256xf32>
    %332 = math.exp %331 : vector<1x256xf32>
    %cst_101 = arith.constant 1.000000e+00 : f32
    %333 = vector.broadcast %cst_101 : f32 to vector<1x256xf32>
    %334 = arith.addf %333, %332 : vector<1x256xf32>
    %335 = arith.divf %333, %334 : vector<1x256xf32>
    %336 = vector.extract_strided_slice %323 {offsets = [0, 512], sizes = [1, 256], strides = [1, 1]} : vector<1x1024xf32> to vector<1x256xf32>
    %337 = math.tanh %336 : vector<1x256xf32>
    %338 = vector.extract_strided_slice %323 {offsets = [0, 768], sizes = [1, 256], strides = [1, 1]} : vector<1x1024xf32> to vector<1x256xf32>
    %339 = arith.negf %338 : vector<1x256xf32>
    %340 = math.exp %339 : vector<1x256xf32>
    %cst_102 = arith.constant 1.000000e+00 : f32
    %341 = vector.broadcast %cst_102 : f32 to vector<1x256xf32>
    %342 = arith.addf %341, %340 : vector<1x256xf32>
    %343 = arith.divf %341, %342 : vector<1x256xf32>
    %344 = arith.mulf %335, %317 : vector<1x256xf32>
    %345 = arith.mulf %329, %337 : vector<1x256xf32>
    %346 = arith.addf %344, %345 : vector<1x256xf32>
    %347 = math.tanh %346 : vector<1x256xf32>
    %348 = arith.mulf %343, %347 : vector<1x256xf32>
    %c2_i32_103 = arith.constant 2 : i32
    %cst_104 = arith.constant dense<0.000000e+00> : vector<1x1024xf32>
    %349 = tpu.matmul %348, %281, %cst_104 {dimension_numbers = #tpu.dot_dimension_numbers<[1], [0], [0], [1], [0, 0, 1, 1], [], []>} : vector<1x256xf32>, vector<256x1024xf32>, vector<1x1024xf32> -> vector<1x1024xf32>
    %350 = arith.index_cast %c2_i32_103 : i32 to index
    %c0_105 = arith.constant 0 : index
    %351 = vector.load %arg16[%350, %c0_105] : memref<8x1024xf32, #tpu.memory_space<vmem>>, vector<1x1024xf32>
    %352 = arith.addf %349, %351 : vector<1x1024xf32>
    %353 = vector.extract_strided_slice %352 {offsets = [0, 0], sizes = [1, 256], strides = [1, 1]} : vector<1x1024xf32> to vector<1x256xf32>
    %354 = arith.negf %353 : vector<1x256xf32>
    %355 = math.exp %354 : vector<1x256xf32>
    %cst_106 = arith.constant 1.000000e+00 : f32
    %356 = vector.broadcast %cst_106 : f32 to vector<1x256xf32>
    %357 = arith.addf %356, %355 : vector<1x256xf32>
    %358 = arith.divf %356, %357 : vector<1x256xf32>
    %359 = vector.extract_strided_slice %352 {offsets = [0, 256], sizes = [1, 256], strides = [1, 1]} : vector<1x1024xf32> to vector<1x256xf32>
    %360 = arith.negf %359 : vector<1x256xf32>
    %361 = math.exp %360 : vector<1x256xf32>
    %cst_107 = arith.constant 1.000000e+00 : f32
    %362 = vector.broadcast %cst_107 : f32 to vector<1x256xf32>
    %363 = arith.addf %362, %361 : vector<1x256xf32>
    %364 = arith.divf %362, %363 : vector<1x256xf32>
    %365 = vector.extract_strided_slice %352 {offsets = [0, 512], sizes = [1, 256], strides = [1, 1]} : vector<1x1024xf32> to vector<1x256xf32>
    %366 = math.tanh %365 : vector<1x256xf32>
    %367 = vector.extract_strided_slice %352 {offsets = [0, 768], sizes = [1, 256], strides = [1, 1]} : vector<1x1024xf32> to vector<1x256xf32>
    %368 = arith.negf %367 : vector<1x256xf32>
    %369 = math.exp %368 : vector<1x256xf32>
    %cst_108 = arith.constant 1.000000e+00 : f32
    %370 = vector.broadcast %cst_108 : f32 to vector<1x256xf32>
    %371 = arith.addf %370, %369 : vector<1x256xf32>
    %372 = arith.divf %370, %371 : vector<1x256xf32>
    %373 = arith.mulf %364, %346 : vector<1x256xf32>
    %374 = arith.mulf %358, %366 : vector<1x256xf32>
    %375 = arith.addf %373, %374 : vector<1x256xf32>
    %376 = math.tanh %375 : vector<1x256xf32>
    %377 = arith.mulf %372, %376 : vector<1x256xf32>
    %c3_i32_109 = arith.constant 3 : i32
    %cst_110 = arith.constant dense<0.000000e+00> : vector<1x1024xf32>
    %378 = tpu.matmul %377, %281, %cst_110 {dimension_numbers = #tpu.dot_dimension_numbers<[1], [0], [0], [1], [0, 0, 1, 1], [], []>} : vector<1x256xf32>, vector<256x1024xf32>, vector<1x1024xf32> -> vector<1x1024xf32>
    %379 = arith.index_cast %c3_i32_109 : i32 to index
    %c0_111 = arith.constant 0 : index
    %380 = vector.load %arg16[%379, %c0_111] : memref<8x1024xf32, #tpu.memory_space<vmem>>, vector<1x1024xf32>
    %381 = arith.addf %378, %380 : vector<1x1024xf32>
    %382 = vector.extract_strided_slice %381 {offsets = [0, 0], sizes = [1, 256], strides = [1, 1]} : vector<1x1024xf32> to vector<1x256xf32>
    %383 = arith.negf %382 : vector<1x256xf32>
    %384 = math.exp %383 : vector<1x256xf32>
    %cst_112 = arith.constant 1.000000e+00 : f32
    %385 = vector.broadcast %cst_112 : f32 to vector<1x256xf32>
    %386 = arith.addf %385, %384 : vector<1x256xf32>
    %387 = arith.divf %385, %386 : vector<1x256xf32>
    %388 = vector.extract_strided_slice %381 {offsets = [0, 256], sizes = [1, 256], strides = [1, 1]} : vector<1x1024xf32> to vector<1x256xf32>
    %389 = arith.negf %388 : vector<1x256xf32>
    %390 = math.exp %389 : vector<1x256xf32>
    %cst_113 = arith.constant 1.000000e+00 : f32
    %391 = vector.broadcast %cst_113 : f32 to vector<1x256xf32>
    %392 = arith.addf %391, %390 : vector<1x256xf32>
    %393 = arith.divf %391, %392 : vector<1x256xf32>
    %394 = vector.extract_strided_slice %381 {offsets = [0, 512], sizes = [1, 256], strides = [1, 1]} : vector<1x1024xf32> to vector<1x256xf32>
    %395 = math.tanh %394 : vector<1x256xf32>
    %396 = vector.extract_strided_slice %381 {offsets = [0, 768], sizes = [1, 256], strides = [1, 1]} : vector<1x1024xf32> to vector<1x256xf32>
    %397 = arith.negf %396 : vector<1x256xf32>
    %398 = math.exp %397 : vector<1x256xf32>
    %cst_114 = arith.constant 1.000000e+00 : f32
    %399 = vector.broadcast %cst_114 : f32 to vector<1x256xf32>
    %400 = arith.addf %399, %398 : vector<1x256xf32>
    %401 = arith.divf %399, %400 : vector<1x256xf32>
    %402 = arith.mulf %393, %375 : vector<1x256xf32>
    %403 = arith.mulf %387, %395 : vector<1x256xf32>
    %404 = arith.addf %402, %403 : vector<1x256xf32>
    %405 = math.tanh %404 : vector<1x256xf32>
    %406 = arith.mulf %401, %405 : vector<1x256xf32>
    %c4_i32_115 = arith.constant 4 : i32
    %cst_116 = arith.constant dense<0.000000e+00> : vector<1x1024xf32>
    %407 = tpu.matmul %406, %281, %cst_116 {dimension_numbers = #tpu.dot_dimension_numbers<[1], [0], [0], [1], [0, 0, 1, 1], [], []>} : vector<1x256xf32>, vector<256x1024xf32>, vector<1x1024xf32> -> vector<1x1024xf32>
    %408 = arith.index_cast %c4_i32_115 : i32 to index
    %c0_117 = arith.constant 0 : index
    %409 = vector.load %arg16[%408, %c0_117] : memref<8x1024xf32, #tpu.memory_space<vmem>>, vector<1x1024xf32>
    %410 = arith.addf %407, %409 : vector<1x1024xf32>
    %411 = vector.extract_strided_slice %410 {offsets = [0, 0], sizes = [1, 256], strides = [1, 1]} : vector<1x1024xf32> to vector<1x256xf32>
    %412 = arith.negf %411 : vector<1x256xf32>
    %413 = math.exp %412 : vector<1x256xf32>
    %cst_118 = arith.constant 1.000000e+00 : f32
    %414 = vector.broadcast %cst_118 : f32 to vector<1x256xf32>
    %415 = arith.addf %414, %413 : vector<1x256xf32>
    %416 = arith.divf %414, %415 : vector<1x256xf32>
    %417 = vector.extract_strided_slice %410 {offsets = [0, 256], sizes = [1, 256], strides = [1, 1]} : vector<1x1024xf32> to vector<1x256xf32>
    %418 = arith.negf %417 : vector<1x256xf32>
    %419 = math.exp %418 : vector<1x256xf32>
    %cst_119 = arith.constant 1.000000e+00 : f32
    %420 = vector.broadcast %cst_119 : f32 to vector<1x256xf32>
    %421 = arith.addf %420, %419 : vector<1x256xf32>
    %422 = arith.divf %420, %421 : vector<1x256xf32>
    %423 = vector.extract_strided_slice %410 {offsets = [0, 512], sizes = [1, 256], strides = [1, 1]} : vector<1x1024xf32> to vector<1x256xf32>
    %424 = math.tanh %423 : vector<1x256xf32>
    %425 = vector.extract_strided_slice %410 {offsets = [0, 768], sizes = [1, 256], strides = [1, 1]} : vector<1x1024xf32> to vector<1x256xf32>
    %426 = arith.negf %425 : vector<1x256xf32>
    %427 = math.exp %426 : vector<1x256xf32>
    %cst_120 = arith.constant 1.000000e+00 : f32
    %428 = vector.broadcast %cst_120 : f32 to vector<1x256xf32>
    %429 = arith.addf %428, %427 : vector<1x256xf32>
    %430 = arith.divf %428, %429 : vector<1x256xf32>
    %431 = arith.mulf %422, %404 : vector<1x256xf32>
    %432 = arith.mulf %416, %424 : vector<1x256xf32>
    %433 = arith.addf %431, %432 : vector<1x256xf32>
    %434 = math.tanh %433 : vector<1x256xf32>
    %435 = arith.mulf %430, %434 : vector<1x256xf32>
    %c5_i32_121 = arith.constant 5 : i32
    %cst_122 = arith.constant dense<0.000000e+00> : vector<1x1024xf32>
    %436 = tpu.matmul %435, %281, %cst_122 {dimension_numbers = #tpu.dot_dimension_numbers<[1], [0], [0], [1], [0, 0, 1, 1], [], []>} : vector<1x256xf32>, vector<256x1024xf32>, vector<1x1024xf32> -> vector<1x1024xf32>
    %437 = arith.index_cast %c5_i32_121 : i32 to index
    %c0_123 = arith.constant 0 : index
    %438 = vector.load %arg16[%437, %c0_123] : memref<8x1024xf32, #tpu.memory_space<vmem>>, vector<1x1024xf32>
    %439 = arith.addf %436, %438 : vector<1x1024xf32>
    %440 = vector.extract_strided_slice %439 {offsets = [0, 0], sizes = [1, 256], strides = [1, 1]} : vector<1x1024xf32> to vector<1x256xf32>
    %441 = arith.negf %440 : vector<1x256xf32>
    %442 = math.exp %441 : vector<1x256xf32>
    %cst_124 = arith.constant 1.000000e+00 : f32
    %443 = vector.broadcast %cst_124 : f32 to vector<1x256xf32>
    %444 = arith.addf %443, %442 : vector<1x256xf32>
    %445 = arith.divf %443, %444 : vector<1x256xf32>
    %446 = vector.extract_strided_slice %439 {offsets = [0, 256], sizes = [1, 256], strides = [1, 1]} : vector<1x1024xf32> to vector<1x256xf32>
    %447 = arith.negf %446 : vector<1x256xf32>
    %448 = math.exp %447 : vector<1x256xf32>
    %cst_125 = arith.constant 1.000000e+00 : f32
    %449 = vector.broadcast %cst_125 : f32 to vector<1x256xf32>
    %450 = arith.addf %449, %448 : vector<1x256xf32>
    %451 = arith.divf %449, %450 : vector<1x256xf32>
    %452 = vector.extract_strided_slice %439 {offsets = [0, 512], sizes = [1, 256], strides = [1, 1]} : vector<1x1024xf32> to vector<1x256xf32>
    %453 = math.tanh %452 : vector<1x256xf32>
    %454 = vector.extract_strided_slice %439 {offsets = [0, 768], sizes = [1, 256], strides = [1, 1]} : vector<1x1024xf32> to vector<1x256xf32>
    %455 = arith.negf %454 : vector<1x256xf32>
    %456 = math.exp %455 : vector<1x256xf32>
    %cst_126 = arith.constant 1.000000e+00 : f32
    %457 = vector.broadcast %cst_126 : f32 to vector<1x256xf32>
    %458 = arith.addf %457, %456 : vector<1x256xf32>
    %459 = arith.divf %457, %458 : vector<1x256xf32>
    %460 = arith.mulf %451, %433 : vector<1x256xf32>
    %461 = arith.mulf %445, %453 : vector<1x256xf32>
    %462 = arith.addf %460, %461 : vector<1x256xf32>
    %463 = math.tanh %462 : vector<1x256xf32>
    %464 = arith.mulf %459, %463 : vector<1x256xf32>
    %c6_i32_127 = arith.constant 6 : i32
    %cst_128 = arith.constant dense<0.000000e+00> : vector<1x1024xf32>
    %465 = tpu.matmul %464, %281, %cst_128 {dimension_numbers = #tpu.dot_dimension_numbers<[1], [0], [0], [1], [0, 0, 1, 1], [], []>} : vector<1x256xf32>, vector<256x1024xf32>, vector<1x1024xf32> -> vector<1x1024xf32>
    %466 = arith.index_cast %c6_i32_127 : i32 to index
    %c0_129 = arith.constant 0 : index
    %467 = vector.load %arg16[%466, %c0_129] : memref<8x1024xf32, #tpu.memory_space<vmem>>, vector<1x1024xf32>
    %468 = arith.addf %465, %467 : vector<1x1024xf32>
    %469 = vector.extract_strided_slice %468 {offsets = [0, 0], sizes = [1, 256], strides = [1, 1]} : vector<1x1024xf32> to vector<1x256xf32>
    %470 = arith.negf %469 : vector<1x256xf32>
    %471 = math.exp %470 : vector<1x256xf32>
    %cst_130 = arith.constant 1.000000e+00 : f32
    %472 = vector.broadcast %cst_130 : f32 to vector<1x256xf32>
    %473 = arith.addf %472, %471 : vector<1x256xf32>
    %474 = arith.divf %472, %473 : vector<1x256xf32>
    %475 = vector.extract_strided_slice %468 {offsets = [0, 256], sizes = [1, 256], strides = [1, 1]} : vector<1x1024xf32> to vector<1x256xf32>
    %476 = arith.negf %475 : vector<1x256xf32>
    %477 = math.exp %476 : vector<1x256xf32>
    %cst_131 = arith.constant 1.000000e+00 : f32
    %478 = vector.broadcast %cst_131 : f32 to vector<1x256xf32>
    %479 = arith.addf %478, %477 : vector<1x256xf32>
    %480 = arith.divf %478, %479 : vector<1x256xf32>
    %481 = vector.extract_strided_slice %468 {offsets = [0, 512], sizes = [1, 256], strides = [1, 1]} : vector<1x1024xf32> to vector<1x256xf32>
    %482 = math.tanh %481 : vector<1x256xf32>
    %483 = vector.extract_strided_slice %468 {offsets = [0, 768], sizes = [1, 256], strides = [1, 1]} : vector<1x1024xf32> to vector<1x256xf32>
    %484 = arith.negf %483 : vector<1x256xf32>
    %485 = math.exp %484 : vector<1x256xf32>
    %cst_132 = arith.constant 1.000000e+00 : f32
    %486 = vector.broadcast %cst_132 : f32 to vector<1x256xf32>
    %487 = arith.addf %486, %485 : vector<1x256xf32>
    %488 = arith.divf %486, %487 : vector<1x256xf32>
    %489 = arith.mulf %480, %462 : vector<1x256xf32>
    %490 = arith.mulf %474, %482 : vector<1x256xf32>
    %491 = arith.addf %489, %490 : vector<1x256xf32>
    %492 = math.tanh %491 : vector<1x256xf32>
    %493 = arith.mulf %488, %492 : vector<1x256xf32>
    %c7_i32_133 = arith.constant 7 : i32
    %cst_134 = arith.constant dense<0.000000e+00> : vector<1x1024xf32>
    %494 = tpu.matmul %493, %281, %cst_134 {dimension_numbers = #tpu.dot_dimension_numbers<[1], [0], [0], [1], [0, 0, 1, 1], [], []>} : vector<1x256xf32>, vector<256x1024xf32>, vector<1x1024xf32> -> vector<1x1024xf32>
    %495 = arith.index_cast %c7_i32_133 : i32 to index
    %c0_135 = arith.constant 0 : index
    %496 = vector.load %arg16[%495, %c0_135] : memref<8x1024xf32, #tpu.memory_space<vmem>>, vector<1x1024xf32>
    %497 = arith.addf %494, %496 : vector<1x1024xf32>
    %498 = vector.extract_strided_slice %497 {offsets = [0, 0], sizes = [1, 256], strides = [1, 1]} : vector<1x1024xf32> to vector<1x256xf32>
    %499 = arith.negf %498 : vector<1x256xf32>
    %500 = math.exp %499 : vector<1x256xf32>
    %cst_136 = arith.constant 1.000000e+00 : f32
    %501 = vector.broadcast %cst_136 : f32 to vector<1x256xf32>
    %502 = arith.addf %501, %500 : vector<1x256xf32>
    %503 = arith.divf %501, %502 : vector<1x256xf32>
    %504 = vector.extract_strided_slice %497 {offsets = [0, 256], sizes = [1, 256], strides = [1, 1]} : vector<1x1024xf32> to vector<1x256xf32>
    %505 = arith.negf %504 : vector<1x256xf32>
    %506 = math.exp %505 : vector<1x256xf32>
    %cst_137 = arith.constant 1.000000e+00 : f32
    %507 = vector.broadcast %cst_137 : f32 to vector<1x256xf32>
    %508 = arith.addf %507, %506 : vector<1x256xf32>
    %509 = arith.divf %507, %508 : vector<1x256xf32>
    %510 = vector.extract_strided_slice %497 {offsets = [0, 512], sizes = [1, 256], strides = [1, 1]} : vector<1x1024xf32> to vector<1x256xf32>
    %511 = math.tanh %510 : vector<1x256xf32>
    %512 = vector.extract_strided_slice %497 {offsets = [0, 768], sizes = [1, 256], strides = [1, 1]} : vector<1x1024xf32> to vector<1x256xf32>
    %513 = arith.negf %512 : vector<1x256xf32>
    %514 = math.exp %513 : vector<1x256xf32>
    %cst_138 = arith.constant 1.000000e+00 : f32
    %515 = vector.broadcast %cst_138 : f32 to vector<1x256xf32>
    %516 = arith.addf %515, %514 : vector<1x256xf32>
    %517 = arith.divf %515, %516 : vector<1x256xf32>
    %518 = arith.mulf %509, %491 : vector<1x256xf32>
    %519 = arith.mulf %503, %511 : vector<1x256xf32>
    %520 = arith.addf %518, %519 : vector<1x256xf32>
    %521 = math.tanh %520 : vector<1x256xf32>
    %522 = arith.mulf %517, %521 : vector<1x256xf32>
    %c8_i32_139 = arith.constant 8 : i32
    %c1_140 = arith.constant 1 : index
    %c0_141 = arith.constant 0 : index
    %523 = vector.load %arg14[%c1_140, %c0_141] : memref<2x256xf32, #tpu.memory_space<vmem>>, vector<1x256xf32>
    tpu.vector_store %arg14[%c1_140, %c0_141], %522 {strides = array<i32>} : memref<2x256xf32, #tpu.memory_space<vmem>>, vector<1x256xf32>,
    %c1_142 = arith.constant 1 : index
    %c0_143 = arith.constant 0 : index
    %524 = vector.load %arg15[%c1_142, %c0_143] : memref<2x256xf32, #tpu.memory_space<vmem>>, vector<1x256xf32>
    tpu.vector_store %arg15[%c1_142, %c0_143], %520 {strides = array<i32>} : memref<2x256xf32, #tpu.memory_space<vmem>>, vector<1x256xf32>,
    %c0_144 = arith.constant 0 : index
    %c0_145 = arith.constant 0 : index
    %525 = vector.load %arg9[%c0_144, %c0_145] : memref<256x32xf32, #tpu.memory_space<vmem>>, vector<256x32xf32>
    %cst_146 = arith.constant dense<0.000000e+00> : vector<1x32xf32>
    %526 = tpu.matmul %522, %525, %cst_146 {dimension_numbers = #tpu.dot_dimension_numbers<[1], [0], [0], [1], [0, 0, 1, 1], [], []>} : vector<1x256xf32>, vector<256x32xf32>, vector<1x32xf32> -> vector<1x32xf32>
    %c0_147 = arith.constant 0 : index
    %c0_148 = arith.constant 0 : index
    %527 = vector.load %arg10[%c0_147, %c0_148] : memref<1x32xf32, #tpu.memory_space<vmem>>, vector<1x32xf32>
    %528 = arith.addf %526, %527 : vector<1x32xf32>
    %cst_149 = arith.constant 0.000000e+00 : f32
    %529 = vector.broadcast %cst_149 : f32 to vector<1x32xf32>
    %530 = arith.cmpf ogt, %528, %529 : vector<1x32xf32>
    %cst_150 = arith.constant 0.00999999977 : f32
    %531 = vector.broadcast %cst_150 : f32 to vector<1x32xf32>
    %532 = arith.mulf %531, %528 : vector<1x32xf32>
    %533 = arith.select %530, %528, %532 : vector<1x32xi1>, vector<1x32xf32>
    %c0_151 = arith.constant 0 : index
    %c0_152 = arith.constant 0 : index
    %534 = vector.load %arg11[%c0_151, %c0_152] : memref<32x2xf32, #tpu.memory_space<vmem>>, vector<32x2xf32>
    %cst_153 = arith.constant dense<0.000000e+00> : vector<1x2xf32>
    %535 = tpu.matmul %533, %534, %cst_153 {dimension_numbers = #tpu.dot_dimension_numbers<[1], [0], [0], [1], [0, 0, 1, 1], [], []>} : vector<1x32xf32>, vector<32x2xf32>, vector<1x2xf32> -> vector<1x2xf32>
    %c0_154 = arith.constant 0 : index
    %c0_155 = arith.constant 0 : index
    %536 = vector.load %arg12[%c0_154, %c0_155] : memref<1x1xf32, #tpu.memory_space<vmem>>, vector<1x1xf32>
    %537 = vector.broadcast %536 : vector<1x1xf32> to vector<1x2xf32>
    %538 = arith.addf %535, %537 : vector<1x2xf32>
    %c0_156 = arith.constant 0 : index
    %c0_157 = arith.constant 0 : index
    %539 = vector.load %arg13[%c0_156, %c0_157] : memref<1x2xf32, #tpu.memory_space<vmem>>, vector<1x2xf32>
    tpu.vector_store %arg13[%c0_156, %c0_157], %538 {strides = array<i32>} : memref<1x2xf32, #tpu.memory_space<vmem>>, vector<1x2xf32>,
    return
  }
}

</mosaic_0001>

<llo_original>
// kernel: _soh_forward.1
$region0: #{_soh_forward.1}
  #allocation0 [shape = 'u32[]', space=smem, size = 0x4, offset = 0x4, fixed_abs, tag = 'smem constant byte address 0x4 - core index']
  #allocation1 [shape = 'u32[144,128]{1,0:T(1,128)}', space=vmem, size = 0x12000, scoped, tag = 'internal scratch']
  #allocation2 [shape = 'f32[8,1024]{1,0:T(8,128)}', space=vmem, size = 0x8000, scoped, tag = 'scratch operand']
  #allocation3 [shape = 'f32[8,256]{1,0:T(8,128)}', space=vmem, size = 0x2000, scoped, tag = 'scratch operand']
  #allocation4 [shape = 'f32[1,1]{1,0:T(1,128)S(1)}', space=vmem, size = 0x200, scoped, tag = 'scoped memory for _soh_forward.1']
  %s0 = inlined_call_operand.vmem [shape: f32[2,8,4], index: 0, kind: input, shape index: {}]
  %s1 = inlined_call_operand.vmem [shape: f32[2,256], index: 1, kind: input, shape index: {}]
  %s2 = inlined_call_operand.vmem [shape: f32[2,256], index: 2, kind: input, shape index: {}]
  %s3 = inlined_call_operand.vmem [shape: f32[4,512], index: 3, kind: input, shape index: {}]
  %s4 = inlined_call_operand.vmem [shape: f32[1,512], index: 4, kind: input, shape index: {}]
  %s5 = inlined_call_operand.hbm [shape: f32[256,1024], index: 5, kind: input, shape index: {}]
  %s6 = inlined_call_operand.hbm [shape: f32[256,1024], index: 6, kind: input, shape index: {}]
  %s7 = inlined_call_operand.vmem [shape: f32[1,1024], index: 7, kind: input, shape index: {}]
  %s8 = inlined_call_operand.hbm [shape: f32[256,1024], index: 8, kind: input, shape index: {}]
  %s9 = inlined_call_operand.vmem [shape: f32[256,32], index: 9, kind: input, shape index: {}]
  %s10 = inlined_call_operand.vmem [shape: f32[1,32], index: 10, kind: input, shape index: {}]
  %s11 = inlined_call_operand.vmem [shape: f32[32,2], index: 11, kind: input, shape index: {}]
  %s12 = inlined_call_operand.<no memory space> [shape: f32[1,1], index: 12, kind: input, shape index: {}]
  %s13 = inlined_call_operand.hbm [shape: f32[1,2], index: 13, kind: output, shape index: {0}]
  %s14 = inlined_call_operand.hbm [shape: f32[2,256], index: 14, kind: output, shape index: {1}]
  %s15 = inlined_call_operand.hbm [shape: f32[2,256], index: 15, kind: output, shape index: {2}]
  %16 = xla_tuple %s13, %s14, %s15
  %s17 = sld [smem:[#allocation0]]
  $region90: #{_soh_forward.1} parent=0
    _
  %s19 = ssub.s32 1, %s17
  %s20 = scalar_select 0, %s19, %s17
  %v21 = vstv %s12
  %22 = vst [vmem:[#allocation4] sm:$0x1] %v21
  $region1: #{_soh_forward.1} parent=0
    #allocation5 [shape = 'u8[1048576]{0}', space=vmem, size = 0x100000, scoped, tag = 'input window, operand 5, single buffered']
    #allocation6 [shape = 's32[1]{0}', space=sflag, size = 0x4, scoped, tag = 'scoped memory for _soh_forward.1']
    #allocation7 [shape = 's32[1]{0}', space=sflag, size = 0x4, scoped, tag = 'scoped memory for _soh_forward.1']
    #allocation8 [shape = 'u8[1048576]{0}', space=vmem, size = 0x100000, scoped, tag = 'input window, operand 6, single buffered']
    #allocation9 [shape = 's32[1]{0}', space=sflag, size = 0x4, scoped, tag = 'scoped memory for _soh_forward.1']
    #allocation10 [shape = 'u8[1048576]{0}', space=vmem, size = 0x100000, scoped, tag = 'input window, operand 8, single buffered']
    #allocation11 [shape = 'u8[512]{0}', space=vmem, size = 0x400, scoped, tag = 'output window, operand 0, single buffered']
    #allocation12 [shape = 'u8[2048]{0}', space=vmem, size = 0x800, scoped, tag = 'output window, operand 1, single buffered']
    #allocation13 [shape = 's32[1]{0}', space=sflag, size = 0x4, scoped, tag = 'scoped memory for _soh_forward.1']
    #allocation14 [shape = 'u8[2048]{0}', space=vmem, size = 0x800, scoped, tag = 'output window, operand 2, single buffered']
    %23 = vsyncpa [#allocation6], 0
    %24 = vsyncpa [#allocation9], 0
    %25 = vsyncpa [#allocation7], 0
    %26 = vsyncpa [#allocation13], 0
    // Predicated region
    $region2: #{_soh_forward.1} parent=1 // pred_check
      _
    $region3: #{_soh_forward.1} parent=1 // pred_check_branch
      %28 = sbr.rel (0) target = $region5
    $region4: #{_soh_forward.1} parent=1 // pred_region
      _
    $region5: #{_soh_forward.1} parent=1 // pred_fallthru
      _
    // Predicated region
    $region6: #{_soh_forward.1} parent=1 // pred_check
      _
    $region7: #{_soh_forward.1} parent=1 // pred_check_branch
      %30 = sbr.rel (0) target = $region9
    $region8: #{_soh_forward.1} parent=1 // pred_region
      _
    $region9: #{_soh_forward.1} parent=1 // pred_fallthru
      _
    // Predicated region
    $region10: #{_soh_forward.1} parent=1 // pred_check
      _
    $region11: #{_soh_forward.1} parent=1 // pred_check_branch
      %32 = sbr.rel (0) target = $region13
    $region12: #{_soh_forward.1} parent=1 // pred_region
      _
    $region13: #{_soh_forward.1} parent=1 // pred_fallthru
      _
    // Predicated region
    $region14: #{_soh_forward.1} parent=1 // pred_check
      _
    $region15: #{_soh_forward.1} parent=1 // pred_check_branch
      %34 = sbr.rel (0) target = $region17
    $region16: #{_soh_forward.1} parent=1 // pred_region
      _
    $region17: #{_soh_forward.1} parent=1 // pred_fallthru
      _
    // Predicated region
    $region18: #{_soh_forward.1} parent=1 // pred_check
      _
    $region19: #{_soh_forward.1} parent=1 // pred_check_branch
      %36 = sbr.rel (0) target = $region21
    $region20: #{_soh_forward.1} parent=1 // pred_region
      _
    $region21: #{_soh_forward.1} parent=1 // pred_fallthru
      _
    // Predicated region
    $region22: #{_soh_forward.1} parent=1 // pred_check
      _
    $region23: #{_soh_forward.1} parent=1 // pred_check_branch
      %38 = sbr.rel (0) target = $region25
    $region24: #{_soh_forward.1} parent=1 // pred_region
      %s40 = ssub.s32 32768, 32768
      %41 = vsyncadd [#allocation6], %s40
      %s42 = sshll.u32 [#allocation5], 4
      %s43 = int_to_ptr.vmem [resolvable:$true] %s42
      %48 = dma.hbm_to_vmem [thread:$0]  %s5, 32768, %s43, [#allocation6], 1024, 1024, 64
    $region25: #{_soh_forward.1} parent=1 // pred_fallthru
      _
    // Predicated region
    $region26: #{_soh_forward.1} parent=1 // pred_check
      _
    $region27: #{_soh_forward.1} parent=1 // pred_check_branch
      %50 = sbr.rel (0) target = $region29
    $region28: #{_soh_forward.1} parent=1 // pred_region
      %s52 = ssub.s32 32768, 32768
      %53 = vsyncadd [#allocation9], %s52
      %s54 = sshll.u32 [#allocation8], 4
      %s55 = int_to_ptr.vmem [resolvable:$true] %s54
      %60 = dma.hbm_to_vmem [thread:$0]  %s6, 32768, %s55, [#allocation9], 1024, 1024, 64
    $region29: #{_soh_forward.1} parent=1 // pred_fallthru
      _
    // Predicated region
    $region30: #{_soh_forward.1} parent=1 // pred_check
      _
    $region31: #{_soh_forward.1} parent=1 // pred_check_branch
      %62 = sbr.rel (0) target = $region33
    $region32: #{_soh_forward.1} parent=1 // pred_region
      _
    $region33: #{_soh_forward.1} parent=1 // pred_fallthru
      _
    // Predicated region
    $region34: #{_soh_forward.1} parent=1 // pred_check
      _
    $region35: #{_soh_forward.1} parent=1 // pred_check_branch
      %64 = sbr.rel (0) target = $region37
    $region36: #{_soh_forward.1} parent=1 // pred_region
      %s66 = ssub.s32 32768, 32768
      %67 = vsyncadd [#allocation9], %s66
      %s68 = sshll.u32 [#allocation10], 4
      %s69 = int_to_ptr.vmem [resolvable:$true] %s68
      %74 = dma.hbm_to_vmem [thread:$0]  %s8, 32768, %s69, [#allocation9], 1024, 1024, 64
    $region37: #{_soh_forward.1} parent=1 // pred_fallthru
      _
    // Predicated region
    $region38: #{_soh_forward.1} parent=1 // pred_check
      _
    $region39: #{_soh_forward.1} parent=1 // pred_check_branch
      %76 = sbr.rel (0) target = $region41
    $region40: #{_soh_forward.1} parent=1 // pred_region
      _
    $region41: #{_soh_forward.1} parent=1 // pred_fallthru
      _
    // Predicated region
    $region42: #{_soh_forward.1} parent=1 // pred_check
      _
    $region43: #{_soh_forward.1} parent=1 // pred_check_branch
      %78 = sbr.rel (0) target = $region45
    $region44: #{_soh_forward.1} parent=1 // pred_region
      _
    $region45: #{_soh_forward.1} parent=1 // pred_fallthru
      _
    // Predicated region
    $region46: #{_soh_forward.1} parent=1 // pred_check
      _
    $region47: #{_soh_forward.1} parent=1 // pred_check_branch
      %80 = sbr.rel (0) target = $region49
    $region48: #{_soh_forward.1} parent=1 // pred_region
      _
    $region49: #{_soh_forward.1} parent=1 // pred_fallthru
      _
    // Predicated region
    $region50: #{_soh_forward.1} parent=1 // pred_check
      _
    $region51: #{_soh_forward.1} parent=1 // pred_check_branch
      %82 = sbr.rel (0) target = $region53
    $region52: #{_soh_forward.1} parent=1 // pred_region
      _
    $region53: #{_soh_forward.1} parent=1 // pred_fallthru
      _
    // Predicated region
    $region54: #{_soh_forward.1} parent=1 // pred_check
      _
    $region55: #{_soh_forward.1} parent=1 // pred_check_branch
      %84 = sbr.rel (0) target = $region57
    $region56: #{_soh_forward.1} parent=1 // pred_region
      %85 = dma.done [#allocation6], 32768
    $region57: #{_soh_forward.1} parent=1 // pred_fallthru
      _
    // Predicated region
    $region58: #{_soh_forward.1} parent=1 // pred_check
      _
    $region59: #{_soh_forward.1} parent=1 // pred_check_branch
      %87 = sbr.rel (0) target = $region61
    $region60: #{_soh_forward.1} parent=1 // pred_region
      %88 = dma.done [#allocation9], 32768
    $region61: #{_soh_forward.1} parent=1 // pred_fallthru
      _
    // Predicated region
    $region62: #{_soh_forward.1} parent=1 // pred_check
      _
    $region63: #{_soh_forward.1} parent=1 // pred_check_branch
      %90 = sbr.rel (0) target = $region65
    $region64: #{_soh_forward.1} parent=1 // pred_region
      %91 = dma.done [#allocation9], 32768
    $region65: #{_soh_forward.1} parent=1 // pred_fallthru
      _
    %v92 = vld [vmem:[#allocation5] sm:$0xff]
    %v93 = vld [vmem:[#allocation5 + $0x8] sm:$0xff]
    %v94 = vld [vmem:[#allocation5 + $0x10] sm:$0xff]
    %v95 = vld [vmem:[#allocation5 + $0x18] sm:$0xff]
    %v96 = vld [vmem:[#allocation5 + $0x20] sm:$0xff]
    %v97 = vld [vmem:[#allocation5 + $0x28] sm:$0xff]
    %v98 = vld [vmem:[#allocation5 + $0x30] sm:$0xff]
    %v99 = vld [vmem:[#allocation5 + $0x38] sm:$0xff]
    %v100 = vld [vmem:[#allocation5 + $0x40] sm:$0xff]
    %v101 = vld [vmem:[#allocation5 + $0x48] sm:$0xff]
    %v102 = vld [vmem:[#allocation5 + $0x50] sm:$0xff]
    %v103 = vld [vmem:[#allocation5 + $0x58] sm:$0xff]
    %v104 = vld [vmem:[#allocation5 + $0x60] sm:$0xff]
    %v105 = vld [vmem:[#allocation5 + $0x68] sm:$0xff]
    %v106 = vld [vmem:[#allocation5 + $0x70] sm:$0xff]
    %v107 = vld [vmem:[#allocation5 + $0x78] sm:$0xff]
    %v108 = vld [vmem:[#allocation5 + $0x80] sm:$0xff]
    %v109 = vld [vmem:[#allocation5 + $0x88] sm:$0xff]
    %v110 = vld [vmem:[#allocation5 + $0x90] sm:$0xff]
    %v111 = vld [vmem:[#allocation5 + $0x98] sm:$0xff]
    %v112 = vld [vmem:[#allocation5 + $0xa0] sm:$0xff]
    %v113 = vld [vmem:[#allocation5 + $0xa8] sm:$0xff]
    %v114 = vld [vmem:[#allocation5 + $0xb0] sm:$0xff]
    %v115 = vld [vmem:[#allocation5 + $0xb8] sm:$0xff]
    %v116 = vld [vmem:[#allocation5 + $0xc0] sm:$0xff]
    %v117 = vld [vmem:[#allocation5 + $0xc8] sm:$0xff]
    %v118 = vld [vmem:[#allocation5 + $0xd0] sm:$0xff]
    %v119 = vld [vmem:[#allocation5 + $0xd8] sm:$0xff]
    %v120 = vld [vmem:[#allocation5 + $0xe0] sm:$0xff]
    %v121 = vld [vmem:[#allocation5 + $0xe8] sm:$0xff]
    %v122 = vld [vmem:[#allocation5 + $0xf0] sm:$0xff]
    %v123 = vld [vmem:[#allocation5 + $0xf8] sm:$0xff]
    %v124 = vld [vmem:[#allocation5 + $0x100] sm:$0xff]
    %v125 = vld [vmem:[#allocation5 + $0x108] sm:$0xff]
    %v126 = vld [vmem:[#allocation5 + $0x110] sm:$0xff]
    %v127 = vld [vmem:[#allocation5 + $0x118] sm:$0xff]
    %v128 = vld [vmem:[#allocation5 + $0x120] sm:$0xff]
    %v129 = vld [vmem:[#allocation5 + $0x128] sm:$0xff]
    %v130 = vld [vmem:[#allocation5 + $0x130] sm:$0xff]
    %v131 = vld [vmem:[#allocation5 + $0x138] sm:$0xff]
    %v132 = vld [vmem:[#allocation5 + $0x140] sm:$0xff]
    %v133 = vld [vmem:[#allocation5 + $0x148] sm:$0xff]
    %v134 = vld [vmem:[#allocation5 + $0x150] sm:$0xff]
    %v135 = vld [vmem:[#allocation5 + $0x158] sm:$0xff]
    %v136 = vld [vmem:[#allocation5 + $0x160] sm:$0xff]
    %v137 = vld [vmem:[#allocation5 + $0x168] sm:$0xff]
    %v138 = vld [vmem:[#allocation5 + $0x170] sm:$0xff]
    %v139 = vld [vmem:[#allocation5 + $0x178] sm:$0xff]
    %v140 = vld [vmem:[#allocation5 + $0x180] sm:$0xff]
    %v141 = vld [vmem:[#allocation5 + $0x188] sm:$0xff]
    %v142 = vld [vmem:[#allocation5 + $0x190] sm:$0xff]
    %v143 = vld [vmem:[#allocation5 + $0x198] sm:$0xff]
    %v144 = vld [vmem:[#allocation5 + $0x1a0] sm:$0xff]
    %v145 = vld [vmem:[#allocation5 + $0x1a8] sm:$0xff]
    %v146 = vld [vmem:[#allocation5 + $0x1b0] sm:$0xff]
    %v147 = vld [vmem:[#allocation5 + $0x1b8] sm:$0xff]
    %v148 = vld [vmem:[#allocation5 + $0x1c0] sm:$0xff]
    %v149 = vld [vmem:[#allocation5 + $0x1c8] sm:$0xff]
    %v150 = vld [vmem:[#allocation5 + $0x1d0] sm:$0xff]
    %v151 = vld [vmem:[#allocation5 + $0x1d8] sm:$0xff]
    %v152 = vld [vmem:[#allocation5 + $0x1e0] sm:$0xff]
    %v153 = vld [vmem:[#allocation5 + $0x1e8] sm:$0xff]
    %v154 = vld [vmem:[#allocation5 + $0x1f0] sm:$0xff]
    %v155 = vld [vmem:[#allocation5 + $0x1f8] sm:$0xff]
    %v156 = vld [vmem:[#allocation5 + $0x200] sm:$0xff]
    %v157 = vld [vmem:[#allocation5 + $0x208] sm:$0xff]
    %v158 = vld [vmem:[#allocation5 + $0x210] sm:$0xff]
    %v159 = vld [vmem:[#allocation5 + $0x218] sm:$0xff]
    %v160 = vld [vmem:[#allocation5 + $0x220] sm:$0xff]
    %v161 = vld [vmem:[#allocation5 + $0x228] sm:$0xff]
    %v162 = vld [vmem:[#allocation5 + $0x230] sm:$0xff]
    %v163 = vld [vmem:[#allocation5 + $0x238] sm:$0xff]
    %v164 = vld [vmem:[#allocation5 + $0x240] sm:$0xff]
    %v165 = vld [vmem:[#allocation5 + $0x248] sm:$0xff]
    %v166 = vld [vmem:[#allocation5 + $0x250] sm:$0xff]
    %v167 = vld [vmem:[#allocation5 + $0x258] sm:$0xff]
    %v168 = vld [vmem:[#allocation5 + $0x260] sm:$0xff]
    %v169 = vld [vmem:[#allocation5 + $0x268] sm:$0xff]
    %v170 = vld [vmem:[#allocation5 + $0x270] sm:$0xff]
    %v171 = vld [vmem:[#allocation5 + $0x278] sm:$0xff]
    %v172 = vld [vmem:[#allocation5 + $0x280] sm:$0xff]
    %v173 = vld [vmem:[#allocation5 + $0x288] sm:$0xff]
    %v174 = vld [vmem:[#allocation5 + $0x290] sm:$0xff]
    %v175 = vld [vmem:[#allocation5 + $0x298] sm:$0xff]
    %v176 = vld [vmem:[#allocation5 + $0x2a0] sm:$0xff]
    %v177 = vld [vmem:[#allocation5 + $0x2a8] sm:$0xff]
    %v178 = vld [vmem:[#allocation5 + $0x2b0] sm:$0xff]
    %v179 = vld [vmem:[#allocation5 + $0x2b8] sm:$0xff]
    %v180 = vld [vmem:[#allocation5 + $0x2c0] sm:$0xff]
    %v181 = vld [vmem:[#allocation5 + $0x2c8] sm:$0xff]
    %v182 = vld [vmem:[#allocation5 + $0x2d0] sm:$0xff]
    %v183 = vld [vmem:[#allocation5 + $0x2d8] sm:$0xff]
    %v184 = vld [vmem:[#allocation5 + $0x2e0] sm:$0xff]
    %v185 = vld [vmem:[#allocation5 + $0x2e8] sm:$0xff]
    %v186 = vld [vmem:[#allocation5 + $0x2f0] sm:$0xff]
    %v187 = vld [vmem:[#allocation5 + $0x2f8] sm:$0xff]
    %v188 = vld [vmem:[#allocation5 + $0x300] sm:$0xff]
    %v189 = vld [vmem:[#allocation5 + $0x308] sm:$0xff]
    %v190 = vld [vmem:[#allocation5 + $0x310] sm:$0xff]
    %v191 = vld [vmem:[#allocation5 + $0x318] sm:$0xff]
    %v192 = vld [vmem:[#allocation5 + $0x320] sm:$0xff]
    %v193 = vld [vmem:[#allocation5 + $0x328] sm:$0xff]
    %v194 = vld [vmem:[#allocation5 + $0x330] sm:$0xff]
    %v195 = vld [vmem:[#allocation5 + $0x338] sm:$0xff]
    %v196 = vld [vmem:[#allocation5 + $0x340] sm:$0xff]
    %v197 = vld [vmem:[#allocation5 + $0x348] sm:$0xff]
    %v198 = vld [vmem:[#allocation5 + $0x350] sm:$0xff]
    %v199 = vld [vmem:[#allocation5 + $0x358] sm:$0xff]
    %v200 = vld [vmem:[#allocation5 + $0x360] sm:$0xff]
    %v201 = vld [vmem:[#allocation5 + $0x368] sm:$0xff]
    %v202 = vld [vmem:[#allocation5 + $0x370] sm:$0xff]
    %v203 = vld [vmem:[#allocation5 + $0x378] sm:$0xff]
    %v204 = vld [vmem:[#allocation5 + $0x380] sm:$0xff]
    %v205 = vld [vmem:[#allocation5 + $0x388] sm:$0xff]
    %v206 = vld [vmem:[#allocation5 + $0x390] sm:$0xff]
    %v207 = vld [vmem:[#allocation5 + $0x398] sm:$0xff]
    %v208 = vld [vmem:[#allocation5 + $0x3a0] sm:$0xff]
    %v209 = vld [vmem:[#allocation5 + $0x3a8] sm:$0xff]
    %v210 = vld [vmem:[#allocation5 + $0x3b0] sm:$0xff]
    %v211 = vld [vmem:[#allocation5 + $0x3b8] sm:$0xff]
    %v212 = vld [vmem:[#allocation5 + $0x3c0] sm:$0xff]
    %v213 = vld [vmem:[#allocation5 + $0x3c8] sm:$0xff]
    %v214 = vld [vmem:[#allocation5 + $0x3d0] sm:$0xff]
    %v215 = vld [vmem:[#allocation5 + $0x3d8] sm:$0xff]
    %v216 = vld [vmem:[#allocation5 + $0x3e0] sm:$0xff]
    %v217 = vld [vmem:[#allocation5 + $0x3e8] sm:$0xff]
    %v218 = vld [vmem:[#allocation5 + $0x3f0] sm:$0xff]
    %v219 = vld [vmem:[#allocation5 + $0x3f8] sm:$0xff]
    %v220 = vld [vmem:[#allocation5 + $0x400] sm:$0xff]
    %v221 = vld [vmem:[#allocation5 + $0x408] sm:$0xff]
    %v222 = vld [vmem:[#allocation5 + $0x410] sm:$0xff]
    %v223 = vld [vmem:[#allocation5 + $0x418] sm:$0xff]
    %v224 = vld [vmem:[#allocation5 + $0x420] sm:$0xff]
    %v225 = vld [vmem:[#allocation5 + $0x428] sm:$0xff]
    %v226 = vld [vmem:[#allocation5 + $0x430] sm:$0xff]
    %v227 = vld [vmem:[#allocation5 + $0x438] sm:$0xff]
    %v228 = vld [vmem:[#allocation5 + $0x440] sm:$0xff]
    %v229 = vld [vmem:[#allocation5 + $0x448] sm:$0xff]
    %v230 = vld [vmem:[#allocation5 + $0x450] sm:$0xff]
    %v231 = vld [vmem:[#allocation5 + $0x458] sm:$0xff]
    %v232 = vld [vmem:[#allocation5 + $0x460] sm:$0xff]
    %v233 = vld [vmem:[#allocation5 + $0x468] sm:$0xff]
    %v234 = vld [vmem:[#allocation5 + $0x470] sm:$0xff]
    %v235 = vld [vmem:[#allocation5 + $0x478] sm:$0xff]
    %v236 = vld [vmem:[#allocation5 + $0x480] sm:$0xff]
    %v237 = vld [vmem:[#allocation5 + $0x488] sm:$0xff]
    %v238 = vld [vmem:[#allocation5 + $0x490] sm:$0xff]
    %v239 = vld [vmem:[#allocation5 + $0x498] sm:$0xff]
    %v240 = vld [vmem:[#allocation5 + $0x4a0] sm:$0xff]
    %v241 = vld [vmem:[#allocation5 + $0x4a8] sm:$0xff]
    %v242 = vld [vmem:[#allocation5 + $0x4b0] sm:$0xff]
    %v243 = vld [vmem:[#allocation5 + $0x4b8] sm:$0xff]
    %v244 = vld [vmem:[#allocation5 + $0x4c0] sm:$0xff]
    %v245 = vld [vmem:[#allocation5 + $0x4c8] sm:$0xff]
    %v246 = vld [vmem:[#allocation5 + $0x4d0] sm:$0xff]
    %v247 = vld [vmem:[#allocation5 + $0x4d8] sm:$0xff]
    %v248 = vld [vmem:[#allocation5 + $0x4e0] sm:$0xff]
    %v249 = vld [vmem:[#allocation5 + $0x4e8] sm:$0xff]
    %v250 = vld [vmem:[#allocation5 + $0x4f0] sm:$0xff]
    %v251 = vld [vmem:[#allocation5 + $0x4f8] sm:$0xff]
    %v252 = vld [vmem:[#allocation5 + $0x500] sm:$0xff]
    %v253 = vld [vmem:[#allocation5 + $0x508] sm:$0xff]
    %v254 = vld [vmem:[#allocation5 + $0x510] sm:$0xff]
    %v255 = vld [vmem:[#allocation5 + $0x518] sm:$0xff]
    %v256 = vld [vmem:[#allocation5 + $0x520] sm:$0xff]
    %v257 = vld [vmem:[#allocation5 + $0x528] sm:$0xff]
    %v258 = vld [vmem:[#allocation5 + $0x530] sm:$0xff]
    %v259 = vld [vmem:[#allocation5 + $0x538] sm:$0xff]
    %v260 = vld [vmem:[#allocation5 + $0x540] sm:$0xff]
    %v261 = vld [vmem:[#allocation5 + $0x548] sm:$0xff]
    %v262 = vld [vmem:[#allocation5 + $0x550] sm:$0xff]
    %v263 = vld [vmem:[#allocation5 + $0x558] sm:$0xff]
    %v264 = vld [vmem:[#allocation5 + $0x560] sm:$0xff]
    %v265 = vld [vmem:[#allocation5 + $0x568] sm:$0xff]
    %v266 = vld [vmem:[#allocation5 + $0x570] sm:$0xff]
    %v267 = vld [vmem:[#allocation5 + $0x578] sm:$0xff]
    %v268 = vld [vmem:[#allocation5 + $0x580] sm:$0xff]
    %v269 = vld [vmem:[#allocation5 + $0x588] sm:$0xff]
    %v270 = vld [vmem:[#allocation5 + $0x590] sm:$0xff]
    %v271 = vld [vmem:[#allocation5 + $0x598] sm:$0xff]
    %v272 = vld [vmem:[#allocation5 + $0x5a0] sm:$0xff]
    %v273 = vld [vmem:[#allocation5 + $0x5a8] sm:$0xff]
    %v274 = vld [vmem:[#allocation5 + $0x5b0] sm:$0xff]
    %v275 = vld [vmem:[#allocation5 + $0x5b8] sm:$0xff]
    %v276 = vld [vmem:[#allocation5 + $0x5c0] sm:$0xff]
    %v277 = vld [vmem:[#allocation5 + $0x5c8] sm:$0xff]
    %v278 = vld [vmem:[#allocation5 + $0x5d0] sm:$0xff]
    %v279 = vld [vmem:[#allocation5 + $0x5d8] sm:$0xff]
    %v280 = vld [vmem:[#allocation5 + $0x5e0] sm:$0xff]
    %v281 = vld [vmem:[#allocation5 + $0x5e8] sm:$0xff]
    %v282 = vld [vmem:[#allocation5 + $0x5f0] sm:$0xff]
    %v283 = vld [vmem:[#allocation5 + $0x5f8] sm:$0xff]
    %v284 = vld [vmem:[#allocation5 + $0x600] sm:$0xff]
    %v285 = vld [vmem:[#allocation5 + $0x608] sm:$0xff]
    %v286 = vld [vmem:[#allocation5 + $0x610] sm:$0xff]
    %v287 = vld [vmem:[#allocation5 + $0x618] sm:$0xff]
    %v288 = vld [vmem:[#allocation5 + $0x620] sm:$0xff]
    %v289 = vld [vmem:[#allocation5 + $0x628] sm:$0xff]
    %v290 = vld [vmem:[#allocation5 + $0x630] sm:$0xff]
    %v291 = vld [vmem:[#allocation5 + $0x638] sm:$0xff]
    %v292 = vld [vmem:[#allocation5 + $0x640] sm:$0xff]
    %v293 = vld [vmem:[#allocation5 + $0x648] sm:$0xff]
    %v294 = vld [vmem:[#allocation5 + $0x650] sm:$0xff]
    %v295 = vld [vmem:[#allocation5 + $0x658] sm:$0xff]
    %v296 = vld [vmem:[#allocation5 + $0x660] sm:$0xff]
    %v297 = vld [vmem:[#allocation5 + $0x668] sm:$0xff]
    %v298 = vld [vmem:[#allocation5 + $0x670] sm:$0xff]
    %v299 = vld [vmem:[#allocation5 + $0x678] sm:$0xff]
    %v300 = vld [vmem:[#allocation5 + $0x680] sm:$0xff]
    %v301 = vld [vmem:[#allocation5 + $0x688] sm:$0xff]
    %v302 = vld [vmem:[#allocation5 + $0x690] sm:$0xff]
    %v303 = vld [vmem:[#allocation5 + $0x698] sm:$0xff]
    %v304 = vld [vmem:[#allocation5 + $0x6a0] sm:$0xff]
    %v305 = vld [vmem:[#allocation5 + $0x6a8] sm:$0xff]
    %v306 = vld [vmem:[#allocation5 + $0x6b0] sm:$0xff]
    %v307 = vld [vmem:[#allocation5 + $0x6b8] sm:$0xff]
    %v308 = vld [vmem:[#allocation5 + $0x6c0] sm:$0xff]
    %v309 = vld [vmem:[#allocation5 + $0x6c8] sm:$0xff]
    %v310 = vld [vmem:[#allocation5 + $0x6d0] sm:$0xff]
    %v311 = vld [vmem:[#allocation5 + $0x6d8] sm:$0xff]
    %v312 = vld [vmem:[#allocation5 + $0x6e0] sm:$0xff]
    %v313 = vld [vmem:[#allocation5 + $0x6e8] sm:$0xff]
    %v314 = vld [vmem:[#allocation5 + $0x6f0] sm:$0xff]
    %v315 = vld [vmem:[#allocation5 + $0x6f8] sm:$0xff]
    %v316 = vld [vmem:[#allocation5 + $0x700] sm:$0xff]
    %v317 = vld [vmem:[#allocation5 + $0x708] sm:$0xff]
    %v318 = vld [vmem:[#allocation5 + $0x710] sm:$0xff]
    %v319 = vld [vmem:[#allocation5 + $0x718] sm:$0xff]
    %v320 = vld [vmem:[#allocation5 + $0x720] sm:$0xff]
    %v321 = vld [vmem:[#allocation5 + $0x728] sm:$0xff]
    %v322 = vld [vmem:[#allocation5 + $0x730] sm:$0xff]
    %v323 = vld [vmem:[#allocation5 + $0x738] sm:$0xff]
    %v324 = vld [vmem:[#allocation5 + $0x740] sm:$0xff]
    %v325 = vld [vmem:[#allocation5 + $0x748] sm:$0xff]
    %v326 = vld [vmem:[#allocation5 + $0x750] sm:$0xff]
    %v327 = vld [vmem:[#allocation5 + $0x758] sm:$0xff]
    %v328 = vld [vmem:[#allocation5 + $0x760] sm:$0xff]
    %v329 = vld [vmem:[#allocation5 + $0x768] sm:$0xff]
    %v330 = vld [vmem:[#allocation5 + $0x770] sm:$0xff]
    %v331 = vld [vmem:[#allocation5 + $0x778] sm:$0xff]
    %v332 = vld [vmem:[#allocation5 + $0x780] sm:$0xff]
    %v333 = vld [vmem:[#allocation5 + $0x788] sm:$0xff]
    %v334 = vld [vmem:[#allocation5 + $0x790] sm:$0xff]
    %v335 = vld [vmem:[#allocation5 + $0x798] sm:$0xff]
    %v336 = vld [vmem:[#allocation5 + $0x7a0] sm:$0xff]
    %v337 = vld [vmem:[#allocation5 + $0x7a8] sm:$0xff]
    %v338 = vld [vmem:[#allocation5 + $0x7b0] sm:$0xff]
    %v339 = vld [vmem:[#allocation5 + $0x7b8] sm:$0xff]
    %v340 = vld [vmem:[#allocation5 + $0x7c0] sm:$0xff]
    %v341 = vld [vmem:[#allocation5 + $0x7c8] sm:$0xff]
    %v342 = vld [vmem:[#allocation5 + $0x7d0] sm:$0xff]
    %v343 = vld [vmem:[#allocation5 + $0x7d8] sm:$0xff]
    %v344 = vld [vmem:[#allocation5 + $0x7e0] sm:$0xff]
    %v345 = vld [vmem:[#allocation5 + $0x7e8] sm:$0xff]
    %v346 = vld [vmem:[#allocation5 + $0x7f0] sm:$0xff]
    %v347 = vld [vmem:[#allocation5 + $0x7f8] sm:$0xff]
    %v348 = vld [vmem:[%s3] sm:$0xff]
    %v349 = vld [vmem:[%s3 + $0x8] sm:$0xff]
    %v350 = vld [vmem:[%s4] sm:$0xf]
    %v351 = vld [vmem:[%s0] sm:$0xff]
    %v353 = vlaneseq
    %v354 = vshrl.u32 %v353, 7
    %v355 = vsub.s32 0, %v354
    %v356 = vrot.slane %v350, %v355
    %v357 = vlaneseq
    %v358 = vshrl.u32 %v357, 7
    %v359 = vsub.s32 1, %v358
    %v360 = vrot.slane %v350, %v359
    %v361 = vlaneseq
    %v362 = vshrl.u32 %v361, 7
    %v363 = vsub.s32 2, %v362
    %v364 = vrot.slane %v350, %v363
    %v365 = vlaneseq
    %v366 = vshrl.u32 %v365, 7
    %v367 = vsub.s32 3, %v366
    %v368 = vrot.slane %v350, %v367
    %v375 = vcombine.high %v348, %v348
    %v376 = vcombine.high %v349, %v349
    %vm377 = vcmask 31744
    %v379 = vsel %vm377, %v351, 0
    %vm381 = vcmask 1043456
    %v382 = vsel %vm381, %v348, 0
    %v384 = vsel %vm381, %v375, 0
    %v386 = vsel %vm381, %v349, 0
    %v388 = vsel %vm381, %v376, 0
    %390 = vmatprep.subr.mxu0 %v384
    %391 = vmatpush1.msra.mxu0 %v382
    %392 = vmatprep.subr.mxu0 0.0
    %393 = vmatpush1.msra.mxu0 0.0
    %394 = vmatprep.subr.mxu0 0.0
    %395 = vmatpush1.msra.mxu0 0.0
    %396 = vmatprep.subr.mxu0 0.0
    %397 = vmatpush1.msra.mxu0 0.0
    %398 = vmatprep.subr.mxu0 0.0
    %399 = vmatpush1.msra.mxu0 0.0
    %400 = vmatprep.subr.mxu0 0.0
    %401 = vmatpush1.msra.mxu0 0.0
    %402 = vmatprep.subr.mxu0 0.0
    %403 = vmatpush1.msra.mxu0 0.0
    %404 = vmatprep.subr.mxu0 0.0
    %405 = vmatpush1.msra.mxu0 0.0
    %406 = vmatprep.subr.mxu0 0.0
    %407 = vmatpush1.msra.mxu0 0.0
    %408 = vmatprep.subr.mxu0 0.0
    %409 = vmatpush1.msra.mxu0 0.0
    %410 = vmatprep.subr.mxu0 0.0
    %411 = vmatpush1.msra.mxu0 0.0
    %412 = vmatprep.subr.mxu0 0.0
    %413 = vmatpush1.msra.mxu0 0.0
    %414 = vmatprep.subr.mxu0 0.0
    %415 = vmatpush1.msra.mxu0 0.0
    %416 = vmatprep.subr.mxu0 0.0
    %417 = vmatpush1.msra.mxu0 0.0
    %418 = vmatprep.subr.mxu0 0.0
    %419 = vmatpush1.msra.mxu0 0.0
    %420 = vmatprep.subr.mxu0 0.0
    %421 = vmatpush1.msra.mxu0 0.0
    %422 = vmatprep.subr.mxu0 0.0
    %423 = vmatpush1.msra.mxu0 0.0
    %424 = vmatprep.subr.mxu0 0.0
    %425 = vmatpush1.msra.mxu0 0.0
    %426 = vmatprep.subr.mxu0 0.0
    %427 = vmatpush1.msra.mxu0 0.0
    %428 = vmatprep.subr.mxu0 0.0
    %429 = vmatpush1.msra.mxu0 0.0
    %430 = vmatprep.subr.mxu0 0.0
    %431 = vmatpush1.msra.mxu0 0.0
    %432 = vmatprep.subr.mxu0 0.0
    %433 = vmatpush1.msra.mxu0 0.0
    %434 = vmatprep.subr.mxu0 0.0
    %435 = vmatpush1.msra.mxu0 0.0
    %436 = vmatprep.subr.mxu0 0.0
    %437 = vmatpush1.msra.mxu0 0.0
    %438 = vmatprep.subr.mxu0 0.0
    %439 = vmatpush1.msra.mxu0 0.0
    %440 = vmatprep.subr.mxu0 0.0
    %441 = vmatpush1.msra.mxu0 0.0
    %442 = vmatprep.subr.mxu0 0.0
    %443 = vmatpush1.msra.mxu0 0.0
    %444 = vmatprep.subr.mxu0 0.0
    %445 = vmatpush1.msra.mxu0 0.0
    %446 = vmatprep.subr.mxu0 0.0
    %447 = vmatpush1.msra.mxu0 0.0
    %448 = vmatprep.subr.mxu0 0.0
    %449 = vmatpush1.msra.mxu0 0.0
    %450 = vmatprep.subr.mxu0 0.0
    %451 = vmatpush1.msra.mxu0 0.0
    %452 = vmatprep.subr.mxu0 0.0
    %453 = vmatpush1.msra.mxu0 0.0
    %454 = vmatprep.mubr.f32.mxu0 0.0
    %455 = vmatmul.mubr.f32.gmra.mrb[0].mxu0 %v379
    %v456 = vpop.f32.mrb[0].mxu0
    %v457 = vadd.f32 %v356, %v456
    %v458 = vpop.f32.mrb[0].mxu0
    %v459 = vadd.f32 %v360, %v458
    %460 = vdwg.mxu0
    %461 = vmatprep.subr.mxu0 %v388
    %462 = vmatpush1.msra.mxu0 %v386
    %463 = vmatprep.subr.mxu0 0.0
    %464 = vmatpush1.msra.mxu0 0.0
    %465 = vmatprep.subr.mxu0 0.0
    %466 = vmatpush1.msra.mxu0 0.0
    %467 = vmatprep.subr.mxu0 0.0
    %468 = vmatpush1.msra.mxu0 0.0
    %469 = vmatprep.subr.mxu0 0.0
    %470 = vmatpush1.msra.mxu0 0.0
    %471 = vmatprep.subr.mxu0 0.0
    %472 = vmatpush1.msra.mxu0 0.0
    %473 = vmatprep.subr.mxu0 0.0
    %474 = vmatpush1.msra.mxu0 0.0
    %475 = vmatprep.subr.mxu0 0.0
    %476 = vmatpush1.msra.mxu0 0.0
    %477 = vmatprep.subr.mxu0 0.0
    %478 = vmatpush1.msra.mxu0 0.0
    %479 = vmatprep.subr.mxu0 0.0
    %480 = vmatpush1.msra.mxu0 0.0
    %481 = vmatprep.subr.mxu0 0.0
    %482 = vmatpush1.msra.mxu0 0.0
    %483 = vmatprep.subr.mxu0 0.0
    %484 = vmatpush1.msra.mxu0 0.0
    %485 = vmatprep.subr.mxu0 0.0
    %486 = vmatpush1.msra.mxu0 0.0
    %487 = vmatprep.subr.mxu0 0.0
    %488 = vmatpush1.msra.mxu0 0.0
    %489 = vmatprep.subr.mxu0 0.0
    %490 = vmatpush1.msra.mxu0 0.0
    %491 = vmatprep.subr.mxu0 0.0
    %492 = vmatpush1.msra.mxu0 0.0
    %493 = vmatprep.subr.mxu0 0.0
    %494 = vmatpush1.msra.mxu0 0.0
    %495 = vmatprep.subr.mxu0 0.0
    %496 = vmatpush1.msra.mxu0 0.0
    %497 = vmatprep.subr.mxu0 0.0
    %498 = vmatpush1.msra.mxu0 0.0
    %499 = vmatprep.subr.mxu0 0.0
    %500 = vmatpush1.msra.mxu0 0.0
    %501 = vmatprep.subr.mxu0 0.0
    %502 = vmatpush1.msra.mxu0 0.0
    %503 = vmatprep.subr.mxu0 0.0
    %504 = vmatpush1.msra.mxu0 0.0
    %505 = vmatprep.subr.mxu0 0.0
    %506 = vmatpush1.msra.mxu0 0.0
    %507 = vmatprep.subr.mxu0 0.0
    %508 = vmatpush1.msra.mxu0 0.0
    %509 = vmatprep.subr.mxu0 0.0
    %510 = vmatpush1.msra.mxu0 0.0
    %511 = vmatprep.subr.mxu0 0.0
    %512 = vmatpush1.msra.mxu0 0.0
    %513 = vmatprep.subr.mxu0 0.0
    %514 = vmatpush1.msra.mxu0 0.0
    %515 = vmatprep.subr.mxu0 0.0
    %516 = vmatpush1.msra.mxu0 0.0
    %517 = vmatprep.subr.mxu0 0.0
    %518 = vmatpush1.msra.mxu0 0.0
    %519 = vmatprep.subr.mxu0 0.0
    %520 = vmatpush1.msra.mxu0 0.0
    %521 = vmatprep.subr.mxu0 0.0
    %522 = vmatpush1.msra.mxu0 0.0
    %523 = vmatprep.subr.mxu0 0.0
    %524 = vmatpush1.msra.mxu0 0.0
    %525 = vmatprep.mubr.f32.mxu0 0.0
    %526 = vmatmul.mubr.f32.gmra.mrb[0].mxu0 %v379
    %v527 = vpop.f32.mrb[0].mxu0
    %v528 = vadd.f32 %v364, %v527
    %v529 = vpop.f32.mrb[0].mxu0
    %v530 = vadd.f32 %v368, %v529
    %531 = vdwg.mxu0
    %532 = vst [vmem:[#allocation2] sm:$0xff] %v457
    %533 = vst [vmem:[#allocation2 + $0x10] sm:$0xff] %v459
    %534 = vst [vmem:[#allocation2 + $0x20] sm:$0xff] %v528
    %535 = vst [vmem:[#allocation2 + $0x30] sm:$0xff] %v530
    %s536 = scalar_lea.vmem %s0, 8
    %v537 = vld [vmem:[%s536] sm:$0xff]
    %v539 = vsel %vm377, %v537, 0
    %541 = vmatprep.subr.mxu0 %v384
    %542 = vmatpush1.msra.mxu0 %v382
    %543 = vmatprep.subr.mxu0 0.0
    %544 = vmatpush1.msra.mxu0 0.0
    %545 = vmatprep.subr.mxu0 0.0
    %546 = vmatpush1.msra.mxu0 0.0
    %547 = vmatprep.subr.mxu0 0.0
    %548 = vmatpush1.msra.mxu0 0.0
    %549 = vmatprep.subr.mxu0 0.0
    %550 = vmatpush1.msra.mxu0 0.0
    %551 = vmatprep.subr.mxu0 0.0
    %552 = vmatpush1.msra.mxu0 0.0
    %553 = vmatprep.subr.mxu0 0.0
    %554 = vmatpush1.msra.mxu0 0.0
    %555 = vmatprep.subr.mxu0 0.0
    %556 = vmatpush1.msra.mxu0 0.0
    %557 = vmatprep.subr.mxu0 0.0
    %558 = vmatpush1.msra.mxu0 0.0
    %559 = vmatprep.subr.mxu0 0.0
    %560 = vmatpush1.msra.mxu0 0.0
    %561 = vmatprep.subr.mxu0 0.0
    %562 = vmatpush1.msra.mxu0 0.0
    %563 = vmatprep.subr.mxu0 0.0
    %564 = vmatpush1.msra.mxu0 0.0
    %565 = vmatprep.subr.mxu0 0.0
    %566 = vmatpush1.msra.mxu0 0.0
    %567 = vmatprep.subr.mxu0 0.0
    %568 = vmatpush1.msra.mxu0 0.0
    %569 = vmatprep.subr.mxu0 0.0
    %570 = vmatpush1.msra.mxu0 0.0
    %571 = vmatprep.subr.mxu0 0.0
    %572 = vmatpush1.msra.mxu0 0.0
    %573 = vmatprep.subr.mxu0 0.0
    %574 = vmatpush1.msra.mxu0 0.0
    %575 = vmatprep.subr.mxu0 0.0
    %576 = vmatpush1.msra.mxu0 0.0
    %577 = vmatprep.subr.mxu0 0.0
    %578 = vmatpush1.msra.mxu0 0.0
    %579 = vmatprep.subr.mxu0 0.0
    %580 = vmatpush1.msra.mxu0 0.0
    %581 = vmatprep.subr.mxu0 0.0
    %582 = vmatpush1.msra.mxu0 0.0
    %583 = vmatprep.subr.mxu0 0.0
    %584 = vmatpush1.msra.mxu0 0.0
    %585 = vmatprep.subr.mxu0 0.0
    %586 = vmatpush1.msra.mxu0 0.0
    %587 = vmatprep.subr.mxu0 0.0
    %588 = vmatpush1.msra.mxu0 0.0
    %589 = vmatprep.subr.mxu0 0.0
    %590 = vmatpush1.msra.mxu0 0.0
    %591 = vmatprep.subr.mxu0 0.0
    %592 = vmatpush1.msra.mxu0 0.0
    %593 = vmatprep.subr.mxu0 0.0
    %594 = vmatpush1.msra.mxu0 0.0
    %595 = vmatprep.subr.mxu0 0.0
    %596 = vmatpush1.msra.mxu0 0.0
    %597 = vmatprep.subr.mxu0 0.0
    %598 = vmatpush1.msra.mxu0 0.0
    %599 = vmatprep.subr.mxu0 0.0
    %600 = vmatpush1.msra.mxu0 0.0
    %601 = vmatprep.subr.mxu0 0.0
    %602 = vmatpush1.msra.mxu0 0.0
    %603 = vmatprep.subr.mxu0 0.0
    %604 = vmatpush1.msra.mxu0 0.0
    %605 = vmatprep.mubr.f32.mxu0 0.0
    %606 = vmatmul.mubr.f32.gmra.mrb[0].mxu0 %v539
    %v607 = vpop.f32.mrb[0].mxu0
    %v608 = vadd.f32 %v356, %v607
    %v609 = vpop.f32.mrb[0].mxu0
    %v610 = vadd.f32 %v360, %v609
    %611 = vdwg.mxu0
    %612 = vmatprep.subr.mxu0 %v388
    %613 = vmatpush1.msra.mxu0 %v386
    %614 = vmatprep.subr.mxu0 0.0
    %615 = vmatpush1.msra.mxu0 0.0
    %616 = vmatprep.subr.mxu0 0.0
    %617 = vmatpush1.msra.mxu0 0.0
    %618 = vmatprep.subr.mxu0 0.0
    %619 = vmatpush1.msra.mxu0 0.0
    %620 = vmatprep.subr.mxu0 0.0
    %621 = vmatpush1.msra.mxu0 0.0
    %622 = vmatprep.subr.mxu0 0.0
    %623 = vmatpush1.msra.mxu0 0.0
    %624 = vmatprep.subr.mxu0 0.0
    %625 = vmatpush1.msra.mxu0 0.0
    %626 = vmatprep.subr.mxu0 0.0
    %627 = vmatpush1.msra.mxu0 0.0
    %628 = vmatprep.subr.mxu0 0.0
    %629 = vmatpush1.msra.mxu0 0.0
    %630 = vmatprep.subr.mxu0 0.0
    %631 = vmatpush1.msra.mxu0 0.0
    %632 = vmatprep.subr.mxu0 0.0
    %633 = vmatpush1.msra.mxu0 0.0
    %634 = vmatprep.subr.mxu0 0.0
    %635 = vmatpush1.msra.mxu0 0.0
    %636 = vmatprep.subr.mxu0 0.0
    %637 = vmatpush1.msra.mxu0 0.0
    %638 = vmatprep.subr.mxu0 0.0
    %639 = vmatpush1.msra.mxu0 0.0
    %640 = vmatprep.subr.mxu0 0.0
    %641 = vmatpush1.msra.mxu0 0.0
    %642 = vmatprep.subr.mxu0 0.0
    %643 = vmatpush1.msra.mxu0 0.0
    %644 = vmatprep.subr.mxu0 0.0
    %645 = vmatpush1.msra.mxu0 0.0
    %646 = vmatprep.subr.mxu0 0.0
    %647 = vmatpush1.msra.mxu0 0.0
    %648 = vmatprep.subr.mxu0 0.0
    %649 = vmatpush1.msra.mxu0 0.0
    %650 = vmatprep.subr.mxu0 0.0
    %651 = vmatpush1.msra.mxu0 0.0
    %652 = vmatprep.subr.mxu0 0.0
    %653 = vmatpush1.msra.mxu0 0.0
    %654 = vmatprep.subr.mxu0 0.0
    %655 = vmatpush1.msra.mxu0 0.0
    %656 = vmatprep.subr.mxu0 0.0
    %657 = vmatpush1.msra.mxu0 0.0
    %658 = vmatprep.subr.mxu0 0.0
    %659 = vmatpush1.msra.mxu0 0.0
    %660 = vmatprep.subr.mxu0 0.0
    %661 = vmatpush1.msra.mxu0 0.0
    %662 = vmatprep.subr.mxu0 0.0
    %663 = vmatpush1.msra.mxu0 0.0
    %664 = vmatprep.subr.mxu0 0.0
    %665 = vmatpush1.msra.mxu0 0.0
    %666 = vmatprep.subr.mxu0 0.0
    %667 = vmatpush1.msra.mxu0 0.0
    %668 = vmatprep.subr.mxu0 0.0
    %669 = vmatpush1.msra.mxu0 0.0
    %670 = vmatprep.subr.mxu0 0.0
    %671 = vmatpush1.msra.mxu0 0.0
    %672 = vmatprep.subr.mxu0 0.0
    %673 = vmatpush1.msra.mxu0 0.0
    %674 = vmatprep.subr.mxu0 0.0
    %675 = vmatpush1.msra.mxu0 0.0
    %676 = vmatprep.mubr.f32.mxu0 0.0
    %677 = vmatmul.mubr.f32.gmra.mrb[0].mxu0 %v539
    %v678 = vpop.f32.mrb[0].mxu0
    %v679 = vadd.f32 %v364, %v678
    %v680 = vpop.f32.mrb[0].mxu0
    %v681 = vadd.f32 %v368, %v680
    %682 = vdwg.mxu0
    %683 = vst [vmem:[#allocation2 + $0x8] sm:$0xff] %v608
    %684 = vst [vmem:[#allocation2 + $0x18] sm:$0xff] %v610
    %685 = vst [vmem:[#allocation2 + $0x28] sm:$0xff] %v679
    %686 = vst [vmem:[#allocation2 + $0x38] sm:$0xff] %v681
    %v687 = vld [vmem:[%s1] ss:$2 sm:$0x3]
    %v688 = vld [vmem:[%s2] ss:$2 sm:$0x3]
    %v689 = vld [vmem:[#allocation2] ss:$8 sm:$0xf]
    %v690 = vld [vmem:[#allocation2] ss:$8 sm:$0xf0]
    %v691 = vor.u32 %v689, %v690
    %v693 = vlaneseq
    %v694 = vshrl.u32 %v693, 7
    %v695 = vsub.s32 0, %v694
    %v696 = vrot.slane %v687, %v695
    %v697 = vlaneseq
    %v698 = vshrl.u32 %v697, 7
    %v699 = vsub.s32 1, %v698
    %v700 = vrot.slane %v687, %v699
    %v704 = vlaneseq
    %v705 = vshrl.u32 %v704, 7
    %v706 = vsub.s32 0, %v705
    %v707 = vrot.slane %v691, %v706
    %v708 = vlaneseq
    %v709 = vshrl.u32 %v708, 7
    %v710 = vsub.s32 1, %v709
    %v711 = vrot.slane %v691, %v710
    %v712 = vlaneseq
    %v713 = vshrl.u32 %v712, 7
    %v714 = vsub.s32 2, %v713
    %v715 = vrot.slane %v691, %v714
    %v716 = vlaneseq
    %v717 = vshrl.u32 %v716, 7
    %v718 = vsub.s32 3, %v717
    %v719 = vrot.slane %v691, %v718
    %v720 = vlaneseq
    %v721 = vshrl.u32 %v720, 7
    %v722 = vsub.s32 4, %v721
    %v723 = vrot.slane %v691, %v722
    %v724 = vlaneseq
    %v725 = vshrl.u32 %v724, 7
    %v726 = vsub.s32 5, %v725
    %v727 = vrot.slane %v691, %v726
    %v728 = vlaneseq
    %v729 = vshrl.u32 %v728, 7
    %v730 = vsub.s32 6, %v729
    %v731 = vrot.slane %v691, %v730
    %v732 = vlaneseq
    %v733 = vshrl.u32 %v732, 7
    %v734 = vsub.s32 7, %v733
    %v735 = vrot.slane %v691, %v734
    %744 = vmatprep.subr.mxu0 %v93
    %745 = vmatpush1.msra.mxu0 %v92
    %746 = vmatprep.subr.mxu0 %v101
    %747 = vmatpush1.msra.mxu0 %v100
    %748 = vmatprep.subr.mxu0 %v109
    %749 = vmatpush1.msra.mxu0 %v108
    %750 = vmatprep.subr.mxu0 %v117
    %751 = vmatpush1.msra.mxu0 %v116
    %752 = vmatprep.subr.mxu0 %v125
    %753 = vmatpush1.msra.mxu0 %v124
    %754 = vmatprep.subr.mxu0 %v133
    %755 = vmatpush1.msra.mxu0 %v132
    %756 = vmatprep.subr.mxu0 %v141
    %757 = vmatpush1.msra.mxu0 %v140
    %758 = vmatprep.subr.mxu0 %v149
    %759 = vmatpush1.msra.mxu0 %v148
    %760 = vmatprep.subr.mxu0 %v157
    %761 = vmatpush1.msra.mxu0 %v156
    %762 = vmatprep.subr.mxu0 %v165
    %763 = vmatpush1.msra.mxu0 %v164
    %764 = vmatprep.subr.mxu0 %v173
    %765 = vmatpush1.msra.mxu0 %v172
    %766 = vmatprep.subr.mxu0 %v181
    %767 = vmatpush1.msra.mxu0 %v180
    %768 = vmatprep.subr.mxu0 %v189
    %769 = vmatpush1.msra.mxu0 %v188
    %770 = vmatprep.subr.mxu0 %v197
    %771 = vmatpush1.msra.mxu0 %v196
    %772 = vmatprep.subr.mxu0 %v205
    %773 = vmatpush1.msra.mxu0 %v204
    %774 = vmatprep.subr.mxu0 %v213
    %775 = vmatpush1.msra.mxu0 %v212
    %776 = vmatprep.subr.mxu0 %v221
    %777 = vmatpush1.msra.mxu0 %v220
    %778 = vmatprep.subr.mxu0 %v229
    %779 = vmatpush1.msra.mxu0 %v228
    %780 = vmatprep.subr.mxu0 %v237
    %781 = vmatpush1.msra.mxu0 %v236
    %782 = vmatprep.subr.mxu0 %v245
    %783 = vmatpush1.msra.mxu0 %v244
    %784 = vmatprep.subr.mxu0 %v253
    %785 = vmatpush1.msra.mxu0 %v252
    %786 = vmatprep.subr.mxu0 %v261
    %787 = vmatpush1.msra.mxu0 %v260
    %788 = vmatprep.subr.mxu0 %v269
    %789 = vmatpush1.msra.mxu0 %v268
    %790 = vmatprep.subr.mxu0 %v277
    %791 = vmatpush1.msra.mxu0 %v276
    %792 = vmatprep.subr.mxu0 %v285
    %793 = vmatpush1.msra.mxu0 %v284
    %794 = vmatprep.subr.mxu0 %v293
    %795 = vmatpush1.msra.mxu0 %v292
    %796 = vmatprep.subr.mxu0 %v301
    %797 = vmatpush1.msra.mxu0 %v300
    %798 = vmatprep.subr.mxu0 %v309
    %799 = vmatpush1.msra.mxu0 %v308
    %800 = vmatprep.subr.mxu0 %v317
    %801 = vmatpush1.msra.mxu0 %v316
    %802 = vmatprep.subr.mxu0 %v325
    %803 = vmatpush1.msra.mxu0 %v324
    %804 = vmatprep.subr.mxu0 %v333
    %805 = vmatpush1.msra.mxu0 %v332
    %806 = vmatprep.subr.mxu0 %v341
    %807 = vmatpush1.msra.mxu0 %v340
    %808 = vmatprep.mubr.f32.mxu0 %v700
    %809 = vmatmul.mubr.f32.gmra.mrb[0].mxu0 %v696
    %v810 = vpop.f32.mrb[0].mxu0
    %v811 = vadd.f32 %v707, %v810
    %v812 = vpop.f32.mrb[0].mxu0
    %v813 = vadd.f32 %v711, %v812
    %814 = vdwg.mxu0
    %815 = vmatprep.subr.mxu0 %v95
    %816 = vmatpush1.msra.mxu0 %v94
    %817 = vmatprep.subr.mxu0 %v103
    %818 = vmatpush1.msra.mxu0 %v102
    %819 = vmatprep.subr.mxu0 %v111
    %820 = vmatpush1.msra.mxu0 %v110
    %821 = vmatprep.subr.mxu0 %v119
    %822 = vmatpush1.msra.mxu0 %v118
    %823 = vmatprep.subr.mxu0 %v127
    %824 = vmatpush1.msra.mxu0 %v126
    %825 = vmatprep.subr.mxu0 %v135
    %826 = vmatpush1.msra.mxu0 %v134
    %827 = vmatprep.subr.mxu0 %v143
    %828 = vmatpush1.msra.mxu0 %v142
    %829 = vmatprep.subr.mxu0 %v151
    %830 = vmatpush1.msra.mxu0 %v150
    %831 = vmatprep.subr.mxu0 %v159
    %832 = vmatpush1.msra.mxu0 %v158
    %833 = vmatprep.subr.mxu0 %v167
    %834 = vmatpush1.msra.mxu0 %v166
    %835 = vmatprep.subr.mxu0 %v175
    %836 = vmatpush1.msra.mxu0 %v174
    %837 = vmatprep.subr.mxu0 %v183
    %838 = vmatpush1.msra.mxu0 %v182
    %839 = vmatprep.subr.mxu0 %v191
    %840 = vmatpush1.msra.mxu0 %v190
    %841 = vmatprep.subr.mxu0 %v199
    %842 = vmatpush1.msra.mxu0 %v198
    %843 = vmatprep.subr.mxu0 %v207
    %844 = vmatpush1.msra.mxu0 %v206
    %845 = vmatprep.subr.mxu0 %v215
    %846 = vmatpush1.msra.mxu0 %v214
    %847 = vmatprep.subr.mxu0 %v223
    %848 = vmatpush1.msra.mxu0 %v222
    %849 = vmatprep.subr.mxu0 %v231
    %850 = vmatpush1.msra.mxu0 %v230
    %851 = vmatprep.subr.mxu0 %v239
    %852 = vmatpush1.msra.mxu0 %v238
    %853 = vmatprep.subr.mxu0 %v247
    %854 = vmatpush1.msra.mxu0 %v246
    %855 = vmatprep.subr.mxu0 %v255
    %856 = vmatpush1.msra.mxu0 %v254
    %857 = vmatprep.subr.mxu0 %v263
    %858 = vmatpush1.msra.mxu0 %v262
    %859 = vmatprep.subr.mxu0 %v271
    %860 = vmatpush1.msra.mxu0 %v270
    %861 = vmatprep.subr.mxu0 %v279
    %862 = vmatpush1.msra.mxu0 %v278
    %863 = vmatprep.subr.mxu0 %v287
    %864 = vmatpush1.msra.mxu0 %v286
    %865 = vmatprep.subr.mxu0 %v295
    %866 = vmatpush1.msra.mxu0 %v294
    %867 = vmatprep.subr.mxu0 %v303
    %868 = vmatpush1.msra.mxu0 %v302
    %869 = vmatprep.subr.mxu0 %v311
    %870 = vmatpush1.msra.mxu0 %v310
    %871 = vmatprep.subr.mxu0 %v319
    %872 = vmatpush1.msra.mxu0 %v318
    %873 = vmatprep.subr.mxu0 %v327
    %874 = vmatpush1.msra.mxu0 %v326
    %875 = vmatprep.subr.mxu0 %v335
    %876 = vmatpush1.msra.mxu0 %v334
    %877 = vmatprep.subr.mxu0 %v343
    %878 = vmatpush1.msra.mxu0 %v342
    %879 = vmatprep.mubr.f32.mxu0 %v700
    %880 = vmatmul.mubr.f32.gmra.mrb[0].mxu0 %v696
    %v881 = vpop.f32.mrb[0].mxu0
    %v882 = vadd.f32 %v715, %v881
    %v883 = vpop.f32.mrb[0].mxu0
    %v884 = vadd.f32 %v719, %v883
    %885 = vdwg.mxu0
    %886 = vmatprep.subr.mxu0 %v97
    %887 = vmatpush1.msra.mxu0 %v96
    %888 = vmatprep.subr.mxu0 %v105
    %889 = vmatpush1.msra.mxu0 %v104
    %890 = vmatprep.subr.mxu0 %v113
    %891 = vmatpush1.msra.mxu0 %v112
    %892 = vmatprep.subr.mxu0 %v121
    %893 = vmatpush1.msra.mxu0 %v120
    %894 = vmatprep.subr.mxu0 %v129
    %895 = vmatpush1.msra.mxu0 %v128
    %896 = vmatprep.subr.mxu0 %v137
    %897 = vmatpush1.msra.mxu0 %v136
    %898 = vmatprep.subr.mxu0 %v145
    %899 = vmatpush1.msra.mxu0 %v144
    %900 = vmatprep.subr.mxu0 %v153
    %901 = vmatpush1.msra.mxu0 %v152
    %902 = vmatprep.subr.mxu0 %v161
    %903 = vmatpush1.msra.mxu0 %v160
    %904 = vmatprep.subr.mxu0 %v169
    %905 = vmatpush1.msra.mxu0 %v168
    %906 = vmatprep.subr.mxu0 %v177
    %907 = vmatpush1.msra.mxu0 %v176
    %908 = vmatprep.subr.mxu0 %v185
    %909 = vmatpush1.msra.mxu0 %v184
    %910 = vmatprep.subr.mxu0 %v193
    %911 = vmatpush1.msra.mxu0 %v192
    %912 = vmatprep.subr.mxu0 %v201
    %913 = vmatpush1.msra.mxu0 %v200
    %914 = vmatprep.subr.mxu0 %v209
    %915 = vmatpush1.msra.mxu0 %v208
    %916 = vmatprep.subr.mxu0 %v217
    %917 = vmatpush1.msra.mxu0 %v216
    %918 = vmatprep.subr.mxu0 %v225
    %919 = vmatpush1.msra.mxu0 %v224
    %920 = vmatprep.subr.mxu0 %v233
    %921 = vmatpush1.msra.mxu0 %v232
    %922 = vmatprep.subr.mxu0 %v241
    %923 = vmatpush1.msra.mxu0 %v240
    %924 = vmatprep.subr.mxu0 %v249
    %925 = vmatpush1.msra.mxu0 %v248
    %926 = vmatprep.subr.mxu0 %v257
    %927 = vmatpush1.msra.mxu0 %v256
    %928 = vmatprep.subr.mxu0 %v265
    %929 = vmatpush1.msra.mxu0 %v264
    %930 = vmatprep.subr.mxu0 %v273
    %931 = vmatpush1.msra.mxu0 %v272
    %932 = vmatprep.subr.mxu0 %v281
    %933 = vmatpush1.msra.mxu0 %v280
    %934 = vmatprep.subr.mxu0 %v289
    %935 = vmatpush1.msra.mxu0 %v288
    %936 = vmatprep.subr.mxu0 %v297
    %937 = vmatpush1.msra.mxu0 %v296
    %938 = vmatprep.subr.mxu0 %v305
    %939 = vmatpush1.msra.mxu0 %v304
    %940 = vmatprep.subr.mxu0 %v313
    %941 = vmatpush1.msra.mxu0 %v312
    %942 = vmatprep.subr.mxu0 %v321
    %943 = vmatpush1.msra.mxu0 %v320
    %944 = vmatprep.subr.mxu0 %v329
    %945 = vmatpush1.msra.mxu0 %v328
    %946 = vmatprep.subr.mxu0 %v337
    %947 = vmatpush1.msra.mxu0 %v336
    %948 = vmatprep.subr.mxu0 %v345
    %949 = vmatpush1.msra.mxu0 %v344
    %950 = vmatprep.mubr.f32.mxu0 %v700
    %951 = vmatmul.mubr.f32.gmra.mrb[0].mxu0 %v696
    %v952 = vpop.f32.mrb[0].mxu0
    %v953 = vadd.f32 %v723, %v952
    %v954 = vpop.f32.mrb[0].mxu0
    %v955 = vadd.f32 %v727, %v954
    %956 = vdwg.mxu0
    %957 = vmatprep.subr.mxu0 %v99
    %958 = vmatpush1.msra.mxu0 %v98
    %959 = vmatprep.subr.mxu0 %v107
    %960 = vmatpush1.msra.mxu0 %v106
    %961 = vmatprep.subr.mxu0 %v115
    %962 = vmatpush1.msra.mxu0 %v114
    %963 = vmatprep.subr.mxu0 %v123
    %964 = vmatpush1.msra.mxu0 %v122
    %965 = vmatprep.subr.mxu0 %v131
    %966 = vmatpush1.msra.mxu0 %v130
    %967 = vmatprep.subr.mxu0 %v139
    %968 = vmatpush1.msra.mxu0 %v138
    %969 = vmatprep.subr.mxu0 %v147
    %970 = vmatpush1.msra.mxu0 %v146
    %971 = vmatprep.subr.mxu0 %v155
    %972 = vmatpush1.msra.mxu0 %v154
    %973 = vmatprep.subr.mxu0 %v163
    %974 = vmatpush1.msra.mxu0 %v162
    %975 = vmatprep.subr.mxu0 %v171
    %976 = vmatpush1.msra.mxu0 %v170
    %977 = vmatprep.subr.mxu0 %v179
    %978 = vmatpush1.msra.mxu0 %v178
    %979 = vmatprep.subr.mxu0 %v187
    %980 = vmatpush1.msra.mxu0 %v186
    %981 = vmatprep.subr.mxu0 %v195
    %982 = vmatpush1.msra.mxu0 %v194
    %983 = vmatprep.subr.mxu0 %v203
    %984 = vmatpush1.msra.mxu0 %v202
    %985 = vmatprep.subr.mxu0 %v211
    %986 = vmatpush1.msra.mxu0 %v210
    %987 = vmatprep.subr.mxu0 %v219
    %988 = vmatpush1.msra.mxu0 %v218
    %989 = vmatprep.subr.mxu0 %v227
    %990 = vmatpush1.msra.mxu0 %v226
    %991 = vmatprep.subr.mxu0 %v235
    %992 = vmatpush1.msra.mxu0 %v234
    %993 = vmatprep.subr.mxu0 %v243
    %994 = vmatpush1.msra.mxu0 %v242
    %995 = vmatprep.subr.mxu0 %v251
    %996 = vmatpush1.msra.mxu0 %v250
    %997 = vmatprep.subr.mxu0 %v259
    %998 = vmatpush1.msra.mxu0 %v258
    %999 = vmatprep.subr.mxu0 %v267
    %1000 = vmatpush1.msra.mxu0 %v266
    %1001 = vmatprep.subr.mxu0 %v275
    %1002 = vmatpush1.msra.mxu0 %v274
    %1003 = vmatprep.subr.mxu0 %v283
    %1004 = vmatpush1.msra.mxu0 %v282
    %1005 = vmatprep.subr.mxu0 %v291
    %1006 = vmatpush1.msra.mxu0 %v290
    %1007 = vmatprep.subr.mxu0 %v299
    %1008 = vmatpush1.msra.mxu0 %v298
    %1009 = vmatprep.subr.mxu0 %v307
    %1010 = vmatpush1.msra.mxu0 %v306
    %1011 = vmatprep.subr.mxu0 %v315
    %1012 = vmatpush1.msra.mxu0 %v314
    %1013 = vmatprep.subr.mxu0 %v323
    %1014 = vmatpush1.msra.mxu0 %v322
    %1015 = vmatprep.subr.mxu0 %v331
    %1016 = vmatpush1.msra.mxu0 %v330
    %1017 = vmatprep.subr.mxu0 %v339
    %1018 = vmatpush1.msra.mxu0 %v338
    %1019 = vmatprep.subr.mxu0 %v347
    %1020 = vmatpush1.msra.mxu0 %v346
    %1021 = vmatprep.mubr.f32.mxu0 %v700
    %1022 = vmatmul.mubr.f32.gmra.mrb[0].mxu0 %v696
    %v1023 = vpop.f32.mrb[0].mxu0
    %v1024 = vadd.f32 %v731, %v1023
    %v1025 = vpop.f32.mrb[0].mxu0
    %v1026 = vadd.f32 %v735, %v1025
    %1027 = vdwg.mxu0
    %v1028 = vxor.u32 %v811, 2147483648
    %v1029 = vxor.u32 %v813, 2147483648
    %v1030 = vmul.f32 %v1028, 1.442695
    %v1031 = vpow.pop %v1030
    %v1032 = vmul.f32 %v1029, 1.442695
    %v1033 = vpow.pop %v1032
    %v1034 = vadd.f32 %v1031, 1.0
    %v1035 = vadd.f32 %v1033, 1.0
    %v1036 = vrcp.pop %v1034
    %v1037 = vmul.f32 1.0, %v1036
    %v1038 = vrcp.pop %v1035
    %v1039 = vmul.f32 1.0, %v1038
    %v1040 = vxor.u32 %v882, 2147483648
    %v1041 = vxor.u32 %v884, 2147483648
    %v1042 = vmul.f32 %v1040, 1.442695
    %v1043 = vpow.pop %v1042
    %v1044 = vmul.f32 %v1041, 1.442695
    %v1045 = vpow.pop %v1044
    %v1046 = vadd.f32 %v1043, 1.0
    %v1047 = vadd.f32 %v1045, 1.0
    %v1048 = vrcp.pop %v1046
    %v1049 = vmul.f32 1.0, %v1048
    %v1050 = vrcp.pop %v1047
    %v1051 = vmul.f32 1.0, %v1050
    %v1052 = vtanh.pop %v953
    %v1053 = vtanh.pop %v955
    %v1054 = vxor.u32 %v1024, 2147483648
    %v1055 = vxor.u32 %v1026, 2147483648
    %v1056 = vmul.f32 %v1054, 1.442695
    %v1057 = vpow.pop %v1056
    %v1058 = vmul.f32 %v1055, 1.442695
    %v1059 = vpow.pop %v1058
    %v1060 = vadd.f32 %v1057, 1.0
    %v1061 = vadd.f32 %v1059, 1.0
    %v1062 = vrcp.pop %v1060
    %v1063 = vmul.f32 1.0, %v1062
    %v1064 = vrcp.pop %v1061
    %v1065 = vmul.f32 1.0, %v1064
    %v1067 = vlaneseq
    %v1068 = vshrl.u32 %v1067, 7
    %v1069 = vsub.s32 0, %v1068
    %v1070 = vrot.slane %v688, %v1069
    %v1071 = vlaneseq
    %v1072 = vshrl.u32 %v1071, 7
    %v1073 = vsub.s32 1, %v1072
    %v1074 = vrot.slane %v688, %v1073
    %v1077 = vmul.f32 %v1049, %v1070
    %v1078 = vmul.f32 %v1051, %v1074
    %v1079 = vmul.f32 %v1037, %v1052
    %v1080 = vmul.f32 %v1039, %v1053
    %v1081 = vadd.f32 %v1077, %v1079
    %v1082 = vadd.f32 %v1078, %v1080
    %v1083 = vtanh.pop %v1081
    %v1084 = vtanh.pop %v1082
    %v1085 = vmul.f32 %v1063, %v1083
    %v1086 = vmul.f32 %v1065, %v1084
    %v1089 = vcombine.low %v1085, %v1086
    %v1091 = vunpack.c.l.s4 1966171168
    %v1092 = vunpack.c.0.s8 %v1091
    %v1093 = vlaneseq
    %v1094 = vshrl.u32 %v1093, 7
    %v1095 = vsub.s32 %v1092, %v1094
    %v1096 = vrot.slane %v1089, %v1095
    %v1098 = vunpack.c.l.s4 1966171168
    %v1099 = vunpack.c.0.s8 %v1098
    %v1100 = vlaneseq
    %v1101 = vshrl.u32 %v1100, 7
    %v1102 = vsub.s32 %v1099, %v1101
    %v1103 = vrot.slane %v1096, %v1102
    %v1105 = vlaneseq
    %vm1106 = vcmp.ge.s32.totalorder %v1105, 0
    %vm1107 = vcmp.lt.s32.totalorder %v1105, 256
    %vm1108 = vmand %vm1106, %vm1107
    %1109 = vst.msk [vmem:[#allocation3] ss:$8 sm:$0x3] %vm1108, %v1103
    %1110 = vst.msk [vmem:[#allocation3] ss:$8 sm:$0x0] %vm1108, %v1103
    %s1111 = scalar_lea.vmem [#allocation2], 1
    %v1112 = vld [vmem:[%s1111] ss:$8 sm:$0xf]
    %v1113 = vld [vmem:[%s1111] ss:$8 sm:$0xf0]
    %v1114 = vor.u32 %v1112, %v1113
    %v1116 = vlaneseq
    %v1117 = vshrl.u32 %v1116, 7
    %v1118 = vsub.s32 0, %v1117
    %v1119 = vrot.slane %v1114, %v1118
    %v1120 = vlaneseq
    %v1121 = vshrl.u32 %v1120, 7
    %v1122 = vsub.s32 1, %v1121
    %v1123 = vrot.slane %v1114, %v1122
    %v1124 = vlaneseq
    %v1125 = vshrl.u32 %v1124, 7
    %v1126 = vsub.s32 2, %v1125
    %v1127 = vrot.slane %v1114, %v1126
    %v1128 = vlaneseq
    %v1129 = vshrl.u32 %v1128, 7
    %v1130 = vsub.s32 3, %v1129
    %v1131 = vrot.slane %v1114, %v1130
    %v1132 = vlaneseq
    %v1133 = vshrl.u32 %v1132, 7
    %v1134 = vsub.s32 4, %v1133
    %v1135 = vrot.slane %v1114, %v1134
    %v1136 = vlaneseq
    %v1137 = vshrl.u32 %v1136, 7
    %v1138 = vsub.s32 5, %v1137
    %v1139 = vrot.slane %v1114, %v1138
    %v1140 = vlaneseq
    %v1141 = vshrl.u32 %v1140, 7
    %v1142 = vsub.s32 6, %v1141
    %v1143 = vrot.slane %v1114, %v1142
    %v1144 = vlaneseq
    %v1145 = vshrl.u32 %v1144, 7
    %v1146 = vsub.s32 7, %v1145
    %v1147 = vrot.slane %v1114, %v1146
    %1156 = vmatprep.subr.mxu0 %v93
    %1157 = vmatpush1.msra.mxu0 %v92
    %1158 = vmatprep.subr.mxu0 %v101
    %1159 = vmatpush1.msra.mxu0 %v100
    %1160 = vmatprep.subr.mxu0 %v109
    %1161 = vmatpush1.msra.mxu0 %v108
    %1162 = vmatprep.subr.mxu0 %v117
    %1163 = vmatpush1.msra.mxu0 %v116
    %1164 = vmatprep.subr.mxu0 %v125
    %1165 = vmatpush1.msra.mxu0 %v124
    %1166 = vmatprep.subr.mxu0 %v133
    %1167 = vmatpush1.msra.mxu0 %v132
    %1168 = vmatprep.subr.mxu0 %v141
    %1169 = vmatpush1.msra.mxu0 %v140
    %1170 = vmatprep.subr.mxu0 %v149
    %1171 = vmatpush1.msra.mxu0 %v148
    %1172 = vmatprep.subr.mxu0 %v157
    %1173 = vmatpush1.msra.mxu0 %v156
    %1174 = vmatprep.subr.mxu0 %v165
    %1175 = vmatpush1.msra.mxu0 %v164
    %1176 = vmatprep.subr.mxu0 %v173
    %1177 = vmatpush1.msra.mxu0 %v172
    %1178 = vmatprep.subr.mxu0 %v181
    %1179 = vmatpush1.msra.mxu0 %v180
    %1180 = vmatprep.subr.mxu0 %v189
    %1181 = vmatpush1.msra.mxu0 %v188
    %1182 = vmatprep.subr.mxu0 %v197
    %1183 = vmatpush1.msra.mxu0 %v196
    %1184 = vmatprep.subr.mxu0 %v205
    %1185 = vmatpush1.msra.mxu0 %v204
    %1186 = vmatprep.subr.mxu0 %v213
    %1187 = vmatpush1.msra.mxu0 %v212
    %1188 = vmatprep.subr.mxu0 %v221
    %1189 = vmatpush1.msra.mxu0 %v220
    %1190 = vmatprep.subr.mxu0 %v229
    %1191 = vmatpush1.msra.mxu0 %v228
    %1192 = vmatprep.subr.mxu0 %v237
    %1193 = vmatpush1.msra.mxu0 %v236
    %1194 = vmatprep.subr.mxu0 %v245
    %1195 = vmatpush1.msra.mxu0 %v244
    %1196 = vmatprep.subr.mxu0 %v253
    %1197 = vmatpush1.msra.mxu0 %v252
    %1198 = vmatprep.subr.mxu0 %v261
    %1199 = vmatpush1.msra.mxu0 %v260
    %1200 = vmatprep.subr.mxu0 %v269
    %1201 = vmatpush1.msra.mxu0 %v268
    %1202 = vmatprep.subr.mxu0 %v277
    %1203 = vmatpush1.msra.mxu0 %v276
    %1204 = vmatprep.subr.mxu0 %v285
    %1205 = vmatpush1.msra.mxu0 %v284
    %1206 = vmatprep.subr.mxu0 %v293
    %1207 = vmatpush1.msra.mxu0 %v292
    %1208 = vmatprep.subr.mxu0 %v301
    %1209 = vmatpush1.msra.mxu0 %v300
    %1210 = vmatprep.subr.mxu0 %v309
    %1211 = vmatpush1.msra.mxu0 %v308
    %1212 = vmatprep.subr.mxu0 %v317
    %1213 = vmatpush1.msra.mxu0 %v316
    %1214 = vmatprep.subr.mxu0 %v325
    %1215 = vmatpush1.msra.mxu0 %v324
    %1216 = vmatprep.subr.mxu0 %v333
    %1217 = vmatpush1.msra.mxu0 %v332
    %1218 = vmatprep.subr.mxu0 %v341
    %1219 = vmatpush1.msra.mxu0 %v340
    %1220 = vmatprep.mubr.f32.mxu0 %v1086
    %1221 = vmatmul.mubr.f32.gmra.mrb[0].mxu0 %v1085
    %v1222 = vpop.f32.mrb[0].mxu0
    %v1223 = vadd.f32 %v1119, %v1222
    %v1224 = vpop.f32.mrb[0].mxu0
    %v1225 = vadd.f32 %v1123, %v1224
    %1226 = vdwg.mxu0
    %1227 = vmatprep.subr.mxu0 %v95
    %1228 = vmatpush1.msra.mxu0 %v94
    %1229 = vmatprep.subr.mxu0 %v103
    %1230 = vmatpush1.msra.mxu0 %v102
    %1231 = vmatprep.subr.mxu0 %v111
    %1232 = vmatpush1.msra.mxu0 %v110
    %1233 = vmatprep.subr.mxu0 %v119
    %1234 = vmatpush1.msra.mxu0 %v118
    %1235 = vmatprep.subr.mxu0 %v127
    %1236 = vmatpush1.msra.mxu0 %v126
    %1237 = vmatprep.subr.mxu0 %v135
    %1238 = vmatpush1.msra.mxu0 %v134
    %1239 = vmatprep.subr.mxu0 %v143
    %1240 = vmatpush1.msra.mxu0 %v142
    %1241 = vmatprep.subr.mxu0 %v151
    %1242 = vmatpush1.msra.mxu0 %v150
    %1243 = vmatprep.subr.mxu0 %v159
    %1244 = vmatpush1.msra.mxu0 %v158
    %1245 = vmatprep.subr.mxu0 %v167
    %1246 = vmatpush1.msra.mxu0 %v166
    %1247 = vmatprep.subr.mxu0 %v175
    %1248 = vmatpush1.msra.mxu0 %v174
    %1249 = vmatprep.subr.mxu0 %v183
    %1250 = vmatpush1.msra.mxu0 %v182
    %1251 = vmatprep.subr.mxu0 %v191
    %1252 = vmatpush1.msra.mxu0 %v190
    %1253 = vmatprep.subr.mxu0 %v199
    %1254 = vmatpush1.msra.mxu0 %v198
    %1255 = vmatprep.subr.mxu0 %v207
    %1256 = vmatpush1.msra.mxu0 %v206
    %1257 = vmatprep.subr.mxu0 %v215
    %1258 = vmatpush1.msra.mxu0 %v214
    %1259 = vmatprep.subr.mxu0 %v223
    %1260 = vmatpush1.msra.mxu0 %v222
    %1261 = vmatprep.subr.mxu0 %v231
    %1262 = vmatpush1.msra.mxu0 %v230
    %1263 = vmatprep.subr.mxu0 %v239
    %1264 = vmatpush1.msra.mxu0 %v238
    %1265 = vmatprep.subr.mxu0 %v247
    %1266 = vmatpush1.msra.mxu0 %v246
    %1267 = vmatprep.subr.mxu0 %v255
    %1268 = vmatpush1.msra.mxu0 %v254
    %1269 = vmatprep.subr.mxu0 %v263
    %1270 = vmatpush1.msra.mxu0 %v262
    %1271 = vmatprep.subr.mxu0 %v271
    %1272 = vmatpush1.msra.mxu0 %v270
    %1273 = vmatprep.subr.mxu0 %v279
    %1274 = vmatpush1.msra.mxu0 %v278
    %1275 = vmatprep.subr.mxu0 %v287
    %1276 = vmatpush1.msra.mxu0 %v286
    %1277 = vmatprep.subr.mxu0 %v295
    %1278 = vmatpush1.msra.mxu0 %v294
    %1279 = vmatprep.subr.mxu0 %v303
    %1280 = vmatpush1.msra.mxu0 %v302
    %1281 = vmatprep.subr.mxu0 %v311
    %1282 = vmatpush1.msra.mxu0 %v310
    %1283 = vmatprep.subr.mxu0 %v319
    %1284 = vmatpush1.msra.mxu0 %v318
    %1285 = vmatprep.subr.mxu0 %v327
    %1286 = vmatpush1.msra.mxu0 %v326
    %1287 = vmatprep.subr.mxu0 %v335
    %1288 = vmatpush1.msra.mxu0 %v334
    %1289 = vmatprep.subr.mxu0 %v343
    %1290 = vmatpush1.msra.mxu0 %v342
    %1291 = vmatprep.mubr.f32.mxu0 %v1086
    %1292 = vmatmul.mubr.f32.gmra.mrb[0].mxu0 %v1085
    %v1293 = vpop.f32.mrb[0].mxu0
    %v1294 = vadd.f32 %v1127, %v1293
    %v1295 = vpop.f32.mrb[0].mxu0
    %v1296 = vadd.f32 %v1131, %v1295
    %1297 = vdwg.mxu0
    %1298 = vmatprep.subr.mxu0 %v97
    %1299 = vmatpush1.msra.mxu0 %v96
    %1300 = vmatprep.subr.mxu0 %v105
    %1301 = vmatpush1.msra.mxu0 %v104
    %1302 = vmatprep.subr.mxu0 %v113
    %1303 = vmatpush1.msra.mxu0 %v112
    %1304 = vmatprep.subr.mxu0 %v121
    %1305 = vmatpush1.msra.mxu0 %v120
    %1306 = vmatprep.subr.mxu0 %v129
    %1307 = vmatpush1.msra.mxu0 %v128
    %1308 = vmatprep.subr.mxu0 %v137
    %1309 = vmatpush1.msra.mxu0 %v136
    %1310 = vmatprep.subr.mxu0 %v145
    %1311 = vmatpush1.msra.mxu0 %v144
    %1312 = vmatprep.subr.mxu0 %v153
    %1313 = vmatpush1.msra.mxu0 %v152
    %1314 = vmatprep.subr.mxu0 %v161
    %1315 = vmatpush1.msra.mxu0 %v160
    %1316 = vmatprep.subr.mxu0 %v169
    %1317 = vmatpush1.msra.mxu0 %v168
    %1318 = vmatprep.subr.mxu0 %v177
    %1319 = vmatpush1.msra.mxu0 %v176
    %1320 = vmatprep.subr.mxu0 %v185
    %1321 = vmatpush1.msra.mxu0 %v184
    %1322 = vmatprep.subr.mxu0 %v193
    %1323 = vmatpush1.msra.mxu0 %v192
    %1324 = vmatprep.subr.mxu0 %v201
    %1325 = vmatpush1.msra.mxu0 %v200
    %1326 = vmatprep.subr.mxu0 %v209
    %1327 = vmatpush1.msra.mxu0 %v208
    %1328 = vmatprep.subr.mxu0 %v217
    %1329 = vmatpush1.msra.mxu0 %v216
    %1330 = vmatprep.subr.mxu0 %v225
    %1331 = vmatpush1.msra.mxu0 %v224
    %1332 = vmatprep.subr.mxu0 %v233
    %1333 = vmatpush1.msra.mxu0 %v232
    %1334 = vmatprep.subr.mxu0 %v241
    %1335 = vmatpush1.msra.mxu0 %v240
    %1336 = vmatprep.subr.mxu0 %v249
    %1337 = vmatpush1.msra.mxu0 %v248
    %1338 = vmatprep.subr.mxu0 %v257
    %1339 = vmatpush1.msra.mxu0 %v256
    %1340 = vmatprep.subr.mxu0 %v265
    %1341 = vmatpush1.msra.mxu0 %v264
    %1342 = vmatprep.subr.mxu0 %v273
    %1343 = vmatpush1.msra.mxu0 %v272
    %1344 = vmatprep.subr.mxu0 %v281
    %1345 = vmatpush1.msra.mxu0 %v280
    %1346 = vmatprep.subr.mxu0 %v289
    %1347 = vmatpush1.msra.mxu0 %v288
    %1348 = vmatprep.subr.mxu0 %v297
    %1349 = vmatpush1.msra.mxu0 %v296
    %1350 = vmatprep.subr.mxu0 %v305
    %1351 = vmatpush1.msra.mxu0 %v304
    %1352 = vmatprep.subr.mxu0 %v313
    %1353 = vmatpush1.msra.mxu0 %v312
    %1354 = vmatprep.subr.mxu0 %v321
    %1355 = vmatpush1.msra.mxu0 %v320
    %1356 = vmatprep.subr.mxu0 %v329
    %1357 = vmatpush1.msra.mxu0 %v328
    %1358 = vmatprep.subr.mxu0 %v337
    %1359 = vmatpush1.msra.mxu0 %v336
    %1360 = vmatprep.subr.mxu0 %v345
    %1361 = vmatpush1.msra.mxu0 %v344
    %1362 = vmatprep.mubr.f32.mxu0 %v1086
    %1363 = vmatmul.mubr.f32.gmra.mrb[0].mxu0 %v1085
    %v1364 = vpop.f32.mrb[0].mxu0
    %v1365 = vadd.f32 %v1135, %v1364
    %v1366 = vpop.f32.mrb[0].mxu0
    %v1367 = vadd.f32 %v1139, %v1366
    %1368 = vdwg.mxu0
    %1369 = vmatprep.subr.mxu0 %v99
    %1370 = vmatpush1.msra.mxu0 %v98
    %1371 = vmatprep.subr.mxu0 %v107
    %1372 = vmatpush1.msra.mxu0 %v106
    %1373 = vmatprep.subr.mxu0 %v115
    %1374 = vmatpush1.msra.mxu0 %v114
    %1375 = vmatprep.subr.mxu0 %v123
    %1376 = vmatpush1.msra.mxu0 %v122
    %1377 = vmatprep.subr.mxu0 %v131
    %1378 = vmatpush1.msra.mxu0 %v130
    %1379 = vmatprep.subr.mxu0 %v139
    %1380 = vmatpush1.msra.mxu0 %v138
    %1381 = vmatprep.subr.mxu0 %v147
    %1382 = vmatpush1.msra.mxu0 %v146
    %1383 = vmatprep.subr.mxu0 %v155
    %1384 = vmatpush1.msra.mxu0 %v154
    %1385 = vmatprep.subr.mxu0 %v163
    %1386 = vmatpush1.msra.mxu0 %v162
    %1387 = vmatprep.subr.mxu0 %v171
    %1388 = vmatpush1.msra.mxu0 %v170
    %1389 = vmatprep.subr.mxu0 %v179
    %1390 = vmatpush1.msra.mxu0 %v178
    %1391 = vmatprep.subr.mxu0 %v187
    %1392 = vmatpush1.msra.mxu0 %v186
    %1393 = vmatprep.subr.mxu0 %v195
    %1394 = vmatpush1.msra.mxu0 %v194
    %1395 = vmatprep.subr.mxu0 %v203
    %1396 = vmatpush1.msra.mxu0 %v202
    %1397 = vmatprep.subr.mxu0 %v211
    %1398 = vmatpush1.msra.mxu0 %v210
    %1399 = vmatprep.subr.mxu0 %v219
    %1400 = vmatpush1.msra.mxu0 %v218
    %1401 = vmatprep.subr.mxu0 %v227
    %1402 = vmatpush1.msra.mxu0 %v226
    %1403 = vmatprep.subr.mxu0 %v235
    %1404 = vmatpush1.msra.mxu0 %v234
    %1405 = vmatprep.subr.mxu0 %v243
    %1406 = vmatpush1.msra.mxu0 %v242
    %1407 = vmatprep.subr.mxu0 %v251
    %1408 = vmatpush1.msra.mxu0 %v250
    %1409 = vmatprep.subr.mxu0 %v259
    %1410 = vmatpush1.msra.mxu0 %v258
    %1411 = vmatprep.subr.mxu0 %v267
    %1412 = vmatpush1.msra.mxu0 %v266
    %1413 = vmatprep.subr.mxu0 %v275
    %1414 = vmatpush1.msra.mxu0 %v274
    %1415 = vmatprep.subr.mxu0 %v283
    %1416 = vmatpush1.msra.mxu0 %v282
    %1417 = vmatprep.subr.mxu0 %v291
    %1418 = vmatpush1.msra.mxu0 %v290
    %1419 = vmatprep.subr.mxu0 %v299
    %1420 = vmatpush1.msra.mxu0 %v298
    %1421 = vmatprep.subr.mxu0 %v307
    %1422 = vmatpush1.msra.mxu0 %v306
    %1423 = vmatprep.subr.mxu0 %v315
    %1424 = vmatpush1.msra.mxu0 %v314
    %1425 = vmatprep.subr.mxu0 %v323
    %1426 = vmatpush1.msra.mxu0 %v322
    %1427 = vmatprep.subr.mxu0 %v331
    %1428 = vmatpush1.msra.mxu0 %v330
    %1429 = vmatprep.subr.mxu0 %v339
    %1430 = vmatpush1.msra.mxu0 %v338
    %1431 = vmatprep.subr.mxu0 %v347
    %1432 = vmatpush1.msra.mxu0 %v346
    %1433 = vmatprep.mubr.f32.mxu0 %v1086
    %1434 = vmatmul.mubr.f32.gmra.mrb[0].mxu0 %v1085
    %v1435 = vpop.f32.mrb[0].mxu0
    %v1436 = vadd.f32 %v1143, %v1435
    %v1437 = vpop.f32.mrb[0].mxu0
    %v1438 = vadd.f32 %v1147, %v1437
    %1439 = vdwg.mxu0
    %v1440 = vxor.u32 %v1223, 2147483648
    %v1441 = vxor.u32 %v1225, 2147483648
    %v1442 = vmul.f32 %v1440, 1.442695
    %v1443 = vpow.pop %v1442
    %v1444 = vmul.f32 %v1441, 1.442695
    %v1445 = vpow.pop %v1444
    %v1446 = vadd.f32 %v1443, 1.0
    %v1447 = vadd.f32 %v1445, 1.0
    %v1448 = vrcp.pop %v1446
    %v1449 = vmul.f32 1.0, %v1448
    %v1450 = vrcp.pop %v1447
    %v1451 = vmul.f32 1.0, %v1450
    %v1452 = vxor.u32 %v1294, 2147483648
    %v1453 = vxor.u32 %v1296, 2147483648
    %v1454 = vmul.f32 %v1452, 1.442695
    %v1455 = vpow.pop %v1454
    %v1456 = vmul.f32 %v1453, 1.442695
    %v1457 = vpow.pop %v1456
    %v1458 = vadd.f32 %v1455, 1.0
    %v1459 = vadd.f32 %v1457, 1.0
    %v1460 = vrcp.pop %v1458
    %v1461 = vmul.f32 1.0, %v1460
    %v1462 = vrcp.pop %v1459
    %v1463 = vmul.f32 1.0, %v1462
    %v1464 = vtanh.pop %v1365
    %v1465 = vtanh.pop %v1367
    %v1466 = vxor.u32 %v1436, 2147483648
    %v1467 = vxor.u32 %v1438, 2147483648
    %v1468 = vmul.f32 %v1466, 1.442695
    %v1469 = vpow.pop %v1468
    %v1470 = vmul.f32 %v1467, 1.442695
    %v1471 = vpow.pop %v1470
    %v1472 = vadd.f32 %v1469, 1.0
    %v1473 = vadd.f32 %v1471, 1.0
    %v1474 = vrcp.pop %v1472
    %v1475 = vmul.f32 1.0, %v1474
    %v1476 = vrcp.pop %v1473
    %v1477 = vmul.f32 1.0, %v1476
    %v1478 = vmul.f32 %v1461, %v1081
    %v1479 = vmul.f32 %v1463, %v1082
    %v1480 = vmul.f32 %v1449, %v1464
    %v1481 = vmul.f32 %v1451, %v1465
    %v1482 = vadd.f32 %v1478, %v1480
    %v1483 = vadd.f32 %v1479, %v1481
    %v1484 = vtanh.pop %v1482
    %v1485 = vtanh.pop %v1483
    %v1486 = vmul.f32 %v1475, %v1484
    %v1487 = vmul.f32 %v1477, %v1485
    %v1490 = vcombine.low %v1486, %v1487
    %v1492 = vunpack.c.l.s4 1966171168
    %v1493 = vunpack.c.0.s8 %v1492
    %v1494 = vlaneseq
    %v1495 = vshrl.u32 %v1494, 7
    %v1496 = vsub.s32 %v1493, %v1495
    %v1497 = vrot.slane %v1490, %v1496
    %v1499 = vunpack.c.l.s4 1966171168
    %v1500 = vunpack.c.0.s8 %v1499
    %v1501 = vlaneseq
    %v1502 = vshrl.u32 %v1501, 7
    %v1503 = vsub.s32 %v1500, %v1502
    %v1504 = vrot.slane %v1497, %v1503
    %s1506 = scalar_lea.vmem [#allocation3], 1
    %1507 = vst.msk [vmem:[%s1506] ss:$8 sm:$0x3] %vm1108, %v1504
    %1508 = vst.msk [vmem:[%s1506] ss:$8 sm:$0x0] %vm1108, %v1504
    %s1509 = scalar_lea.vmem [#allocation2], 2
    %v1510 = vld [vmem:[%s1509] ss:$8 sm:$0xf]
    %v1511 = vld [vmem:[%s1509] ss:$8 sm:$0xf0]
    %v1512 = vor.u32 %v1510, %v1511
    %v1514 = vlaneseq
    %v1515 = vshrl.u32 %v1514, 7
    %v1516 = vsub.s32 0, %v1515
    %v1517 = vrot.slane %v1512, %v1516
    %v1518 = vlaneseq
    %v1519 = vshrl.u32 %v1518, 7
    %v1520 = vsub.s32 1, %v1519
    %v1521 = vrot.slane %v1512, %v1520
    %v1522 = vlaneseq
    %v1523 = vshrl.u32 %v1522, 7
    %v1524 = vsub.s32 2, %v1523
    %v1525 = vrot.slane %v1512, %v1524
    %v1526 = vlaneseq
    %v1527 = vshrl.u32 %v1526, 7
    %v1528 = vsub.s32 3, %v1527
    %v1529 = vrot.slane %v1512, %v1528
    %v1530 = vlaneseq
    %v1531 = vshrl.u32 %v1530, 7
    %v1532 = vsub.s32 4, %v1531
    %v1533 = vrot.slane %v1512, %v1532
    %v1534 = vlaneseq
    %v1535 = vshrl.u32 %v1534, 7
    %v1536 = vsub.s32 5, %v1535
    %v1537 = vrot.slane %v1512, %v1536
    %v1538 = vlaneseq
    %v1539 = vshrl.u32 %v1538, 7
    %v1540 = vsub.s32 6, %v1539
    %v1541 = vrot.slane %v1512, %v1540
    %v1542 = vlaneseq
    %v1543 = vshrl.u32 %v1542, 7
    %v1544 = vsub.s32 7, %v1543
    %v1545 = vrot.slane %v1512, %v1544
    %1554 = vmatprep.subr.mxu0 %v93
    %1555 = vmatpush1.msra.mxu0 %v92
    %1556 = vmatprep.subr.mxu0 %v101
    %1557 = vmatpush1.msra.mxu0 %v100
    %1558 = vmatprep.subr.mxu0 %v109
    %1559 = vmatpush1.msra.mxu0 %v108
    %1560 = vmatprep.subr.mxu0 %v117
    %1561 = vmatpush1.msra.mxu0 %v116
    %1562 = vmatprep.subr.mxu0 %v125
    %1563 = vmatpush1.msra.mxu0 %v124
    %1564 = vmatprep.subr.mxu0 %v133
    %1565 = vmatpush1.msra.mxu0 %v132
    %1566 = vmatprep.subr.mxu0 %v141
    %1567 = vmatpush1.msra.mxu0 %v140
    %1568 = vmatprep.subr.mxu0 %v149
    %1569 = vmatpush1.msra.mxu0 %v148
    %1570 = vmatprep.subr.mxu0 %v157
    %1571 = vmatpush1.msra.mxu0 %v156
    %1572 = vmatprep.subr.mxu0 %v165
    %1573 = vmatpush1.msra.mxu0 %v164
    %1574 = vmatprep.subr.mxu0 %v173
    %1575 = vmatpush1.msra.mxu0 %v172
    %1576 = vmatprep.subr.mxu0 %v181
    %1577 = vmatpush1.msra.mxu0 %v180
    %1578 = vmatprep.subr.mxu0 %v189
    %1579 = vmatpush1.msra.mxu0 %v188
    %1580 = vmatprep.subr.mxu0 %v197
    %1581 = vmatpush1.msra.mxu0 %v196
    %1582 = vmatprep.subr.mxu0 %v205
    %1583 = vmatpush1.msra.mxu0 %v204
    %1584 = vmatprep.subr.mxu0 %v213
    %1585 = vmatpush1.msra.mxu0 %v212
    %1586 = vmatprep.subr.mxu0 %v221
    %1587 = vmatpush1.msra.mxu0 %v220
    %1588 = vmatprep.subr.mxu0 %v229
    %1589 = vmatpush1.msra.mxu0 %v228
    %1590 = vmatprep.subr.mxu0 %v237
    %1591 = vmatpush1.msra.mxu0 %v236
    %1592 = vmatprep.subr.mxu0 %v245
    %1593 = vmatpush1.msra.mxu0 %v244
    %1594 = vmatprep.subr.mxu0 %v253
    %1595 = vmatpush1.msra.mxu0 %v252
    %1596 = vmatprep.subr.mxu0 %v261
    %1597 = vmatpush1.msra.mxu0 %v260
    %1598 = vmatprep.subr.mxu0 %v269
    %1599 = vmatpush1.msra.mxu0 %v268
    %1600 = vmatprep.subr.mxu0 %v277
    %1601 = vmatpush1.msra.mxu0 %v276
    %1602 = vmatprep.subr.mxu0 %v285
    %1603 = vmatpush1.msra.mxu0 %v284
    %1604 = vmatprep.subr.mxu0 %v293
    %1605 = vmatpush1.msra.mxu0 %v292
    %1606 = vmatprep.subr.mxu0 %v301
    %1607 = vmatpush1.msra.mxu0 %v300
    %1608 = vmatprep.subr.mxu0 %v309
    %1609 = vmatpush1.msra.mxu0 %v308
    %1610 = vmatprep.subr.mxu0 %v317
    %1611 = vmatpush1.msra.mxu0 %v316
    %1612 = vmatprep.subr.mxu0 %v325
    %1613 = vmatpush1.msra.mxu0 %v324
    %1614 = vmatprep.subr.mxu0 %v333
    %1615 = vmatpush1.msra.mxu0 %v332
    %1616 = vmatprep.subr.mxu0 %v341
    %1617 = vmatpush1.msra.mxu0 %v340
    %1618 = vmatprep.mubr.f32.mxu0 %v1487
    %1619 = vmatmul.mubr.f32.gmra.mrb[0].mxu0 %v1486
    %v1620 = vpop.f32.mrb[0].mxu0
    %v1621 = vadd.f32 %v1517, %v1620
    %v1622 = vpop.f32.mrb[0].mxu0
    %v1623 = vadd.f32 %v1521, %v1622
    %1624 = vdwg.mxu0
    %1625 = vmatprep.subr.mxu0 %v95
    %1626 = vmatpush1.msra.mxu0 %v94
    %1627 = vmatprep.subr.mxu0 %v103
    %1628 = vmatpush1.msra.mxu0 %v102
    %1629 = vmatprep.subr.mxu0 %v111
    %1630 = vmatpush1.msra.mxu0 %v110
    %1631 = vmatprep.subr.mxu0 %v119
    %1632 = vmatpush1.msra.mxu0 %v118
    %1633 = vmatprep.subr.mxu0 %v127
    %1634 = vmatpush1.msra.mxu0 %v126
    %1635 = vmatprep.subr.mxu0 %v135
    %1636 = vmatpush1.msra.mxu0 %v134
    %1637 = vmatprep.subr.mxu0 %v143
    %1638 = vmatpush1.msra.mxu0 %v142
    %1639 = vmatprep.subr.mxu0 %v151
    %1640 = vmatpush1.msra.mxu0 %v150
    %1641 = vmatprep.subr.mxu0 %v159
    %1642 = vmatpush1.msra.mxu0 %v158
    %1643 = vmatprep.subr.mxu0 %v167
    %1644 = vmatpush1.msra.mxu0 %v166
    %1645 = vmatprep.subr.mxu0 %v175
    %1646 = vmatpush1.msra.mxu0 %v174
    %1647 = vmatprep.subr.mxu0 %v183
    %1648 = vmatpush1.msra.mxu0 %v182
    %1649 = vmatprep.subr.mxu0 %v191
    %1650 = vmatpush1.msra.mxu0 %v190
    %1651 = vmatprep.subr.mxu0 %v199
    %1652 = vmatpush1.msra.mxu0 %v198
    %1653 = vmatprep.subr.mxu0 %v207
    %1654 = vmatpush1.msra.mxu0 %v206
    %1655 = vmatprep.subr.mxu0 %v215
    %1656 = vmatpush1.msra.mxu0 %v214
    %1657 = vmatprep.subr.mxu0 %v223
    %1658 = vmatpush1.msra.mxu0 %v222
    %1659 = vmatprep.subr.mxu0 %v231
    %1660 = vmatpush1.msra.mxu0 %v230
    %1661 = vmatprep.subr.mxu0 %v239
    %1662 = vmatpush1.msra.mxu0 %v238
    %1663 = vmatprep.subr.mxu0 %v247
    %1664 = vmatpush1.msra.mxu0 %v246
    %1665 = vmatprep.subr.mxu0 %v255
    %1666 = vmatpush1.msra.mxu0 %v254
    %1667 = vmatprep.subr.mxu0 %v263
    %1668 = vmatpush1.msra.mxu0 %v262
    %1669 = vmatprep.subr.mxu0 %v271
    %1670 = vmatpush1.msra.mxu0 %v270
    %1671 = vmatprep.subr.mxu0 %v279
    %1672 = vmatpush1.msra.mxu0 %v278
    %1673 = vmatprep.subr.mxu0 %v287
    %1674 = vmatpush1.msra.mxu0 %v286
    %1675 = vmatprep.subr.mxu0 %v295
    %1676 = vmatpush1.msra.mxu0 %v294
    %1677 = vmatprep.subr.mxu0 %v303
    %1678 = vmatpush1.msra.mxu0 %v302
    %1679 = vmatprep.subr.mxu0 %v311
    %1680 = vmatpush1.msra.mxu0 %v310
    %1681 = vmatprep.subr.mxu0 %v319
    %1682 = vmatpush1.msra.mxu0 %v318
    %1683 = vmatprep.subr.mxu0 %v327
    %1684 = vmatpush1.msra.mxu0 %v326
    %1685 = vmatprep.subr.mxu0 %v335
    %1686 = vmatpush1.msra.mxu0 %v334
    %1687 = vmatprep.subr.mxu0 %v343
    %1688 = vmatpush1.msra.mxu0 %v342
    %1689 = vmatprep.mubr.f32.mxu0 %v1487
    %1690 = vmatmul.mubr.f32.gmra.mrb[0].mxu0 %v1486
    %v1691 = vpop.f32.mrb[0].mxu0
    %v1692 = vadd.f32 %v1525, %v1691
    %v1693 = vpop.f32.mrb[0].mxu0
    %v1694 = vadd.f32 %v1529, %v1693
    %1695 = vdwg.mxu0
    %1696 = vmatprep.subr.mxu0 %v97
    %1697 = vmatpush1.msra.mxu0 %v96
    %1698 = vmatprep.subr.mxu0 %v105
    %1699 = vmatpush1.msra.mxu0 %v104
    %1700 = vmatprep.subr.mxu0 %v113
    %1701 = vmatpush1.msra.mxu0 %v112
    %1702 = vmatprep.subr.mxu0 %v121
    %1703 = vmatpush1.msra.mxu0 %v120
    %1704 = vmatprep.subr.mxu0 %v129
    %1705 = vmatpush1.msra.mxu0 %v128
    %1706 = vmatprep.subr.mxu0 %v137
    %1707 = vmatpush1.msra.mxu0 %v136
    %1708 = vmatprep.subr.mxu0 %v145
    %1709 = vmatpush1.msra.mxu0 %v144
    %1710 = vmatprep.subr.mxu0 %v153
    %1711 = vmatpush1.msra.mxu0 %v152
    %1712 = vmatprep.subr.mxu0 %v161
    %1713 = vmatpush1.msra.mxu0 %v160
    %1714 = vmatprep.subr.mxu0 %v169
    %1715 = vmatpush1.msra.mxu0 %v168
    %1716 = vmatprep.subr.mxu0 %v177
    %1717 = vmatpush1.msra.mxu0 %v176
    %1718 = vmatprep.subr.mxu0 %v185
    %1719 = vmatpush1.msra.mxu0 %v184
    %1720 = vmatprep.subr.mxu0 %v193
    %1721 = vmatpush1.msra.mxu0 %v192
    %1722 = vmatprep.subr.mxu0 %v201
    %1723 = vmatpush1.msra.mxu0 %v200
    %1724 = vmatprep.subr.mxu0 %v209
    %1725 = vmatpush1.msra.mxu0 %v208
    %1726 = vmatprep.subr.mxu0 %v217
    %1727 = vmatpush1.msra.mxu0 %v216
    %1728 = vmatprep.subr.mxu0 %v225
    %1729 = vmatpush1.msra.mxu0 %v224
    %1730 = vmatprep.subr.mxu0 %v233
    %1731 = vmatpush1.msra.mxu0 %v232
    %1732 = vmatprep.subr.mxu0 %v241
    %1733 = vmatpush1.msra.mxu0 %v240
    %1734 = vmatprep.subr.mxu0 %v249
    %1735 = vmatpush1.msra.mxu0 %v248
    %1736 = vmatprep.subr.mxu0 %v257
    %1737 = vmatpush1.msra.mxu0 %v256
    %1738 = vmatprep.subr.mxu0 %v265
    %1739 = vmatpush1.msra.mxu0 %v264
    %1740 = vmatprep.subr.mxu0 %v273
    %1741 = vmatpush1.msra.mxu0 %v272
    %1742 = vmatprep.subr.mxu0 %v281
    %1743 = vmatpush1.msra.mxu0 %v280
    %1744 = vmatprep.subr.mxu0 %v289
    %1745 = vmatpush1.msra.mxu0 %v288
    %1746 = vmatprep.subr.mxu0 %v297
    %1747 = vmatpush1.msra.mxu0 %v296
    %1748 = vmatprep.subr.mxu0 %v305
    %1749 = vmatpush1.msra.mxu0 %v304
    %1750 = vmatprep.subr.mxu0 %v313
    %1751 = vmatpush1.msra.mxu0 %v312
    %1752 = vmatprep.subr.mxu0 %v321
    %1753 = vmatpush1.msra.mxu0 %v320
    %1754 = vmatprep.subr.mxu0 %v329
    %1755 = vmatpush1.msra.mxu0 %v328
    %1756 = vmatprep.subr.mxu0 %v337
    %1757 = vmatpush1.msra.mxu0 %v336
    %1758 = vmatprep.subr.mxu0 %v345
    %1759 = vmatpush1.msra.mxu0 %v344
    %1760 = vmatprep.mubr.f32.mxu0 %v1487
    %1761 = vmatmul.mubr.f32.gmra.mrb[0].mxu0 %v1486
    %v1762 = vpop.f32.mrb[0].mxu0
    %v1763 = vadd.f32 %v1533, %v1762
    %v1764 = vpop.f32.mrb[0].mxu0
    %v1765 = vadd.f32 %v1537, %v1764
    %1766 = vdwg.mxu0
    %1767 = vmatprep.subr.mxu0 %v99
    %1768 = vmatpush1.msra.mxu0 %v98
    %1769 = vmatprep.subr.mxu0 %v107
    %1770 = vmatpush1.msra.mxu0 %v106
    %1771 = vmatprep.subr.mxu0 %v115
    %1772 = vmatpush1.msra.mxu0 %v114
    %1773 = vmatprep.subr.mxu0 %v123
    %1774 = vmatpush1.msra.mxu0 %v122
    %1775 = vmatprep.subr.mxu0 %v131
    %1776 = vmatpush1.msra.mxu0 %v130
    %1777 = vmatprep.subr.mxu0 %v139
    %1778 = vmatpush1.msra.mxu0 %v138
    %1779 = vmatprep.subr.mxu0 %v147
    %1780 = vmatpush1.msra.mxu0 %v146
    %1781 = vmatprep.subr.mxu0 %v155
    %1782 = vmatpush1.msra.mxu0 %v154
    %1783 = vmatprep.subr.mxu0 %v163
    %1784 = vmatpush1.msra.mxu0 %v162
    %1785 = vmatprep.subr.mxu0 %v171
    %1786 = vmatpush1.msra.mxu0 %v170
    %1787 = vmatprep.subr.mxu0 %v179
    %1788 = vmatpush1.msra.mxu0 %v178
    %1789 = vmatprep.subr.mxu0 %v187
    %1790 = vmatpush1.msra.mxu0 %v186
    %1791 = vmatprep.subr.mxu0 %v195
    %1792 = vmatpush1.msra.mxu0 %v194
    %1793 = vmatprep.subr.mxu0 %v203
    %1794 = vmatpush1.msra.mxu0 %v202
    %1795 = vmatprep.subr.mxu0 %v211
    %1796 = vmatpush1.msra.mxu0 %v210
    %1797 = vmatprep.subr.mxu0 %v219
    %1798 = vmatpush1.msra.mxu0 %v218
    %1799 = vmatprep.subr.mxu0 %v227
    %1800 = vmatpush1.msra.mxu0 %v226
    %1801 = vmatprep.subr.mxu0 %v235
    %1802 = vmatpush1.msra.mxu0 %v234
    %1803 = vmatprep.subr.mxu0 %v243
    %1804 = vmatpush1.msra.mxu0 %v242
    %1805 = vmatprep.subr.mxu0 %v251
    %1806 = vmatpush1.msra.mxu0 %v250
    %1807 = vmatprep.subr.mxu0 %v259
    %1808 = vmatpush1.msra.mxu0 %v258
    %1809 = vmatprep.subr.mxu0 %v267
    %1810 = vmatpush1.msra.mxu0 %v266
    %1811 = vmatprep.subr.mxu0 %v275
    %1812 = vmatpush1.msra.mxu0 %v274
    %1813 = vmatprep.subr.mxu0 %v283
    %1814 = vmatpush1.msra.mxu0 %v282
    %1815 = vmatprep.subr.mxu0 %v291
    %1816 = vmatpush1.msra.mxu0 %v290
    %1817 = vmatprep.subr.mxu0 %v299
    %1818 = vmatpush1.msra.mxu0 %v298
    %1819 = vmatprep.subr.mxu0 %v307
    %1820 = vmatpush1.msra.mxu0 %v306
    %1821 = vmatprep.subr.mxu0 %v315
    %1822 = vmatpush1.msra.mxu0 %v314
    %1823 = vmatprep.subr.mxu0 %v323
    %1824 = vmatpush1.msra.mxu0 %v322
    %1825 = vmatprep.subr.mxu0 %v331
    %1826 = vmatpush1.msra.mxu0 %v330
    %1827 = vmatprep.subr.mxu0 %v339
    %1828 = vmatpush1.msra.mxu0 %v338
    %1829 = vmatprep.subr.mxu0 %v347
    %1830 = vmatpush1.msra.mxu0 %v346
    %1831 = vmatprep.mubr.f32.mxu0 %v1487
    %1832 = vmatmul.mubr.f32.gmra.mrb[0].mxu0 %v1486
    %v1833 = vpop.f32.mrb[0].mxu0
    %v1834 = vadd.f32 %v1541, %v1833
    %v1835 = vpop.f32.mrb[0].mxu0
    %v1836 = vadd.f32 %v1545, %v1835
    %1837 = vdwg.mxu0
    %v1838 = vxor.u32 %v1621, 2147483648
    %v1839 = vxor.u32 %v1623, 2147483648
    %v1840 = vmul.f32 %v1838, 1.442695
    %v1841 = vpow.pop %v1840
    %v1842 = vmul.f32 %v1839, 1.442695
    %v1843 = vpow.pop %v1842
    %v1844 = vadd.f32 %v1841, 1.0
    %v1845 = vadd.f32 %v1843, 1.0
    %v1846 = vrcp.pop %v1844
    %v1847 = vmul.f32 1.0, %v1846
    %v1848 = vrcp.pop %v1845
    %v1849 = vmul.f32 1.0, %v1848
    %v1850 = vxor.u32 %v1692, 2147483648
    %v1851 = vxor.u32 %v1694, 2147483648
    %v1852 = vmul.f32 %v1850, 1.442695
    %v1853 = vpow.pop %v1852
    %v1854 = vmul.f32 %v1851, 1.442695
    %v1855 = vpow.pop %v1854
    %v1856 = vadd.f32 %v1853, 1.0
    %v1857 = vadd.f32 %v1855, 1.0
    %v1858 = vrcp.pop %v1856
    %v1859 = vmul.f32 1.0, %v1858
    %v1860 = vrcp.pop %v1857
    %v1861 = vmul.f32 1.0, %v1860
    %v1862 = vtanh.pop %v1763
    %v1863 = vtanh.pop %v1765
    %v1864 = vxor.u32 %v1834, 2147483648
    %v1865 = vxor.u32 %v1836, 2147483648
    %v1866 = vmul.f32 %v1864, 1.442695
    %v1867 = vpow.pop %v1866
    %v1868 = vmul.f32 %v1865, 1.442695
    %v1869 = vpow.pop %v1868
    %v1870 = vadd.f32 %v1867, 1.0
    %v1871 = vadd.f32 %v1869, 1.0
    %v1872 = vrcp.pop %v1870
    %v1873 = vmul.f32 1.0, %v1872
    %v1874 = vrcp.pop %v1871
    %v1875 = vmul.f32 1.0, %v1874
    %v1876 = vmul.f32 %v1859, %v1482
    %v1877 = vmul.f32 %v1861, %v1483
    %v1878 = vmul.f32 %v1847, %v1862
    %v1879 = vmul.f32 %v1849, %v1863
    %v1880 = vadd.f32 %v1876, %v1878
    %v1881 = vadd.f32 %v1877, %v1879
    %v1882 = vtanh.pop %v1880
    %v1883 = vtanh.pop %v1881
    %v1884 = vmul.f32 %v1873, %v1882
    %v1885 = vmul.f32 %v1875, %v1883
    %v1888 = vcombine.low %v1884, %v1885
    %v1890 = vunpack.c.l.s4 1966171168
    %v1891 = vunpack.c.0.s8 %v1890
    %v1892 = vlaneseq
    %v1893 = vshrl.u32 %v1892, 7
    %v1894 = vsub.s32 %v1891, %v1893
    %v1895 = vrot.slane %v1888, %v1894
    %v1897 = vunpack.c.l.s4 1966171168
    %v1898 = vunpack.c.0.s8 %v1897
    %v1899 = vlaneseq
    %v1900 = vshrl.u32 %v1899, 7
    %v1901 = vsub.s32 %v1898, %v1900
    %v1902 = vrot.slane %v1895, %v1901
    %s1904 = scalar_lea.vmem [#allocation3], 2
    %1905 = vst.msk [vmem:[%s1904] ss:$8 sm:$0x3] %vm1108, %v1902
    %1906 = vst.msk [vmem:[%s1904] ss:$8 sm:$0x0] %vm1108, %v1902
    %s1907 = scalar_lea.vmem [#allocation2], 3
    %v1908 = vld [vmem:[%s1907] ss:$8 sm:$0xf]
    %v1909 = vld [vmem:[%s1907] ss:$8 sm:$0xf0]
    %v1910 = vor.u32 %v1908, %v1909
    %v1912 = vlaneseq
    %v1913 = vshrl.u32 %v1912, 7
    %v1914 = vsub.s32 0, %v1913
    %v1915 = vrot.slane %v1910, %v1914
    %v1916 = vlaneseq
    %v1917 = vshrl.u32 %v1916, 7
    %v1918 = vsub.s32 1, %v1917
    %v1919 = vrot.slane %v1910, %v1918
    %v1920 = vlaneseq
    %v1921 = vshrl.u32 %v1920, 7
    %v1922 = vsub.s32 2, %v1921
    %v1923 = vrot.slane %v1910, %v1922
    %v1924 = vlaneseq
    %v1925 = vshrl.u32 %v1924, 7
    %v1926 = vsub.s32 3, %v1925
    %v1927 = vrot.slane %v1910, %v1926
    %v1928 = vlaneseq
    %v1929 = vshrl.u32 %v1928, 7
    %v1930 = vsub.s32 4, %v1929
    %v1931 = vrot.slane %v1910, %v1930
    %v1932 = vlaneseq
    %v1933 = vshrl.u32 %v1932, 7
    %v1934 = vsub.s32 5, %v1933
    %v1935 = vrot.slane %v1910, %v1934
    %v1936 = vlaneseq
    %v1937 = vshrl.u32 %v1936, 7
    %v1938 = vsub.s32 6, %v1937
    %v1939 = vrot.slane %v1910, %v1938
    %v1940 = vlaneseq
    %v1941 = vshrl.u32 %v1940, 7
    %v1942 = vsub.s32 7, %v1941
    %v1943 = vrot.slane %v1910, %v1942
    %1952 = vmatprep.subr.mxu0 %v93
    %1953 = vmatpush1.msra.mxu0 %v92
    %1954 = vmatprep.subr.mxu0 %v101
    %1955 = vmatpush1.msra.mxu0 %v100
    %1956 = vmatprep.subr.mxu0 %v109
    %1957 = vmatpush1.msra.mxu0 %v108
    %1958 = vmatprep.subr.mxu0 %v117
    %1959 = vmatpush1.msra.mxu0 %v116
    %1960 = vmatprep.subr.mxu0 %v125
    %1961 = vmatpush1.msra.mxu0 %v124
    %1962 = vmatprep.subr.mxu0 %v133
    %1963 = vmatpush1.msra.mxu0 %v132
    %1964 = vmatprep.subr.mxu0 %v141
    %1965 = vmatpush1.msra.mxu0 %v140
    %1966 = vmatprep.subr.mxu0 %v149
    %1967 = vmatpush1.msra.mxu0 %v148
    %1968 = vmatprep.subr.mxu0 %v157
    %1969 = vmatpush1.msra.mxu0 %v156
    %1970 = vmatprep.subr.mxu0 %v165
    %1971 = vmatpush1.msra.mxu0 %v164
    %1972 = vmatprep.subr.mxu0 %v173
    %1973 = vmatpush1.msra.mxu0 %v172
    %1974 = vmatprep.subr.mxu0 %v181
    %1975 = vmatpush1.msra.mxu0 %v180
    %1976 = vmatprep.subr.mxu0 %v189
    %1977 = vmatpush1.msra.mxu0 %v188
    %1978 = vmatprep.subr.mxu0 %v197
    %1979 = vmatpush1.msra.mxu0 %v196
    %1980 = vmatprep.subr.mxu0 %v205
    %1981 = vmatpush1.msra.mxu0 %v204
    %1982 = vmatprep.subr.mxu0 %v213
    %1983 = vmatpush1.msra.mxu0 %v212
    %1984 = vmatprep.subr.mxu0 %v221
    %1985 = vmatpush1.msra.mxu0 %v220
    %1986 = vmatprep.subr.mxu0 %v229
    %1987 = vmatpush1.msra.mxu0 %v228
    %1988 = vmatprep.subr.mxu0 %v237
    %1989 = vmatpush1.msra.mxu0 %v236
    %1990 = vmatprep.subr.mxu0 %v245
    %1991 = vmatpush1.msra.mxu0 %v244
    %1992 = vmatprep.subr.mxu0 %v253
    %1993 = vmatpush1.msra.mxu0 %v252
    %1994 = vmatprep.subr.mxu0 %v261
    %1995 = vmatpush1.msra.mxu0 %v260
    %1996 = vmatprep.subr.mxu0 %v269
    %1997 = vmatpush1.msra.mxu0 %v268
    %1998 = vmatprep.subr.mxu0 %v277
    %1999 = vmatpush1.msra.mxu0 %v276
    %2000 = vmatprep.subr.mxu0 %v285
    %2001 = vmatpush1.msra.mxu0 %v284
    %2002 = vmatprep.subr.mxu0 %v293
    %2003 = vmatpush1.msra.mxu0 %v292
    %2004 = vmatprep.subr.mxu0 %v301
    %2005 = vmatpush1.msra.mxu0 %v300
    %2006 = vmatprep.subr.mxu0 %v309
    %2007 = vmatpush1.msra.mxu0 %v308
    %2008 = vmatprep.subr.mxu0 %v317
    %2009 = vmatpush1.msra.mxu0 %v316
    %2010 = vmatprep.subr.mxu0 %v325
    %2011 = vmatpush1.msra.mxu0 %v324
    %2012 = vmatprep.subr.mxu0 %v333
    %2013 = vmatpush1.msra.mxu0 %v332
    %2014 = vmatprep.subr.mxu0 %v341
    %2015 = vmatpush1.msra.mxu0 %v340
    %2016 = vmatprep.mubr.f32.mxu0 %v1885
    %2017 = vmatmul.mubr.f32.gmra.mrb[0].mxu0 %v1884
    %v2018 = vpop.f32.mrb[0].mxu0
    %v2019 = vadd.f32 %v1915, %v2018
    %v2020 = vpop.f32.mrb[0].mxu0
    %v2021 = vadd.f32 %v1919, %v2020
    %2022 = vdwg.mxu0
    %2023 = vmatprep.subr.mxu0 %v95
    %2024 = vmatpush1.msra.mxu0 %v94
    %2025 = vmatprep.subr.mxu0 %v103
    %2026 = vmatpush1.msra.mxu0 %v102
    %2027 = vmatprep.subr.mxu0 %v111
    %2028 = vmatpush1.msra.mxu0 %v110
    %2029 = vmatprep.subr.mxu0 %v119
    %2030 = vmatpush1.msra.mxu0 %v118
    %2031 = vmatprep.subr.mxu0 %v127
    %2032 = vmatpush1.msra.mxu0 %v126
    %2033 = vmatprep.subr.mxu0 %v135
    %2034 = vmatpush1.msra.mxu0 %v134
    %2035 = vmatprep.subr.mxu0 %v143
    %2036 = vmatpush1.msra.mxu0 %v142
    %2037 = vmatprep.subr.mxu0 %v151
    %2038 = vmatpush1.msra.mxu0 %v150
    %2039 = vmatprep.subr.mxu0 %v159
    %2040 = vmatpush1.msra.mxu0 %v158
    %2041 = vmatprep.subr.mxu0 %v167
    %2042 = vmatpush1.msra.mxu0 %v166
    %2043 = vmatprep.subr.mxu0 %v175
    %2044 = vmatpush1.msra.mxu0 %v174
    %2045 = vmatprep.subr.mxu0 %v183
    %2046 = vmatpush1.msra.mxu0 %v182
    %2047 = vmatprep.subr.mxu0 %v191
    %2048 = vmatpush1.msra.mxu0 %v190
    %2049 = vmatprep.subr.mxu0 %v199
    %2050 = vmatpush1.msra.mxu0 %v198
    %2051 = vmatprep.subr.mxu0 %v207
    %2052 = vmatpush1.msra.mxu0 %v206
    %2053 = vmatprep.subr.mxu0 %v215
    %2054 = vmatpush1.msra.mxu0 %v214
    %2055 = vmatprep.subr.mxu0 %v223
    %2056 = vmatpush1.msra.mxu0 %v222
    %2057 = vmatprep.subr.mxu0 %v231
    %2058 = vmatpush1.msra.mxu0 %v230
    %2059 = vmatprep.subr.mxu0 %v239
    %2060 = vmatpush1.msra.mxu0 %v238
    %2061 = vmatprep.subr.mxu0 %v247
    %2062 = vmatpush1.msra.mxu0 %v246
    %2063 = vmatprep.subr.mxu0 %v255
    %2064 = vmatpush1.msra.mxu0 %v254
    %2065 = vmatprep.subr.mxu0 %v263
    %2066 = vmatpush1.msra.mxu0 %v262
    %2067 = vmatprep.subr.mxu0 %v271
    %2068 = vmatpush1.msra.mxu0 %v270
    %2069 = vmatprep.subr.mxu0 %v279
    %2070 = vmatpush1.msra.mxu0 %v278
    %2071 = vmatprep.subr.mxu0 %v287
    %2072 = vmatpush1.msra.mxu0 %v286
    %2073 = vmatprep.subr.mxu0 %v295
    %2074 = vmatpush1.msra.mxu0 %v294
    %2075 = vmatprep.subr.mxu0 %v303
    %2076 = vmatpush1.msra.mxu0 %v302
    %2077 = vmatprep.subr.mxu0 %v311
    %2078 = vmatpush1.msra.mxu0 %v310
    %2079 = vmatprep.subr.mxu0 %v319
    %2080 = vmatpush1.msra.mxu0 %v318
    %2081 = vmatprep.subr.mxu0 %v327
    %2082 = vmatpush1.msra.mxu0 %v326
    %2083 = vmatprep.subr.mxu0 %v335
    %2084 = vmatpush1.msra.mxu0 %v334
    %2085 = vmatprep.subr.mxu0 %v343
    %2086 = vmatpush1.msra.mxu0 %v342
    %2087 = vmatprep.mubr.f32.mxu0 %v1885
    %2088 = vmatmul.mubr.f32.gmra.mrb[0].mxu0 %v1884
    %v2089 = vpop.f32.mrb[0].mxu0
    %v2090 = vadd.f32 %v1923, %v2089
    %v2091 = vpop.f32.mrb[0].mxu0
    %v2092 = vadd.f32 %v1927, %v2091
    %2093 = vdwg.mxu0
    %2094 = vmatprep.subr.mxu0 %v97
    %2095 = vmatpush1.msra.mxu0 %v96
    %2096 = vmatprep.subr.mxu0 %v105
    %2097 = vmatpush1.msra.mxu0 %v104
    %2098 = vmatprep.subr.mxu0 %v113
    %2099 = vmatpush1.msra.mxu0 %v112
    %2100 = vmatprep.subr.mxu0 %v121
    %2101 = vmatpush1.msra.mxu0 %v120
    %2102 = vmatprep.subr.mxu0 %v129
    %2103 = vmatpush1.msra.mxu0 %v128
    %2104 = vmatprep.subr.mxu0 %v137
    %2105 = vmatpush1.msra.mxu0 %v136
    %2106 = vmatprep.subr.mxu0 %v145
    %2107 = vmatpush1.msra.mxu0 %v144
    %2108 = vmatprep.subr.mxu0 %v153
    %2109 = vmatpush1.msra.mxu0 %v152
    %2110 = vmatprep.subr.mxu0 %v161
    %2111 = vmatpush1.msra.mxu0 %v160
    %2112 = vmatprep.subr.mxu0 %v169
    %2113 = vmatpush1.msra.mxu0 %v168
    %2114 = vmatprep.subr.mxu0 %v177
    %2115 = vmatpush1.msra.mxu0 %v176
    %2116 = vmatprep.subr.mxu0 %v185
    %2117 = vmatpush1.msra.mxu0 %v184
    %2118 = vmatprep.subr.mxu0 %v193
    %2119 = vmatpush1.msra.mxu0 %v192
    %2120 = vmatprep.subr.mxu0 %v201
    %2121 = vmatpush1.msra.mxu0 %v200
    %2122 = vmatprep.subr.mxu0 %v209
    %2123 = vmatpush1.msra.mxu0 %v208
    %2124 = vmatprep.subr.mxu0 %v217
    %2125 = vmatpush1.msra.mxu0 %v216
    %2126 = vmatprep.subr.mxu0 %v225
    %2127 = vmatpush1.msra.mxu0 %v224
    %2128 = vmatprep.subr.mxu0 %v233
    %2129 = vmatpush1.msra.mxu0 %v232
    %2130 = vmatprep.subr.mxu0 %v241
    %2131 = vmatpush1.msra.mxu0 %v240
    %2132 = vmatprep.subr.mxu0 %v249
    %2133 = vmatpush1.msra.mxu0 %v248
    %2134 = vmatprep.subr.mxu0 %v257
    %2135 = vmatpush1.msra.mxu0 %v256
    %2136 = vmatprep.subr.mxu0 %v265
    %2137 = vmatpush1.msra.mxu0 %v264
    %2138 = vmatprep.subr.mxu0 %v273
    %2139 = vmatpush1.msra.mxu0 %v272
    %2140 = vmatprep.subr.mxu0 %v281
    %2141 = vmatpush1.msra.mxu0 %v280
    %2142 = vmatprep.subr.mxu0 %v289
    %2143 = vmatpush1.msra.mxu0 %v288
    %2144 = vmatprep.subr.mxu0 %v297
    %2145 = vmatpush1.msra.mxu0 %v296
    %2146 = vmatprep.subr.mxu0 %v305
    %2147 = vmatpush1.msra.mxu0 %v304
    %2148 = vmatprep.subr.mxu0 %v313
    %2149 = vmatpush1.msra.mxu0 %v312
    %2150 = vmatprep.subr.mxu0 %v321
    %2151 = vmatpush1.msra.mxu0 %v320
    %2152 = vmatprep.subr.mxu0 %v329
    %2153 = vmatpush1.msra.mxu0 %v328
    %2154 = vmatprep.subr.mxu0 %v337
    %2155 = vmatpush1.msra.mxu0 %v336
    %2156 = vmatprep.subr.mxu0 %v345
    %2157 = vmatpush1.msra.mxu0 %v344
    %2158 = vmatprep.mubr.f32.mxu0 %v1885
    %2159 = vmatmul.mubr.f32.gmra.mrb[0].mxu0 %v1884
    %v2160 = vpop.f32.mrb[0].mxu0
    %v2161 = vadd.f32 %v1931, %v2160
    %v2162 = vpop.f32.mrb[0].mxu0
    %v2163 = vadd.f32 %v1935, %v2162
    %2164 = vdwg.mxu0
    %2165 = vmatprep.subr.mxu0 %v99
    %2166 = vmatpush1.msra.mxu0 %v98
    %2167 = vmatprep.subr.mxu0 %v107
    %2168 = vmatpush1.msra.mxu0 %v106
    %2169 = vmatprep.subr.mxu0 %v115
    %2170 = vmatpush1.msra.mxu0 %v114
    %2171 = vmatprep.subr.mxu0 %v123
    %2172 = vmatpush1.msra.mxu0 %v122
    %2173 = vmatprep.subr.mxu0 %v131
    %2174 = vmatpush1.msra.mxu0 %v130
    %2175 = vmatprep.subr.mxu0 %v139
    %2176 = vmatpush1.msra.mxu0 %v138
    %2177 = vmatprep.subr.mxu0 %v147
    %2178 = vmatpush1.msra.mxu0 %v146
    %2179 = vmatprep.subr.mxu0 %v155
    %2180 = vmatpush1.msra.mxu0 %v154
    %2181 = vmatprep.subr.mxu0 %v163
    %2182 = vmatpush1.msra.mxu0 %v162
    %2183 = vmatprep.subr.mxu0 %v171
    %2184 = vmatpush1.msra.mxu0 %v170
    %2185 = vmatprep.subr.mxu0 %v179
    %2186 = vmatpush1.msra.mxu0 %v178
    %2187 = vmatprep.subr.mxu0 %v187
    %2188 = vmatpush1.msra.mxu0 %v186
    %2189 = vmatprep.subr.mxu0 %v195
    %2190 = vmatpush1.msra.mxu0 %v194
    %2191 = vmatprep.subr.mxu0 %v203
    %2192 = vmatpush1.msra.mxu0 %v202
    %2193 = vmatprep.subr.mxu0 %v211
    %2194 = vmatpush1.msra.mxu0 %v210
    %2195 = vmatprep.subr.mxu0 %v219
    %2196 = vmatpush1.msra.mxu0 %v218
    %2197 = vmatprep.subr.mxu0 %v227
    %2198 = vmatpush1.msra.mxu0 %v226
    %2199 = vmatprep.subr.mxu0 %v235
    %2200 = vmatpush1.msra.mxu0 %v234
    %2201 = vmatprep.subr.mxu0 %v243
    %2202 = vmatpush1.msra.mxu0 %v242
    %2203 = vmatprep.subr.mxu0 %v251
    %2204 = vmatpush1.msra.mxu0 %v250
    %2205 = vmatprep.subr.mxu0 %v259
    %2206 = vmatpush1.msra.mxu0 %v258
    %2207 = vmatprep.subr.mxu0 %v267
    %2208 = vmatpush1.msra.mxu0 %v266
    %2209 = vmatprep.subr.mxu0 %v275
    %2210 = vmatpush1.msra.mxu0 %v274
    %2211 = vmatprep.subr.mxu0 %v283
    %2212 = vmatpush1.msra.mxu0 %v282
    %2213 = vmatprep.subr.mxu0 %v291
    %2214 = vmatpush1.msra.mxu0 %v290
    %2215 = vmatprep.subr.mxu0 %v299
    %2216 = vmatpush1.msra.mxu0 %v298
    %2217 = vmatprep.subr.mxu0 %v307
    %2218 = vmatpush1.msra.mxu0 %v306
    %2219 = vmatprep.subr.mxu0 %v315
    %2220 = vmatpush1.msra.mxu0 %v314
    %2221 = vmatprep.subr.mxu0 %v323
    %2222 = vmatpush1.msra.mxu0 %v322
    %2223 = vmatprep.subr.mxu0 %v331
    %2224 = vmatpush1.msra.mxu0 %v330
    %2225 = vmatprep.subr.mxu0 %v339
    %2226 = vmatpush1.msra.mxu0 %v338
    %2227 = vmatprep.subr.mxu0 %v347
    %2228 = vmatpush1.msra.mxu0 %v346
    %2229 = vmatprep.mubr.f32.mxu0 %v1885
    %2230 = vmatmul.mubr.f32.gmra.mrb[0].mxu0 %v1884
    %v2231 = vpop.f32.mrb[0].mxu0
    %v2232 = vadd.f32 %v1939, %v2231
    %v2233 = vpop.f32.mrb[0].mxu0
    %v2234 = vadd.f32 %v1943, %v2233
    %2235 = vdwg.mxu0
    %v2236 = vxor.u32 %v2019, 2147483648
    %v2237 = vxor.u32 %v2021, 2147483648
    %v2238 = vmul.f32 %v2236, 1.442695
    %v2239 = vpow.pop %v2238
    %v2240 = vmul.f32 %v2237, 1.442695
    %v2241 = vpow.pop %v2240
    %v2242 = vadd.f32 %v2239, 1.0
    %v2243 = vadd.f32 %v2241, 1.0
    %v2244 = vrcp.pop %v2242
    %v2245 = vmul.f32 1.0, %v2244
    %v2246 = vrcp.pop %v2243
    %v2247 = vmul.f32 1.0, %v2246
    %v2248 = vxor.u32 %v2090, 2147483648
    %v2249 = vxor.u32 %v2092, 2147483648
    %v2250 = vmul.f32 %v2248, 1.442695
    %v2251 = vpow.pop %v2250
    %v2252 = vmul.f32 %v2249, 1.442695
    %v2253 = vpow.pop %v2252
    %v2254 = vadd.f32 %v2251, 1.0
    %v2255 = vadd.f32 %v2253, 1.0
    %v2256 = vrcp.pop %v2254
    %v2257 = vmul.f32 1.0, %v2256
    %v2258 = vrcp.pop %v2255
    %v2259 = vmul.f32 1.0, %v2258
    %v2260 = vtanh.pop %v2161
    %v2261 = vtanh.pop %v2163
    %v2262 = vxor.u32 %v2232, 2147483648
    %v2263 = vxor.u32 %v2234, 2147483648
    %v2264 = vmul.f32 %v2262, 1.442695
    %v2265 = vpow.pop %v2264
    %v2266 = vmul.f32 %v2263, 1.442695
    %v2267 = vpow.pop %v2266
    %v2268 = vadd.f32 %v2265, 1.0
    %v2269 = vadd.f32 %v2267, 1.0
    %v2270 = vrcp.pop %v2268
    %v2271 = vmul.f32 1.0, %v2270
    %v2272 = vrcp.pop %v2269
    %v2273 = vmul.f32 1.0, %v2272
    %v2274 = vmul.f32 %v2257, %v1880
    %v2275 = vmul.f32 %v2259, %v1881
    %v2276 = vmul.f32 %v2245, %v2260
    %v2277 = vmul.f32 %v2247, %v2261
    %v2278 = vadd.f32 %v2274, %v2276
    %v2279 = vadd.f32 %v2275, %v2277
    %v2280 = vtanh.pop %v2278
    %v2281 = vtanh.pop %v2279
    %v2282 = vmul.f32 %v2271, %v2280
    %v2283 = vmul.f32 %v2273, %v2281
    %v2286 = vcombine.low %v2282, %v2283
    %v2288 = vunpack.c.l.s4 1966171168
    %v2289 = vunpack.c.0.s8 %v2288
    %v2290 = vlaneseq
    %v2291 = vshrl.u32 %v2290, 7
    %v2292 = vsub.s32 %v2289, %v2291
    %v2293 = vrot.slane %v2286, %v2292
    %v2295 = vunpack.c.l.s4 1966171168
    %v2296 = vunpack.c.0.s8 %v2295
    %v2297 = vlaneseq
    %v2298 = vshrl.u32 %v2297, 7
    %v2299 = vsub.s32 %v2296, %v2298
    %v2300 = vrot.slane %v2293, %v2299
    %s2302 = scalar_lea.vmem [#allocation3], 3
    %2303 = vst.msk [vmem:[%s2302] ss:$8 sm:$0x3] %vm1108, %v2300
    %2304 = vst.msk [vmem:[%s2302] ss:$8 sm:$0x0] %vm1108, %v2300
    %s2305 = scalar_lea.vmem [#allocation2], 4
    %v2306 = vld [vmem:[%s2305] ss:$8 sm:$0xf]
    %v2307 = vld [vmem:[%s2305] ss:$8 sm:$0xf0]
    %v2308 = vor.u32 %v2306, %v2307
    %v2310 = vlaneseq
    %v2311 = vshrl.u32 %v2310, 7
    %v2312 = vsub.s32 0, %v2311
    %v2313 = vrot.slane %v2308, %v2312
    %v2314 = vlaneseq
    %v2315 = vshrl.u32 %v2314, 7
    %v2316 = vsub.s32 1, %v2315
    %v2317 = vrot.slane %v2308, %v2316
    %v2318 = vlaneseq
    %v2319 = vshrl.u32 %v2318, 7
    %v2320 = vsub.s32 2, %v2319
    %v2321 = vrot.slane %v2308, %v2320
    %v2322 = vlaneseq
    %v2323 = vshrl.u32 %v2322, 7
    %v2324 = vsub.s32 3, %v2323
    %v2325 = vrot.slane %v2308, %v2324
    %v2326 = vlaneseq
    %v2327 = vshrl.u32 %v2326, 7
    %v2328 = vsub.s32 4, %v2327
    %v2329 = vrot.slane %v2308, %v2328
    %v2330 = vlaneseq
    %v2331 = vshrl.u32 %v2330, 7
    %v2332 = vsub.s32 5, %v2331
    %v2333 = vrot.slane %v2308, %v2332
    %v2334 = vlaneseq
    %v2335 = vshrl.u32 %v2334, 7
    %v2336 = vsub.s32 6, %v2335
    %v2337 = vrot.slane %v2308, %v2336
    %v2338 = vlaneseq
    %v2339 = vshrl.u32 %v2338, 7
    %v2340 = vsub.s32 7, %v2339
    %v2341 = vrot.slane %v2308, %v2340
    %2350 = vmatprep.subr.mxu0 %v93
    %2351 = vmatpush1.msra.mxu0 %v92
    %2352 = vmatprep.subr.mxu0 %v101
    %2353 = vmatpush1.msra.mxu0 %v100
    %2354 = vmatprep.subr.mxu0 %v109
    %2355 = vmatpush1.msra.mxu0 %v108
    %2356 = vmatprep.subr.mxu0 %v117
    %2357 = vmatpush1.msra.mxu0 %v116
    %2358 = vmatprep.subr.mxu0 %v125
    %2359 = vmatpush1.msra.mxu0 %v124
    %2360 = vmatprep.subr.mxu0 %v133
    %2361 = vmatpush1.msra.mxu0 %v132
    %2362 = vmatprep.subr.mxu0 %v141
    %2363 = vmatpush1.msra.mxu0 %v140
    %2364 = vmatprep.subr.mxu0 %v149
    %2365 = vmatpush1.msra.mxu0 %v148
    %2366 = vmatprep.subr.mxu0 %v157
    %2367 = vmatpush1.msra.mxu0 %v156
    %2368 = vmatprep.subr.mxu0 %v165
    %2369 = vmatpush1.msra.mxu0 %v164
    %2370 = vmatprep.subr.mxu0 %v173
    %2371 = vmatpush1.msra.mxu0 %v172
    %2372 = vmatprep.subr.mxu0 %v181
    %2373 = vmatpush1.msra.mxu0 %v180
    %2374 = vmatprep.subr.mxu0 %v189
    %2375 = vmatpush1.msra.mxu0 %v188
    %2376 = vmatprep.subr.mxu0 %v197
    %2377 = vmatpush1.msra.mxu0 %v196
    %2378 = vmatprep.subr.mxu0 %v205
    %2379 = vmatpush1.msra.mxu0 %v204
    %2380 = vmatprep.subr.mxu0 %v213
    %2381 = vmatpush1.msra.mxu0 %v212
    %2382 = vmatprep.subr.mxu0 %v221
    %2383 = vmatpush1.msra.mxu0 %v220
    %2384 = vmatprep.subr.mxu0 %v229
    %2385 = vmatpush1.msra.mxu0 %v228
    %2386 = vmatprep.subr.mxu0 %v237
    %2387 = vmatpush1.msra.mxu0 %v236
    %2388 = vmatprep.subr.mxu0 %v245
    %2389 = vmatpush1.msra.mxu0 %v244
    %2390 = vmatprep.subr.mxu0 %v253
    %2391 = vmatpush1.msra.mxu0 %v252
    %2392 = vmatprep.subr.mxu0 %v261
    %2393 = vmatpush1.msra.mxu0 %v260
    %2394 = vmatprep.subr.mxu0 %v269
    %2395 = vmatpush1.msra.mxu0 %v268
    %2396 = vmatprep.subr.mxu0 %v277
    %2397 = vmatpush1.msra.mxu0 %v276
    %2398 = vmatprep.subr.mxu0 %v285
    %2399 = vmatpush1.msra.mxu0 %v284
    %2400 = vmatprep.subr.mxu0 %v293
    %2401 = vmatpush1.msra.mxu0 %v292
    %2402 = vmatprep.subr.mxu0 %v301
    %2403 = vmatpush1.msra.mxu0 %v300
    %2404 = vmatprep.subr.mxu0 %v309
    %2405 = vmatpush1.msra.mxu0 %v308
    %2406 = vmatprep.subr.mxu0 %v317
    %2407 = vmatpush1.msra.mxu0 %v316
    %2408 = vmatprep.subr.mxu0 %v325
    %2409 = vmatpush1.msra.mxu0 %v324
    %2410 = vmatprep.subr.mxu0 %v333
    %2411 = vmatpush1.msra.mxu0 %v332
    %2412 = vmatprep.subr.mxu0 %v341
    %2413 = vmatpush1.msra.mxu0 %v340
    %2414 = vmatprep.mubr.f32.mxu0 %v2283
    %2415 = vmatmul.mubr.f32.gmra.mrb[0].mxu0 %v2282
    %v2416 = vpop.f32.mrb[0].mxu0
    %v2417 = vadd.f32 %v2313, %v2416
    %v2418 = vpop.f32.mrb[0].mxu0
    %v2419 = vadd.f32 %v2317, %v2418
    %2420 = vdwg.mxu0
    %2421 = vmatprep.subr.mxu0 %v95
    %2422 = vmatpush1.msra.mxu0 %v94
    %2423 = vmatprep.subr.mxu0 %v103
    %2424 = vmatpush1.msra.mxu0 %v102
    %2425 = vmatprep.subr.mxu0 %v111
    %2426 = vmatpush1.msra.mxu0 %v110
    %2427 = vmatprep.subr.mxu0 %v119
    %2428 = vmatpush1.msra.mxu0 %v118
    %2429 = vmatprep.subr.mxu0 %v127
    %2430 = vmatpush1.msra.mxu0 %v126
    %2431 = vmatprep.subr.mxu0 %v135
    %2432 = vmatpush1.msra.mxu0 %v134
    %2433 = vmatprep.subr.mxu0 %v143
    %2434 = vmatpush1.msra.mxu0 %v142
    %2435 = vmatprep.subr.mxu0 %v151
    %2436 = vmatpush1.msra.mxu0 %v150
    %2437 = vmatprep.subr.mxu0 %v159
    %2438 = vmatpush1.msra.mxu0 %v158
    %2439 = vmatprep.subr.mxu0 %v167
    %2440 = vmatpush1.msra.mxu0 %v166
    %2441 = vmatprep.subr.mxu0 %v175
    %2442 = vmatpush1.msra.mxu0 %v174
    %2443 = vmatprep.subr.mxu0 %v183
    %2444 = vmatpush1.msra.mxu0 %v182
    %2445 = vmatprep.subr.mxu0 %v191
    %2446 = vmatpush1.msra.mxu0 %v190
    %2447 = vmatprep.subr.mxu0 %v199
    %2448 = vmatpush1.msra.mxu0 %v198
    %2449 = vmatprep.subr.mxu0 %v207
    %2450 = vmatpush1.msra.mxu0 %v206
    %2451 = vmatprep.subr.mxu0 %v215
    %2452 = vmatpush1.msra.mxu0 %v214
    %2453 = vmatprep.subr.mxu0 %v223
    %2454 = vmatpush1.msra.mxu0 %v222
    %2455 = vmatprep.subr.mxu0 %v231
    %2456 = vmatpush1.msra.mxu0 %v230
    %2457 = vmatprep.subr.mxu0 %v239
    %2458 = vmatpush1.msra.mxu0 %v238
    %2459 = vmatprep.subr.mxu0 %v247
    %2460 = vmatpush1.msra.mxu0 %v246
    %2461 = vmatprep.subr.mxu0 %v255
    %2462 = vmatpush1.msra.mxu0 %v254
    %2463 = vmatprep.subr.mxu0 %v263
    %2464 = vmatpush1.msra.mxu0 %v262
    %2465 = vmatprep.subr.mxu0 %v271
    %2466 = vmatpush1.msra.mxu0 %v270
    %2467 = vmatprep.subr.mxu0 %v279
    %2468 = vmatpush1.msra.mxu0 %v278
    %2469 = vmatprep.subr.mxu0 %v287
    %2470 = vmatpush1.msra.mxu0 %v286
    %2471 = vmatprep.subr.mxu0 %v295
    %2472 = vmatpush1.msra.mxu0 %v294
    %2473 = vmatprep.subr.mxu0 %v303
    %2474 = vmatpush1.msra.mxu0 %v302
    %2475 = vmatprep.subr.mxu0 %v311
    %2476 = vmatpush1.msra.mxu0 %v310
    %2477 = vmatprep.subr.mxu0 %v319
    %2478 = vmatpush1.msra.mxu0 %v318
    %2479 = vmatprep.subr.mxu0 %v327
    %2480 = vmatpush1.msra.mxu0 %v326
    %2481 = vmatprep.subr.mxu0 %v335
    %2482 = vmatpush1.msra.mxu0 %v334
    %2483 = vmatprep.subr.mxu0 %v343
    %2484 = vmatpush1.msra.mxu0 %v342
    %2485 = vmatprep.mubr.f32.mxu0 %v2283
    %2486 = vmatmul.mubr.f32.gmra.mrb[0].mxu0 %v2282
    %v2487 = vpop.f32.mrb[0].mxu0
    %v2488 = vadd.f32 %v2321, %v2487
    %v2489 = vpop.f32.mrb[0].mxu0
    %v2490 = vadd.f32 %v2325, %v2489
    %2491 = vdwg.mxu0
    %2492 = vmatprep.subr.mxu0 %v97
    %2493 = vmatpush1.msra.mxu0 %v96
    %2494 = vmatprep.subr.mxu0 %v105
    %2495 = vmatpush1.msra.mxu0 %v104
    %2496 = vmatprep.subr.mxu0 %v113
    %2497 = vmatpush1.msra.mxu0 %v112
    %2498 = vmatprep.subr.mxu0 %v121
    %2499 = vmatpush1.msra.mxu0 %v120
    %2500 = vmatprep.subr.mxu0 %v129
    %2501 = vmatpush1.msra.mxu0 %v128
    %2502 = vmatprep.subr.mxu0 %v137
    %2503 = vmatpush1.msra.mxu0 %v136
    %2504 = vmatprep.subr.mxu0 %v145
    %2505 = vmatpush1.msra.mxu0 %v144
    %2506 = vmatprep.subr.mxu0 %v153
    %2507 = vmatpush1.msra.mxu0 %v152
    %2508 = vmatprep.subr.mxu0 %v161
    %2509 = vmatpush1.msra.mxu0 %v160
    %2510 = vmatprep.subr.mxu0 %v169
    %2511 = vmatpush1.msra.mxu0 %v168
    %2512 = vmatprep.subr.mxu0 %v177
    %2513 = vmatpush1.msra.mxu0 %v176
    %2514 = vmatprep.subr.mxu0 %v185
    %2515 = vmatpush1.msra.mxu0 %v184
    %2516 = vmatprep.subr.mxu0 %v193
    %2517 = vmatpush1.msra.mxu0 %v192
    %2518 = vmatprep.subr.mxu0 %v201
    %2519 = vmatpush1.msra.mxu0 %v200
    %2520 = vmatprep.subr.mxu0 %v209
    %2521 = vmatpush1.msra.mxu0 %v208
    %2522 = vmatprep.subr.mxu0 %v217
    %2523 = vmatpush1.msra.mxu0 %v216
    %2524 = vmatprep.subr.mxu0 %v225
    %2525 = vmatpush1.msra.mxu0 %v224
    %2526 = vmatprep.subr.mxu0 %v233
    %2527 = vmatpush1.msra.mxu0 %v232
    %2528 = vmatprep.subr.mxu0 %v241
    %2529 = vmatpush1.msra.mxu0 %v240
    %2530 = vmatprep.subr.mxu0 %v249
    %2531 = vmatpush1.msra.mxu0 %v248
    %2532 = vmatprep.subr.mxu0 %v257
    %2533 = vmatpush1.msra.mxu0 %v256
    %2534 = vmatprep.subr.mxu0 %v265
    %2535 = vmatpush1.msra.mxu0 %v264
    %2536 = vmatprep.subr.mxu0 %v273
    %2537 = vmatpush1.msra.mxu0 %v272
    %2538 = vmatprep.subr.mxu0 %v281
    %2539 = vmatpush1.msra.mxu0 %v280
    %2540 = vmatprep.subr.mxu0 %v289
    %2541 = vmatpush1.msra.mxu0 %v288
    %2542 = vmatprep.subr.mxu0 %v297
    %2543 = vmatpush1.msra.mxu0 %v296
    %2544 = vmatprep.subr.mxu0 %v305
    %2545 = vmatpush1.msra.mxu0 %v304
    %2546 = vmatprep.subr.mxu0 %v313
    %2547 = vmatpush1.msra.mxu0 %v312
    %2548 = vmatprep.subr.mxu0 %v321
    %2549 = vmatpush1.msra.mxu0 %v320
    %2550 = vmatprep.subr.mxu0 %v329
    %2551 = vmatpush1.msra.mxu0 %v328
    %2552 = vmatprep.subr.mxu0 %v337
    %2553 = vmatpush1.msra.mxu0 %v336
    %2554 = vmatprep.subr.mxu0 %v345
    %2555 = vmatpush1.msra.mxu0 %v344
    %2556 = vmatprep.mubr.f32.mxu0 %v2283
    %2557 = vmatmul.mubr.f32.gmra.mrb[0].mxu0 %v2282
    %v2558 = vpop.f32.mrb[0].mxu0
    %v2559 = vadd.f32 %v2329, %v2558
    %v2560 = vpop.f32.mrb[0].mxu0
    %v2561 = vadd.f32 %v2333, %v2560
    %2562 = vdwg.mxu0
    %2563 = vmatprep.subr.mxu0 %v99
    %2564 = vmatpush1.msra.mxu0 %v98
    %2565 = vmatprep.subr.mxu0 %v107
    %2566 = vmatpush1.msra.mxu0 %v106
    %2567 = vmatprep.subr.mxu0 %v115
    %2568 = vmatpush1.msra.mxu0 %v114
    %2569 = vmatprep.subr.mxu0 %v123
    %2570 = vmatpush1.msra.mxu0 %v122
    %2571 = vmatprep.subr.mxu0 %v131
    %2572 = vmatpush1.msra.mxu0 %v130
    %2573 = vmatprep.subr.mxu0 %v139
    %2574 = vmatpush1.msra.mxu0 %v138
    %2575 = vmatprep.subr.mxu0 %v147
    %2576 = vmatpush1.msra.mxu0 %v146
    %2577 = vmatprep.subr.mxu0 %v155
    %2578 = vmatpush1.msra.mxu0 %v154
    %2579 = vmatprep.subr.mxu0 %v163
    %2580 = vmatpush1.msra.mxu0 %v162
    %2581 = vmatprep.subr.mxu0 %v171
    %2582 = vmatpush1.msra.mxu0 %v170
    %2583 = vmatprep.subr.mxu0 %v179
    %2584 = vmatpush1.msra.mxu0 %v178
    %2585 = vmatprep.subr.mxu0 %v187
    %2586 = vmatpush1.msra.mxu0 %v186
    %2587 = vmatprep.subr.mxu0 %v195
    %2588 = vmatpush1.msra.mxu0 %v194
    %2589 = vmatprep.subr.mxu0 %v203
    %2590 = vmatpush1.msra.mxu0 %v202
    %2591 = vmatprep.subr.mxu0 %v211
    %2592 = vmatpush1.msra.mxu0 %v210
    %2593 = vmatprep.subr.mxu0 %v219
    %2594 = vmatpush1.msra.mxu0 %v218
    %2595 = vmatprep.subr.mxu0 %v227
    %2596 = vmatpush1.msra.mxu0 %v226
    %2597 = vmatprep.subr.mxu0 %v235
    %2598 = vmatpush1.msra.mxu0 %v234
    %2599 = vmatprep.subr.mxu0 %v243
    %2600 = vmatpush1.msra.mxu0 %v242
    %2601 = vmatprep.subr.mxu0 %v251
    %2602 = vmatpush1.msra.mxu0 %v250
    %2603 = vmatprep.subr.mxu0 %v259
    %2604 = vmatpush1.msra.mxu0 %v258
    %2605 = vmatprep.subr.mxu0 %v267
    %2606 = vmatpush1.msra.mxu0 %v266
    %2607 = vmatprep.subr.mxu0 %v275
    %2608 = vmatpush1.msra.mxu0 %v274
    %2609 = vmatprep.subr.mxu0 %v283
    %2610 = vmatpush1.msra.mxu0 %v282
    %2611 = vmatprep.subr.mxu0 %v291
    %2612 = vmatpush1.msra.mxu0 %v290
    %2613 = vmatprep.subr.mxu0 %v299
    %2614 = vmatpush1.msra.mxu0 %v298
    %2615 = vmatprep.subr.mxu0 %v307
    %2616 = vmatpush1.msra.mxu0 %v306
    %2617 = vmatprep.subr.mxu0 %v315
    %2618 = vmatpush1.msra.mxu0 %v314
    %2619 = vmatprep.subr.mxu0 %v323
    %2620 = vmatpush1.msra.mxu0 %v322
    %2621 = vmatprep.subr.mxu0 %v331
    %2622 = vmatpush1.msra.mxu0 %v330
    %2623 = vmatprep.subr.mxu0 %v339
    %2624 = vmatpush1.msra.mxu0 %v338
    %2625 = vmatprep.subr.mxu0 %v347
    %2626 = vmatpush1.msra.mxu0 %v346
    %2627 = vmatprep.mubr.f32.mxu0 %v2283
    %2628 = vmatmul.mubr.f32.gmra.mrb[0].mxu0 %v2282
    %v2629 = vpop.f32.mrb[0].mxu0
    %v2630 = vadd.f32 %v2337, %v2629
    %v2631 = vpop.f32.mrb[0].mxu0
    %v2632 = vadd.f32 %v2341, %v2631
    %2633 = vdwg.mxu0
    %v2634 = vxor.u32 %v2417, 2147483648
    %v2635 = vxor.u32 %v2419, 2147483648
    %v2636 = vmul.f32 %v2634, 1.442695
    %v2637 = vpow.pop %v2636
    %v2638 = vmul.f32 %v2635, 1.442695
    %v2639 = vpow.pop %v2638
    %v2640 = vadd.f32 %v2637, 1.0
    %v2641 = vadd.f32 %v2639, 1.0
    %v2642 = vrcp.pop %v2640
    %v2643 = vmul.f32 1.0, %v2642
    %v2644 = vrcp.pop %v2641
    %v2645 = vmul.f32 1.0, %v2644
    %v2646 = vxor.u32 %v2488, 2147483648
    %v2647 = vxor.u32 %v2490, 2147483648
    %v2648 = vmul.f32 %v2646, 1.442695
    %v2649 = vpow.pop %v2648
    %v2650 = vmul.f32 %v2647, 1.442695
    %v2651 = vpow.pop %v2650
    %v2652 = vadd.f32 %v2649, 1.0
    %v2653 = vadd.f32 %v2651, 1.0
    %v2654 = vrcp.pop %v2652
    %v2655 = vmul.f32 1.0, %v2654
    %v2656 = vrcp.pop %v2653
    %v2657 = vmul.f32 1.0, %v2656
    %v2658 = vtanh.pop %v2559
    %v2659 = vtanh.pop %v2561
    %v2660 = vxor.u32 %v2630, 2147483648
    %v2661 = vxor.u32 %v2632, 2147483648
    %v2662 = vmul.f32 %v2660, 1.442695
    %v2663 = vpow.pop %v2662
    %v2664 = vmul.f32 %v2661, 1.442695
    %v2665 = vpow.pop %v2664
    %v2666 = vadd.f32 %v2663, 1.0
    %v2667 = vadd.f32 %v2665, 1.0
    %v2668 = vrcp.pop %v2666
    %v2669 = vmul.f32 1.0, %v2668
    %v2670 = vrcp.pop %v2667
    %v2671 = vmul.f32 1.0, %v2670
    %v2672 = vmul.f32 %v2655, %v2278
    %v2673 = vmul.f32 %v2657, %v2279
    %v2674 = vmul.f32 %v2643, %v2658
    %v2675 = vmul.f32 %v2645, %v2659
    %v2676 = vadd.f32 %v2672, %v2674
    %v2677 = vadd.f32 %v2673, %v2675
    %v2678 = vtanh.pop %v2676
    %v2679 = vtanh.pop %v2677
    %v2680 = vmul.f32 %v2669, %v2678
    %v2681 = vmul.f32 %v2671, %v2679
    %v2684 = vcombine.low %v2680, %v2681
    %v2686 = vunpack.c.l.s4 1966171168
    %v2687 = vunpack.c.0.s8 %v2686
    %v2688 = vlaneseq
    %v2689 = vshrl.u32 %v2688, 7
    %v2690 = vsub.s32 %v2687, %v2689
    %v2691 = vrot.slane %v2684, %v2690
    %v2693 = vunpack.c.l.s4 1966171168
    %v2694 = vunpack.c.0.s8 %v2693
    %v2695 = vlaneseq
    %v2696 = vshrl.u32 %v2695, 7
    %v2697 = vsub.s32 %v2694, %v2696
    %v2698 = vrot.slane %v2691, %v2697
    %s2700 = scalar_lea.vmem [#allocation3], 4
    %2701 = vst.msk [vmem:[%s2700] ss:$8 sm:$0x3] %vm1108, %v2698
    %2702 = vst.msk [vmem:[%s2700] ss:$8 sm:$0x0] %vm1108, %v2698
    %s2703 = scalar_lea.vmem [#allocation2], 5
    %v2704 = vld [vmem:[%s2703] ss:$8 sm:$0xf]
    %v2705 = vld [vmem:[%s2703] ss:$8 sm:$0xf0]
    %v2706 = vor.u32 %v2704, %v2705
    %v2708 = vlaneseq
    %v2709 = vshrl.u32 %v2708, 7
    %v2710 = vsub.s32 0, %v2709
    %v2711 = vrot.slane %v2706, %v2710
    %v2712 = vlaneseq
    %v2713 = vshrl.u32 %v2712, 7
    %v2714 = vsub.s32 1, %v2713
    %v2715 = vrot.slane %v2706, %v2714
    %v2716 = vlaneseq
    %v2717 = vshrl.u32 %v2716, 7
    %v2718 = vsub.s32 2, %v2717
    %v2719 = vrot.slane %v2706, %v2718
    %v2720 = vlaneseq
    %v2721 = vshrl.u32 %v2720, 7
    %v2722 = vsub.s32 3, %v2721
    %v2723 = vrot.slane %v2706, %v2722
    %v2724 = vlaneseq
    %v2725 = vshrl.u32 %v2724, 7
    %v2726 = vsub.s32 4, %v2725
    %v2727 = vrot.slane %v2706, %v2726
    %v2728 = vlaneseq
    %v2729 = vshrl.u32 %v2728, 7
    %v2730 = vsub.s32 5, %v2729
    %v2731 = vrot.slane %v2706, %v2730
    %v2732 = vlaneseq
    %v2733 = vshrl.u32 %v2732, 7
    %v2734 = vsub.s32 6, %v2733
    %v2735 = vrot.slane %v2706, %v2734
    %v2736 = vlaneseq
    %v2737 = vshrl.u32 %v2736, 7
    %v2738 = vsub.s32 7, %v2737
    %v2739 = vrot.slane %v2706, %v2738
    %2748 = vmatprep.subr.mxu0 %v93
    %2749 = vmatpush1.msra.mxu0 %v92
    %2750 = vmatprep.subr.mxu0 %v101
    %2751 = vmatpush1.msra.mxu0 %v100
    %2752 = vmatprep.subr.mxu0 %v109
    %2753 = vmatpush1.msra.mxu0 %v108
    %2754 = vmatprep.subr.mxu0 %v117
    %2755 = vmatpush1.msra.mxu0 %v116
    %2756 = vmatprep.subr.mxu0 %v125
    %2757 = vmatpush1.msra.mxu0 %v124
    %2758 = vmatprep.subr.mxu0 %v133
    %2759 = vmatpush1.msra.mxu0 %v132
    %2760 = vmatprep.subr.mxu0 %v141
    %2761 = vmatpush1.msra.mxu0 %v140
    %2762 = vmatprep.subr.mxu0 %v149
    %2763 = vmatpush1.msra.mxu0 %v148
    %2764 = vmatprep.subr.mxu0 %v157
    %2765 = vmatpush1.msra.mxu0 %v156
    %2766 = vmatprep.subr.mxu0 %v165
    %2767 = vmatpush1.msra.mxu0 %v164
    %2768 = vmatprep.subr.mxu0 %v173
    %2769 = vmatpush1.msra.mxu0 %v172
    %2770 = vmatprep.subr.mxu0 %v181
    %2771 = vmatpush1.msra.mxu0 %v180
    %2772 = vmatprep.subr.mxu0 %v189
    %2773 = vmatpush1.msra.mxu0 %v188
    %2774 = vmatprep.subr.mxu0 %v197
    %2775 = vmatpush1.msra.mxu0 %v196
    %2776 = vmatprep.subr.mxu0 %v205
    %2777 = vmatpush1.msra.mxu0 %v204
    %2778 = vmatprep.subr.mxu0 %v213
    %2779 = vmatpush1.msra.mxu0 %v212
    %2780 = vmatprep.subr.mxu0 %v221
    %2781 = vmatpush1.msra.mxu0 %v220
    %2782 = vmatprep.subr.mxu0 %v229
    %2783 = vmatpush1.msra.mxu0 %v228
    %2784 = vmatprep.subr.mxu0 %v237
    %2785 = vmatpush1.msra.mxu0 %v236
    %2786 = vmatprep.subr.mxu0 %v245
    %2787 = vmatpush1.msra.mxu0 %v244
    %2788 = vmatprep.subr.mxu0 %v253
    %2789 = vmatpush1.msra.mxu0 %v252
    %2790 = vmatprep.subr.mxu0 %v261
    %2791 = vmatpush1.msra.mxu0 %v260
    %2792 = vmatprep.subr.mxu0 %v269
    %2793 = vmatpush1.msra.mxu0 %v268
    %2794 = vmatprep.subr.mxu0 %v277
    %2795 = vmatpush1.msra.mxu0 %v276
    %2796 = vmatprep.subr.mxu0 %v285
    %2797 = vmatpush1.msra.mxu0 %v284
    %2798 = vmatprep.subr.mxu0 %v293
    %2799 = vmatpush1.msra.mxu0 %v292
    %2800 = vmatprep.subr.mxu0 %v301
    %2801 = vmatpush1.msra.mxu0 %v300
    %2802 = vmatprep.subr.mxu0 %v309
    %2803 = vmatpush1.msra.mxu0 %v308
    %2804 = vmatprep.subr.mxu0 %v317
    %2805 = vmatpush1.msra.mxu0 %v316
    %2806 = vmatprep.subr.mxu0 %v325
    %2807 = vmatpush1.msra.mxu0 %v324
    %2808 = vmatprep.subr.mxu0 %v333
    %2809 = vmatpush1.msra.mxu0 %v332
    %2810 = vmatprep.subr.mxu0 %v341
    %2811 = vmatpush1.msra.mxu0 %v340
    %2812 = vmatprep.mubr.f32.mxu0 %v2681
    %2813 = vmatmul.mubr.f32.gmra.mrb[0].mxu0 %v2680
    %v2814 = vpop.f32.mrb[0].mxu0
    %v2815 = vadd.f32 %v2711, %v2814
    %v2816 = vpop.f32.mrb[0].mxu0
    %v2817 = vadd.f32 %v2715, %v2816
    %2818 = vdwg.mxu0
    %2819 = vmatprep.subr.mxu0 %v95
    %2820 = vmatpush1.msra.mxu0 %v94
    %2821 = vmatprep.subr.mxu0 %v103
    %2822 = vmatpush1.msra.mxu0 %v102
    %2823 = vmatprep.subr.mxu0 %v111
    %2824 = vmatpush1.msra.mxu0 %v110
    %2825 = vmatprep.subr.mxu0 %v119
    %2826 = vmatpush1.msra.mxu0 %v118
    %2827 = vmatprep.subr.mxu0 %v127
    %2828 = vmatpush1.msra.mxu0 %v126
    %2829 = vmatprep.subr.mxu0 %v135
    %2830 = vmatpush1.msra.mxu0 %v134
    %2831 = vmatprep.subr.mxu0 %v143
    %2832 = vmatpush1.msra.mxu0 %v142
    %2833 = vmatprep.subr.mxu0 %v151
    %2834 = vmatpush1.msra.mxu0 %v150
    %2835 = vmatprep.subr.mxu0 %v159
    %2836 = vmatpush1.msra.mxu0 %v158
    %2837 = vmatprep.subr.mxu0 %v167
    %2838 = vmatpush1.msra.mxu0 %v166
    %2839 = vmatprep.subr.mxu0 %v175
    %2840 = vmatpush1.msra.mxu0 %v174
    %2841 = vmatprep.subr.mxu0 %v183
    %2842 = vmatpush1.msra.mxu0 %v182
    %2843 = vmatprep.subr.mxu0 %v191
    %2844 = vmatpush1.msra.mxu0 %v190
    %2845 = vmatprep.subr.mxu0 %v199
    %2846 = vmatpush1.msra.mxu0 %v198
    %2847 = vmatprep.subr.mxu0 %v207
    %2848 = vmatpush1.msra.mxu0 %v206
    %2849 = vmatprep.subr.mxu0 %v215
    %2850 = vmatpush1.msra.mxu0 %v214
    %2851 = vmatprep.subr.mxu0 %v223
    %2852 = vmatpush1.msra.mxu0 %v222
    %2853 = vmatprep.subr.mxu0 %v231
    %2854 = vmatpush1.msra.mxu0 %v230
    %2855 = vmatprep.subr.mxu0 %v239
    %2856 = vmatpush1.msra.mxu0 %v238
    %2857 = vmatprep.subr.mxu0 %v247
    %2858 = vmatpush1.msra.mxu0 %v246
    %2859 = vmatprep.subr.mxu0 %v255
    %2860 = vmatpush1.msra.mxu0 %v254
    %2861 = vmatprep.subr.mxu0 %v263
    %2862 = vmatpush1.msra.mxu0 %v262
    %2863 = vmatprep.subr.mxu0 %v271
    %2864 = vmatpush1.msra.mxu0 %v270
    %2865 = vmatprep.subr.mxu0 %v279
    %2866 = vmatpush1.msra.mxu0 %v278
    %2867 = vmatprep.subr.mxu0 %v287
    %2868 = vmatpush1.msra.mxu0 %v286
    %2869 = vmatprep.subr.mxu0 %v295
    %2870 = vmatpush1.msra.mxu0 %v294
    %2871 = vmatprep.subr.mxu0 %v303
    %2872 = vmatpush1.msra.mxu0 %v302
    %2873 = vmatprep.subr.mxu0 %v311
    %2874 = vmatpush1.msra.mxu0 %v310
    %2875 = vmatprep.subr.mxu0 %v319
    %2876 = vmatpush1.msra.mxu0 %v318
    %2877 = vmatprep.subr.mxu0 %v327
    %2878 = vmatpush1.msra.mxu0 %v326
    %2879 = vmatprep.subr.mxu0 %v335
    %2880 = vmatpush1.msra.mxu0 %v334
    %2881 = vmatprep.subr.mxu0 %v343
    %2882 = vmatpush1.msra.mxu0 %v342
    %2883 = vmatprep.mubr.f32.mxu0 %v2681
    %2884 = vmatmul.mubr.f32.gmra.mrb[0].mxu0 %v2680
    %v2885 = vpop.f32.mrb[0].mxu0
    %v2886 = vadd.f32 %v2719, %v2885
    %v2887 = vpop.f32.mrb[0].mxu0
    %v2888 = vadd.f32 %v2723, %v2887
    %2889 = vdwg.mxu0
    %2890 = vmatprep.subr.mxu0 %v97
    %2891 = vmatpush1.msra.mxu0 %v96
    %2892 = vmatprep.subr.mxu0 %v105
    %2893 = vmatpush1.msra.mxu0 %v104
    %2894 = vmatprep.subr.mxu0 %v113
    %2895 = vmatpush1.msra.mxu0 %v112
    %2896 = vmatprep.subr.mxu0 %v121
    %2897 = vmatpush1.msra.mxu0 %v120
    %2898 = vmatprep.subr.mxu0 %v129
    %2899 = vmatpush1.msra.mxu0 %v128
    %2900 = vmatprep.subr.mxu0 %v137
    %2901 = vmatpush1.msra.mxu0 %v136
    %2902 = vmatprep.subr.mxu0 %v145
    %2903 = vmatpush1.msra.mxu0 %v144
    %2904 = vmatprep.subr.mxu0 %v153
    %2905 = vmatpush1.msra.mxu0 %v152
    %2906 = vmatprep.subr.mxu0 %v161
    %2907 = vmatpush1.msra.mxu0 %v160
    %2908 = vmatprep.subr.mxu0 %v169
    %2909 = vmatpush1.msra.mxu0 %v168
    %2910 = vmatprep.subr.mxu0 %v177
    %2911 = vmatpush1.msra.mxu0 %v176
    %2912 = vmatprep.subr.mxu0 %v185
    %2913 = vmatpush1.msra.mxu0 %v184
    %2914 = vmatprep.subr.mxu0 %v193
    %2915 = vmatpush1.msra.mxu0 %v192
    %2916 = vmatprep.subr.mxu0 %v201
    %2917 = vmatpush1.msra.mxu0 %v200
    %2918 = vmatprep.subr.mxu0 %v209
    %2919 = vmatpush1.msra.mxu0 %v208
    %2920 = vmatprep.subr.mxu0 %v217
    %2921 = vmatpush1.msra.mxu0 %v216
    %2922 = vmatprep.subr.mxu0 %v225
    %2923 = vmatpush1.msra.mxu0 %v224
    %2924 = vmatprep.subr.mxu0 %v233
    %2925 = vmatpush1.msra.mxu0 %v232
    %2926 = vmatprep.subr.mxu0 %v241
    %2927 = vmatpush1.msra.mxu0 %v240
    %2928 = vmatprep.subr.mxu0 %v249
    %2929 = vmatpush1.msra.mxu0 %v248
    %2930 = vmatprep.subr.mxu0 %v257
    %2931 = vmatpush1.msra.mxu0 %v256
    %2932 = vmatprep.subr.mxu0 %v265
    %2933 = vmatpush1.msra.mxu0 %v264
    %2934 = vmatprep.subr.mxu0 %v273
    %2935 = vmatpush1.msra.mxu0 %v272
    %2936 = vmatprep.subr.mxu0 %v281
    %2937 = vmatpush1.msra.mxu0 %v280
    %2938 = vmatprep.subr.mxu0 %v289
    %2939 = vmatpush1.msra.mxu0 %v288
    %2940 = vmatprep.subr.mxu0 %v297
    %2941 = vmatpush1.msra.mxu0 %v296
    %2942 = vmatprep.subr.mxu0 %v305
    %2943 = vmatpush1.msra.mxu0 %v304
    %2944 = vmatprep.subr.mxu0 %v313
    %2945 = vmatpush1.msra.mxu0 %v312
    %2946 = vmatprep.subr.mxu0 %v321
    %2947 = vmatpush1.msra.mxu0 %v320
    %2948 = vmatprep.subr.mxu0 %v329
    %2949 = vmatpush1.msra.mxu0 %v328
    %2950 = vmatprep.subr.mxu0 %v337
    %2951 = vmatpush1.msra.mxu0 %v336
    %2952 = vmatprep.subr.mxu0 %v345
    %2953 = vmatpush1.msra.mxu0 %v344
    %2954 = vmatprep.mubr.f32.mxu0 %v2681
    %2955 = vmatmul.mubr.f32.gmra.mrb[0].mxu0 %v2680
    %v2956 = vpop.f32.mrb[0].mxu0
    %v2957 = vadd.f32 %v2727, %v2956
    %v2958 = vpop.f32.mrb[0].mxu0
    %v2959 = vadd.f32 %v2731, %v2958
    %2960 = vdwg.mxu0
    %2961 = vmatprep.subr.mxu0 %v99
    %2962 = vmatpush1.msra.mxu0 %v98
    %2963 = vmatprep.subr.mxu0 %v107
    %2964 = vmatpush1.msra.mxu0 %v106
    %2965 = vmatprep.subr.mxu0 %v115
    %2966 = vmatpush1.msra.mxu0 %v114
    %2967 = vmatprep.subr.mxu0 %v123
    %2968 = vmatpush1.msra.mxu0 %v122
    %2969 = vmatprep.subr.mxu0 %v131
    %2970 = vmatpush1.msra.mxu0 %v130
    %2971 = vmatprep.subr.mxu0 %v139
    %2972 = vmatpush1.msra.mxu0 %v138
    %2973 = vmatprep.subr.mxu0 %v147
    %2974 = vmatpush1.msra.mxu0 %v146
    %2975 = vmatprep.subr.mxu0 %v155
    %2976 = vmatpush1.msra.mxu0 %v154
    %2977 = vmatprep.subr.mxu0 %v163
    %2978 = vmatpush1.msra.mxu0 %v162
    %2979 = vmatprep.subr.mxu0 %v171
    %2980 = vmatpush1.msra.mxu0 %v170
    %2981 = vmatprep.subr.mxu0 %v179
    %2982 = vmatpush1.msra.mxu0 %v178
    %2983 = vmatprep.subr.mxu0 %v187
    %2984 = vmatpush1.msra.mxu0 %v186
    %2985 = vmatprep.subr.mxu0 %v195
    %2986 = vmatpush1.msra.mxu0 %v194
    %2987 = vmatprep.subr.mxu0 %v203
    %2988 = vmatpush1.msra.mxu0 %v202
    %2989 = vmatprep.subr.mxu0 %v211
    %2990 = vmatpush1.msra.mxu0 %v210
    %2991 = vmatprep.subr.mxu0 %v219
    %2992 = vmatpush1.msra.mxu0 %v218
    %2993 = vmatprep.subr.mxu0 %v227
    %2994 = vmatpush1.msra.mxu0 %v226
    %2995 = vmatprep.subr.mxu0 %v235
    %2996 = vmatpush1.msra.mxu0 %v234
    %2997 = vmatprep.subr.mxu0 %v243
    %2998 = vmatpush1.msra.mxu0 %v242
    %2999 = vmatprep.subr.mxu0 %v251
    %3000 = vmatpush1.msra.mxu0 %v250
    %3001 = vmatprep.subr.mxu0 %v259
    %3002 = vmatpush1.msra.mxu0 %v258
    %3003 = vmatprep.subr.mxu0 %v267
    %3004 = vmatpush1.msra.mxu0 %v266
    %3005 = vmatprep.subr.mxu0 %v275
    %3006 = vmatpush1.msra.mxu0 %v274
    %3007 = vmatprep.subr.mxu0 %v283
    %3008 = vmatpush1.msra.mxu0 %v282
    %3009 = vmatprep.subr.mxu0 %v291
    %3010 = vmatpush1.msra.mxu0 %v290
    %3011 = vmatprep.subr.mxu0 %v299
    %3012 = vmatpush1.msra.mxu0 %v298
    %3013 = vmatprep.subr.mxu0 %v307
    %3014 = vmatpush1.msra.mxu0 %v306
    %3015 = vmatprep.subr.mxu0 %v315
    %3016 = vmatpush1.msra.mxu0 %v314
    %3017 = vmatprep.subr.mxu0 %v323
    %3018 = vmatpush1.msra.mxu0 %v322
    %3019 = vmatprep.subr.mxu0 %v331
    %3020 = vmatpush1.msra.mxu0 %v330
    %3021 = vmatprep.subr.mxu0 %v339
    %3022 = vmatpush1.msra.mxu0 %v338
    %3023 = vmatprep.subr.mxu0 %v347
    %3024 = vmatpush1.msra.mxu0 %v346
    %3025 = vmatprep.mubr.f32.mxu0 %v2681
    %3026 = vmatmul.mubr.f32.gmra.mrb[0].mxu0 %v2680
    %v3027 = vpop.f32.mrb[0].mxu0
    %v3028 = vadd.f32 %v2735, %v3027
    %v3029 = vpop.f32.mrb[0].mxu0
    %v3030 = vadd.f32 %v2739, %v3029
    %3031 = vdwg.mxu0
    %v3032 = vxor.u32 %v2815, 2147483648
    %v3033 = vxor.u32 %v2817, 2147483648
    %v3034 = vmul.f32 %v3032, 1.442695
    %v3035 = vpow.pop %v3034
    %v3036 = vmul.f32 %v3033, 1.442695
    %v3037 = vpow.pop %v3036
    %v3038 = vadd.f32 %v3035, 1.0
    %v3039 = vadd.f32 %v3037, 1.0
    %v3040 = vrcp.pop %v3038
    %v3041 = vmul.f32 1.0, %v3040
    %v3042 = vrcp.pop %v3039
    %v3043 = vmul.f32 1.0, %v3042
    %v3044 = vxor.u32 %v2886, 2147483648
    %v3045 = vxor.u32 %v2888, 2147483648
    %v3046 = vmul.f32 %v3044, 1.442695
    %v3047 = vpow.pop %v3046
    %v3048 = vmul.f32 %v3045, 1.442695
    %v3049 = vpow.pop %v3048
    %v3050 = vadd.f32 %v3047, 1.0
    %v3051 = vadd.f32 %v3049, 1.0
    %v3052 = vrcp.pop %v3050
    %v3053 = vmul.f32 1.0, %v3052
    %v3054 = vrcp.pop %v3051
    %v3055 = vmul.f32 1.0, %v3054
    %v3056 = vtanh.pop %v2957
    %v3057 = vtanh.pop %v2959
    %v3058 = vxor.u32 %v3028, 2147483648
    %v3059 = vxor.u32 %v3030, 2147483648
    %v3060 = vmul.f32 %v3058, 1.442695
    %v3061 = vpow.pop %v3060
    %v3062 = vmul.f32 %v3059, 1.442695
    %v3063 = vpow.pop %v3062
    %v3064 = vadd.f32 %v3061, 1.0
    %v3065 = vadd.f32 %v3063, 1.0
    %v3066 = vrcp.pop %v3064
    %v3067 = vmul.f32 1.0, %v3066
    %v3068 = vrcp.pop %v3065
    %v3069 = vmul.f32 1.0, %v3068
    %v3070 = vmul.f32 %v3053, %v2676
    %v3071 = vmul.f32 %v3055, %v2677
    %v3072 = vmul.f32 %v3041, %v3056
    %v3073 = vmul.f32 %v3043, %v3057
    %v3074 = vadd.f32 %v3070, %v3072
    %v3075 = vadd.f32 %v3071, %v3073
    %v3076 = vtanh.pop %v3074
    %v3077 = vtanh.pop %v3075
    %v3078 = vmul.f32 %v3067, %v3076
    %v3079 = vmul.f32 %v3069, %v3077
    %v3082 = vcombine.low %v3078, %v3079
    %v3084 = vunpack.c.l.s4 1966171168
    %v3085 = vunpack.c.0.s8 %v3084
    %v3086 = vlaneseq
    %v3087 = vshrl.u32 %v3086, 7
    %v3088 = vsub.s32 %v3085, %v3087
    %v3089 = vrot.slane %v3082, %v3088
    %v3091 = vunpack.c.l.s4 1966171168
    %v3092 = vunpack.c.0.s8 %v3091
    %v3093 = vlaneseq
    %v3094 = vshrl.u32 %v3093, 7
    %v3095 = vsub.s32 %v3092, %v3094
    %v3096 = vrot.slane %v3089, %v3095
    %s3098 = scalar_lea.vmem [#allocation3], 5
    %3099 = vst.msk [vmem:[%s3098] ss:$8 sm:$0x3] %vm1108, %v3096
    %3100 = vst.msk [vmem:[%s3098] ss:$8 sm:$0x0] %vm1108, %v3096
    %s3101 = scalar_lea.vmem [#allocation2], 6
    %v3102 = vld [vmem:[%s3101] ss:$8 sm:$0xf]
    %v3103 = vld [vmem:[%s3101] ss:$8 sm:$0xf0]
    %v3104 = vor.u32 %v3102, %v3103
    %v3106 = vlaneseq
    %v3107 = vshrl.u32 %v3106, 7
    %v3108 = vsub.s32 0, %v3107
    %v3109 = vrot.slane %v3104, %v3108
    %v3110 = vlaneseq
    %v3111 = vshrl.u32 %v3110, 7
    %v3112 = vsub.s32 1, %v3111
    %v3113 = vrot.slane %v3104, %v3112
    %v3114 = vlaneseq
    %v3115 = vshrl.u32 %v3114, 7
    %v3116 = vsub.s32 2, %v3115
    %v3117 = vrot.slane %v3104, %v3116
    %v3118 = vlaneseq
    %v3119 = vshrl.u32 %v3118, 7
    %v3120 = vsub.s32 3, %v3119
    %v3121 = vrot.slane %v3104, %v3120
    %v3122 = vlaneseq
    %v3123 = vshrl.u32 %v3122, 7
    %v3124 = vsub.s32 4, %v3123
    %v3125 = vrot.slane %v3104, %v3124
    %v3126 = vlaneseq
    %v3127 = vshrl.u32 %v3126, 7
    %v3128 = vsub.s32 5, %v3127
    %v3129 = vrot.slane %v3104, %v3128
    %v3130 = vlaneseq
    %v3131 = vshrl.u32 %v3130, 7
    %v3132 = vsub.s32 6, %v3131
    %v3133 = vrot.slane %v3104, %v3132
    %v3134 = vlaneseq
    %v3135 = vshrl.u32 %v3134, 7
    %v3136 = vsub.s32 7, %v3135
    %v3137 = vrot.slane %v3104, %v3136
    %3146 = vmatprep.subr.mxu0 %v93
    %3147 = vmatpush1.msra.mxu0 %v92
    %3148 = vmatprep.subr.mxu0 %v101
    %3149 = vmatpush1.msra.mxu0 %v100
    %3150 = vmatprep.subr.mxu0 %v109
    %3151 = vmatpush1.msra.mxu0 %v108
    %3152 = vmatprep.subr.mxu0 %v117
    %3153 = vmatpush1.msra.mxu0 %v116
    %3154 = vmatprep.subr.mxu0 %v125
    %3155 = vmatpush1.msra.mxu0 %v124
    %3156 = vmatprep.subr.mxu0 %v133
    %3157 = vmatpush1.msra.mxu0 %v132
    %3158 = vmatprep.subr.mxu0 %v141
    %3159 = vmatpush1.msra.mxu0 %v140
    %3160 = vmatprep.subr.mxu0 %v149
    %3161 = vmatpush1.msra.mxu0 %v148
    %3162 = vmatprep.subr.mxu0 %v157
    %3163 = vmatpush1.msra.mxu0 %v156
    %3164 = vmatprep.subr.mxu0 %v165
    %3165 = vmatpush1.msra.mxu0 %v164
    %3166 = vmatprep.subr.mxu0 %v173
    %3167 = vmatpush1.msra.mxu0 %v172
    %3168 = vmatprep.subr.mxu0 %v181
    %3169 = vmatpush1.msra.mxu0 %v180
    %3170 = vmatprep.subr.mxu0 %v189
    %3171 = vmatpush1.msra.mxu0 %v188
    %3172 = vmatprep.subr.mxu0 %v197
    %3173 = vmatpush1.msra.mxu0 %v196
    %3174 = vmatprep.subr.mxu0 %v205
    %3175 = vmatpush1.msra.mxu0 %v204
    %3176 = vmatprep.subr.mxu0 %v213
    %3177 = vmatpush1.msra.mxu0 %v212
    %3178 = vmatprep.subr.mxu0 %v221
    %3179 = vmatpush1.msra.mxu0 %v220
    %3180 = vmatprep.subr.mxu0 %v229
    %3181 = vmatpush1.msra.mxu0 %v228
    %3182 = vmatprep.subr.mxu0 %v237
    %3183 = vmatpush1.msra.mxu0 %v236
    %3184 = vmatprep.subr.mxu0 %v245
    %3185 = vmatpush1.msra.mxu0 %v244
    %3186 = vmatprep.subr.mxu0 %v253
    %3187 = vmatpush1.msra.mxu0 %v252
    %3188 = vmatprep.subr.mxu0 %v261
    %3189 = vmatpush1.msra.mxu0 %v260
    %3190 = vmatprep.subr.mxu0 %v269
    %3191 = vmatpush1.msra.mxu0 %v268
    %3192 = vmatprep.subr.mxu0 %v277
    %3193 = vmatpush1.msra.mxu0 %v276
    %3194 = vmatprep.subr.mxu0 %v285
    %3195 = vmatpush1.msra.mxu0 %v284
    %3196 = vmatprep.subr.mxu0 %v293
    %3197 = vmatpush1.msra.mxu0 %v292
    %3198 = vmatprep.subr.mxu0 %v301
    %3199 = vmatpush1.msra.mxu0 %v300
    %3200 = vmatprep.subr.mxu0 %v309
    %3201 = vmatpush1.msra.mxu0 %v308
    %3202 = vmatprep.subr.mxu0 %v317
    %3203 = vmatpush1.msra.mxu0 %v316
    %3204 = vmatprep.subr.mxu0 %v325
    %3205 = vmatpush1.msra.mxu0 %v324
    %3206 = vmatprep.subr.mxu0 %v333
    %3207 = vmatpush1.msra.mxu0 %v332
    %3208 = vmatprep.subr.mxu0 %v341
    %3209 = vmatpush1.msra.mxu0 %v340
    %3210 = vmatprep.mubr.f32.mxu0 %v3079
    %3211 = vmatmul.mubr.f32.gmra.mrb[0].mxu0 %v3078
    %v3212 = vpop.f32.mrb[0].mxu0
    %v3213 = vadd.f32 %v3109, %v3212
    %v3214 = vpop.f32.mrb[0].mxu0
    %v3215 = vadd.f32 %v3113, %v3214
    %3216 = vdwg.mxu0
    %3217 = vmatprep.subr.mxu0 %v95
    %3218 = vmatpush1.msra.mxu0 %v94
    %3219 = vmatprep.subr.mxu0 %v103
    %3220 = vmatpush1.msra.mxu0 %v102
    %3221 = vmatprep.subr.mxu0 %v111
    %3222 = vmatpush1.msra.mxu0 %v110
    %3223 = vmatprep.subr.mxu0 %v119
    %3224 = vmatpush1.msra.mxu0 %v118
    %3225 = vmatprep.subr.mxu0 %v127
    %3226 = vmatpush1.msra.mxu0 %v126
    %3227 = vmatprep.subr.mxu0 %v135
    %3228 = vmatpush1.msra.mxu0 %v134
    %3229 = vmatprep.subr.mxu0 %v143
    %3230 = vmatpush1.msra.mxu0 %v142
    %3231 = vmatprep.subr.mxu0 %v151
    %3232 = vmatpush1.msra.mxu0 %v150
    %3233 = vmatprep.subr.mxu0 %v159
    %3234 = vmatpush1.msra.mxu0 %v158
    %3235 = vmatprep.subr.mxu0 %v167
    %3236 = vmatpush1.msra.mxu0 %v166
    %3237 = vmatprep.subr.mxu0 %v175
    %3238 = vmatpush1.msra.mxu0 %v174
    %3239 = vmatprep.subr.mxu0 %v183
    %3240 = vmatpush1.msra.mxu0 %v182
    %3241 = vmatprep.subr.mxu0 %v191
    %3242 = vmatpush1.msra.mxu0 %v190
    %3243 = vmatprep.subr.mxu0 %v199
    %3244 = vmatpush1.msra.mxu0 %v198
    %3245 = vmatprep.subr.mxu0 %v207
    %3246 = vmatpush1.msra.mxu0 %v206
    %3247 = vmatprep.subr.mxu0 %v215
    %3248 = vmatpush1.msra.mxu0 %v214
    %3249 = vmatprep.subr.mxu0 %v223
    %3250 = vmatpush1.msra.mxu0 %v222
    %3251 = vmatprep.subr.mxu0 %v231
    %3252 = vmatpush1.msra.mxu0 %v230
    %3253 = vmatprep.subr.mxu0 %v239
    %3254 = vmatpush1.msra.mxu0 %v238
    %3255 = vmatprep.subr.mxu0 %v247
    %3256 = vmatpush1.msra.mxu0 %v246
    %3257 = vmatprep.subr.mxu0 %v255
    %3258 = vmatpush1.msra.mxu0 %v254
    %3259 = vmatprep.subr.mxu0 %v263
    %3260 = vmatpush1.msra.mxu0 %v262
    %3261 = vmatprep.subr.mxu0 %v271
    %3262 = vmatpush1.msra.mxu0 %v270
    %3263 = vmatprep.subr.mxu0 %v279
    %3264 = vmatpush1.msra.mxu0 %v278
    %3265 = vmatprep.subr.mxu0 %v287
    %3266 = vmatpush1.msra.mxu0 %v286
    %3267 = vmatprep.subr.mxu0 %v295
    %3268 = vmatpush1.msra.mxu0 %v294
    %3269 = vmatprep.subr.mxu0 %v303
    %3270 = vmatpush1.msra.mxu0 %v302
    %3271 = vmatprep.subr.mxu0 %v311
    %3272 = vmatpush1.msra.mxu0 %v310
    %3273 = vmatprep.subr.mxu0 %v319
    %3274 = vmatpush1.msra.mxu0 %v318
    %3275 = vmatprep.subr.mxu0 %v327
    %3276 = vmatpush1.msra.mxu0 %v326
    %3277 = vmatprep.subr.mxu0 %v335
    %3278 = vmatpush1.msra.mxu0 %v334
    %3279 = vmatprep.subr.mxu0 %v343
    %3280 = vmatpush1.msra.mxu0 %v342
    %3281 = vmatprep.mubr.f32.mxu0 %v3079
    %3282 = vmatmul.mubr.f32.gmra.mrb[0].mxu0 %v3078
    %v3283 = vpop.f32.mrb[0].mxu0
    %v3284 = vadd.f32 %v3117, %v3283
    %v3285 = vpop.f32.mrb[0].mxu0
    %v3286 = vadd.f32 %v3121, %v3285
    %3287 = vdwg.mxu0
    %3288 = vmatprep.subr.mxu0 %v97
    %3289 = vmatpush1.msra.mxu0 %v96
    %3290 = vmatprep.subr.mxu0 %v105
    %3291 = vmatpush1.msra.mxu0 %v104
    %3292 = vmatprep.subr.mxu0 %v113
    %3293 = vmatpush1.msra.mxu0 %v112
    %3294 = vmatprep.subr.mxu0 %v121
    %3295 = vmatpush1.msra.mxu0 %v120
    %3296 = vmatprep.subr.mxu0 %v129
    %3297 = vmatpush1.msra.mxu0 %v128
    %3298 = vmatprep.subr.mxu0 %v137
    %3299 = vmatpush1.msra.mxu0 %v136
    %3300 = vmatprep.subr.mxu0 %v145
    %3301 = vmatpush1.msra.mxu0 %v144
    %3302 = vmatprep.subr.mxu0 %v153
    %3303 = vmatpush1.msra.mxu0 %v152
    %3304 = vmatprep.subr.mxu0 %v161
    %3305 = vmatpush1.msra.mxu0 %v160
    %3306 = vmatprep.subr.mxu0 %v169
    %3307 = vmatpush1.msra.mxu0 %v168
    %3308 = vmatprep.subr.mxu0 %v177
    %3309 = vmatpush1.msra.mxu0 %v176
    %3310 = vmatprep.subr.mxu0 %v185
    %3311 = vmatpush1.msra.mxu0 %v184
    %3312 = vmatprep.subr.mxu0 %v193
    %3313 = vmatpush1.msra.mxu0 %v192
    %3314 = vmatprep.subr.mxu0 %v201
    %3315 = vmatpush1.msra.mxu0 %v200
    %3316 = vmatprep.subr.mxu0 %v209
    %3317 = vmatpush1.msra.mxu0 %v208
    %3318 = vmatprep.subr.mxu0 %v217
    %3319 = vmatpush1.msra.mxu0 %v216
    %3320 = vmatprep.subr.mxu0 %v225
    %3321 = vmatpush1.msra.mxu0 %v224
    %3322 = vmatprep.subr.mxu0 %v233
    %3323 = vmatpush1.msra.mxu0 %v232
    %3324 = vmatprep.subr.mxu0 %v241
    %3325 = vmatpush1.msra.mxu0 %v240
    %3326 = vmatprep.subr.mxu0 %v249
    %3327 = vmatpush1.msra.mxu0 %v248
    %3328 = vmatprep.subr.mxu0 %v257
    %3329 = vmatpush1.msra.mxu0 %v256
    %3330 = vmatprep.subr.mxu0 %v265
    %3331 = vmatpush1.msra.mxu0 %v264
    %3332 = vmatprep.subr.mxu0 %v273
    %3333 = vmatpush1.msra.mxu0 %v272
    %3334 = vmatprep.subr.mxu0 %v281
    %3335 = vmatpush1.msra.mxu0 %v280
    %3336 = vmatprep.subr.mxu0 %v289
    %3337 = vmatpush1.msra.mxu0 %v288
    %3338 = vmatprep.subr.mxu0 %v297
    %3339 = vmatpush1.msra.mxu0 %v296
    %3340 = vmatprep.subr.mxu0 %v305
    %3341 = vmatpush1.msra.mxu0 %v304
    %3342 = vmatprep.subr.mxu0 %v313
    %3343 = vmatpush1.msra.mxu0 %v312
    %3344 = vmatprep.subr.mxu0 %v321
    %3345 = vmatpush1.msra.mxu0 %v320
    %3346 = vmatprep.subr.mxu0 %v329
    %3347 = vmatpush1.msra.mxu0 %v328
    %3348 = vmatprep.subr.mxu0 %v337
    %3349 = vmatpush1.msra.mxu0 %v336
    %3350 = vmatprep.subr.mxu0 %v345
    %3351 = vmatpush1.msra.mxu0 %v344
    %3352 = vmatprep.mubr.f32.mxu0 %v3079
    %3353 = vmatmul.mubr.f32.gmra.mrb[0].mxu0 %v3078
    %v3354 = vpop.f32.mrb[0].mxu0
    %v3355 = vadd.f32 %v3125, %v3354
    %v3356 = vpop.f32.mrb[0].mxu0
    %v3357 = vadd.f32 %v3129, %v3356
    %3358 = vdwg.mxu0
    %3359 = vmatprep.subr.mxu0 %v99
    %3360 = vmatpush1.msra.mxu0 %v98
    %3361 = vmatprep.subr.mxu0 %v107
    %3362 = vmatpush1.msra.mxu0 %v106
    %3363 = vmatprep.subr.mxu0 %v115
    %3364 = vmatpush1.msra.mxu0 %v114
    %3365 = vmatprep.subr.mxu0 %v123
    %3366 = vmatpush1.msra.mxu0 %v122
    %3367 = vmatprep.subr.mxu0 %v131
    %3368 = vmatpush1.msra.mxu0 %v130
    %3369 = vmatprep.subr.mxu0 %v139
    %3370 = vmatpush1.msra.mxu0 %v138
    %3371 = vmatprep.subr.mxu0 %v147
    %3372 = vmatpush1.msra.mxu0 %v146
    %3373 = vmatprep.subr.mxu0 %v155
    %3374 = vmatpush1.msra.mxu0 %v154
    %3375 = vmatprep.subr.mxu0 %v163
    %3376 = vmatpush1.msra.mxu0 %v162
    %3377 = vmatprep.subr.mxu0 %v171
    %3378 = vmatpush1.msra.mxu0 %v170
    %3379 = vmatprep.subr.mxu0 %v179
    %3380 = vmatpush1.msra.mxu0 %v178
    %3381 = vmatprep.subr.mxu0 %v187
    %3382 = vmatpush1.msra.mxu0 %v186
    %3383 = vmatprep.subr.mxu0 %v195
    %3384 = vmatpush1.msra.mxu0 %v194
    %3385 = vmatprep.subr.mxu0 %v203
    %3386 = vmatpush1.msra.mxu0 %v202
    %3387 = vmatprep.subr.mxu0 %v211
    %3388 = vmatpush1.msra.mxu0 %v210
    %3389 = vmatprep.subr.mxu0 %v219
    %3390 = vmatpush1.msra.mxu0 %v218
    %3391 = vmatprep.subr.mxu0 %v227
    %3392 = vmatpush1.msra.mxu0 %v226
    %3393 = vmatprep.subr.mxu0 %v235
    %3394 = vmatpush1.msra.mxu0 %v234
    %3395 = vmatprep.subr.mxu0 %v243
    %3396 = vmatpush1.msra.mxu0 %v242
    %3397 = vmatprep.subr.mxu0 %v251
    %3398 = vmatpush1.msra.mxu0 %v250
    %3399 = vmatprep.subr.mxu0 %v259
    %3400 = vmatpush1.msra.mxu0 %v258
    %3401 = vmatprep.subr.mxu0 %v267
    %3402 = vmatpush1.msra.mxu0 %v266
    %3403 = vmatprep.subr.mxu0 %v275
    %3404 = vmatpush1.msra.mxu0 %v274
    %3405 = vmatprep.subr.mxu0 %v283
    %3406 = vmatpush1.msra.mxu0 %v282
    %3407 = vmatprep.subr.mxu0 %v291
    %3408 = vmatpush1.msra.mxu0 %v290
    %3409 = vmatprep.subr.mxu0 %v299
    %3410 = vmatpush1.msra.mxu0 %v298
    %3411 = vmatprep.subr.mxu0 %v307
    %3412 = vmatpush1.msra.mxu0 %v306
    %3413 = vmatprep.subr.mxu0 %v315
    %3414 = vmatpush1.msra.mxu0 %v314
    %3415 = vmatprep.subr.mxu0 %v323
    %3416 = vmatpush1.msra.mxu0 %v322
    %3417 = vmatprep.subr.mxu0 %v331
    %3418 = vmatpush1.msra.mxu0 %v330
    %3419 = vmatprep.subr.mxu0 %v339
    %3420 = vmatpush1.msra.mxu0 %v338
    %3421 = vmatprep.subr.mxu0 %v347
    %3422 = vmatpush1.msra.mxu0 %v346
    %3423 = vmatprep.mubr.f32.mxu0 %v3079
    %3424 = vmatmul.mubr.f32.gmra.mrb[0].mxu0 %v3078
    %v3425 = vpop.f32.mrb[0].mxu0
    %v3426 = vadd.f32 %v3133, %v3425
    %v3427 = vpop.f32.mrb[0].mxu0
    %v3428 = vadd.f32 %v3137, %v3427
    %3429 = vdwg.mxu0
    %v3430 = vxor.u32 %v3213, 2147483648
    %v3431 = vxor.u32 %v3215, 2147483648
    %v3432 = vmul.f32 %v3430, 1.442695
    %v3433 = vpow.pop %v3432
    %v3434 = vmul.f32 %v3431, 1.442695
    %v3435 = vpow.pop %v3434
    %v3436 = vadd.f32 %v3433, 1.0
    %v3437 = vadd.f32 %v3435, 1.0
    %v3438 = vrcp.pop %v3436
    %v3439 = vmul.f32 1.0, %v3438
    %v3440 = vrcp.pop %v3437
    %v3441 = vmul.f32 1.0, %v3440
    %v3442 = vxor.u32 %v3284, 2147483648
    %v3443 = vxor.u32 %v3286, 2147483648
    %v3444 = vmul.f32 %v3442, 1.442695
    %v3445 = vpow.pop %v3444
    %v3446 = vmul.f32 %v3443, 1.442695
    %v3447 = vpow.pop %v3446
    %v3448 = vadd.f32 %v3445, 1.0
    %v3449 = vadd.f32 %v3447, 1.0
    %v3450 = vrcp.pop %v3448
    %v3451 = vmul.f32 1.0, %v3450
    %v3452 = vrcp.pop %v3449
    %v3453 = vmul.f32 1.0, %v3452
    %v3454 = vtanh.pop %v3355
    %v3455 = vtanh.pop %v3357
    %v3456 = vxor.u32 %v3426, 2147483648
    %v3457 = vxor.u32 %v3428, 2147483648
    %v3458 = vmul.f32 %v3456, 1.442695
    %v3459 = vpow.pop %v3458
    %v3460 = vmul.f32 %v3457, 1.442695
    %v3461 = vpow.pop %v3460
    %v3462 = vadd.f32 %v3459, 1.0
    %v3463 = vadd.f32 %v3461, 1.0
    %v3464 = vrcp.pop %v3462
    %v3465 = vmul.f32 1.0, %v3464
    %v3466 = vrcp.pop %v3463
    %v3467 = vmul.f32 1.0, %v3466
    %v3468 = vmul.f32 %v3451, %v3074
    %v3469 = vmul.f32 %v3453, %v3075
    %v3470 = vmul.f32 %v3439, %v3454
    %v3471 = vmul.f32 %v3441, %v3455
    %v3472 = vadd.f32 %v3468, %v3470
    %v3473 = vadd.f32 %v3469, %v3471
    %v3474 = vtanh.pop %v3472
    %v3475 = vtanh.pop %v3473
    %v3476 = vmul.f32 %v3465, %v3474
    %v3477 = vmul.f32 %v3467, %v3475
    %v3480 = vcombine.low %v3476, %v3477
    %v3482 = vunpack.c.l.s4 1966171168
    %v3483 = vunpack.c.0.s8 %v3482
    %v3484 = vlaneseq
    %v3485 = vshrl.u32 %v3484, 7
    %v3486 = vsub.s32 %v3483, %v3485
    %v3487 = vrot.slane %v3480, %v3486
    %v3489 = vunpack.c.l.s4 1966171168
    %v3490 = vunpack.c.0.s8 %v3489
    %v3491 = vlaneseq
    %v3492 = vshrl.u32 %v3491, 7
    %v3493 = vsub.s32 %v3490, %v3492
    %v3494 = vrot.slane %v3487, %v3493
    %s3496 = scalar_lea.vmem [#allocation3], 6
    %3497 = vst.msk [vmem:[%s3496] ss:$8 sm:$0x3] %vm1108, %v3494
    %3498 = vst.msk [vmem:[%s3496] ss:$8 sm:$0x0] %vm1108, %v3494
    %s3499 = scalar_lea.vmem [#allocation2], 7
    %v3500 = vld [vmem:[%s3499] ss:$8 sm:$0xf]
    %v3501 = vld [vmem:[%s3499] ss:$8 sm:$0xf0]
    %v3502 = vor.u32 %v3500, %v3501
    %v3504 = vlaneseq
    %v3505 = vshrl.u32 %v3504, 7
    %v3506 = vsub.s32 0, %v3505
    %v3507 = vrot.slane %v3502, %v3506
    %v3508 = vlaneseq
    %v3509 = vshrl.u32 %v3508, 7
    %v3510 = vsub.s32 1, %v3509
    %v3511 = vrot.slane %v3502, %v3510
    %v3512 = vlaneseq
    %v3513 = vshrl.u32 %v3512, 7
    %v3514 = vsub.s32 2, %v3513
    %v3515 = vrot.slane %v3502, %v3514
    %v3516 = vlaneseq
    %v3517 = vshrl.u32 %v3516, 7
    %v3518 = vsub.s32 3, %v3517
    %v3519 = vrot.slane %v3502, %v3518
    %v3520 = vlaneseq
    %v3521 = vshrl.u32 %v3520, 7
    %v3522 = vsub.s32 4, %v3521
    %v3523 = vrot.slane %v3502, %v3522
    %v3524 = vlaneseq
    %v3525 = vshrl.u32 %v3524, 7
    %v3526 = vsub.s32 5, %v3525
    %v3527 = vrot.slane %v3502, %v3526
    %v3528 = vlaneseq
    %v3529 = vshrl.u32 %v3528, 7
    %v3530 = vsub.s32 6, %v3529
    %v3531 = vrot.slane %v3502, %v3530
    %v3532 = vlaneseq
    %v3533 = vshrl.u32 %v3532, 7
    %v3534 = vsub.s32 7, %v3533
    %v3535 = vrot.slane %v3502, %v3534
    %3544 = vmatprep.subr.mxu0 %v93
    %3545 = vmatpush1.msra.mxu0 %v92
    %3546 = vmatprep.subr.mxu0 %v101
    %3547 = vmatpush1.msra.mxu0 %v100
    %3548 = vmatprep.subr.mxu0 %v109
    %3549 = vmatpush1.msra.mxu0 %v108
    %3550 = vmatprep.subr.mxu0 %v117
    %3551 = vmatpush1.msra.mxu0 %v116
    %3552 = vmatprep.subr.mxu0 %v125
    %3553 = vmatpush1.msra.mxu0 %v124
    %3554 = vmatprep.subr.mxu0 %v133
    %3555 = vmatpush1.msra.mxu0 %v132
    %3556 = vmatprep.subr.mxu0 %v141
    %3557 = vmatpush1.msra.mxu0 %v140
    %3558 = vmatprep.subr.mxu0 %v149
    %3559 = vmatpush1.msra.mxu0 %v148
    %3560 = vmatprep.subr.mxu0 %v157
    %3561 = vmatpush1.msra.mxu0 %v156
    %3562 = vmatprep.subr.mxu0 %v165
    %3563 = vmatpush1.msra.mxu0 %v164
    %3564 = vmatprep.subr.mxu0 %v173
    %3565 = vmatpush1.msra.mxu0 %v172
    %3566 = vmatprep.subr.mxu0 %v181
    %3567 = vmatpush1.msra.mxu0 %v180
    %3568 = vmatprep.subr.mxu0 %v189
    %3569 = vmatpush1.msra.mxu0 %v188
    %3570 = vmatprep.subr.mxu0 %v197
    %3571 = vmatpush1.msra.mxu0 %v196
    %3572 = vmatprep.subr.mxu0 %v205
    %3573 = vmatpush1.msra.mxu0 %v204
    %3574 = vmatprep.subr.mxu0 %v213
    %3575 = vmatpush1.msra.mxu0 %v212
    %3576 = vmatprep.subr.mxu0 %v221
    %3577 = vmatpush1.msra.mxu0 %v220
    %3578 = vmatprep.subr.mxu0 %v229
    %3579 = vmatpush1.msra.mxu0 %v228
    %3580 = vmatprep.subr.mxu0 %v237
    %3581 = vmatpush1.msra.mxu0 %v236
    %3582 = vmatprep.subr.mxu0 %v245
    %3583 = vmatpush1.msra.mxu0 %v244
    %3584 = vmatprep.subr.mxu0 %v253
    %3585 = vmatpush1.msra.mxu0 %v252
    %3586 = vmatprep.subr.mxu0 %v261
    %3587 = vmatpush1.msra.mxu0 %v260
    %3588 = vmatprep.subr.mxu0 %v269
    %3589 = vmatpush1.msra.mxu0 %v268
    %3590 = vmatprep.subr.mxu0 %v277
    %3591 = vmatpush1.msra.mxu0 %v276
    %3592 = vmatprep.subr.mxu0 %v285
    %3593 = vmatpush1.msra.mxu0 %v284
    %3594 = vmatprep.subr.mxu0 %v293
    %3595 = vmatpush1.msra.mxu0 %v292
    %3596 = vmatprep.subr.mxu0 %v301
    %3597 = vmatpush1.msra.mxu0 %v300
    %3598 = vmatprep.subr.mxu0 %v309
    %3599 = vmatpush1.msra.mxu0 %v308
    %3600 = vmatprep.subr.mxu0 %v317
    %3601 = vmatpush1.msra.mxu0 %v316
    %3602 = vmatprep.subr.mxu0 %v325
    %3603 = vmatpush1.msra.mxu0 %v324
    %3604 = vmatprep.subr.mxu0 %v333
    %3605 = vmatpush1.msra.mxu0 %v332
    %3606 = vmatprep.subr.mxu0 %v341
    %3607 = vmatpush1.msra.mxu0 %v340
    %3608 = vmatprep.mubr.f32.mxu0 %v3477
    %3609 = vmatmul.mubr.f32.gmra.mrb[0].mxu0 %v3476
    %v3610 = vpop.f32.mrb[0].mxu0
    %v3611 = vadd.f32 %v3507, %v3610
    %v3612 = vpop.f32.mrb[0].mxu0
    %v3613 = vadd.f32 %v3511, %v3612
    %3614 = vdwg.mxu0
    %3615 = vmatprep.subr.mxu0 %v95
    %3616 = vmatpush1.msra.mxu0 %v94
    %3617 = vmatprep.subr.mxu0 %v103
    %3618 = vmatpush1.msra.mxu0 %v102
    %3619 = vmatprep.subr.mxu0 %v111
    %3620 = vmatpush1.msra.mxu0 %v110
    %3621 = vmatprep.subr.mxu0 %v119
    %3622 = vmatpush1.msra.mxu0 %v118
    %3623 = vmatprep.subr.mxu0 %v127
    %3624 = vmatpush1.msra.mxu0 %v126
    %3625 = vmatprep.subr.mxu0 %v135
    %3626 = vmatpush1.msra.mxu0 %v134
    %3627 = vmatprep.subr.mxu0 %v143
    %3628 = vmatpush1.msra.mxu0 %v142
    %3629 = vmatprep.subr.mxu0 %v151
    %3630 = vmatpush1.msra.mxu0 %v150
    %3631 = vmatprep.subr.mxu0 %v159
    %3632 = vmatpush1.msra.mxu0 %v158
    %3633 = vmatprep.subr.mxu0 %v167
    %3634 = vmatpush1.msra.mxu0 %v166
    %3635 = vmatprep.subr.mxu0 %v175
    %3636 = vmatpush1.msra.mxu0 %v174
    %3637 = vmatprep.subr.mxu0 %v183
    %3638 = vmatpush1.msra.mxu0 %v182
    %3639 = vmatprep.subr.mxu0 %v191
    %3640 = vmatpush1.msra.mxu0 %v190
    %3641 = vmatprep.subr.mxu0 %v199
    %3642 = vmatpush1.msra.mxu0 %v198
    %3643 = vmatprep.subr.mxu0 %v207
    %3644 = vmatpush1.msra.mxu0 %v206
    %3645 = vmatprep.subr.mxu0 %v215
    %3646 = vmatpush1.msra.mxu0 %v214
    %3647 = vmatprep.subr.mxu0 %v223
    %3648 = vmatpush1.msra.mxu0 %v222
    %3649 = vmatprep.subr.mxu0 %v231
    %3650 = vmatpush1.msra.mxu0 %v230
    %3651 = vmatprep.subr.mxu0 %v239
    %3652 = vmatpush1.msra.mxu0 %v238
    %3653 = vmatprep.subr.mxu0 %v247
    %3654 = vmatpush1.msra.mxu0 %v246
    %3655 = vmatprep.subr.mxu0 %v255
    %3656 = vmatpush1.msra.mxu0 %v254
    %3657 = vmatprep.subr.mxu0 %v263
    %3658 = vmatpush1.msra.mxu0 %v262
    %3659 = vmatprep.subr.mxu0 %v271
    %3660 = vmatpush1.msra.mxu0 %v270
    %3661 = vmatprep.subr.mxu0 %v279
    %3662 = vmatpush1.msra.mxu0 %v278
    %3663 = vmatprep.subr.mxu0 %v287
    %3664 = vmatpush1.msra.mxu0 %v286
    %3665 = vmatprep.subr.mxu0 %v295
    %3666 = vmatpush1.msra.mxu0 %v294
    %3667 = vmatprep.subr.mxu0 %v303
    %3668 = vmatpush1.msra.mxu0 %v302
    %3669 = vmatprep.subr.mxu0 %v311
    %3670 = vmatpush1.msra.mxu0 %v310
    %3671 = vmatprep.subr.mxu0 %v319
    %3672 = vmatpush1.msra.mxu0 %v318
    %3673 = vmatprep.subr.mxu0 %v327
    %3674 = vmatpush1.msra.mxu0 %v326
    %3675 = vmatprep.subr.mxu0 %v335
    %3676 = vmatpush1.msra.mxu0 %v334
    %3677 = vmatprep.subr.mxu0 %v343
    %3678 = vmatpush1.msra.mxu0 %v342
    %3679 = vmatprep.mubr.f32.mxu0 %v3477
    %3680 = vmatmul.mubr.f32.gmra.mrb[0].mxu0 %v3476
    %v3681 = vpop.f32.mrb[0].mxu0
    %v3682 = vadd.f32 %v3515, %v3681
    %v3683 = vpop.f32.mrb[0].mxu0
    %v3684 = vadd.f32 %v3519, %v3683
    %3685 = vdwg.mxu0
    %3686 = vmatprep.subr.mxu0 %v97
    %3687 = vmatpush1.msra.mxu0 %v96
    %3688 = vmatprep.subr.mxu0 %v105
    %3689 = vmatpush1.msra.mxu0 %v104
    %3690 = vmatprep.subr.mxu0 %v113
    %3691 = vmatpush1.msra.mxu0 %v112
    %3692 = vmatprep.subr.mxu0 %v121
    %3693 = vmatpush1.msra.mxu0 %v120
    %3694 = vmatprep.subr.mxu0 %v129
    %3695 = vmatpush1.msra.mxu0 %v128
    %3696 = vmatprep.subr.mxu0 %v137
    %3697 = vmatpush1.msra.mxu0 %v136
    %3698 = vmatprep.subr.mxu0 %v145
    %3699 = vmatpush1.msra.mxu0 %v144
    %3700 = vmatprep.subr.mxu0 %v153
    %3701 = vmatpush1.msra.mxu0 %v152
    %3702 = vmatprep.subr.mxu0 %v161
    %3703 = vmatpush1.msra.mxu0 %v160
    %3704 = vmatprep.subr.mxu0 %v169
    %3705 = vmatpush1.msra.mxu0 %v168
    %3706 = vmatprep.subr.mxu0 %v177
    %3707 = vmatpush1.msra.mxu0 %v176
    %3708 = vmatprep.subr.mxu0 %v185
    %3709 = vmatpush1.msra.mxu0 %v184
    %3710 = vmatprep.subr.mxu0 %v193
    %3711 = vmatpush1.msra.mxu0 %v192
    %3712 = vmatprep.subr.mxu0 %v201
    %3713 = vmatpush1.msra.mxu0 %v200
    %3714 = vmatprep.subr.mxu0 %v209
    %3715 = vmatpush1.msra.mxu0 %v208
    %3716 = vmatprep.subr.mxu0 %v217
    %3717 = vmatpush1.msra.mxu0 %v216
    %3718 = vmatprep.subr.mxu0 %v225
    %3719 = vmatpush1.msra.mxu0 %v224
    %3720 = vmatprep.subr.mxu0 %v233
    %3721 = vmatpush1.msra.mxu0 %v232
    %3722 = vmatprep.subr.mxu0 %v241
    %3723 = vmatpush1.msra.mxu0 %v240
    %3724 = vmatprep.subr.mxu0 %v249
    %3725 = vmatpush1.msra.mxu0 %v248
    %3726 = vmatprep.subr.mxu0 %v257
    %3727 = vmatpush1.msra.mxu0 %v256
    %3728 = vmatprep.subr.mxu0 %v265
    %3729 = vmatpush1.msra.mxu0 %v264
    %3730 = vmatprep.subr.mxu0 %v273
    %3731 = vmatpush1.msra.mxu0 %v272
    %3732 = vmatprep.subr.mxu0 %v281
    %3733 = vmatpush1.msra.mxu0 %v280
    %3734 = vmatprep.subr.mxu0 %v289
    %3735 = vmatpush1.msra.mxu0 %v288
    %3736 = vmatprep.subr.mxu0 %v297
    %3737 = vmatpush1.msra.mxu0 %v296
    %3738 = vmatprep.subr.mxu0 %v305
    %3739 = vmatpush1.msra.mxu0 %v304
    %3740 = vmatprep.subr.mxu0 %v313
    %3741 = vmatpush1.msra.mxu0 %v312
    %3742 = vmatprep.subr.mxu0 %v321
    %3743 = vmatpush1.msra.mxu0 %v320
    %3744 = vmatprep.subr.mxu0 %v329
    %3745 = vmatpush1.msra.mxu0 %v328
    %3746 = vmatprep.subr.mxu0 %v337
    %3747 = vmatpush1.msra.mxu0 %v336
    %3748 = vmatprep.subr.mxu0 %v345
    %3749 = vmatpush1.msra.mxu0 %v344
    %3750 = vmatprep.mubr.f32.mxu0 %v3477
    %3751 = vmatmul.mubr.f32.gmra.mrb[0].mxu0 %v3476
    %v3752 = vpop.f32.mrb[0].mxu0
    %v3753 = vadd.f32 %v3523, %v3752
    %v3754 = vpop.f32.mrb[0].mxu0
    %v3755 = vadd.f32 %v3527, %v3754
    %3756 = vdwg.mxu0
    %3757 = vmatprep.subr.mxu0 %v99
    %3758 = vmatpush1.msra.mxu0 %v98
    %3759 = vmatprep.subr.mxu0 %v107
    %3760 = vmatpush1.msra.mxu0 %v106
    %3761 = vmatprep.subr.mxu0 %v115
    %3762 = vmatpush1.msra.mxu0 %v114
    %3763 = vmatprep.subr.mxu0 %v123
    %3764 = vmatpush1.msra.mxu0 %v122
    %3765 = vmatprep.subr.mxu0 %v131
    %3766 = vmatpush1.msra.mxu0 %v130
    %3767 = vmatprep.subr.mxu0 %v139
    %3768 = vmatpush1.msra.mxu0 %v138
    %3769 = vmatprep.subr.mxu0 %v147
    %3770 = vmatpush1.msra.mxu0 %v146
    %3771 = vmatprep.subr.mxu0 %v155
    %3772 = vmatpush1.msra.mxu0 %v154
    %3773 = vmatprep.subr.mxu0 %v163
    %3774 = vmatpush1.msra.mxu0 %v162
    %3775 = vmatprep.subr.mxu0 %v171
    %3776 = vmatpush1.msra.mxu0 %v170
    %3777 = vmatprep.subr.mxu0 %v179
    %3778 = vmatpush1.msra.mxu0 %v178
    %3779 = vmatprep.subr.mxu0 %v187
    %3780 = vmatpush1.msra.mxu0 %v186
    %3781 = vmatprep.subr.mxu0 %v195
    %3782 = vmatpush1.msra.mxu0 %v194
    %3783 = vmatprep.subr.mxu0 %v203
    %3784 = vmatpush1.msra.mxu0 %v202
    %3785 = vmatprep.subr.mxu0 %v211
    %3786 = vmatpush1.msra.mxu0 %v210
    %3787 = vmatprep.subr.mxu0 %v219
    %3788 = vmatpush1.msra.mxu0 %v218
    %3789 = vmatprep.subr.mxu0 %v227
    %3790 = vmatpush1.msra.mxu0 %v226
    %3791 = vmatprep.subr.mxu0 %v235
    %3792 = vmatpush1.msra.mxu0 %v234
    %3793 = vmatprep.subr.mxu0 %v243
    %3794 = vmatpush1.msra.mxu0 %v242
    %3795 = vmatprep.subr.mxu0 %v251
    %3796 = vmatpush1.msra.mxu0 %v250
    %3797 = vmatprep.subr.mxu0 %v259
    %3798 = vmatpush1.msra.mxu0 %v258
    %3799 = vmatprep.subr.mxu0 %v267
    %3800 = vmatpush1.msra.mxu0 %v266
    %3801 = vmatprep.subr.mxu0 %v275
    %3802 = vmatpush1.msra.mxu0 %v274
    %3803 = vmatprep.subr.mxu0 %v283
    %3804 = vmatpush1.msra.mxu0 %v282
    %3805 = vmatprep.subr.mxu0 %v291
    %3806 = vmatpush1.msra.mxu0 %v290
    %3807 = vmatprep.subr.mxu0 %v299
    %3808 = vmatpush1.msra.mxu0 %v298
    %3809 = vmatprep.subr.mxu0 %v307
    %3810 = vmatpush1.msra.mxu0 %v306
    %3811 = vmatprep.subr.mxu0 %v315
    %3812 = vmatpush1.msra.mxu0 %v314
    %3813 = vmatprep.subr.mxu0 %v323
    %3814 = vmatpush1.msra.mxu0 %v322
    %3815 = vmatprep.subr.mxu0 %v331
    %3816 = vmatpush1.msra.mxu0 %v330
    %3817 = vmatprep.subr.mxu0 %v339
    %3818 = vmatpush1.msra.mxu0 %v338
    %3819 = vmatprep.subr.mxu0 %v347
    %3820 = vmatpush1.msra.mxu0 %v346
    %3821 = vmatprep.mubr.f32.mxu0 %v3477
    %3822 = vmatmul.mubr.f32.gmra.mrb[0].mxu0 %v3476
    %v3823 = vpop.f32.mrb[0].mxu0
    %v3824 = vadd.f32 %v3531, %v3823
    %v3825 = vpop.f32.mrb[0].mxu0
    %v3826 = vadd.f32 %v3535, %v3825
    %3827 = vdwg.mxu0
    %v3828 = vxor.u32 %v3611, 2147483648
    %v3829 = vxor.u32 %v3613, 2147483648
    %v3830 = vmul.f32 %v3828, 1.442695
    %v3831 = vpow.pop %v3830
    %v3832 = vmul.f32 %v3829, 1.442695
    %v3833 = vpow.pop %v3832
    %v3834 = vadd.f32 %v3831, 1.0
    %v3835 = vadd.f32 %v3833, 1.0
    %v3836 = vrcp.pop %v3834
    %v3837 = vmul.f32 1.0, %v3836
    %v3838 = vrcp.pop %v3835
    %v3839 = vmul.f32 1.0, %v3838
    %v3840 = vxor.u32 %v3682, 2147483648
    %v3841 = vxor.u32 %v3684, 2147483648
    %v3842 = vmul.f32 %v3840, 1.442695
    %v3843 = vpow.pop %v3842
    %v3844 = vmul.f32 %v3841, 1.442695
    %v3845 = vpow.pop %v3844
    %v3846 = vadd.f32 %v3843, 1.0
    %v3847 = vadd.f32 %v3845, 1.0
    %v3848 = vrcp.pop %v3846
    %v3849 = vmul.f32 1.0, %v3848
    %v3850 = vrcp.pop %v3847
    %v3851 = vmul.f32 1.0, %v3850
    %v3852 = vtanh.pop %v3753
    %v3853 = vtanh.pop %v3755
    %v3854 = vxor.u32 %v3824, 2147483648
    %v3855 = vxor.u32 %v3826, 2147483648
    %v3856 = vmul.f32 %v3854, 1.442695
    %v3857 = vpow.pop %v3856
    %v3858 = vmul.f32 %v3855, 1.442695
    %v3859 = vpow.pop %v3858
    %v3860 = vadd.f32 %v3857, 1.0
    %v3861 = vadd.f32 %v3859, 1.0
    %v3862 = vrcp.pop %v3860
    %v3863 = vmul.f32 1.0, %v3862
    %v3864 = vrcp.pop %v3861
    %v3865 = vmul.f32 1.0, %v3864
    %v3866 = vmul.f32 %v3849, %v3472
    %v3867 = vmul.f32 %v3851, %v3473
    %v3868 = vmul.f32 %v3837, %v3852
    %v3869 = vmul.f32 %v3839, %v3853
    %v3870 = vadd.f32 %v3866, %v3868
    %v3871 = vadd.f32 %v3867, %v3869
    %v3872 = vtanh.pop %v3870
    %v3873 = vtanh.pop %v3871
    %v3874 = vmul.f32 %v3863, %v3872
    %v3875 = vmul.f32 %v3865, %v3873
    %v3878 = vcombine.low %v3874, %v3875
    %v3880 = vunpack.c.l.s4 1966171168
    %v3881 = vunpack.c.0.s8 %v3880
    %v3882 = vlaneseq
    %v3883 = vshrl.u32 %v3882, 7
    %v3884 = vsub.s32 %v3881, %v3883
    %v3885 = vrot.slane %v3878, %v3884
    %v3887 = vunpack.c.l.s4 1966171168
    %v3888 = vunpack.c.0.s8 %v3887
    %v3889 = vlaneseq
    %v3890 = vshrl.u32 %v3889, 7
    %v3891 = vsub.s32 %v3888, %v3890
    %v3892 = vrot.slane %v3885, %v3891
    %s3894 = scalar_lea.vmem [#allocation3], 7
    %3895 = vst.msk [vmem:[%s3894] ss:$8 sm:$0x3] %vm1108, %v3892
    %3896 = vst.msk [vmem:[%s3894] ss:$8 sm:$0x0] %vm1108, %v3892
    %3897 = vst.msk [vmem:[#allocation12] ss:$2 sm:$0x3] %vm1108, %v3892
    %v3900 = vcombine.low %v3870, %v3871
    %v3902 = vunpack.c.l.s4 1966171168
    %v3903 = vunpack.c.0.s8 %v3902
    %v3904 = vlaneseq
    %v3905 = vshrl.u32 %v3904, 7
    %v3906 = vsub.s32 %v3903, %v3905
    %v3907 = vrot.slane %v3900, %v3906
    %v3909 = vunpack.c.l.s4 1966171168
    %v3910 = vunpack.c.0.s8 %v3909
    %v3911 = vlaneseq
    %v3912 = vshrl.u32 %v3911, 7
    %v3913 = vsub.s32 %v3910, %v3912
    %v3914 = vrot.slane %v3907, %v3913
    %3916 = vst.msk [vmem:[#allocation14] ss:$2 sm:$0x3] %vm1108, %v3914
    %v3917 = vld [vmem:[#allocation10] sm:$0xff]
    %v3918 = vld [vmem:[#allocation10 + $0x8] sm:$0xff]
    %v3919 = vld [vmem:[#allocation10 + $0x10] sm:$0xff]
    %v3920 = vld [vmem:[#allocation10 + $0x18] sm:$0xff]
    %v3921 = vld [vmem:[#allocation10 + $0x20] sm:$0xff]
    %v3922 = vld [vmem:[#allocation10 + $0x28] sm:$0xff]
    %v3923 = vld [vmem:[#allocation10 + $0x30] sm:$0xff]
    %v3924 = vld [vmem:[#allocation10 + $0x38] sm:$0xff]
    %v3925 = vld [vmem:[#allocation10 + $0x40] sm:$0xff]
    %v3926 = vld [vmem:[#allocation10 + $0x48] sm:$0xff]
    %v3927 = vld [vmem:[#allocation10 + $0x50] sm:$0xff]
    %v3928 = vld [vmem:[#allocation10 + $0x58] sm:$0xff]
    %v3929 = vld [vmem:[#allocation10 + $0x60] sm:$0xff]
    %v3930 = vld [vmem:[#allocation10 + $0x68] sm:$0xff]
    %v3931 = vld [vmem:[#allocation10 + $0x70] sm:$0xff]
    %v3932 = vld [vmem:[#allocation10 + $0x78] sm:$0xff]
    %v3933 = vld [vmem:[#allocation10 + $0x80] sm:$0xff]
    %v3934 = vld [vmem:[#allocation10 + $0x88] sm:$0xff]
    %v3935 = vld [vmem:[#allocation10 + $0x90] sm:$0xff]
    %v3936 = vld [vmem:[#allocation10 + $0x98] sm:$0xff]
    %v3937 = vld [vmem:[#allocation10 + $0xa0] sm:$0xff]
    %v3938 = vld [vmem:[#allocation10 + $0xa8] sm:$0xff]
    %v3939 = vld [vmem:[#allocation10 + $0xb0] sm:$0xff]
    %v3940 = vld [vmem:[#allocation10 + $0xb8] sm:$0xff]
    %v3941 = vld [vmem:[#allocation10 + $0xc0] sm:$0xff]
    %v3942 = vld [vmem:[#allocation10 + $0xc8] sm:$0xff]
    %v3943 = vld [vmem:[#allocation10 + $0xd0] sm:$0xff]
    %v3944 = vld [vmem:[#allocation10 + $0xd8] sm:$0xff]
    %v3945 = vld [vmem:[#allocation10 + $0xe0] sm:$0xff]
    %v3946 = vld [vmem:[#allocation10 + $0xe8] sm:$0xff]
    %v3947 = vld [vmem:[#allocation10 + $0xf0] sm:$0xff]
    %v3948 = vld [vmem:[#allocation10 + $0xf8] sm:$0xff]
    %v3949 = vld [vmem:[#allocation10 + $0x100] sm:$0xff]
    %v3950 = vld [vmem:[#allocation10 + $0x108] sm:$0xff]
    %v3951 = vld [vmem:[#allocation10 + $0x110] sm:$0xff]
    %v3952 = vld [vmem:[#allocation10 + $0x118] sm:$0xff]
    %v3953 = vld [vmem:[#allocation10 + $0x120] sm:$0xff]
    %v3954 = vld [vmem:[#allocation10 + $0x128] sm:$0xff]
    %v3955 = vld [vmem:[#allocation10 + $0x130] sm:$0xff]
    %v3956 = vld [vmem:[#allocation10 + $0x138] sm:$0xff]
    %v3957 = vld [vmem:[#allocation10 + $0x140] sm:$0xff]
    %v3958 = vld [vmem:[#allocation10 + $0x148] sm:$0xff]
    %v3959 = vld [vmem:[#allocation10 + $0x150] sm:$0xff]
    %v3960 = vld [vmem:[#allocation10 + $0x158] sm:$0xff]
    %v3961 = vld [vmem:[#allocation10 + $0x160] sm:$0xff]
    %v3962 = vld [vmem:[#allocation10 + $0x168] sm:$0xff]
    %v3963 = vld [vmem:[#allocation10 + $0x170] sm:$0xff]
    %v3964 = vld [vmem:[#allocation10 + $0x178] sm:$0xff]
    %v3965 = vld [vmem:[#allocation10 + $0x180] sm:$0xff]
    %v3966 = vld [vmem:[#allocation10 + $0x188] sm:$0xff]
    %v3967 = vld [vmem:[#allocation10 + $0x190] sm:$0xff]
    %v3968 = vld [vmem:[#allocation10 + $0x198] sm:$0xff]
    %v3969 = vld [vmem:[#allocation10 + $0x1a0] sm:$0xff]
    %v3970 = vld [vmem:[#allocation10 + $0x1a8] sm:$0xff]
    %v3971 = vld [vmem:[#allocation10 + $0x1b0] sm:$0xff]
    %v3972 = vld [vmem:[#allocation10 + $0x1b8] sm:$0xff]
    %v3973 = vld [vmem:[#allocation10 + $0x1c0] sm:$0xff]
    %v3974 = vld [vmem:[#allocation10 + $0x1c8] sm:$0xff]
    %v3975 = vld [vmem:[#allocation10 + $0x1d0] sm:$0xff]
    %v3976 = vld [vmem:[#allocation10 + $0x1d8] sm:$0xff]
    %v3977 = vld [vmem:[#allocation10 + $0x1e0] sm:$0xff]
    %v3978 = vld [vmem:[#allocation10 + $0x1e8] sm:$0xff]
    %v3979 = vld [vmem:[#allocation10 + $0x1f0] sm:$0xff]
    %v3980 = vld [vmem:[#allocation10 + $0x1f8] sm:$0xff]
    %v3981 = vld [vmem:[#allocation10 + $0x200] sm:$0xff]
    %v3982 = vld [vmem:[#allocation10 + $0x208] sm:$0xff]
    %v3983 = vld [vmem:[#allocation10 + $0x210] sm:$0xff]
    %v3984 = vld [vmem:[#allocation10 + $0x218] sm:$0xff]
    %v3985 = vld [vmem:[#allocation10 + $0x220] sm:$0xff]
    %v3986 = vld [vmem:[#allocation10 + $0x228] sm:$0xff]
    %v3987 = vld [vmem:[#allocation10 + $0x230] sm:$0xff]
    %v3988 = vld [vmem:[#allocation10 + $0x238] sm:$0xff]
    %v3989 = vld [vmem:[#allocation10 + $0x240] sm:$0xff]
    %v3990 = vld [vmem:[#allocation10 + $0x248] sm:$0xff]
    %v3991 = vld [vmem:[#allocation10 + $0x250] sm:$0xff]
    %v3992 = vld [vmem:[#allocation10 + $0x258] sm:$0xff]
    %v3993 = vld [vmem:[#allocation10 + $0x260] sm:$0xff]
    %v3994 = vld [vmem:[#allocation10 + $0x268] sm:$0xff]
    %v3995 = vld [vmem:[#allocation10 + $0x270] sm:$0xff]
    %v3996 = vld [vmem:[#allocation10 + $0x278] sm:$0xff]
    %v3997 = vld [vmem:[#allocation10 + $0x280] sm:$0xff]
    %v3998 = vld [vmem:[#allocation10 + $0x288] sm:$0xff]
    %v3999 = vld [vmem:[#allocation10 + $0x290] sm:$0xff]
    %v4000 = vld [vmem:[#allocation10 + $0x298] sm:$0xff]
    %v4001 = vld [vmem:[#allocation10 + $0x2a0] sm:$0xff]
    %v4002 = vld [vmem:[#allocation10 + $0x2a8] sm:$0xff]
    %v4003 = vld [vmem:[#allocation10 + $0x2b0] sm:$0xff]
    %v4004 = vld [vmem:[#allocation10 + $0x2b8] sm:$0xff]
    %v4005 = vld [vmem:[#allocation10 + $0x2c0] sm:$0xff]
    %v4006 = vld [vmem:[#allocation10 + $0x2c8] sm:$0xff]
    %v4007 = vld [vmem:[#allocation10 + $0x2d0] sm:$0xff]
    %v4008 = vld [vmem:[#allocation10 + $0x2d8] sm:$0xff]
    %v4009 = vld [vmem:[#allocation10 + $0x2e0] sm:$0xff]
    %v4010 = vld [vmem:[#allocation10 + $0x2e8] sm:$0xff]
    %v4011 = vld [vmem:[#allocation10 + $0x2f0] sm:$0xff]
    %v4012 = vld [vmem:[#allocation10 + $0x2f8] sm:$0xff]
    %v4013 = vld [vmem:[#allocation10 + $0x300] sm:$0xff]
    %v4014 = vld [vmem:[#allocation10 + $0x308] sm:$0xff]
    %v4015 = vld [vmem:[#allocation10 + $0x310] sm:$0xff]
    %v4016 = vld [vmem:[#allocation10 + $0x318] sm:$0xff]
    %v4017 = vld [vmem:[#allocation10 + $0x320] sm:$0xff]
    %v4018 = vld [vmem:[#allocation10 + $0x328] sm:$0xff]
    %v4019 = vld [vmem:[#allocation10 + $0x330] sm:$0xff]
    %v4020 = vld [vmem:[#allocation10 + $0x338] sm:$0xff]
    %v4021 = vld [vmem:[#allocation10 + $0x340] sm:$0xff]
    %v4022 = vld [vmem:[#allocation10 + $0x348] sm:$0xff]
    %v4023 = vld [vmem:[#allocation10 + $0x350] sm:$0xff]
    %v4024 = vld [vmem:[#allocation10 + $0x358] sm:$0xff]
    %v4025 = vld [vmem:[#allocation10 + $0x360] sm:$0xff]
    %v4026 = vld [vmem:[#allocation10 + $0x368] sm:$0xff]
    %v4027 = vld [vmem:[#allocation10 + $0x370] sm:$0xff]
    %v4028 = vld [vmem:[#allocation10 + $0x378] sm:$0xff]
    %v4029 = vld [vmem:[#allocation10 + $0x380] sm:$0xff]
    %v4030 = vld [vmem:[#allocation10 + $0x388] sm:$0xff]
    %v4031 = vld [vmem:[#allocation10 + $0x390] sm:$0xff]
    %v4032 = vld [vmem:[#allocation10 + $0x398] sm:$0xff]
    %v4033 = vld [vmem:[#allocation10 + $0x3a0] sm:$0xff]
    %v4034 = vld [vmem:[#allocation10 + $0x3a8] sm:$0xff]
    %v4035 = vld [vmem:[#allocation10 + $0x3b0] sm:$0xff]
    %v4036 = vld [vmem:[#allocation10 + $0x3b8] sm:$0xff]
    %v4037 = vld [vmem:[#allocation10 + $0x3c0] sm:$0xff]
    %v4038 = vld [vmem:[#allocation10 + $0x3c8] sm:$0xff]
    %v4039 = vld [vmem:[#allocation10 + $0x3d0] sm:$0xff]
    %v4040 = vld [vmem:[#allocation10 + $0x3d8] sm:$0xff]
    %v4041 = vld [vmem:[#allocation10 + $0x3e0] sm:$0xff]
    %v4042 = vld [vmem:[#allocation10 + $0x3e8] sm:$0xff]
    %v4043 = vld [vmem:[#allocation10 + $0x3f0] sm:$0xff]
    %v4044 = vld [vmem:[#allocation10 + $0x3f8] sm:$0xff]
    %v4045 = vld [vmem:[#allocation10 + $0x400] sm:$0xff]
    %v4046 = vld [vmem:[#allocation10 + $0x408] sm:$0xff]
    %v4047 = vld [vmem:[#allocation10 + $0x410] sm:$0xff]
    %v4048 = vld [vmem:[#allocation10 + $0x418] sm:$0xff]
    %v4049 = vld [vmem:[#allocation10 + $0x420] sm:$0xff]
    %v4050 = vld [vmem:[#allocation10 + $0x428] sm:$0xff]
    %v4051 = vld [vmem:[#allocation10 + $0x430] sm:$0xff]
    %v4052 = vld [vmem:[#allocation10 + $0x438] sm:$0xff]
    %v4053 = vld [vmem:[#allocation10 + $0x440] sm:$0xff]
    %v4054 = vld [vmem:[#allocation10 + $0x448] sm:$0xff]
    %v4055 = vld [vmem:[#allocation10 + $0x450] sm:$0xff]
    %v4056 = vld [vmem:[#allocation10 + $0x458] sm:$0xff]
    %v4057 = vld [vmem:[#allocation10 + $0x460] sm:$0xff]
    %v4058 = vld [vmem:[#allocation10 + $0x468] sm:$0xff]
    %v4059 = vld [vmem:[#allocation10 + $0x470] sm:$0xff]
    %v4060 = vld [vmem:[#allocation10 + $0x478] sm:$0xff]
    %v4061 = vld [vmem:[#allocation10 + $0x480] sm:$0xff]
    %v4062 = vld [vmem:[#allocation10 + $0x488] sm:$0xff]
    %v4063 = vld [vmem:[#allocation10 + $0x490] sm:$0xff]
    %v4064 = vld [vmem:[#allocation10 + $0x498] sm:$0xff]
    %v4065 = vld [vmem:[#allocation10 + $0x4a0] sm:$0xff]
    %v4066 = vld [vmem:[#allocation10 + $0x4a8] sm:$0xff]
    %v4067 = vld [vmem:[#allocation10 + $0x4b0] sm:$0xff]
    %v4068 = vld [vmem:[#allocation10 + $0x4b8] sm:$0xff]
    %v4069 = vld [vmem:[#allocation10 + $0x4c0] sm:$0xff]
    %v4070 = vld [vmem:[#allocation10 + $0x4c8] sm:$0xff]
    %v4071 = vld [vmem:[#allocation10 + $0x4d0] sm:$0xff]
    %v4072 = vld [vmem:[#allocation10 + $0x4d8] sm:$0xff]
    %v4073 = vld [vmem:[#allocation10 + $0x4e0] sm:$0xff]
    %v4074 = vld [vmem:[#allocation10 + $0x4e8] sm:$0xff]
    %v4075 = vld [vmem:[#allocation10 + $0x4f0] sm:$0xff]
    %v4076 = vld [vmem:[#allocation10 + $0x4f8] sm:$0xff]
    %v4077 = vld [vmem:[#allocation10 + $0x500] sm:$0xff]
    %v4078 = vld [vmem:[#allocation10 + $0x508] sm:$0xff]
    %v4079 = vld [vmem:[#allocation10 + $0x510] sm:$0xff]
    %v4080 = vld [vmem:[#allocation10 + $0x518] sm:$0xff]
    %v4081 = vld [vmem:[#allocation10 + $0x520] sm:$0xff]
    %v4082 = vld [vmem:[#allocation10 + $0x528] sm:$0xff]
    %v4083 = vld [vmem:[#allocation10 + $0x530] sm:$0xff]
    %v4084 = vld [vmem:[#allocation10 + $0x538] sm:$0xff]
    %v4085 = vld [vmem:[#allocation10 + $0x540] sm:$0xff]
    %v4086 = vld [vmem:[#allocation10 + $0x548] sm:$0xff]
    %v4087 = vld [vmem:[#allocation10 + $0x550] sm:$0xff]
    %v4088 = vld [vmem:[#allocation10 + $0x558] sm:$0xff]
    %v4089 = vld [vmem:[#allocation10 + $0x560] sm:$0xff]
    %v4090 = vld [vmem:[#allocation10 + $0x568] sm:$0xff]
    %v4091 = vld [vmem:[#allocation10 + $0x570] sm:$0xff]
    %v4092 = vld [vmem:[#allocation10 + $0x578] sm:$0xff]
    %v4093 = vld [vmem:[#allocation10 + $0x580] sm:$0xff]
    %v4094 = vld [vmem:[#allocation10 + $0x588] sm:$0xff]
    %v4095 = vld [vmem:[#allocation10 + $0x590] sm:$0xff]
    %v4096 = vld [vmem:[#allocation10 + $0x598] sm:$0xff]
    %v4097 = vld [vmem:[#allocation10 + $0x5a0] sm:$0xff]
    %v4098 = vld [vmem:[#allocation10 + $0x5a8] sm:$0xff]
    %v4099 = vld [vmem:[#allocation10 + $0x5b0] sm:$0xff]
    %v4100 = vld [vmem:[#allocation10 + $0x5b8] sm:$0xff]
    %v4101 = vld [vmem:[#allocation10 + $0x5c0] sm:$0xff]
    %v4102 = vld [vmem:[#allocation10 + $0x5c8] sm:$0xff]
    %v4103 = vld [vmem:[#allocation10 + $0x5d0] sm:$0xff]
    %v4104 = vld [vmem:[#allocation10 + $0x5d8] sm:$0xff]
    %v4105 = vld [vmem:[#allocation10 + $0x5e0] sm:$0xff]
    %v4106 = vld [vmem:[#allocation10 + $0x5e8] sm:$0xff]
    %v4107 = vld [vmem:[#allocation10 + $0x5f0] sm:$0xff]
    %v4108 = vld [vmem:[#allocation10 + $0x5f8] sm:$0xff]
    %v4109 = vld [vmem:[#allocation10 + $0x600] sm:$0xff]
    %v4110 = vld [vmem:[#allocation10 + $0x608] sm:$0xff]
    %v4111 = vld [vmem:[#allocation10 + $0x610] sm:$0xff]
    %v4112 = vld [vmem:[#allocation10 + $0x618] sm:$0xff]
    %v4113 = vld [vmem:[#allocation10 + $0x620] sm:$0xff]
    %v4114 = vld [vmem:[#allocation10 + $0x628] sm:$0xff]
    %v4115 = vld [vmem:[#allocation10 + $0x630] sm:$0xff]
    %v4116 = vld [vmem:[#allocation10 + $0x638] sm:$0xff]
    %v4117 = vld [vmem:[#allocation10 + $0x640] sm:$0xff]
    %v4118 = vld [vmem:[#allocation10 + $0x648] sm:$0xff]
    %v4119 = vld [vmem:[#allocation10 + $0x650] sm:$0xff]
    %v4120 = vld [vmem:[#allocation10 + $0x658] sm:$0xff]
    %v4121 = vld [vmem:[#allocation10 + $0x660] sm:$0xff]
    %v4122 = vld [vmem:[#allocation10 + $0x668] sm:$0xff]
    %v4123 = vld [vmem:[#allocation10 + $0x670] sm:$0xff]
    %v4124 = vld [vmem:[#allocation10 + $0x678] sm:$0xff]
    %v4125 = vld [vmem:[#allocation10 + $0x680] sm:$0xff]
    %v4126 = vld [vmem:[#allocation10 + $0x688] sm:$0xff]
    %v4127 = vld [vmem:[#allocation10 + $0x690] sm:$0xff]
    %v4128 = vld [vmem:[#allocation10 + $0x698] sm:$0xff]
    %v4129 = vld [vmem:[#allocation10 + $0x6a0] sm:$0xff]
    %v4130 = vld [vmem:[#allocation10 + $0x6a8] sm:$0xff]
    %v4131 = vld [vmem:[#allocation10 + $0x6b0] sm:$0xff]
    %v4132 = vld [vmem:[#allocation10 + $0x6b8] sm:$0xff]
    %v4133 = vld [vmem:[#allocation10 + $0x6c0] sm:$0xff]
    %v4134 = vld [vmem:[#allocation10 + $0x6c8] sm:$0xff]
    %v4135 = vld [vmem:[#allocation10 + $0x6d0] sm:$0xff]
    %v4136 = vld [vmem:[#allocation10 + $0x6d8] sm:$0xff]
    %v4137 = vld [vmem:[#allocation10 + $0x6e0] sm:$0xff]
    %v4138 = vld [vmem:[#allocation10 + $0x6e8] sm:$0xff]
    %v4139 = vld [vmem:[#allocation10 + $0x6f0] sm:$0xff]
    %v4140 = vld [vmem:[#allocation10 + $0x6f8] sm:$0xff]
    %v4141 = vld [vmem:[#allocation10 + $0x700] sm:$0xff]
    %v4142 = vld [vmem:[#allocation10 + $0x708] sm:$0xff]
    %v4143 = vld [vmem:[#allocation10 + $0x710] sm:$0xff]
    %v4144 = vld [vmem:[#allocation10 + $0x718] sm:$0xff]
    %v4145 = vld [vmem:[#allocation10 + $0x720] sm:$0xff]
    %v4146 = vld [vmem:[#allocation10 + $0x728] sm:$0xff]
    %v4147 = vld [vmem:[#allocation10 + $0x730] sm:$0xff]
    %v4148 = vld [vmem:[#allocation10 + $0x738] sm:$0xff]
    %v4149 = vld [vmem:[#allocation10 + $0x740] sm:$0xff]
    %v4150 = vld [vmem:[#allocation10 + $0x748] sm:$0xff]
    %v4151 = vld [vmem:[#allocation10 + $0x750] sm:$0xff]
    %v4152 = vld [vmem:[#allocation10 + $0x758] sm:$0xff]
    %v4153 = vld [vmem:[#allocation10 + $0x760] sm:$0xff]
    %v4154 = vld [vmem:[#allocation10 + $0x768] sm:$0xff]
    %v4155 = vld [vmem:[#allocation10 + $0x770] sm:$0xff]
    %v4156 = vld [vmem:[#allocation10 + $0x778] sm:$0xff]
    %v4157 = vld [vmem:[#allocation10 + $0x780] sm:$0xff]
    %v4158 = vld [vmem:[#allocation10 + $0x788] sm:$0xff]
    %v4159 = vld [vmem:[#allocation10 + $0x790] sm:$0xff]
    %v4160 = vld [vmem:[#allocation10 + $0x798] sm:$0xff]
    %v4161 = vld [vmem:[#allocation10 + $0x7a0] sm:$0xff]
    %v4162 = vld [vmem:[#allocation10 + $0x7a8] sm:$0xff]
    %v4163 = vld [vmem:[#allocation10 + $0x7b0] sm:$0xff]
    %v4164 = vld [vmem:[#allocation10 + $0x7b8] sm:$0xff]
    %v4165 = vld [vmem:[#allocation10 + $0x7c0] sm:$0xff]
    %v4166 = vld [vmem:[#allocation10 + $0x7c8] sm:$0xff]
    %v4167 = vld [vmem:[#allocation10 + $0x7d0] sm:$0xff]
    %v4168 = vld [vmem:[#allocation10 + $0x7d8] sm:$0xff]
    %v4169 = vld [vmem:[#allocation10 + $0x7e0] sm:$0xff]
    %v4170 = vld [vmem:[#allocation10 + $0x7e8] sm:$0xff]
    %v4171 = vld [vmem:[#allocation10 + $0x7f0] sm:$0xff]
    %v4172 = vld [vmem:[#allocation10 + $0x7f8] sm:$0xff]
    %v4173 = vld [vmem:[#allocation3] sm:$0xff]
    %v4174 = vld [vmem:[#allocation3 + $0x8] sm:$0xff]
    %v4175 = vld [vmem:[#allocation8] sm:$0xff]
    %v4176 = vld [vmem:[#allocation8 + $0x8] sm:$0xff]
    %v4177 = vld [vmem:[#allocation8 + $0x10] sm:$0xff]
    %v4178 = vld [vmem:[#allocation8 + $0x18] sm:$0xff]
    %v4179 = vld [vmem:[#allocation8 + $0x20] sm:$0xff]
    %v4180 = vld [vmem:[#allocation8 + $0x28] sm:$0xff]
    %v4181 = vld [vmem:[#allocation8 + $0x30] sm:$0xff]
    %v4182 = vld [vmem:[#allocation8 + $0x38] sm:$0xff]
    %v4183 = vld [vmem:[#allocation8 + $0x40] sm:$0xff]
    %v4184 = vld [vmem:[#allocation8 + $0x48] sm:$0xff]
    %v4185 = vld [vmem:[#allocation8 + $0x50] sm:$0xff]
    %v4186 = vld [vmem:[#allocation8 + $0x58] sm:$0xff]
    %v4187 = vld [vmem:[#allocation8 + $0x60] sm:$0xff]
    %v4188 = vld [vmem:[#allocation8 + $0x68] sm:$0xff]
    %v4189 = vld [vmem:[#allocation8 + $0x70] sm:$0xff]
    %v4190 = vld [vmem:[#allocation8 + $0x78] sm:$0xff]
    %v4191 = vld [vmem:[#allocation8 + $0x80] sm:$0xff]
    %v4192 = vld [vmem:[#allocation8 + $0x88] sm:$0xff]
    %v4193 = vld [vmem:[#allocation8 + $0x90] sm:$0xff]
    %v4194 = vld [vmem:[#allocation8 + $0x98] sm:$0xff]
    %v4195 = vld [vmem:[#allocation8 + $0xa0] sm:$0xff]
    %v4196 = vld [vmem:[#allocation8 + $0xa8] sm:$0xff]
    %v4197 = vld [vmem:[#allocation8 + $0xb0] sm:$0xff]
    %v4198 = vld [vmem:[#allocation8 + $0xb8] sm:$0xff]
    %v4199 = vld [vmem:[#allocation8 + $0xc0] sm:$0xff]
    %v4200 = vld [vmem:[#allocation8 + $0xc8] sm:$0xff]
    %v4201 = vld [vmem:[#allocation8 + $0xd0] sm:$0xff]
    %v4202 = vld [vmem:[#allocation8 + $0xd8] sm:$0xff]
    %v4203 = vld [vmem:[#allocation8 + $0xe0] sm:$0xff]
    %v4204 = vld [vmem:[#allocation8 + $0xe8] sm:$0xff]
    %v4205 = vld [vmem:[#allocation8 + $0xf0] sm:$0xff]
    %v4206 = vld [vmem:[#allocation8 + $0xf8] sm:$0xff]
    %v4207 = vld [vmem:[#allocation8 + $0x100] sm:$0xff]
    %v4208 = vld [vmem:[#allocation8 + $0x108] sm:$0xff]
    %v4209 = vld [vmem:[#allocation8 + $0x110] sm:$0xff]
    %v4210 = vld [vmem:[#allocation8 + $0x118] sm:$0xff]
    %v4211 = vld [vmem:[#allocation8 + $0x120] sm:$0xff]
    %v4212 = vld [vmem:[#allocation8 + $0x128] sm:$0xff]
    %v4213 = vld [vmem:[#allocation8 + $0x130] sm:$0xff]
    %v4214 = vld [vmem:[#allocation8 + $0x138] sm:$0xff]
    %v4215 = vld [vmem:[#allocation8 + $0x140] sm:$0xff]
    %v4216 = vld [vmem:[#allocation8 + $0x148] sm:$0xff]
    %v4217 = vld [vmem:[#allocation8 + $0x150] sm:$0xff]
    %v4218 = vld [vmem:[#allocation8 + $0x158] sm:$0xff]
    %v4219 = vld [vmem:[#allocation8 + $0x160] sm:$0xff]
    %v4220 = vld [vmem:[#allocation8 + $0x168] sm:$0xff]
    %v4221 = vld [vmem:[#allocation8 + $0x170] sm:$0xff]
    %v4222 = vld [vmem:[#allocation8 + $0x178] sm:$0xff]
    %v4223 = vld [vmem:[#allocation8 + $0x180] sm:$0xff]
    %v4224 = vld [vmem:[#allocation8 + $0x188] sm:$0xff]
    %v4225 = vld [vmem:[#allocation8 + $0x190] sm:$0xff]
    %v4226 = vld [vmem:[#allocation8 + $0x198] sm:$0xff]
    %v4227 = vld [vmem:[#allocation8 + $0x1a0] sm:$0xff]
    %v4228 = vld [vmem:[#allocation8 + $0x1a8] sm:$0xff]
    %v4229 = vld [vmem:[#allocation8 + $0x1b0] sm:$0xff]
    %v4230 = vld [vmem:[#allocation8 + $0x1b8] sm:$0xff]
    %v4231 = vld [vmem:[#allocation8 + $0x1c0] sm:$0xff]
    %v4232 = vld [vmem:[#allocation8 + $0x1c8] sm:$0xff]
    %v4233 = vld [vmem:[#allocation8 + $0x1d0] sm:$0xff]
    %v4234 = vld [vmem:[#allocation8 + $0x1d8] sm:$0xff]
    %v4235 = vld [vmem:[#allocation8 + $0x1e0] sm:$0xff]
    %v4236 = vld [vmem:[#allocation8 + $0x1e8] sm:$0xff]
    %v4237 = vld [vmem:[#allocation8 + $0x1f0] sm:$0xff]
    %v4238 = vld [vmem:[#allocation8 + $0x1f8] sm:$0xff]
    %v4239 = vld [vmem:[#allocation8 + $0x200] sm:$0xff]
    %v4240 = vld [vmem:[#allocation8 + $0x208] sm:$0xff]
    %v4241 = vld [vmem:[#allocation8 + $0x210] sm:$0xff]
    %v4242 = vld [vmem:[#allocation8 + $0x218] sm:$0xff]
    %v4243 = vld [vmem:[#allocation8 + $0x220] sm:$0xff]
    %v4244 = vld [vmem:[#allocation8 + $0x228] sm:$0xff]
    %v4245 = vld [vmem:[#allocation8 + $0x230] sm:$0xff]
    %v4246 = vld [vmem:[#allocation8 + $0x238] sm:$0xff]
    %v4247 = vld [vmem:[#allocation8 + $0x240] sm:$0xff]
    %v4248 = vld [vmem:[#allocation8 + $0x248] sm:$0xff]
    %v4249 = vld [vmem:[#allocation8 + $0x250] sm:$0xff]
    %v4250 = vld [vmem:[#allocation8 + $0x258] sm:$0xff]
    %v4251 = vld [vmem:[#allocation8 + $0x260] sm:$0xff]
    %v4252 = vld [vmem:[#allocation8 + $0x268] sm:$0xff]
    %v4253 = vld [vmem:[#allocation8 + $0x270] sm:$0xff]
    %v4254 = vld [vmem:[#allocation8 + $0x278] sm:$0xff]
    %v4255 = vld [vmem:[#allocation8 + $0x280] sm:$0xff]
    %v4256 = vld [vmem:[#allocation8 + $0x288] sm:$0xff]
    %v4257 = vld [vmem:[#allocation8 + $0x290] sm:$0xff]
    %v4258 = vld [vmem:[#allocation8 + $0x298] sm:$0xff]
    %v4259 = vld [vmem:[#allocation8 + $0x2a0] sm:$0xff]
    %v4260 = vld [vmem:[#allocation8 + $0x2a8] sm:$0xff]
    %v4261 = vld [vmem:[#allocation8 + $0x2b0] sm:$0xff]
    %v4262 = vld [vmem:[#allocation8 + $0x2b8] sm:$0xff]
    %v4263 = vld [vmem:[#allocation8 + $0x2c0] sm:$0xff]
    %v4264 = vld [vmem:[#allocation8 + $0x2c8] sm:$0xff]
    %v4265 = vld [vmem:[#allocation8 + $0x2d0] sm:$0xff]
    %v4266 = vld [vmem:[#allocation8 + $0x2d8] sm:$0xff]
    %v4267 = vld [vmem:[#allocation8 + $0x2e0] sm:$0xff]
    %v4268 = vld [vmem:[#allocation8 + $0x2e8] sm:$0xff]
    %v4269 = vld [vmem:[#allocation8 + $0x2f0] sm:$0xff]
    %v4270 = vld [vmem:[#allocation8 + $0x2f8] sm:$0xff]
    %v4271 = vld [vmem:[#allocation8 + $0x300] sm:$0xff]
    %v4272 = vld [vmem:[#allocation8 + $0x308] sm:$0xff]
    %v4273 = vld [vmem:[#allocation8 + $0x310] sm:$0xff]
    %v4274 = vld [vmem:[#allocation8 + $0x318] sm:$0xff]
    %v4275 = vld [vmem:[#allocation8 + $0x320] sm:$0xff]
    %v4276 = vld [vmem:[#allocation8 + $0x328] sm:$0xff]
    %v4277 = vld [vmem:[#allocation8 + $0x330] sm:$0xff]
    %v4278 = vld [vmem:[#allocation8 + $0x338] sm:$0xff]
    %v4279 = vld [vmem:[#allocation8 + $0x340] sm:$0xff]
    %v4280 = vld [vmem:[#allocation8 + $0x348] sm:$0xff]
    %v4281 = vld [vmem:[#allocation8 + $0x350] sm:$0xff]
    %v4282 = vld [vmem:[#allocation8 + $0x358] sm:$0xff]
    %v4283 = vld [vmem:[#allocation8 + $0x360] sm:$0xff]
    %v4284 = vld [vmem:[#allocation8 + $0x368] sm:$0xff]
    %v4285 = vld [vmem:[#allocation8 + $0x370] sm:$0xff]
    %v4286 = vld [vmem:[#allocation8 + $0x378] sm:$0xff]
    %v4287 = vld [vmem:[#allocation8 + $0x380] sm:$0xff]
    %v4288 = vld [vmem:[#allocation8 + $0x388] sm:$0xff]
    %v4289 = vld [vmem:[#allocation8 + $0x390] sm:$0xff]
    %v4290 = vld [vmem:[#allocation8 + $0x398] sm:$0xff]
    %v4291 = vld [vmem:[#allocation8 + $0x3a0] sm:$0xff]
    %v4292 = vld [vmem:[#allocation8 + $0x3a8] sm:$0xff]
    %v4293 = vld [vmem:[#allocation8 + $0x3b0] sm:$0xff]
    %v4294 = vld [vmem:[#allocation8 + $0x3b8] sm:$0xff]
    %v4295 = vld [vmem:[#allocation8 + $0x3c0] sm:$0xff]
    %v4296 = vld [vmem:[#allocation8 + $0x3c8] sm:$0xff]
    %v4297 = vld [vmem:[#allocation8 + $0x3d0] sm:$0xff]
    %v4298 = vld [vmem:[#allocation8 + $0x3d8] sm:$0xff]
    %v4299 = vld [vmem:[#allocation8 + $0x3e0] sm:$0xff]
    %v4300 = vld [vmem:[#allocation8 + $0x3e8] sm:$0xff]
    %v4301 = vld [vmem:[#allocation8 + $0x3f0] sm:$0xff]
    %v4302 = vld [vmem:[#allocation8 + $0x3f8] sm:$0xff]
    %v4303 = vld [vmem:[#allocation8 + $0x400] sm:$0xff]
    %v4304 = vld [vmem:[#allocation8 + $0x408] sm:$0xff]
    %v4305 = vld [vmem:[#allocation8 + $0x410] sm:$0xff]
    %v4306 = vld [vmem:[#allocation8 + $0x418] sm:$0xff]
    %v4307 = vld [vmem:[#allocation8 + $0x420] sm:$0xff]
    %v4308 = vld [vmem:[#allocation8 + $0x428] sm:$0xff]
    %v4309 = vld [vmem:[#allocation8 + $0x430] sm:$0xff]
    %v4310 = vld [vmem:[#allocation8 + $0x438] sm:$0xff]
    %v4311 = vld [vmem:[#allocation8 + $0x440] sm:$0xff]
    %v4312 = vld [vmem:[#allocation8 + $0x448] sm:$0xff]
    %v4313 = vld [vmem:[#allocation8 + $0x450] sm:$0xff]
    %v4314 = vld [vmem:[#allocation8 + $0x458] sm:$0xff]
    %v4315 = vld [vmem:[#allocation8 + $0x460] sm:$0xff]
    %v4316 = vld [vmem:[#allocation8 + $0x468] sm:$0xff]
    %v4317 = vld [vmem:[#allocation8 + $0x470] sm:$0xff]
    %v4318 = vld [vmem:[#allocation8 + $0x478] sm:$0xff]
    %v4319 = vld [vmem:[#allocation8 + $0x480] sm:$0xff]
    %v4320 = vld [vmem:[#allocation8 + $0x488] sm:$0xff]
    %v4321 = vld [vmem:[#allocation8 + $0x490] sm:$0xff]
    %v4322 = vld [vmem:[#allocation8 + $0x498] sm:$0xff]
    %v4323 = vld [vmem:[#allocation8 + $0x4a0] sm:$0xff]
    %v4324 = vld [vmem:[#allocation8 + $0x4a8] sm:$0xff]
    %v4325 = vld [vmem:[#allocation8 + $0x4b0] sm:$0xff]
    %v4326 = vld [vmem:[#allocation8 + $0x4b8] sm:$0xff]
    %v4327 = vld [vmem:[#allocation8 + $0x4c0] sm:$0xff]
    %v4328 = vld [vmem:[#allocation8 + $0x4c8] sm:$0xff]
    %v4329 = vld [vmem:[#allocation8 + $0x4d0] sm:$0xff]
    %v4330 = vld [vmem:[#allocation8 + $0x4d8] sm:$0xff]
    %v4331 = vld [vmem:[#allocation8 + $0x4e0] sm:$0xff]
    %v4332 = vld [vmem:[#allocation8 + $0x4e8] sm:$0xff]
    %v4333 = vld [vmem:[#allocation8 + $0x4f0] sm:$0xff]
    %v4334 = vld [vmem:[#allocation8 + $0x4f8] sm:$0xff]
    %v4335 = vld [vmem:[#allocation8 + $0x500] sm:$0xff]
    %v4336 = vld [vmem:[#allocation8 + $0x508] sm:$0xff]
    %v4337 = vld [vmem:[#allocation8 + $0x510] sm:$0xff]
    %v4338 = vld [vmem:[#allocation8 + $0x518] sm:$0xff]
    %v4339 = vld [vmem:[#allocation8 + $0x520] sm:$0xff]
    %v4340 = vld [vmem:[#allocation8 + $0x528] sm:$0xff]
    %v4341 = vld [vmem:[#allocation8 + $0x530] sm:$0xff]
    %v4342 = vld [vmem:[#allocation8 + $0x538] sm:$0xff]
    %v4343 = vld [vmem:[#allocation8 + $0x540] sm:$0xff]
    %v4344 = vld [vmem:[#allocation8 + $0x548] sm:$0xff]
    %v4345 = vld [vmem:[#allocation8 + $0x550] sm:$0xff]
    %v4346 = vld [vmem:[#allocation8 + $0x558] sm:$0xff]
    %v4347 = vld [vmem:[#allocation8 + $0x560] sm:$0xff]
    %v4348 = vld [vmem:[#allocation8 + $0x568] sm:$0xff]
    %v4349 = vld [vmem:[#allocation8 + $0x570] sm:$0xff]
    %v4350 = vld [vmem:[#allocation8 + $0x578] sm:$0xff]
    %v4351 = vld [vmem:[#allocation8 + $0x580] sm:$0xff]
    %v4352 = vld [vmem:[#allocation8 + $0x588] sm:$0xff]
    %v4353 = vld [vmem:[#allocation8 + $0x590] sm:$0xff]
    %v4354 = vld [vmem:[#allocation8 + $0x598] sm:$0xff]
    %v4355 = vld [vmem:[#allocation8 + $0x5a0] sm:$0xff]
    %v4356 = vld [vmem:[#allocation8 + $0x5a8] sm:$0xff]
    %v4357 = vld [vmem:[#allocation8 + $0x5b0] sm:$0xff]
    %v4358 = vld [vmem:[#allocation8 + $0x5b8] sm:$0xff]
    %v4359 = vld [vmem:[#allocation8 + $0x5c0] sm:$0xff]
    %v4360 = vld [vmem:[#allocation8 + $0x5c8] sm:$0xff]
    %v4361 = vld [vmem:[#allocation8 + $0x5d0] sm:$0xff]
    %v4362 = vld [vmem:[#allocation8 + $0x5d8] sm:$0xff]
    %v4363 = vld [vmem:[#allocation8 + $0x5e0] sm:$0xff]
    %v4364 = vld [vmem:[#allocation8 + $0x5e8] sm:$0xff]
    %v4365 = vld [vmem:[#allocation8 + $0x5f0] sm:$0xff]
    %v4366 = vld [vmem:[#allocation8 + $0x5f8] sm:$0xff]
    %v4367 = vld [vmem:[#allocation8 + $0x600] sm:$0xff]
    %v4368 = vld [vmem:[#allocation8 + $0x608] sm:$0xff]
    %v4369 = vld [vmem:[#allocation8 + $0x610] sm:$0xff]
    %v4370 = vld [vmem:[#allocation8 + $0x618] sm:$0xff]
    %v4371 = vld [vmem:[#allocation8 + $0x620] sm:$0xff]
    %v4372 = vld [vmem:[#allocation8 + $0x628] sm:$0xff]
    %v4373 = vld [vmem:[#allocation8 + $0x630] sm:$0xff]
    %v4374 = vld [vmem:[#allocation8 + $0x638] sm:$0xff]
    %v4375 = vld [vmem:[#allocation8 + $0x640] sm:$0xff]
    %v4376 = vld [vmem:[#allocation8 + $0x648] sm:$0xff]
    %v4377 = vld [vmem:[#allocation8 + $0x650] sm:$0xff]
    %v4378 = vld [vmem:[#allocation8 + $0x658] sm:$0xff]
    %v4379 = vld [vmem:[#allocation8 + $0x660] sm:$0xff]
    %v4380 = vld [vmem:[#allocation8 + $0x668] sm:$0xff]
    %v4381 = vld [vmem:[#allocation8 + $0x670] sm:$0xff]
    %v4382 = vld [vmem:[#allocation8 + $0x678] sm:$0xff]
    %v4383 = vld [vmem:[#allocation8 + $0x680] sm:$0xff]
    %v4384 = vld [vmem:[#allocation8 + $0x688] sm:$0xff]
    %v4385 = vld [vmem:[#allocation8 + $0x690] sm:$0xff]
    %v4386 = vld [vmem:[#allocation8 + $0x698] sm:$0xff]
    %v4387 = vld [vmem:[#allocation8 + $0x6a0] sm:$0xff]
    %v4388 = vld [vmem:[#allocation8 + $0x6a8] sm:$0xff]
    %v4389 = vld [vmem:[#allocation8 + $0x6b0] sm:$0xff]
    %v4390 = vld [vmem:[#allocation8 + $0x6b8] sm:$0xff]
    %v4391 = vld [vmem:[#allocation8 + $0x6c0] sm:$0xff]
    %v4392 = vld [vmem:[#allocation8 + $0x6c8] sm:$0xff]
    %v4393 = vld [vmem:[#allocation8 + $0x6d0] sm:$0xff]
    %v4394 = vld [vmem:[#allocation8 + $0x6d8] sm:$0xff]
    %v4395 = vld [vmem:[#allocation8 + $0x6e0] sm:$0xff]
    %v4396 = vld [vmem:[#allocation8 + $0x6e8] sm:$0xff]
    %v4397 = vld [vmem:[#allocation8 + $0x6f0] sm:$0xff]
    %v4398 = vld [vmem:[#allocation8 + $0x6f8] sm:$0xff]
    %v4399 = vld [vmem:[#allocation8 + $0x700] sm:$0xff]
    %v4400 = vld [vmem:[#allocation8 + $0x708] sm:$0xff]
    %v4401 = vld [vmem:[#allocation8 + $0x710] sm:$0xff]
    %v4402 = vld [vmem:[#allocation8 + $0x718] sm:$0xff]
    %v4403 = vld [vmem:[#allocation8 + $0x720] sm:$0xff]
    %v4404 = vld [vmem:[#allocation8 + $0x728] sm:$0xff]
    %v4405 = vld [vmem:[#allocation8 + $0x730] sm:$0xff]
    %v4406 = vld [vmem:[#allocation8 + $0x738] sm:$0xff]
    %v4407 = vld [vmem:[#allocation8 + $0x740] sm:$0xff]
    %v4408 = vld [vmem:[#allocation8 + $0x748] sm:$0xff]
    %v4409 = vld [vmem:[#allocation8 + $0x750] sm:$0xff]
    %v4410 = vld [vmem:[#allocation8 + $0x758] sm:$0xff]
    %v4411 = vld [vmem:[#allocation8 + $0x760] sm:$0xff]
    %v4412 = vld [vmem:[#allocation8 + $0x768] sm:$0xff]
    %v4413 = vld [vmem:[#allocation8 + $0x770] sm:$0xff]
    %v4414 = vld [vmem:[#allocation8 + $0x778] sm:$0xff]
    %v4415 = vld [vmem:[#allocation8 + $0x780] sm:$0xff]
    %v4416 = vld [vmem:[#allocation8 + $0x788] sm:$0xff]
    %v4417 = vld [vmem:[#allocation8 + $0x790] sm:$0xff]
    %v4418 = vld [vmem:[#allocation8 + $0x798] sm:$0xff]
    %v4419 = vld [vmem:[#allocation8 + $0x7a0] sm:$0xff]
    %v4420 = vld [vmem:[#allocation8 + $0x7a8] sm:$0xff]
    %v4421 = vld [vmem:[#allocation8 + $0x7b0] sm:$0xff]
    %v4422 = vld [vmem:[#allocation8 + $0x7b8] sm:$0xff]
    %v4423 = vld [vmem:[#allocation8 + $0x7c0] sm:$0xff]
    %v4424 = vld [vmem:[#allocation8 + $0x7c8] sm:$0xff]
    %v4425 = vld [vmem:[#allocation8 + $0x7d0] sm:$0xff]
    %v4426 = vld [vmem:[#allocation8 + $0x7d8] sm:$0xff]
    %v4427 = vld [vmem:[#allocation8 + $0x7e0] sm:$0xff]
    %v4428 = vld [vmem:[#allocation8 + $0x7e8] sm:$0xff]
    %v4429 = vld [vmem:[#allocation8 + $0x7f0] sm:$0xff]
    %v4430 = vld [vmem:[#allocation8 + $0x7f8] sm:$0xff]
    %v4431 = vld [vmem:[%s7] sm:$0xff]
    %v4433 = vlaneseq
    %v4434 = vshrl.u32 %v4433, 7
    %v4435 = vsub.s32 0, %v4434
    %v4436 = vrot.slane %v4431, %v4435
    %v4437 = vlaneseq
    %v4438 = vshrl.u32 %v4437, 7
    %v4439 = vsub.s32 1, %v4438
    %v4440 = vrot.slane %v4431, %v4439
    %v4441 = vlaneseq
    %v4442 = vshrl.u32 %v4441, 7
    %v4443 = vsub.s32 2, %v4442
    %v4444 = vrot.slane %v4431, %v4443
    %v4445 = vlaneseq
    %v4446 = vshrl.u32 %v4445, 7
    %v4447 = vsub.s32 3, %v4446
    %v4448 = vrot.slane %v4431, %v4447
    %v4449 = vlaneseq
    %v4450 = vshrl.u32 %v4449, 7
    %v4451 = vsub.s32 4, %v4450
    %v4452 = vrot.slane %v4431, %v4451
    %v4453 = vlaneseq
    %v4454 = vshrl.u32 %v4453, 7
    %v4455 = vsub.s32 5, %v4454
    %v4456 = vrot.slane %v4431, %v4455
    %v4457 = vlaneseq
    %v4458 = vshrl.u32 %v4457, 7
    %v4459 = vsub.s32 6, %v4458
    %v4460 = vrot.slane %v4431, %v4459
    %v4461 = vlaneseq
    %v4462 = vshrl.u32 %v4461, 7
    %v4463 = vsub.s32 7, %v4462
    %v4464 = vrot.slane %v4431, %v4463
    %4473 = vmatprep.subr.mxu0 %v4176
    %4474 = vmatpush1.msra.mxu0 %v4175
    %4475 = vmatprep.subr.mxu0 %v4184
    %4476 = vmatpush1.msra.mxu0 %v4183
    %4477 = vmatprep.subr.mxu0 %v4192
    %4478 = vmatpush1.msra.mxu0 %v4191
    %4479 = vmatprep.subr.mxu0 %v4200
    %4480 = vmatpush1.msra.mxu0 %v4199
    %4481 = vmatprep.subr.mxu0 %v4208
    %4482 = vmatpush1.msra.mxu0 %v4207
    %4483 = vmatprep.subr.mxu0 %v4216
    %4484 = vmatpush1.msra.mxu0 %v4215
    %4485 = vmatprep.subr.mxu0 %v4224
    %4486 = vmatpush1.msra.mxu0 %v4223
    %4487 = vmatprep.subr.mxu0 %v4232
    %4488 = vmatpush1.msra.mxu0 %v4231
    %4489 = vmatprep.subr.mxu0 %v4240
    %4490 = vmatpush1.msra.mxu0 %v4239
    %4491 = vmatprep.subr.mxu0 %v4248
    %4492 = vmatpush1.msra.mxu0 %v4247
    %4493 = vmatprep.subr.mxu0 %v4256
    %4494 = vmatpush1.msra.mxu0 %v4255
    %4495 = vmatprep.subr.mxu0 %v4264
    %4496 = vmatpush1.msra.mxu0 %v4263
    %4497 = vmatprep.subr.mxu0 %v4272
    %4498 = vmatpush1.msra.mxu0 %v4271
    %4499 = vmatprep.subr.mxu0 %v4280
    %4500 = vmatpush1.msra.mxu0 %v4279
    %4501 = vmatprep.subr.mxu0 %v4288
    %4502 = vmatpush1.msra.mxu0 %v4287
    %4503 = vmatprep.subr.mxu0 %v4296
    %4504 = vmatpush1.msra.mxu0 %v4295
    %4505 = vmatprep.subr.mxu0 %v4304
    %4506 = vmatpush1.msra.mxu0 %v4303
    %4507 = vmatprep.subr.mxu0 %v4312
    %4508 = vmatpush1.msra.mxu0 %v4311
    %4509 = vmatprep.subr.mxu0 %v4320
    %4510 = vmatpush1.msra.mxu0 %v4319
    %4511 = vmatprep.subr.mxu0 %v4328
    %4512 = vmatpush1.msra.mxu0 %v4327
    %4513 = vmatprep.subr.mxu0 %v4336
    %4514 = vmatpush1.msra.mxu0 %v4335
    %4515 = vmatprep.subr.mxu0 %v4344
    %4516 = vmatpush1.msra.mxu0 %v4343
    %4517 = vmatprep.subr.mxu0 %v4352
    %4518 = vmatpush1.msra.mxu0 %v4351
    %4519 = vmatprep.subr.mxu0 %v4360
    %4520 = vmatpush1.msra.mxu0 %v4359
    %4521 = vmatprep.subr.mxu0 %v4368
    %4522 = vmatpush1.msra.mxu0 %v4367
    %4523 = vmatprep.subr.mxu0 %v4376
    %4524 = vmatpush1.msra.mxu0 %v4375
    %4525 = vmatprep.subr.mxu0 %v4384
    %4526 = vmatpush1.msra.mxu0 %v4383
    %4527 = vmatprep.subr.mxu0 %v4392
    %4528 = vmatpush1.msra.mxu0 %v4391
    %4529 = vmatprep.subr.mxu0 %v4400
    %4530 = vmatpush1.msra.mxu0 %v4399
    %4531 = vmatprep.subr.mxu0 %v4408
    %4532 = vmatpush1.msra.mxu0 %v4407
    %4533 = vmatprep.subr.mxu0 %v4416
    %4534 = vmatpush1.msra.mxu0 %v4415
    %4535 = vmatprep.subr.mxu0 %v4424
    %4536 = vmatpush1.msra.mxu0 %v4423
    %4537 = vmatprep.mubr.f32.mxu0 %v4174
    %4538 = vmatmul.mubr.f32.gmra.mrb[0].mxu0 %v4173
    %v4539 = vpop.f32.mrb[0].mxu0
    %v4540 = vadd.f32 %v4436, %v4539
    %v4541 = vpop.f32.mrb[0].mxu0
    %v4542 = vadd.f32 %v4440, %v4541
    %4543 = vdwg.mxu0
    %4544 = vmatprep.subr.mxu0 %v4178
    %4545 = vmatpush1.msra.mxu0 %v4177
    %4546 = vmatprep.subr.mxu0 %v4186
    %4547 = vmatpush1.msra.mxu0 %v4185
    %4548 = vmatprep.subr.mxu0 %v4194
    %4549 = vmatpush1.msra.mxu0 %v4193
    %4550 = vmatprep.subr.mxu0 %v4202
    %4551 = vmatpush1.msra.mxu0 %v4201
    %4552 = vmatprep.subr.mxu0 %v4210
    %4553 = vmatpush1.msra.mxu0 %v4209
    %4554 = vmatprep.subr.mxu0 %v4218
    %4555 = vmatpush1.msra.mxu0 %v4217
    %4556 = vmatprep.subr.mxu0 %v4226
    %4557 = vmatpush1.msra.mxu0 %v4225
    %4558 = vmatprep.subr.mxu0 %v4234
    %4559 = vmatpush1.msra.mxu0 %v4233
    %4560 = vmatprep.subr.mxu0 %v4242
    %4561 = vmatpush1.msra.mxu0 %v4241
    %4562 = vmatprep.subr.mxu0 %v4250
    %4563 = vmatpush1.msra.mxu0 %v4249
    %4564 = vmatprep.subr.mxu0 %v4258
    %4565 = vmatpush1.msra.mxu0 %v4257
    %4566 = vmatprep.subr.mxu0 %v4266
    %4567 = vmatpush1.msra.mxu0 %v4265
    %4568 = vmatprep.subr.mxu0 %v4274
    %4569 = vmatpush1.msra.mxu0 %v4273
    %4570 = vmatprep.subr.mxu0 %v4282
    %4571 = vmatpush1.msra.mxu0 %v4281
    %4572 = vmatprep.subr.mxu0 %v4290
    %4573 = vmatpush1.msra.mxu0 %v4289
    %4574 = vmatprep.subr.mxu0 %v4298
    %4575 = vmatpush1.msra.mxu0 %v4297
    %4576 = vmatprep.subr.mxu0 %v4306
    %4577 = vmatpush1.msra.mxu0 %v4305
    %4578 = vmatprep.subr.mxu0 %v4314
    %4579 = vmatpush1.msra.mxu0 %v4313
    %4580 = vmatprep.subr.mxu0 %v4322
    %4581 = vmatpush1.msra.mxu0 %v4321
    %4582 = vmatprep.subr.mxu0 %v4330
    %4583 = vmatpush1.msra.mxu0 %v4329
    %4584 = vmatprep.subr.mxu0 %v4338
    %4585 = vmatpush1.msra.mxu0 %v4337
    %4586 = vmatprep.subr.mxu0 %v4346
    %4587 = vmatpush1.msra.mxu0 %v4345
    %4588 = vmatprep.subr.mxu0 %v4354
    %4589 = vmatpush1.msra.mxu0 %v4353
    %4590 = vmatprep.subr.mxu0 %v4362
    %4591 = vmatpush1.msra.mxu0 %v4361
    %4592 = vmatprep.subr.mxu0 %v4370
    %4593 = vmatpush1.msra.mxu0 %v4369
    %4594 = vmatprep.subr.mxu0 %v4378
    %4595 = vmatpush1.msra.mxu0 %v4377
    %4596 = vmatprep.subr.mxu0 %v4386
    %4597 = vmatpush1.msra.mxu0 %v4385
    %4598 = vmatprep.subr.mxu0 %v4394
    %4599 = vmatpush1.msra.mxu0 %v4393
    %4600 = vmatprep.subr.mxu0 %v4402
    %4601 = vmatpush1.msra.mxu0 %v4401
    %4602 = vmatprep.subr.mxu0 %v4410
    %4603 = vmatpush1.msra.mxu0 %v4409
    %4604 = vmatprep.subr.mxu0 %v4418
    %4605 = vmatpush1.msra.mxu0 %v4417
    %4606 = vmatprep.subr.mxu0 %v4426
    %4607 = vmatpush1.msra.mxu0 %v4425
    %4608 = vmatprep.mubr.f32.mxu0 %v4174
    %4609 = vmatmul.mubr.f32.gmra.mrb[0].mxu0 %v4173
    %v4610 = vpop.f32.mrb[0].mxu0
    %v4611 = vadd.f32 %v4444, %v4610
    %v4612 = vpop.f32.mrb[0].mxu0
    %v4613 = vadd.f32 %v4448, %v4612
    %4614 = vdwg.mxu0
    %4615 = vmatprep.subr.mxu0 %v4180
    %4616 = vmatpush1.msra.mxu0 %v4179
    %4617 = vmatprep.subr.mxu0 %v4188
    %4618 = vmatpush1.msra.mxu0 %v4187
    %4619 = vmatprep.subr.mxu0 %v4196
    %4620 = vmatpush1.msra.mxu0 %v4195
    %4621 = vmatprep.subr.mxu0 %v4204
    %4622 = vmatpush1.msra.mxu0 %v4203
    %4623 = vmatprep.subr.mxu0 %v4212
    %4624 = vmatpush1.msra.mxu0 %v4211
    %4625 = vmatprep.subr.mxu0 %v4220
    %4626 = vmatpush1.msra.mxu0 %v4219
    %4627 = vmatprep.subr.mxu0 %v4228
    %4628 = vmatpush1.msra.mxu0 %v4227
    %4629 = vmatprep.subr.mxu0 %v4236
    %4630 = vmatpush1.msra.mxu0 %v4235
    %4631 = vmatprep.subr.mxu0 %v4244
    %4632 = vmatpush1.msra.mxu0 %v4243
    %4633 = vmatprep.subr.mxu0 %v4252
    %4634 = vmatpush1.msra.mxu0 %v4251
    %4635 = vmatprep.subr.mxu0 %v4260
    %4636 = vmatpush1.msra.mxu0 %v4259
    %4637 = vmatprep.subr.mxu0 %v4268
    %4638 = vmatpush1.msra.mxu0 %v4267
    %4639 = vmatprep.subr.mxu0 %v4276
    %4640 = vmatpush1.msra.mxu0 %v4275
    %4641 = vmatprep.subr.mxu0 %v4284
    %4642 = vmatpush1.msra.mxu0 %v4283
    %4643 = vmatprep.subr.mxu0 %v4292
    %4644 = vmatpush1.msra.mxu0 %v4291
    %4645 = vmatprep.subr.mxu0 %v4300
    %4646 = vmatpush1.msra.mxu0 %v4299
    %4647 = vmatprep.subr.mxu0 %v4308
    %4648 = vmatpush1.msra.mxu0 %v4307
    %4649 = vmatprep.subr.mxu0 %v4316
    %4650 = vmatpush1.msra.mxu0 %v4315
    %4651 = vmatprep.subr.mxu0 %v4324
    %4652 = vmatpush1.msra.mxu0 %v4323
    %4653 = vmatprep.subr.mxu0 %v4332
    %4654 = vmatpush1.msra.mxu0 %v4331
    %4655 = vmatprep.subr.mxu0 %v4340
    %4656 = vmatpush1.msra.mxu0 %v4339
    %4657 = vmatprep.subr.mxu0 %v4348
    %4658 = vmatpush1.msra.mxu0 %v4347
    %4659 = vmatprep.subr.mxu0 %v4356
    %4660 = vmatpush1.msra.mxu0 %v4355
    %4661 = vmatprep.subr.mxu0 %v4364
    %4662 = vmatpush1.msra.mxu0 %v4363
    %4663 = vmatprep.subr.mxu0 %v4372
    %4664 = vmatpush1.msra.mxu0 %v4371
    %4665 = vmatprep.subr.mxu0 %v4380
    %4666 = vmatpush1.msra.mxu0 %v4379
    %4667 = vmatprep.subr.mxu0 %v4388
    %4668 = vmatpush1.msra.mxu0 %v4387
    %4669 = vmatprep.subr.mxu0 %v4396
    %4670 = vmatpush1.msra.mxu0 %v4395
    %4671 = vmatprep.subr.mxu0 %v4404
    %4672 = vmatpush1.msra.mxu0 %v4403
    %4673 = vmatprep.subr.mxu0 %v4412
    %4674 = vmatpush1.msra.mxu0 %v4411
    %4675 = vmatprep.subr.mxu0 %v4420
    %4676 = vmatpush1.msra.mxu0 %v4419
    %4677 = vmatprep.subr.mxu0 %v4428
    %4678 = vmatpush1.msra.mxu0 %v4427
    %4679 = vmatprep.mubr.f32.mxu0 %v4174
    %4680 = vmatmul.mubr.f32.gmra.mrb[0].mxu0 %v4173
    %v4681 = vpop.f32.mrb[0].mxu0
    %v4682 = vadd.f32 %v4452, %v4681
    %v4683 = vpop.f32.mrb[0].mxu0
    %v4684 = vadd.f32 %v4456, %v4683
    %4685 = vdwg.mxu0
    %4686 = vmatprep.subr.mxu0 %v4182
    %4687 = vmatpush1.msra.mxu0 %v4181
    %4688 = vmatprep.subr.mxu0 %v4190
    %4689 = vmatpush1.msra.mxu0 %v4189
    %4690 = vmatprep.subr.mxu0 %v4198
    %4691 = vmatpush1.msra.mxu0 %v4197
    %4692 = vmatprep.subr.mxu0 %v4206
    %4693 = vmatpush1.msra.mxu0 %v4205
    %4694 = vmatprep.subr.mxu0 %v4214
    %4695 = vmatpush1.msra.mxu0 %v4213
    %4696 = vmatprep.subr.mxu0 %v4222
    %4697 = vmatpush1.msra.mxu0 %v4221
    %4698 = vmatprep.subr.mxu0 %v4230
    %4699 = vmatpush1.msra.mxu0 %v4229
    %4700 = vmatprep.subr.mxu0 %v4238
    %4701 = vmatpush1.msra.mxu0 %v4237
    %4702 = vmatprep.subr.mxu0 %v4246
    %4703 = vmatpush1.msra.mxu0 %v4245
    %4704 = vmatprep.subr.mxu0 %v4254
    %4705 = vmatpush1.msra.mxu0 %v4253
    %4706 = vmatprep.subr.mxu0 %v4262
    %4707 = vmatpush1.msra.mxu0 %v4261
    %4708 = vmatprep.subr.mxu0 %v4270
    %4709 = vmatpush1.msra.mxu0 %v4269
    %4710 = vmatprep.subr.mxu0 %v4278
    %4711 = vmatpush1.msra.mxu0 %v4277
    %4712 = vmatprep.subr.mxu0 %v4286
    %4713 = vmatpush1.msra.mxu0 %v4285
    %4714 = vmatprep.subr.mxu0 %v4294
    %4715 = vmatpush1.msra.mxu0 %v4293
    %4716 = vmatprep.subr.mxu0 %v4302
    %4717 = vmatpush1.msra.mxu0 %v4301
    %4718 = vmatprep.subr.mxu0 %v4310
    %4719 = vmatpush1.msra.mxu0 %v4309
    %4720 = vmatprep.subr.mxu0 %v4318
    %4721 = vmatpush1.msra.mxu0 %v4317
    %4722 = vmatprep.subr.mxu0 %v4326
    %4723 = vmatpush1.msra.mxu0 %v4325
    %4724 = vmatprep.subr.mxu0 %v4334
    %4725 = vmatpush1.msra.mxu0 %v4333
    %4726 = vmatprep.subr.mxu0 %v4342
    %4727 = vmatpush1.msra.mxu0 %v4341
    %4728 = vmatprep.subr.mxu0 %v4350
    %4729 = vmatpush1.msra.mxu0 %v4349
    %4730 = vmatprep.subr.mxu0 %v4358
    %4731 = vmatpush1.msra.mxu0 %v4357
    %4732 = vmatprep.subr.mxu0 %v4366
    %4733 = vmatpush1.msra.mxu0 %v4365
    %4734 = vmatprep.subr.mxu0 %v4374
    %4735 = vmatpush1.msra.mxu0 %v4373
    %4736 = vmatprep.subr.mxu0 %v4382
    %4737 = vmatpush1.msra.mxu0 %v4381
    %4738 = vmatprep.subr.mxu0 %v4390
    %4739 = vmatpush1.msra.mxu0 %v4389
    %4740 = vmatprep.subr.mxu0 %v4398
    %4741 = vmatpush1.msra.mxu0 %v4397
    %4742 = vmatprep.subr.mxu0 %v4406
    %4743 = vmatpush1.msra.mxu0 %v4405
    %4744 = vmatprep.subr.mxu0 %v4414
    %4745 = vmatpush1.msra.mxu0 %v4413
    %4746 = vmatprep.subr.mxu0 %v4422
    %4747 = vmatpush1.msra.mxu0 %v4421
    %4748 = vmatprep.subr.mxu0 %v4430
    %4749 = vmatpush1.msra.mxu0 %v4429
    %4750 = vmatprep.mubr.f32.mxu0 %v4174
    %4751 = vmatmul.mubr.f32.gmra.mrb[0].mxu0 %v4173
    %v4752 = vpop.f32.mrb[0].mxu0
    %v4753 = vadd.f32 %v4460, %v4752
    %v4754 = vpop.f32.mrb[0].mxu0
    %v4755 = vadd.f32 %v4464, %v4754
    %4756 = vdwg.mxu0
    %4757 = vst [vmem:[#allocation2] sm:$0xff] %v4540
    %4758 = vst [vmem:[#allocation2 + $0x8] sm:$0xff] %v4542
    %4759 = vst [vmem:[#allocation2 + $0x10] sm:$0xff] %v4611
    %4760 = vst [vmem:[#allocation2 + $0x18] sm:$0xff] %v4613
    %4761 = vst [vmem:[#allocation2 + $0x20] sm:$0xff] %v4682
    %4762 = vst [vmem:[#allocation2 + $0x28] sm:$0xff] %v4684
    %4763 = vst [vmem:[#allocation2 + $0x30] sm:$0xff] %v4753
    %4764 = vst [vmem:[#allocation2 + $0x38] sm:$0xff] %v4755
    %s4765 = scalar_lea.vmem %s1, 1
    %v4766 = vld [vmem:[%s4765] ss:$2 sm:$0x3]
    %s4767 = scalar_lea.vmem %s2, 1
    %v4768 = vld [vmem:[%s4767] ss:$2 sm:$0x3]
    %v4769 = vld [vmem:[#allocation2] ss:$8 sm:$0xf]
    %v4770 = vld [vmem:[#allocation2] ss:$8 sm:$0xf0]
    %v4771 = vor.u32 %v4769, %v4770
    %v4773 = vlaneseq
    %v4774 = vshrl.u32 %v4773, 7
    %v4775 = vsub.s32 0, %v4774
    %v4776 = vrot.slane %v4766, %v4775
    %v4777 = vlaneseq
    %v4778 = vshrl.u32 %v4777, 7
    %v4779 = vsub.s32 1, %v4778
    %v4780 = vrot.slane %v4766, %v4779
    %v4784 = vlaneseq
    %v4785 = vshrl.u32 %v4784, 7
    %v4786 = vsub.s32 0, %v4785
    %v4787 = vrot.slane %v4771, %v4786
    %v4788 = vlaneseq
    %v4789 = vshrl.u32 %v4788, 7
    %v4790 = vsub.s32 1, %v4789
    %v4791 = vrot.slane %v4771, %v4790
    %v4792 = vlaneseq
    %v4793 = vshrl.u32 %v4792, 7
    %v4794 = vsub.s32 2, %v4793
    %v4795 = vrot.slane %v4771, %v4794
    %v4796 = vlaneseq
    %v4797 = vshrl.u32 %v4796, 7
    %v4798 = vsub.s32 3, %v4797
    %v4799 = vrot.slane %v4771, %v4798
    %v4800 = vlaneseq
    %v4801 = vshrl.u32 %v4800, 7
    %v4802 = vsub.s32 4, %v4801
    %v4803 = vrot.slane %v4771, %v4802
    %v4804 = vlaneseq
    %v4805 = vshrl.u32 %v4804, 7
    %v4806 = vsub.s32 5, %v4805
    %v4807 = vrot.slane %v4771, %v4806
    %v4808 = vlaneseq
    %v4809 = vshrl.u32 %v4808, 7
    %v4810 = vsub.s32 6, %v4809
    %v4811 = vrot.slane %v4771, %v4810
    %v4812 = vlaneseq
    %v4813 = vshrl.u32 %v4812, 7
    %v4814 = vsub.s32 7, %v4813
    %v4815 = vrot.slane %v4771, %v4814
    %4824 = vmatprep.subr.mxu0 %v3918
    %4825 = vmatpush1.msra.mxu0 %v3917
    %4826 = vmatprep.subr.mxu0 %v3926
    %4827 = vmatpush1.msra.mxu0 %v3925
    %4828 = vmatprep.subr.mxu0 %v3934
    %4829 = vmatpush1.msra.mxu0 %v3933
    %4830 = vmatprep.subr.mxu0 %v3942
    %4831 = vmatpush1.msra.mxu0 %v3941
    %4832 = vmatprep.subr.mxu0 %v3950
    %4833 = vmatpush1.msra.mxu0 %v3949
    %4834 = vmatprep.subr.mxu0 %v3958
    %4835 = vmatpush1.msra.mxu0 %v3957
    %4836 = vmatprep.subr.mxu0 %v3966
    %4837 = vmatpush1.msra.mxu0 %v3965
    %4838 = vmatprep.subr.mxu0 %v3974
    %4839 = vmatpush1.msra.mxu0 %v3973
    %4840 = vmatprep.subr.mxu0 %v3982
    %4841 = vmatpush1.msra.mxu0 %v3981
    %4842 = vmatprep.subr.mxu0 %v3990
    %4843 = vmatpush1.msra.mxu0 %v3989
    %4844 = vmatprep.subr.mxu0 %v3998
    %4845 = vmatpush1.msra.mxu0 %v3997
    %4846 = vmatprep.subr.mxu0 %v4006
    %4847 = vmatpush1.msra.mxu0 %v4005
    %4848 = vmatprep.subr.mxu0 %v4014
    %4849 = vmatpush1.msra.mxu0 %v4013
    %4850 = vmatprep.subr.mxu0 %v4022
    %4851 = vmatpush1.msra.mxu0 %v4021
    %4852 = vmatprep.subr.mxu0 %v4030
    %4853 = vmatpush1.msra.mxu0 %v4029
    %4854 = vmatprep.subr.mxu0 %v4038
    %4855 = vmatpush1.msra.mxu0 %v4037
    %4856 = vmatprep.subr.mxu0 %v4046
    %4857 = vmatpush1.msra.mxu0 %v4045
    %4858 = vmatprep.subr.mxu0 %v4054
    %4859 = vmatpush1.msra.mxu0 %v4053
    %4860 = vmatprep.subr.mxu0 %v4062
    %4861 = vmatpush1.msra.mxu0 %v4061
    %4862 = vmatprep.subr.mxu0 %v4070
    %4863 = vmatpush1.msra.mxu0 %v4069
    %4864 = vmatprep.subr.mxu0 %v4078
    %4865 = vmatpush1.msra.mxu0 %v4077
    %4866 = vmatprep.subr.mxu0 %v4086
    %4867 = vmatpush1.msra.mxu0 %v4085
    %4868 = vmatprep.subr.mxu0 %v4094
    %4869 = vmatpush1.msra.mxu0 %v4093
    %4870 = vmatprep.subr.mxu0 %v4102
    %4871 = vmatpush1.msra.mxu0 %v4101
    %4872 = vmatprep.subr.mxu0 %v4110
    %4873 = vmatpush1.msra.mxu0 %v4109
    %4874 = vmatprep.subr.mxu0 %v4118
    %4875 = vmatpush1.msra.mxu0 %v4117
    %4876 = vmatprep.subr.mxu0 %v4126
    %4877 = vmatpush1.msra.mxu0 %v4125
    %4878 = vmatprep.subr.mxu0 %v4134
    %4879 = vmatpush1.msra.mxu0 %v4133
    %4880 = vmatprep.subr.mxu0 %v4142
    %4881 = vmatpush1.msra.mxu0 %v4141
    %4882 = vmatprep.subr.mxu0 %v4150
    %4883 = vmatpush1.msra.mxu0 %v4149
    %4884 = vmatprep.subr.mxu0 %v4158
    %4885 = vmatpush1.msra.mxu0 %v4157
    %4886 = vmatprep.subr.mxu0 %v4166
    %4887 = vmatpush1.msra.mxu0 %v4165
    %4888 = vmatprep.mubr.f32.mxu0 %v4780
    %4889 = vmatmul.mubr.f32.gmra.mrb[0].mxu0 %v4776
    %v4890 = vpop.f32.mrb[0].mxu0
    %v4891 = vadd.f32 %v4787, %v4890
    %v4892 = vpop.f32.mrb[0].mxu0
    %v4893 = vadd.f32 %v4791, %v4892
    %4894 = vdwg.mxu0
    %4895 = vmatprep.subr.mxu0 %v3920
    %4896 = vmatpush1.msra.mxu0 %v3919
    %4897 = vmatprep.subr.mxu0 %v3928
    %4898 = vmatpush1.msra.mxu0 %v3927
    %4899 = vmatprep.subr.mxu0 %v3936
    %4900 = vmatpush1.msra.mxu0 %v3935
    %4901 = vmatprep.subr.mxu0 %v3944
    %4902 = vmatpush1.msra.mxu0 %v3943
    %4903 = vmatprep.subr.mxu0 %v3952
    %4904 = vmatpush1.msra.mxu0 %v3951
    %4905 = vmatprep.subr.mxu0 %v3960
    %4906 = vmatpush1.msra.mxu0 %v3959
    %4907 = vmatprep.subr.mxu0 %v3968
    %4908 = vmatpush1.msra.mxu0 %v3967
    %4909 = vmatprep.subr.mxu0 %v3976
    %4910 = vmatpush1.msra.mxu0 %v3975
    %4911 = vmatprep.subr.mxu0 %v3984
    %4912 = vmatpush1.msra.mxu0 %v3983
    %4913 = vmatprep.subr.mxu0 %v3992
    %4914 = vmatpush1.msra.mxu0 %v3991
    %4915 = vmatprep.subr.mxu0 %v4000
    %4916 = vmatpush1.msra.mxu0 %v3999
    %4917 = vmatprep.subr.mxu0 %v4008
    %4918 = vmatpush1.msra.mxu0 %v4007
    %4919 = vmatprep.subr.mxu0 %v4016
    %4920 = vmatpush1.msra.mxu0 %v4015
    %4921 = vmatprep.subr.mxu0 %v4024
    %4922 = vmatpush1.msra.mxu0 %v4023
    %4923 = vmatprep.subr.mxu0 %v4032
    %4924 = vmatpush1.msra.mxu0 %v4031
    %4925 = vmatprep.subr.mxu0 %v4040
    %4926 = vmatpush1.msra.mxu0 %v4039
    %4927 = vmatprep.subr.mxu0 %v4048
    %4928 = vmatpush1.msra.mxu0 %v4047
    %4929 = vmatprep.subr.mxu0 %v4056
    %4930 = vmatpush1.msra.mxu0 %v4055
    %4931 = vmatprep.subr.mxu0 %v4064
    %4932 = vmatpush1.msra.mxu0 %v4063
    %4933 = vmatprep.subr.mxu0 %v4072
    %4934 = vmatpush1.msra.mxu0 %v4071
    %4935 = vmatprep.subr.mxu0 %v4080
    %4936 = vmatpush1.msra.mxu0 %v4079
    %4937 = vmatprep.subr.mxu0 %v4088
    %4938 = vmatpush1.msra.mxu0 %v4087
    %4939 = vmatprep.subr.mxu0 %v4096
    %4940 = vmatpush1.msra.mxu0 %v4095
    %4941 = vmatprep.subr.mxu0 %v4104
    %4942 = vmatpush1.msra.mxu0 %v4103
    %4943 = vmatprep.subr.mxu0 %v4112
    %4944 = vmatpush1.msra.mxu0 %v4111
    %4945 = vmatprep.subr.mxu0 %v4120
    %4946 = vmatpush1.msra.mxu0 %v4119
    %4947 = vmatprep.subr.mxu0 %v4128
    %4948 = vmatpush1.msra.mxu0 %v4127
    %4949 = vmatprep.subr.mxu0 %v4136
    %4950 = vmatpush1.msra.mxu0 %v4135
    %4951 = vmatprep.subr.mxu0 %v4144
    %4952 = vmatpush1.msra.mxu0 %v4143
    %4953 = vmatprep.subr.mxu0 %v4152
    %4954 = vmatpush1.msra.mxu0 %v4151
    %4955 = vmatprep.subr.mxu0 %v4160
    %4956 = vmatpush1.msra.mxu0 %v4159
    %4957 = vmatprep.subr.mxu0 %v4168
    %4958 = vmatpush1.msra.mxu0 %v4167
    %4959 = vmatprep.mubr.f32.mxu0 %v4780
    %4960 = vmatmul.mubr.f32.gmra.mrb[0].mxu0 %v4776
    %v4961 = vpop.f32.mrb[0].mxu0
    %v4962 = vadd.f32 %v4795, %v4961
    %v4963 = vpop.f32.mrb[0].mxu0
    %v4964 = vadd.f32 %v4799, %v4963
    %4965 = vdwg.mxu0
    %4966 = vmatprep.subr.mxu0 %v3922
    %4967 = vmatpush1.msra.mxu0 %v3921
    %4968 = vmatprep.subr.mxu0 %v3930
    %4969 = vmatpush1.msra.mxu0 %v3929
    %4970 = vmatprep.subr.mxu0 %v3938
    %4971 = vmatpush1.msra.mxu0 %v3937
    %4972 = vmatprep.subr.mxu0 %v3946
    %4973 = vmatpush1.msra.mxu0 %v3945
    %4974 = vmatprep.subr.mxu0 %v3954
    %4975 = vmatpush1.msra.mxu0 %v3953
    %4976 = vmatprep.subr.mxu0 %v3962
    %4977 = vmatpush1.msra.mxu0 %v3961
    %4978 = vmatprep.subr.mxu0 %v3970
    %4979 = vmatpush1.msra.mxu0 %v3969
    %4980 = vmatprep.subr.mxu0 %v3978
    %4981 = vmatpush1.msra.mxu0 %v3977
    %4982 = vmatprep.subr.mxu0 %v3986
    %4983 = vmatpush1.msra.mxu0 %v3985
    %4984 = vmatprep.subr.mxu0 %v3994
    %4985 = vmatpush1.msra.mxu0 %v3993
    %4986 = vmatprep.subr.mxu0 %v4002
    %4987 = vmatpush1.msra.mxu0 %v4001
    %4988 = vmatprep.subr.mxu0 %v4010
    %4989 = vmatpush1.msra.mxu0 %v4009
    %4990 = vmatprep.subr.mxu0 %v4018
    %4991 = vmatpush1.msra.mxu0 %v4017
    %4992 = vmatprep.subr.mxu0 %v4026
    %4993 = vmatpush1.msra.mxu0 %v4025
    %4994 = vmatprep.subr.mxu0 %v4034
    %4995 = vmatpush1.msra.mxu0 %v4033
    %4996 = vmatprep.subr.mxu0 %v4042
    %4997 = vmatpush1.msra.mxu0 %v4041
    %4998 = vmatprep.subr.mxu0 %v4050
    %4999 = vmatpush1.msra.mxu0 %v4049
    %5000 = vmatprep.subr.mxu0 %v4058
    %5001 = vmatpush1.msra.mxu0 %v4057
    %5002 = vmatprep.subr.mxu0 %v4066
    %5003 = vmatpush1.msra.mxu0 %v4065
    %5004 = vmatprep.subr.mxu0 %v4074
    %5005 = vmatpush1.msra.mxu0 %v4073
    %5006 = vmatprep.subr.mxu0 %v4082
    %5007 = vmatpush1.msra.mxu0 %v4081
    %5008 = vmatprep.subr.mxu0 %v4090
    %5009 = vmatpush1.msra.mxu0 %v4089
    %5010 = vmatprep.subr.mxu0 %v4098
    %5011 = vmatpush1.msra.mxu0 %v4097
    %5012 = vmatprep.subr.mxu0 %v4106
    %5013 = vmatpush1.msra.mxu0 %v4105
    %5014 = vmatprep.subr.mxu0 %v4114
    %5015 = vmatpush1.msra.mxu0 %v4113
    %5016 = vmatprep.subr.mxu0 %v4122
    %5017 = vmatpush1.msra.mxu0 %v4121
    %5018 = vmatprep.subr.mxu0 %v4130
    %5019 = vmatpush1.msra.mxu0 %v4129
    %5020 = vmatprep.subr.mxu0 %v4138
    %5021 = vmatpush1.msra.mxu0 %v4137
    %5022 = vmatprep.subr.mxu0 %v4146
    %5023 = vmatpush1.msra.mxu0 %v4145
    %5024 = vmatprep.subr.mxu0 %v4154
    %5025 = vmatpush1.msra.mxu0 %v4153
    %5026 = vmatprep.subr.mxu0 %v4162
    %5027 = vmatpush1.msra.mxu0 %v4161
    %5028 = vmatprep.subr.mxu0 %v4170
    %5029 = vmatpush1.msra.mxu0 %v4169
    %5030 = vmatprep.mubr.f32.mxu0 %v4780
    %5031 = vmatmul.mubr.f32.gmra.mrb[0].mxu0 %v4776
    %v5032 = vpop.f32.mrb[0].mxu0
    %v5033 = vadd.f32 %v4803, %v5032
    %v5034 = vpop.f32.mrb[0].mxu0
    %v5035 = vadd.f32 %v4807, %v5034
    %5036 = vdwg.mxu0
    %5037 = vmatprep.subr.mxu0 %v3924
    %5038 = vmatpush1.msra.mxu0 %v3923
    %5039 = vmatprep.subr.mxu0 %v3932
    %5040 = vmatpush1.msra.mxu0 %v3931
    %5041 = vmatprep.subr.mxu0 %v3940
    %5042 = vmatpush1.msra.mxu0 %v3939
    %5043 = vmatprep.subr.mxu0 %v3948
    %5044 = vmatpush1.msra.mxu0 %v3947
    %5045 = vmatprep.subr.mxu0 %v3956
    %5046 = vmatpush1.msra.mxu0 %v3955
    %5047 = vmatprep.subr.mxu0 %v3964
    %5048 = vmatpush1.msra.mxu0 %v3963
    %5049 = vmatprep.subr.mxu0 %v3972
    %5050 = vmatpush1.msra.mxu0 %v3971
    %5051 = vmatprep.subr.mxu0 %v3980
    %5052 = vmatpush1.msra.mxu0 %v3979
    %5053 = vmatprep.subr.mxu0 %v3988
    %5054 = vmatpush1.msra.mxu0 %v3987
    %5055 = vmatprep.subr.mxu0 %v3996
    %5056 = vmatpush1.msra.mxu0 %v3995
    %5057 = vmatprep.subr.mxu0 %v4004
    %5058 = vmatpush1.msra.mxu0 %v4003
    %5059 = vmatprep.subr.mxu0 %v4012
    %5060 = vmatpush1.msra.mxu0 %v4011
    %5061 = vmatprep.subr.mxu0 %v4020
    %5062 = vmatpush1.msra.mxu0 %v4019
    %5063 = vmatprep.subr.mxu0 %v4028
    %5064 = vmatpush1.msra.mxu0 %v4027
    %5065 = vmatprep.subr.mxu0 %v4036
    %5066 = vmatpush1.msra.mxu0 %v4035
    %5067 = vmatprep.subr.mxu0 %v4044
    %5068 = vmatpush1.msra.mxu0 %v4043
    %5069 = vmatprep.subr.mxu0 %v4052
    %5070 = vmatpush1.msra.mxu0 %v4051
    %5071 = vmatprep.subr.mxu0 %v4060
    %5072 = vmatpush1.msra.mxu0 %v4059
    %5073 = vmatprep.subr.mxu0 %v4068
    %5074 = vmatpush1.msra.mxu0 %v4067
    %5075 = vmatprep.subr.mxu0 %v4076
    %5076 = vmatpush1.msra.mxu0 %v4075
    %5077 = vmatprep.subr.mxu0 %v4084
    %5078 = vmatpush1.msra.mxu0 %v4083
    %5079 = vmatprep.subr.mxu0 %v4092
    %5080 = vmatpush1.msra.mxu0 %v4091
    %5081 = vmatprep.subr.mxu0 %v4100
    %5082 = vmatpush1.msra.mxu0 %v4099
    %5083 = vmatprep.subr.mxu0 %v4108
    %5084 = vmatpush1.msra.mxu0 %v4107
    %5085 = vmatprep.subr.mxu0 %v4116
    %5086 = vmatpush1.msra.mxu0 %v4115
    %5087 = vmatprep.subr.mxu0 %v4124
    %5088 = vmatpush1.msra.mxu0 %v4123
    %5089 = vmatprep.subr.mxu0 %v4132
    %5090 = vmatpush1.msra.mxu0 %v4131
    %5091 = vmatprep.subr.mxu0 %v4140
    %5092 = vmatpush1.msra.mxu0 %v4139
    %5093 = vmatprep.subr.mxu0 %v4148
    %5094 = vmatpush1.msra.mxu0 %v4147
    %5095 = vmatprep.subr.mxu0 %v4156
    %5096 = vmatpush1.msra.mxu0 %v4155
    %5097 = vmatprep.subr.mxu0 %v4164
    %5098 = vmatpush1.msra.mxu0 %v4163
    %5099 = vmatprep.subr.mxu0 %v4172
    %5100 = vmatpush1.msra.mxu0 %v4171
    %5101 = vmatprep.mubr.f32.mxu0 %v4780
    %5102 = vmatmul.mubr.f32.gmra.mrb[0].mxu0 %v4776
    %v5103 = vpop.f32.mrb[0].mxu0
    %v5104 = vadd.f32 %v4811, %v5103
    %v5105 = vpop.f32.mrb[0].mxu0
    %v5106 = vadd.f32 %v4815, %v5105
    %5107 = vdwg.mxu0
    %v5108 = vxor.u32 %v4891, 2147483648
    %v5109 = vxor.u32 %v4893, 2147483648
    %v5110 = vmul.f32 %v5108, 1.442695
    %v5111 = vpow.pop %v5110
    %v5112 = vmul.f32 %v5109, 1.442695
    %v5113 = vpow.pop %v5112
    %v5114 = vadd.f32 %v5111, 1.0
    %v5115 = vadd.f32 %v5113, 1.0
    %v5116 = vrcp.pop %v5114
    %v5117 = vmul.f32 1.0, %v5116
    %v5118 = vrcp.pop %v5115
    %v5119 = vmul.f32 1.0, %v5118
    %v5120 = vxor.u32 %v4962, 2147483648
    %v5121 = vxor.u32 %v4964, 2147483648
    %v5122 = vmul.f32 %v5120, 1.442695
    %v5123 = vpow.pop %v5122
    %v5124 = vmul.f32 %v5121, 1.442695
    %v5125 = vpow.pop %v5124
    %v5126 = vadd.f32 %v5123, 1.0
    %v5127 = vadd.f32 %v5125, 1.0
    %v5128 = vrcp.pop %v5126
    %v5129 = vmul.f32 1.0, %v5128
    %v5130 = vrcp.pop %v5127
    %v5131 = vmul.f32 1.0, %v5130
    %v5132 = vtanh.pop %v5033
    %v5133 = vtanh.pop %v5035
    %v5134 = vxor.u32 %v5104, 2147483648
    %v5135 = vxor.u32 %v5106, 2147483648
    %v5136 = vmul.f32 %v5134, 1.442695
    %v5137 = vpow.pop %v5136
    %v5138 = vmul.f32 %v5135, 1.442695
    %v5139 = vpow.pop %v5138
    %v5140 = vadd.f32 %v5137, 1.0
    %v5141 = vadd.f32 %v5139, 1.0
    %v5142 = vrcp.pop %v5140
    %v5143 = vmul.f32 1.0, %v5142
    %v5144 = vrcp.pop %v5141
    %v5145 = vmul.f32 1.0, %v5144
    %v5147 = vlaneseq
    %v5148 = vshrl.u32 %v5147, 7
    %v5149 = vsub.s32 0, %v5148
    %v5150 = vrot.slane %v4768, %v5149
    %v5151 = vlaneseq
    %v5152 = vshrl.u32 %v5151, 7
    %v5153 = vsub.s32 1, %v5152
    %v5154 = vrot.slane %v4768, %v5153
    %v5157 = vmul.f32 %v5129, %v5150
    %v5158 = vmul.f32 %v5131, %v5154
    %v5159 = vmul.f32 %v5117, %v5132
    %v5160 = vmul.f32 %v5119, %v5133
    %v5161 = vadd.f32 %v5157, %v5159
    %v5162 = vadd.f32 %v5158, %v5160
    %v5163 = vtanh.pop %v5161
    %v5164 = vtanh.pop %v5162
    %v5165 = vmul.f32 %v5143, %v5163
    %v5166 = vmul.f32 %v5145, %v5164
    %v5167 = vld [vmem:[%s1111] ss:$8 sm:$0xf]
    %v5168 = vld [vmem:[%s1111] ss:$8 sm:$0xf0]
    %v5169 = vor.u32 %v5167, %v5168
    %v5171 = vlaneseq
    %v5172 = vshrl.u32 %v5171, 7
    %v5173 = vsub.s32 0, %v5172
    %v5174 = vrot.slane %v5169, %v5173
    %v5175 = vlaneseq
    %v5176 = vshrl.u32 %v5175, 7
    %v5177 = vsub.s32 1, %v5176
    %v5178 = vrot.slane %v5169, %v5177
    %v5179 = vlaneseq
    %v5180 = vshrl.u32 %v5179, 7
    %v5181 = vsub.s32 2, %v5180
    %v5182 = vrot.slane %v5169, %v5181
    %v5183 = vlaneseq
    %v5184 = vshrl.u32 %v5183, 7
    %v5185 = vsub.s32 3, %v5184
    %v5186 = vrot.slane %v5169, %v5185
    %v5187 = vlaneseq
    %v5188 = vshrl.u32 %v5187, 7
    %v5189 = vsub.s32 4, %v5188
    %v5190 = vrot.slane %v5169, %v5189
    %v5191 = vlaneseq
    %v5192 = vshrl.u32 %v5191, 7
    %v5193 = vsub.s32 5, %v5192
    %v5194 = vrot.slane %v5169, %v5193
    %v5195 = vlaneseq
    %v5196 = vshrl.u32 %v5195, 7
    %v5197 = vsub.s32 6, %v5196
    %v5198 = vrot.slane %v5169, %v5197
    %v5199 = vlaneseq
    %v5200 = vshrl.u32 %v5199, 7
    %v5201 = vsub.s32 7, %v5200
    %v5202 = vrot.slane %v5169, %v5201
    %5211 = vmatprep.subr.mxu0 %v3918
    %5212 = vmatpush1.msra.mxu0 %v3917
    %5213 = vmatprep.subr.mxu0 %v3926
    %5214 = vmatpush1.msra.mxu0 %v3925
    %5215 = vmatprep.subr.mxu0 %v3934
    %5216 = vmatpush1.msra.mxu0 %v3933
    %5217 = vmatprep.subr.mxu0 %v3942
    %5218 = vmatpush1.msra.mxu0 %v3941
    %5219 = vmatprep.subr.mxu0 %v3950
    %5220 = vmatpush1.msra.mxu0 %v3949
    %5221 = vmatprep.subr.mxu0 %v3958
    %5222 = vmatpush1.msra.mxu0 %v3957
    %5223 = vmatprep.subr.mxu0 %v3966
    %5224 = vmatpush1.msra.mxu0 %v3965
    %5225 = vmatprep.subr.mxu0 %v3974
    %5226 = vmatpush1.msra.mxu0 %v3973
    %5227 = vmatprep.subr.mxu0 %v3982
    %5228 = vmatpush1.msra.mxu0 %v3981
    %5229 = vmatprep.subr.mxu0 %v3990
    %5230 = vmatpush1.msra.mxu0 %v3989
    %5231 = vmatprep.subr.mxu0 %v3998
    %5232 = vmatpush1.msra.mxu0 %v3997
    %5233 = vmatprep.subr.mxu0 %v4006
    %5234 = vmatpush1.msra.mxu0 %v4005
    %5235 = vmatprep.subr.mxu0 %v4014
    %5236 = vmatpush1.msra.mxu0 %v4013
    %5237 = vmatprep.subr.mxu0 %v4022
    %5238 = vmatpush1.msra.mxu0 %v4021
    %5239 = vmatprep.subr.mxu0 %v4030
    %5240 = vmatpush1.msra.mxu0 %v4029
    %5241 = vmatprep.subr.mxu0 %v4038
    %5242 = vmatpush1.msra.mxu0 %v4037
    %5243 = vmatprep.subr.mxu0 %v4046
    %5244 = vmatpush1.msra.mxu0 %v4045
    %5245 = vmatprep.subr.mxu0 %v4054
    %5246 = vmatpush1.msra.mxu0 %v4053
    %5247 = vmatprep.subr.mxu0 %v4062
    %5248 = vmatpush1.msra.mxu0 %v4061
    %5249 = vmatprep.subr.mxu0 %v4070
    %5250 = vmatpush1.msra.mxu0 %v4069
    %5251 = vmatprep.subr.mxu0 %v4078
    %5252 = vmatpush1.msra.mxu0 %v4077
    %5253 = vmatprep.subr.mxu0 %v4086
    %5254 = vmatpush1.msra.mxu0 %v4085
    %5255 = vmatprep.subr.mxu0 %v4094
    %5256 = vmatpush1.msra.mxu0 %v4093
    %5257 = vmatprep.subr.mxu0 %v4102
    %5258 = vmatpush1.msra.mxu0 %v4101
    %5259 = vmatprep.subr.mxu0 %v4110
    %5260 = vmatpush1.msra.mxu0 %v4109
    %5261 = vmatprep.subr.mxu0 %v4118
    %5262 = vmatpush1.msra.mxu0 %v4117
    %5263 = vmatprep.subr.mxu0 %v4126
    %5264 = vmatpush1.msra.mxu0 %v4125
    %5265 = vmatprep.subr.mxu0 %v4134
    %5266 = vmatpush1.msra.mxu0 %v4133
    %5267 = vmatprep.subr.mxu0 %v4142
    %5268 = vmatpush1.msra.mxu0 %v4141
    %5269 = vmatprep.subr.mxu0 %v4150
    %5270 = vmatpush1.msra.mxu0 %v4149
    %5271 = vmatprep.subr.mxu0 %v4158
    %5272 = vmatpush1.msra.mxu0 %v4157
    %5273 = vmatprep.subr.mxu0 %v4166
    %5274 = vmatpush1.msra.mxu0 %v4165
    %5275 = vmatprep.mubr.f32.mxu0 %v5166
    %5276 = vmatmul.mubr.f32.gmra.mrb[0].mxu0 %v5165
    %v5277 = vpop.f32.mrb[0].mxu0
    %v5278 = vadd.f32 %v5174, %v5277
    %v5279 = vpop.f32.mrb[0].mxu0
    %v5280 = vadd.f32 %v5178, %v5279
    %5281 = vdwg.mxu0
    %5282 = vmatprep.subr.mxu0 %v3920
    %5283 = vmatpush1.msra.mxu0 %v3919
    %5284 = vmatprep.subr.mxu0 %v3928
    %5285 = vmatpush1.msra.mxu0 %v3927
    %5286 = vmatprep.subr.mxu0 %v3936
    %5287 = vmatpush1.msra.mxu0 %v3935
    %5288 = vmatprep.subr.mxu0 %v3944
    %5289 = vmatpush1.msra.mxu0 %v3943
    %5290 = vmatprep.subr.mxu0 %v3952
    %5291 = vmatpush1.msra.mxu0 %v3951
    %5292 = vmatprep.subr.mxu0 %v3960
    %5293 = vmatpush1.msra.mxu0 %v3959
    %5294 = vmatprep.subr.mxu0 %v3968
    %5295 = vmatpush1.msra.mxu0 %v3967
    %5296 = vmatprep.subr.mxu0 %v3976
    %5297 = vmatpush1.msra.mxu0 %v3975
    %5298 = vmatprep.subr.mxu0 %v3984
    %5299 = vmatpush1.msra.mxu0 %v3983
    %5300 = vmatprep.subr.mxu0 %v3992
    %5301 = vmatpush1.msra.mxu0 %v3991
    %5302 = vmatprep.subr.mxu0 %v4000
    %5303 = vmatpush1.msra.mxu0 %v3999
    %5304 = vmatprep.subr.mxu0 %v4008
    %5305 = vmatpush1.msra.mxu0 %v4007
    %5306 = vmatprep.subr.mxu0 %v4016
    %5307 = vmatpush1.msra.mxu0 %v4015
    %5308 = vmatprep.subr.mxu0 %v4024
    %5309 = vmatpush1.msra.mxu0 %v4023
    %5310 = vmatprep.subr.mxu0 %v4032
    %5311 = vmatpush1.msra.mxu0 %v4031
    %5312 = vmatprep.subr.mxu0 %v4040
    %5313 = vmatpush1.msra.mxu0 %v4039
    %5314 = vmatprep.subr.mxu0 %v4048
    %5315 = vmatpush1.msra.mxu0 %v4047
    %5316 = vmatprep.subr.mxu0 %v4056
    %5317 = vmatpush1.msra.mxu0 %v4055
    %5318 = vmatprep.subr.mxu0 %v4064
    %5319 = vmatpush1.msra.mxu0 %v4063
    %5320 = vmatprep.subr.mxu0 %v4072
    %5321 = vmatpush1.msra.mxu0 %v4071
    %5322 = vmatprep.subr.mxu0 %v4080
    %5323 = vmatpush1.msra.mxu0 %v4079
    %5324 = vmatprep.subr.mxu0 %v4088
    %5325 = vmatpush1.msra.mxu0 %v4087
    %5326 = vmatprep.subr.mxu0 %v4096
    %5327 = vmatpush1.msra.mxu0 %v4095
    %5328 = vmatprep.subr.mxu0 %v4104
    %5329 = vmatpush1.msra.mxu0 %v4103
    %5330 = vmatprep.subr.mxu0 %v4112
    %5331 = vmatpush1.msra.mxu0 %v4111
    %5332 = vmatprep.subr.mxu0 %v4120
    %5333 = vmatpush1.msra.mxu0 %v4119
    %5334 = vmatprep.subr.mxu0 %v4128
    %5335 = vmatpush1.msra.mxu0 %v4127
    %5336 = vmatprep.subr.mxu0 %v4136
    %5337 = vmatpush1.msra.mxu0 %v4135
    %5338 = vmatprep.subr.mxu0 %v4144
    %5339 = vmatpush1.msra.mxu0 %v4143
    %5340 = vmatprep.subr.mxu0 %v4152
    %5341 = vmatpush1.msra.mxu0 %v4151
    %5342 = vmatprep.subr.mxu0 %v4160
    %5343 = vmatpush1.msra.mxu0 %v4159
    %5344 = vmatprep.subr.mxu0 %v4168
    %5345 = vmatpush1.msra.mxu0 %v4167
    %5346 = vmatprep.mubr.f32.mxu0 %v5166
    %5347 = vmatmul.mubr.f32.gmra.mrb[0].mxu0 %v5165
    %v5348 = vpop.f32.mrb[0].mxu0
    %v5349 = vadd.f32 %v5182, %v5348
    %v5350 = vpop.f32.mrb[0].mxu0
    %v5351 = vadd.f32 %v5186, %v5350
    %5352 = vdwg.mxu0
    %5353 = vmatprep.subr.mxu0 %v3922
    %5354 = vmatpush1.msra.mxu0 %v3921
    %5355 = vmatprep.subr.mxu0 %v3930
    %5356 = vmatpush1.msra.mxu0 %v3929
    %5357 = vmatprep.subr.mxu0 %v3938
    %5358 = vmatpush1.msra.mxu0 %v3937
    %5359 = vmatprep.subr.mxu0 %v3946
    %5360 = vmatpush1.msra.mxu0 %v3945
    %5361 = vmatprep.subr.mxu0 %v3954
    %5362 = vmatpush1.msra.mxu0 %v3953
    %5363 = vmatprep.subr.mxu0 %v3962
    %5364 = vmatpush1.msra.mxu0 %v3961
    %5365 = vmatprep.subr.mxu0 %v3970
    %5366 = vmatpush1.msra.mxu0 %v3969
    %5367 = vmatprep.subr.mxu0 %v3978
    %5368 = vmatpush1.msra.mxu0 %v3977
    %5369 = vmatprep.subr.mxu0 %v3986
    %5370 = vmatpush1.msra.mxu0 %v3985
    %5371 = vmatprep.subr.mxu0 %v3994
    %5372 = vmatpush1.msra.mxu0 %v3993
    %5373 = vmatprep.subr.mxu0 %v4002
    %5374 = vmatpush1.msra.mxu0 %v4001
    %5375 = vmatprep.subr.mxu0 %v4010
    %5376 = vmatpush1.msra.mxu0 %v4009
    %5377 = vmatprep.subr.mxu0 %v4018
    %5378 = vmatpush1.msra.mxu0 %v4017
    %5379 = vmatprep.subr.mxu0 %v4026
    %5380 = vmatpush1.msra.mxu0 %v4025
    %5381 = vmatprep.subr.mxu0 %v4034
    %5382 = vmatpush1.msra.mxu0 %v4033
    %5383 = vmatprep.subr.mxu0 %v4042
    %5384 = vmatpush1.msra.mxu0 %v4041
    %5385 = vmatprep.subr.mxu0 %v4050
    %5386 = vmatpush1.msra.mxu0 %v4049
    %5387 = vmatprep.subr.mxu0 %v4058
    %5388 = vmatpush1.msra.mxu0 %v4057
    %5389 = vmatprep.subr.mxu0 %v4066
    %5390 = vmatpush1.msra.mxu0 %v4065
    %5391 = vmatprep.subr.mxu0 %v4074
    %5392 = vmatpush1.msra.mxu0 %v4073
    %5393 = vmatprep.subr.mxu0 %v4082
    %5394 = vmatpush1.msra.mxu0 %v4081
    %5395 = vmatprep.subr.mxu0 %v4090
    %5396 = vmatpush1.msra.mxu0 %v4089
    %5397 = vmatprep.subr.mxu0 %v4098
    %5398 = vmatpush1.msra.mxu0 %v4097
    %5399 = vmatprep.subr.mxu0 %v4106
    %5400 = vmatpush1.msra.mxu0 %v4105
    %5401 = vmatprep.subr.mxu0 %v4114
    %5402 = vmatpush1.msra.mxu0 %v4113
    %5403 = vmatprep.subr.mxu0 %v4122
    %5404 = vmatpush1.msra.mxu0 %v4121
    %5405 = vmatprep.subr.mxu0 %v4130
    %5406 = vmatpush1.msra.mxu0 %v4129
    %5407 = vmatprep.subr.mxu0 %v4138
    %5408 = vmatpush1.msra.mxu0 %v4137
    %5409 = vmatprep.subr.mxu0 %v4146
    %5410 = vmatpush1.msra.mxu0 %v4145
    %5411 = vmatprep.subr.mxu0 %v4154
    %5412 = vmatpush1.msra.mxu0 %v4153
    %5413 = vmatprep.subr.mxu0 %v4162
    %5414 = vmatpush1.msra.mxu0 %v4161
    %5415 = vmatprep.subr.mxu0 %v4170
    %5416 = vmatpush1.msra.mxu0 %v4169
    %5417 = vmatprep.mubr.f32.mxu0 %v5166
    %5418 = vmatmul.mubr.f32.gmra.mrb[0].mxu0 %v5165
    %v5419 = vpop.f32.mrb[0].mxu0
    %v5420 = vadd.f32 %v5190, %v5419
    %v5421 = vpop.f32.mrb[0].mxu0
    %v5422 = vadd.f32 %v5194, %v5421
    %5423 = vdwg.mxu0
    %5424 = vmatprep.subr.mxu0 %v3924
    %5425 = vmatpush1.msra.mxu0 %v3923
    %5426 = vmatprep.subr.mxu0 %v3932
    %5427 = vmatpush1.msra.mxu0 %v3931
    %5428 = vmatprep.subr.mxu0 %v3940
    %5429 = vmatpush1.msra.mxu0 %v3939
    %5430 = vmatprep.subr.mxu0 %v3948
    %5431 = vmatpush1.msra.mxu0 %v3947
    %5432 = vmatprep.subr.mxu0 %v3956
    %5433 = vmatpush1.msra.mxu0 %v3955
    %5434 = vmatprep.subr.mxu0 %v3964
    %5435 = vmatpush1.msra.mxu0 %v3963
    %5436 = vmatprep.subr.mxu0 %v3972
    %5437 = vmatpush1.msra.mxu0 %v3971
    %5438 = vmatprep.subr.mxu0 %v3980
    %5439 = vmatpush1.msra.mxu0 %v3979
    %5440 = vmatprep.subr.mxu0 %v3988
    %5441 = vmatpush1.msra.mxu0 %v3987
    %5442 = vmatprep.subr.mxu0 %v3996
    %5443 = vmatpush1.msra.mxu0 %v3995
    %5444 = vmatprep.subr.mxu0 %v4004
    %5445 = vmatpush1.msra.mxu0 %v4003
    %5446 = vmatprep.subr.mxu0 %v4012
    %5447 = vmatpush1.msra.mxu0 %v4011
    %5448 = vmatprep.subr.mxu0 %v4020
    %5449 = vmatpush1.msra.mxu0 %v4019
    %5450 = vmatprep.subr.mxu0 %v4028
    %5451 = vmatpush1.msra.mxu0 %v4027
    %5452 = vmatprep.subr.mxu0 %v4036
    %5453 = vmatpush1.msra.mxu0 %v4035
    %5454 = vmatprep.subr.mxu0 %v4044
    %5455 = vmatpush1.msra.mxu0 %v4043
    %5456 = vmatprep.subr.mxu0 %v4052
    %5457 = vmatpush1.msra.mxu0 %v4051
    %5458 = vmatprep.subr.mxu0 %v4060
    %5459 = vmatpush1.msra.mxu0 %v4059
    %5460 = vmatprep.subr.mxu0 %v4068
    %5461 = vmatpush1.msra.mxu0 %v4067
    %5462 = vmatprep.subr.mxu0 %v4076
    %5463 = vmatpush1.msra.mxu0 %v4075
    %5464 = vmatprep.subr.mxu0 %v4084
    %5465 = vmatpush1.msra.mxu0 %v4083
    %5466 = vmatprep.subr.mxu0 %v4092
    %5467 = vmatpush1.msra.mxu0 %v4091
    %5468 = vmatprep.subr.mxu0 %v4100
    %5469 = vmatpush1.msra.mxu0 %v4099
    %5470 = vmatprep.subr.mxu0 %v4108
    %5471 = vmatpush1.msra.mxu0 %v4107
    %5472 = vmatprep.subr.mxu0 %v4116
    %5473 = vmatpush1.msra.mxu0 %v4115
    %5474 = vmatprep.subr.mxu0 %v4124
    %5475 = vmatpush1.msra.mxu0 %v4123
    %5476 = vmatprep.subr.mxu0 %v4132
    %5477 = vmatpush1.msra.mxu0 %v4131
    %5478 = vmatprep.subr.mxu0 %v4140
    %5479 = vmatpush1.msra.mxu0 %v4139
    %5480 = vmatprep.subr.mxu0 %v4148
    %5481 = vmatpush1.msra.mxu0 %v4147
    %5482 = vmatprep.subr.mxu0 %v4156
    %5483 = vmatpush1.msra.mxu0 %v4155
    %5484 = vmatprep.subr.mxu0 %v4164
    %5485 = vmatpush1.msra.mxu0 %v4163
    %5486 = vmatprep.subr.mxu0 %v4172
    %5487 = vmatpush1.msra.mxu0 %v4171
    %5488 = vmatprep.mubr.f32.mxu0 %v5166
    %5489 = vmatmul.mubr.f32.gmra.mrb[0].mxu0 %v5165
    %v5490 = vpop.f32.mrb[0].mxu0
    %v5491 = vadd.f32 %v5198, %v5490
    %v5492 = vpop.f32.mrb[0].mxu0
    %v5493 = vadd.f32 %v5202, %v5492
    %5494 = vdwg.mxu0
    %v5495 = vxor.u32 %v5278, 2147483648
    %v5496 = vxor.u32 %v5280, 2147483648
    %v5497 = vmul.f32 %v5495, 1.442695
    %v5498 = vpow.pop %v5497
    %v5499 = vmul.f32 %v5496, 1.442695
    %v5500 = vpow.pop %v5499
    %v5501 = vadd.f32 %v5498, 1.0
    %v5502 = vadd.f32 %v5500, 1.0
    %v5503 = vrcp.pop %v5501
    %v5504 = vmul.f32 1.0, %v5503
    %v5505 = vrcp.pop %v5502
    %v5506 = vmul.f32 1.0, %v5505
    %v5507 = vxor.u32 %v5349, 2147483648
    %v5508 = vxor.u32 %v5351, 2147483648
    %v5509 = vmul.f32 %v5507, 1.442695
    %v5510 = vpow.pop %v5509
    %v5511 = vmul.f32 %v5508, 1.442695
    %v5512 = vpow.pop %v5511
    %v5513 = vadd.f32 %v5510, 1.0
    %v5514 = vadd.f32 %v5512, 1.0
    %v5515 = vrcp.pop %v5513
    %v5516 = vmul.f32 1.0, %v5515
    %v5517 = vrcp.pop %v5514
    %v5518 = vmul.f32 1.0, %v5517
    %v5519 = vtanh.pop %v5420
    %v5520 = vtanh.pop %v5422
    %v5521 = vxor.u32 %v5491, 2147483648
    %v5522 = vxor.u32 %v5493, 2147483648
    %v5523 = vmul.f32 %v5521, 1.442695
    %v5524 = vpow.pop %v5523
    %v5525 = vmul.f32 %v5522, 1.442695
    %v5526 = vpow.pop %v5525
    %v5527 = vadd.f32 %v5524, 1.0
    %v5528 = vadd.f32 %v5526, 1.0
    %v5529 = vrcp.pop %v5527
    %v5530 = vmul.f32 1.0, %v5529
    %v5531 = vrcp.pop %v5528
    %v5532 = vmul.f32 1.0, %v5531
    %v5533 = vmul.f32 %v5516, %v5161
    %v5534 = vmul.f32 %v5518, %v5162
    %v5535 = vmul.f32 %v5504, %v5519
    %v5536 = vmul.f32 %v5506, %v5520
    %v5537 = vadd.f32 %v5533, %v5535
    %v5538 = vadd.f32 %v5534, %v5536
    %v5539 = vtanh.pop %v5537
    %v5540 = vtanh.pop %v5538
    %v5541 = vmul.f32 %v5530, %v5539
    %v5542 = vmul.f32 %v5532, %v5540
    %v5543 = vld [vmem:[%s1509] ss:$8 sm:$0xf]
    %v5544 = vld [vmem:[%s1509] ss:$8 sm:$0xf0]
    %v5545 = vor.u32 %v5543, %v5544
    %v5547 = vlaneseq
    %v5548 = vshrl.u32 %v5547, 7
    %v5549 = vsub.s32 0, %v5548
    %v5550 = vrot.slane %v5545, %v5549
    %v5551 = vlaneseq
    %v5552 = vshrl.u32 %v5551, 7
    %v5553 = vsub.s32 1, %v5552
    %v5554 = vrot.slane %v5545, %v5553
    %v5555 = vlaneseq
    %v5556 = vshrl.u32 %v5555, 7
    %v5557 = vsub.s32 2, %v5556
    %v5558 = vrot.slane %v5545, %v5557
    %v5559 = vlaneseq
    %v5560 = vshrl.u32 %v5559, 7
    %v5561 = vsub.s32 3, %v5560
    %v5562 = vrot.slane %v5545, %v5561
    %v5563 = vlaneseq
    %v5564 = vshrl.u32 %v5563, 7
    %v5565 = vsub.s32 4, %v5564
    %v5566 = vrot.slane %v5545, %v5565
    %v5567 = vlaneseq
    %v5568 = vshrl.u32 %v5567, 7
    %v5569 = vsub.s32 5, %v5568
    %v5570 = vrot.slane %v5545, %v5569
    %v5571 = vlaneseq
    %v5572 = vshrl.u32 %v5571, 7
    %v5573 = vsub.s32 6, %v5572
    %v5574 = vrot.slane %v5545, %v5573
    %v5575 = vlaneseq
    %v5576 = vshrl.u32 %v5575, 7
    %v5577 = vsub.s32 7, %v5576
    %v5578 = vrot.slane %v5545, %v5577
    %5587 = vmatprep.subr.mxu0 %v3918
    %5588 = vmatpush1.msra.mxu0 %v3917
    %5589 = vmatprep.subr.mxu0 %v3926
    %5590 = vmatpush1.msra.mxu0 %v3925
    %5591 = vmatprep.subr.mxu0 %v3934
    %5592 = vmatpush1.msra.mxu0 %v3933
    %5593 = vmatprep.subr.mxu0 %v3942
    %5594 = vmatpush1.msra.mxu0 %v3941
    %5595 = vmatprep.subr.mxu0 %v3950
    %5596 = vmatpush1.msra.mxu0 %v3949
    %5597 = vmatprep.subr.mxu0 %v3958
    %5598 = vmatpush1.msra.mxu0 %v3957
    %5599 = vmatprep.subr.mxu0 %v3966
    %5600 = vmatpush1.msra.mxu0 %v3965
    %5601 = vmatprep.subr.mxu0 %v3974
    %5602 = vmatpush1.msra.mxu0 %v3973
    %5603 = vmatprep.subr.mxu0 %v3982
    %5604 = vmatpush1.msra.mxu0 %v3981
    %5605 = vmatprep.subr.mxu0 %v3990
    %5606 = vmatpush1.msra.mxu0 %v3989
    %5607 = vmatprep.subr.mxu0 %v3998
    %5608 = vmatpush1.msra.mxu0 %v3997
    %5609 = vmatprep.subr.mxu0 %v4006
    %5610 = vmatpush1.msra.mxu0 %v4005
    %5611 = vmatprep.subr.mxu0 %v4014
    %5612 = vmatpush1.msra.mxu0 %v4013
    %5613 = vmatprep.subr.mxu0 %v4022
    %5614 = vmatpush1.msra.mxu0 %v4021
    %5615 = vmatprep.subr.mxu0 %v4030
    %5616 = vmatpush1.msra.mxu0 %v4029
    %5617 = vmatprep.subr.mxu0 %v4038
    %5618 = vmatpush1.msra.mxu0 %v4037
    %5619 = vmatprep.subr.mxu0 %v4046
    %5620 = vmatpush1.msra.mxu0 %v4045
    %5621 = vmatprep.subr.mxu0 %v4054
    %5622 = vmatpush1.msra.mxu0 %v4053
    %5623 = vmatprep.subr.mxu0 %v4062
    %5624 = vmatpush1.msra.mxu0 %v4061
    %5625 = vmatprep.subr.mxu0 %v4070
    %5626 = vmatpush1.msra.mxu0 %v4069
    %5627 = vmatprep.subr.mxu0 %v4078
    %5628 = vmatpush1.msra.mxu0 %v4077
    %5629 = vmatprep.subr.mxu0 %v4086
    %5630 = vmatpush1.msra.mxu0 %v4085
    %5631 = vmatprep.subr.mxu0 %v4094
    %5632 = vmatpush1.msra.mxu0 %v4093
    %5633 = vmatprep.subr.mxu0 %v4102
    %5634 = vmatpush1.msra.mxu0 %v4101
    %5635 = vmatprep.subr.mxu0 %v4110
    %5636 = vmatpush1.msra.mxu0 %v4109
    %5637 = vmatprep.subr.mxu0 %v4118
    %5638 = vmatpush1.msra.mxu0 %v4117
    %5639 = vmatprep.subr.mxu0 %v4126
    %5640 = vmatpush1.msra.mxu0 %v4125
    %5641 = vmatprep.subr.mxu0 %v4134
    %5642 = vmatpush1.msra.mxu0 %v4133
    %5643 = vmatprep.subr.mxu0 %v4142
    %5644 = vmatpush1.msra.mxu0 %v4141
    %5645 = vmatprep.subr.mxu0 %v4150
    %5646 = vmatpush1.msra.mxu0 %v4149
    %5647 = vmatprep.subr.mxu0 %v4158
    %5648 = vmatpush1.msra.mxu0 %v4157
    %5649 = vmatprep.subr.mxu0 %v4166
    %5650 = vmatpush1.msra.mxu0 %v4165
    %5651 = vmatprep.mubr.f32.mxu0 %v5542
    %5652 = vmatmul.mubr.f32.gmra.mrb[0].mxu0 %v5541
    %v5653 = vpop.f32.mrb[0].mxu0
    %v5654 = vadd.f32 %v5550, %v5653
    %v5655 = vpop.f32.mrb[0].mxu0
    %v5656 = vadd.f32 %v5554, %v5655
    %5657 = vdwg.mxu0
    %5658 = vmatprep.subr.mxu0 %v3920
    %5659 = vmatpush1.msra.mxu0 %v3919
    %5660 = vmatprep.subr.mxu0 %v3928
    %5661 = vmatpush1.msra.mxu0 %v3927
    %5662 = vmatprep.subr.mxu0 %v3936
    %5663 = vmatpush1.msra.mxu0 %v3935
    %5664 = vmatprep.subr.mxu0 %v3944
    %5665 = vmatpush1.msra.mxu0 %v3943
    %5666 = vmatprep.subr.mxu0 %v3952
    %5667 = vmatpush1.msra.mxu0 %v3951
    %5668 = vmatprep.subr.mxu0 %v3960
    %5669 = vmatpush1.msra.mxu0 %v3959
    %5670 = vmatprep.subr.mxu0 %v3968
    %5671 = vmatpush1.msra.mxu0 %v3967
    %5672 = vmatprep.subr.mxu0 %v3976
    %5673 = vmatpush1.msra.mxu0 %v3975
    %5674 = vmatprep.subr.mxu0 %v3984
    %5675 = vmatpush1.msra.mxu0 %v3983
    %5676 = vmatprep.subr.mxu0 %v3992
    %5677 = vmatpush1.msra.mxu0 %v3991
    %5678 = vmatprep.subr.mxu0 %v4000
    %5679 = vmatpush1.msra.mxu0 %v3999
    %5680 = vmatprep.subr.mxu0 %v4008
    %5681 = vmatpush1.msra.mxu0 %v4007
    %5682 = vmatprep.subr.mxu0 %v4016
    %5683 = vmatpush1.msra.mxu0 %v4015
    %5684 = vmatprep.subr.mxu0 %v4024
    %5685 = vmatpush1.msra.mxu0 %v4023
    %5686 = vmatprep.subr.mxu0 %v4032
    %5687 = vmatpush1.msra.mxu0 %v4031
    %5688 = vmatprep.subr.mxu0 %v4040
    %5689 = vmatpush1.msra.mxu0 %v4039
    %5690 = vmatprep.subr.mxu0 %v4048
    %5691 = vmatpush1.msra.mxu0 %v4047
    %5692 = vmatprep.subr.mxu0 %v4056
    %5693 = vmatpush1.msra.mxu0 %v4055
    %5694 = vmatprep.subr.mxu0 %v4064
    %5695 = vmatpush1.msra.mxu0 %v4063
    %5696 = vmatprep.subr.mxu0 %v4072
    %5697 = vmatpush1.msra.mxu0 %v4071
    %5698 = vmatprep.subr.mxu0 %v4080
    %5699 = vmatpush1.msra.mxu0 %v4079
    %5700 = vmatprep.subr.mxu0 %v4088
    %5701 = vmatpush1.msra.mxu0 %v4087
    %5702 = vmatprep.subr.mxu0 %v4096
    %5703 = vmatpush1.msra.mxu0 %v4095
    %5704 = vmatprep.subr.mxu0 %v4104
    %5705 = vmatpush1.msra.mxu0 %v4103
    %5706 = vmatprep.subr.mxu0 %v4112
    %5707 = vmatpush1.msra.mxu0 %v4111
    %5708 = vmatprep.subr.mxu0 %v4120
    %5709 = vmatpush1.msra.mxu0 %v4119
    %5710 = vmatprep.subr.mxu0 %v4128
    %5711 = vmatpush1.msra.mxu0 %v4127
    %5712 = vmatprep.subr.mxu0 %v4136
    %5713 = vmatpush1.msra.mxu0 %v4135
    %5714 = vmatprep.subr.mxu0 %v4144
    %5715 = vmatpush1.msra.mxu0 %v4143
    %5716 = vmatprep.subr.mxu0 %v4152
    %5717 = vmatpush1.msra.mxu0 %v4151
    %5718 = vmatprep.subr.mxu0 %v4160
    %5719 = vmatpush1.msra.mxu0 %v4159
    %5720 = vmatprep.subr.mxu0 %v4168
    %5721 = vmatpush1.msra.mxu0 %v4167
    %5722 = vmatprep.mubr.f32.mxu0 %v5542
    %5723 = vmatmul.mubr.f32.gmra.mrb[0].mxu0 %v5541
    %v5724 = vpop.f32.mrb[0].mxu0
    %v5725 = vadd.f32 %v5558, %v5724
    %v5726 = vpop.f32.mrb[0].mxu0
    %v5727 = vadd.f32 %v5562, %v5726
    %5728 = vdwg.mxu0
    %5729 = vmatprep.subr.mxu0 %v3922
    %5730 = vmatpush1.msra.mxu0 %v3921
    %5731 = vmatprep.subr.mxu0 %v3930
    %5732 = vmatpush1.msra.mxu0 %v3929
    %5733 = vmatprep.subr.mxu0 %v3938
    %5734 = vmatpush1.msra.mxu0 %v3937
    %5735 = vmatprep.subr.mxu0 %v3946
    %5736 = vmatpush1.msra.mxu0 %v3945
    %5737 = vmatprep.subr.mxu0 %v3954
    %5738 = vmatpush1.msra.mxu0 %v3953
    %5739 = vmatprep.subr.mxu0 %v3962
    %5740 = vmatpush1.msra.mxu0 %v3961
    %5741 = vmatprep.subr.mxu0 %v3970
    %5742 = vmatpush1.msra.mxu0 %v3969
    %5743 = vmatprep.subr.mxu0 %v3978
    %5744 = vmatpush1.msra.mxu0 %v3977
    %5745 = vmatprep.subr.mxu0 %v3986
    %5746 = vmatpush1.msra.mxu0 %v3985
    %5747 = vmatprep.subr.mxu0 %v3994
    %5748 = vmatpush1.msra.mxu0 %v3993
    %5749 = vmatprep.subr.mxu0 %v4002
    %5750 = vmatpush1.msra.mxu0 %v4001
    %5751 = vmatprep.subr.mxu0 %v4010
    %5752 = vmatpush1.msra.mxu0 %v4009
    %5753 = vmatprep.subr.mxu0 %v4018
    %5754 = vmatpush1.msra.mxu0 %v4017
    %5755 = vmatprep.subr.mxu0 %v4026
    %5756 = vmatpush1.msra.mxu0 %v4025
    %5757 = vmatprep.subr.mxu0 %v4034
    %5758 = vmatpush1.msra.mxu0 %v4033
    %5759 = vmatprep.subr.mxu0 %v4042
    %5760 = vmatpush1.msra.mxu0 %v4041
    %5761 = vmatprep.subr.mxu0 %v4050
    %5762 = vmatpush1.msra.mxu0 %v4049
    %5763 = vmatprep.subr.mxu0 %v4058
    %5764 = vmatpush1.msra.mxu0 %v4057
    %5765 = vmatprep.subr.mxu0 %v4066
    %5766 = vmatpush1.msra.mxu0 %v4065
    %5767 = vmatprep.subr.mxu0 %v4074
    %5768 = vmatpush1.msra.mxu0 %v4073
    %5769 = vmatprep.subr.mxu0 %v4082
    %5770 = vmatpush1.msra.mxu0 %v4081
    %5771 = vmatprep.subr.mxu0 %v4090
    %5772 = vmatpush1.msra.mxu0 %v4089
    %5773 = vmatprep.subr.mxu0 %v4098
    %5774 = vmatpush1.msra.mxu0 %v4097
    %5775 = vmatprep.subr.mxu0 %v4106
    %5776 = vmatpush1.msra.mxu0 %v4105
    %5777 = vmatprep.subr.mxu0 %v4114
    %5778 = vmatpush1.msra.mxu0 %v4113
    %5779 = vmatprep.subr.mxu0 %v4122
    %5780 = vmatpush1.msra.mxu0 %v4121
    %5781 = vmatprep.subr.mxu0 %v4130
    %5782 = vmatpush1.msra.mxu0 %v4129
    %5783 = vmatprep.subr.mxu0 %v4138
    %5784 = vmatpush1.msra.mxu0 %v4137
    %5785 = vmatprep.subr.mxu0 %v4146
    %5786 = vmatpush1.msra.mxu0 %v4145
    %5787 = vmatprep.subr.mxu0 %v4154
    %5788 = vmatpush1.msra.mxu0 %v4153
    %5789 = vmatprep.subr.mxu0 %v4162
    %5790 = vmatpush1.msra.mxu0 %v4161
    %5791 = vmatprep.subr.mxu0 %v4170
    %5792 = vmatpush1.msra.mxu0 %v4169
    %5793 = vmatprep.mubr.f32.mxu0 %v5542
    %5794 = vmatmul.mubr.f32.gmra.mrb[0].mxu0 %v5541
    %v5795 = vpop.f32.mrb[0].mxu0
    %v5796 = vadd.f32 %v5566, %v5795
    %v5797 = vpop.f32.mrb[0].mxu0
    %v5798 = vadd.f32 %v5570, %v5797
    %5799 = vdwg.mxu0
    %5800 = vmatprep.subr.mxu0 %v3924
    %5801 = vmatpush1.msra.mxu0 %v3923
    %5802 = vmatprep.subr.mxu0 %v3932
    %5803 = vmatpush1.msra.mxu0 %v3931
    %5804 = vmatprep.subr.mxu0 %v3940
    %5805 = vmatpush1.msra.mxu0 %v3939
    %5806 = vmatprep.subr.mxu0 %v3948
    %5807 = vmatpush1.msra.mxu0 %v3947
    %5808 = vmatprep.subr.mxu0 %v3956
    %5809 = vmatpush1.msra.mxu0 %v3955
    %5810 = vmatprep.subr.mxu0 %v3964
    %5811 = vmatpush1.msra.mxu0 %v3963
    %5812 = vmatprep.subr.mxu0 %v3972
    %5813 = vmatpush1.msra.mxu0 %v3971
    %5814 = vmatprep.subr.mxu0 %v3980
    %5815 = vmatpush1.msra.mxu0 %v3979
    %5816 = vmatprep.subr.mxu0 %v3988
    %5817 = vmatpush1.msra.mxu0 %v3987
    %5818 = vmatprep.subr.mxu0 %v3996
    %5819 = vmatpush1.msra.mxu0 %v3995
    %5820 = vmatprep.subr.mxu0 %v4004
    %5821 = vmatpush1.msra.mxu0 %v4003
    %5822 = vmatprep.subr.mxu0 %v4012
    %5823 = vmatpush1.msra.mxu0 %v4011
    %5824 = vmatprep.subr.mxu0 %v4020
    %5825 = vmatpush1.msra.mxu0 %v4019
    %5826 = vmatprep.subr.mxu0 %v4028
    %5827 = vmatpush1.msra.mxu0 %v4027
    %5828 = vmatprep.subr.mxu0 %v4036
    %5829 = vmatpush1.msra.mxu0 %v4035
    %5830 = vmatprep.subr.mxu0 %v4044
    %5831 = vmatpush1.msra.mxu0 %v4043
    %5832 = vmatprep.subr.mxu0 %v4052
    %5833 = vmatpush1.msra.mxu0 %v4051
    %5834 = vmatprep.subr.mxu0 %v4060
    %5835 = vmatpush1.msra.mxu0 %v4059
    %5836 = vmatprep.subr.mxu0 %v4068
    %5837 = vmatpush1.msra.mxu0 %v4067
    %5838 = vmatprep.subr.mxu0 %v4076
    %5839 = vmatpush1.msra.mxu0 %v4075
    %5840 = vmatprep.subr.mxu0 %v4084
    %5841 = vmatpush1.msra.mxu0 %v4083
    %5842 = vmatprep.subr.mxu0 %v4092
    %5843 = vmatpush1.msra.mxu0 %v4091
    %5844 = vmatprep.subr.mxu0 %v4100
    %5845 = vmatpush1.msra.mxu0 %v4099
    %5846 = vmatprep.subr.mxu0 %v4108
    %5847 = vmatpush1.msra.mxu0 %v4107
    %5848 = vmatprep.subr.mxu0 %v4116
    %5849 = vmatpush1.msra.mxu0 %v4115
    %5850 = vmatprep.subr.mxu0 %v4124
    %5851 = vmatpush1.msra.mxu0 %v4123
    %5852 = vmatprep.subr.mxu0 %v4132
    %5853 = vmatpush1.msra.mxu0 %v4131
    %5854 = vmatprep.subr.mxu0 %v4140
    %5855 = vmatpush1.msra.mxu0 %v4139
    %5856 = vmatprep.subr.mxu0 %v4148
    %5857 = vmatpush1.msra.mxu0 %v4147
    %5858 = vmatprep.subr.mxu0 %v4156
    %5859 = vmatpush1.msra.mxu0 %v4155
    %5860 = vmatprep.subr.mxu0 %v4164
    %5861 = vmatpush1.msra.mxu0 %v4163
    %5862 = vmatprep.subr.mxu0 %v4172
    %5863 = vmatpush1.msra.mxu0 %v4171
    %5864 = vmatprep.mubr.f32.mxu0 %v5542
    %5865 = vmatmul.mubr.f32.gmra.mrb[0].mxu0 %v5541
    %v5866 = vpop.f32.mrb[0].mxu0
    %v5867 = vadd.f32 %v5574, %v5866
    %v5868 = vpop.f32.mrb[0].mxu0
    %v5869 = vadd.f32 %v5578, %v5868
    %5870 = vdwg.mxu0
    %v5871 = vxor.u32 %v5654, 2147483648
    %v5872 = vxor.u32 %v5656, 2147483648
    %v5873 = vmul.f32 %v5871, 1.442695
    %v5874 = vpow.pop %v5873
    %v5875 = vmul.f32 %v5872, 1.442695
    %v5876 = vpow.pop %v5875
    %v5877 = vadd.f32 %v5874, 1.0
    %v5878 = vadd.f32 %v5876, 1.0
    %v5879 = vrcp.pop %v5877
    %v5880 = vmul.f32 1.0, %v5879
    %v5881 = vrcp.pop %v5878
    %v5882 = vmul.f32 1.0, %v5881
    %v5883 = vxor.u32 %v5725, 2147483648
    %v5884 = vxor.u32 %v5727, 2147483648
    %v5885 = vmul.f32 %v5883, 1.442695
    %v5886 = vpow.pop %v5885
    %v5887 = vmul.f32 %v5884, 1.442695
    %v5888 = vpow.pop %v5887
    %v5889 = vadd.f32 %v5886, 1.0
    %v5890 = vadd.f32 %v5888, 1.0
    %v5891 = vrcp.pop %v5889
    %v5892 = vmul.f32 1.0, %v5891
    %v5893 = vrcp.pop %v5890
    %v5894 = vmul.f32 1.0, %v5893
    %v5895 = vtanh.pop %v5796
    %v5896 = vtanh.pop %v5798
    %v5897 = vxor.u32 %v5867, 2147483648
    %v5898 = vxor.u32 %v5869, 2147483648
    %v5899 = vmul.f32 %v5897, 1.442695
    %v5900 = vpow.pop %v5899
    %v5901 = vmul.f32 %v5898, 1.442695
    %v5902 = vpow.pop %v5901
    %v5903 = vadd.f32 %v5900, 1.0
    %v5904 = vadd.f32 %v5902, 1.0
    %v5905 = vrcp.pop %v5903
    %v5906 = vmul.f32 1.0, %v5905
    %v5907 = vrcp.pop %v5904
    %v5908 = vmul.f32 1.0, %v5907
    %v5909 = vmul.f32 %v5892, %v5537
    %v5910 = vmul.f32 %v5894, %v5538
    %v5911 = vmul.f32 %v5880, %v5895
    %v5912 = vmul.f32 %v5882, %v5896
    %v5913 = vadd.f32 %v5909, %v5911
    %v5914 = vadd.f32 %v5910, %v5912
    %v5915 = vtanh.pop %v5913
    %v5916 = vtanh.pop %v5914
    %v5917 = vmul.f32 %v5906, %v5915
    %v5918 = vmul.f32 %v5908, %v5916
    %v5919 = vld [vmem:[%s1907] ss:$8 sm:$0xf]
    %v5920 = vld [vmem:[%s1907] ss:$8 sm:$0xf0]
    %v5921 = vor.u32 %v5919, %v5920
    %v5923 = vlaneseq
    %v5924 = vshrl.u32 %v5923, 7
    %v5925 = vsub.s32 0, %v5924
    %v5926 = vrot.slane %v5921, %v5925
    %v5927 = vlaneseq
    %v5928 = vshrl.u32 %v5927, 7
    %v5929 = vsub.s32 1, %v5928
    %v5930 = vrot.slane %v5921, %v5929
    %v5931 = vlaneseq
    %v5932 = vshrl.u32 %v5931, 7
    %v5933 = vsub.s32 2, %v5932
    %v5934 = vrot.slane %v5921, %v5933
    %v5935 = vlaneseq
    %v5936 = vshrl.u32 %v5935, 7
    %v5937 = vsub.s32 3, %v5936
    %v5938 = vrot.slane %v5921, %v5937
    %v5939 = vlaneseq
    %v5940 = vshrl.u32 %v5939, 7
    %v5941 = vsub.s32 4, %v5940
    %v5942 = vrot.slane %v5921, %v5941
    %v5943 = vlaneseq
    %v5944 = vshrl.u32 %v5943, 7
    %v5945 = vsub.s32 5, %v5944
    %v5946 = vrot.slane %v5921, %v5945
    %v5947 = vlaneseq
    %v5948 = vshrl.u32 %v5947, 7
    %v5949 = vsub.s32 6, %v5948
    %v5950 = vrot.slane %v5921, %v5949
    %v5951 = vlaneseq
    %v5952 = vshrl.u32 %v5951, 7
    %v5953 = vsub.s32 7, %v5952
    %v5954 = vrot.slane %v5921, %v5953
    %5963 = vmatprep.subr.mxu0 %v3918
    %5964 = vmatpush1.msra.mxu0 %v3917
    %5965 = vmatprep.subr.mxu0 %v3926
    %5966 = vmatpush1.msra.mxu0 %v3925
    %5967 = vmatprep.subr.mxu0 %v3934
    %5968 = vmatpush1.msra.mxu0 %v3933
    %5969 = vmatprep.subr.mxu0 %v3942
    %5970 = vmatpush1.msra.mxu0 %v3941
    %5971 = vmatprep.subr.mxu0 %v3950
    %5972 = vmatpush1.msra.mxu0 %v3949
    %5973 = vmatprep.subr.mxu0 %v3958
    %5974 = vmatpush1.msra.mxu0 %v3957
    %5975 = vmatprep.subr.mxu0 %v3966
    %5976 = vmatpush1.msra.mxu0 %v3965
    %5977 = vmatprep.subr.mxu0 %v3974
    %5978 = vmatpush1.msra.mxu0 %v3973
    %5979 = vmatprep.subr.mxu0 %v3982
    %5980 = vmatpush1.msra.mxu0 %v3981
    %5981 = vmatprep.subr.mxu0 %v3990
    %5982 = vmatpush1.msra.mxu0 %v3989
    %5983 = vmatprep.subr.mxu0 %v3998
    %5984 = vmatpush1.msra.mxu0 %v3997
    %5985 = vmatprep.subr.mxu0 %v4006
    %5986 = vmatpush1.msra.mxu0 %v4005
    %5987 = vmatprep.subr.mxu0 %v4014
    %5988 = vmatpush1.msra.mxu0 %v4013
    %5989 = vmatprep.subr.mxu0 %v4022
    %5990 = vmatpush1.msra.mxu0 %v4021
    %5991 = vmatprep.subr.mxu0 %v4030
    %5992 = vmatpush1.msra.mxu0 %v4029
    %5993 = vmatprep.subr.mxu0 %v4038
    %5994 = vmatpush1.msra.mxu0 %v4037
    %5995 = vmatprep.subr.mxu0 %v4046
    %5996 = vmatpush1.msra.mxu0 %v4045
    %5997 = vmatprep.subr.mxu0 %v4054
    %5998 = vmatpush1.msra.mxu0 %v4053
    %5999 = vmatprep.subr.mxu0 %v4062
    %6000 = vmatpush1.msra.mxu0 %v4061
    %6001 = vmatprep.subr.mxu0 %v4070
    %6002 = vmatpush1.msra.mxu0 %v4069
    %6003 = vmatprep.subr.mxu0 %v4078
    %6004 = vmatpush1.msra.mxu0 %v4077
    %6005 = vmatprep.subr.mxu0 %v4086
    %6006 = vmatpush1.msra.mxu0 %v4085
    %6007 = vmatprep.subr.mxu0 %v4094
    %6008 = vmatpush1.msra.mxu0 %v4093
    %6009 = vmatprep.subr.mxu0 %v4102
    %6010 = vmatpush1.msra.mxu0 %v4101
    %6011 = vmatprep.subr.mxu0 %v4110
    %6012 = vmatpush1.msra.mxu0 %v4109
    %6013 = vmatprep.subr.mxu0 %v4118
    %6014 = vmatpush1.msra.mxu0 %v4117
    %6015 = vmatprep.subr.mxu0 %v4126
    %6016 = vmatpush1.msra.mxu0 %v4125
    %6017 = vmatprep.subr.mxu0 %v4134
    %6018 = vmatpush1.msra.mxu0 %v4133
    %6019 = vmatprep.subr.mxu0 %v4142
    %6020 = vmatpush1.msra.mxu0 %v4141
    %6021 = vmatprep.subr.mxu0 %v4150
    %6022 = vmatpush1.msra.mxu0 %v4149
    %6023 = vmatprep.subr.mxu0 %v4158
    %6024 = vmatpush1.msra.mxu0 %v4157
    %6025 = vmatprep.subr.mxu0 %v4166
    %6026 = vmatpush1.msra.mxu0 %v4165
    %6027 = vmatprep.mubr.f32.mxu0 %v5918
    %6028 = vmatmul.mubr.f32.gmra.mrb[0].mxu0 %v5917
    %v6029 = vpop.f32.mrb[0].mxu0
    %v6030 = vadd.f32 %v5926, %v6029
    %v6031 = vpop.f32.mrb[0].mxu0
    %v6032 = vadd.f32 %v5930, %v6031
    %6033 = vdwg.mxu0
    %6034 = vmatprep.subr.mxu0 %v3920
    %6035 = vmatpush1.msra.mxu0 %v3919
    %6036 = vmatprep.subr.mxu0 %v3928
    %6037 = vmatpush1.msra.mxu0 %v3927
    %6038 = vmatprep.subr.mxu0 %v3936
    %6039 = vmatpush1.msra.mxu0 %v3935
    %6040 = vmatprep.subr.mxu0 %v3944
    %6041 = vmatpush1.msra.mxu0 %v3943
    %6042 = vmatprep.subr.mxu0 %v3952
    %6043 = vmatpush1.msra.mxu0 %v3951
    %6044 = vmatprep.subr.mxu0 %v3960
    %6045 = vmatpush1.msra.mxu0 %v3959
    %6046 = vmatprep.subr.mxu0 %v3968
    %6047 = vmatpush1.msra.mxu0 %v3967
    %6048 = vmatprep.subr.mxu0 %v3976
    %6049 = vmatpush1.msra.mxu0 %v3975
    %6050 = vmatprep.subr.mxu0 %v3984
    %6051 = vmatpush1.msra.mxu0 %v3983
    %6052 = vmatprep.subr.mxu0 %v3992
    %6053 = vmatpush1.msra.mxu0 %v3991
    %6054 = vmatprep.subr.mxu0 %v4000
    %6055 = vmatpush1.msra.mxu0 %v3999
    %6056 = vmatprep.subr.mxu0 %v4008
    %6057 = vmatpush1.msra.mxu0 %v4007
    %6058 = vmatprep.subr.mxu0 %v4016
    %6059 = vmatpush1.msra.mxu0 %v4015
    %6060 = vmatprep.subr.mxu0 %v4024
    %6061 = vmatpush1.msra.mxu0 %v4023
    %6062 = vmatprep.subr.mxu0 %v4032
    %6063 = vmatpush1.msra.mxu0 %v4031
    %6064 = vmatprep.subr.mxu0 %v4040
    %6065 = vmatpush1.msra.mxu0 %v4039
    %6066 = vmatprep.subr.mxu0 %v4048
    %6067 = vmatpush1.msra.mxu0 %v4047
    %6068 = vmatprep.subr.mxu0 %v4056
    %6069 = vmatpush1.msra.mxu0 %v4055
    %6070 = vmatprep.subr.mxu0 %v4064
    %6071 = vmatpush1.msra.mxu0 %v4063
    %6072 = vmatprep.subr.mxu0 %v4072
    %6073 = vmatpush1.msra.mxu0 %v4071
    %6074 = vmatprep.subr.mxu0 %v4080
    %6075 = vmatpush1.msra.mxu0 %v4079
    %6076 = vmatprep.subr.mxu0 %v4088
    %6077 = vmatpush1.msra.mxu0 %v4087
    %6078 = vmatprep.subr.mxu0 %v4096
    %6079 = vmatpush1.msra.mxu0 %v4095
    %6080 = vmatprep.subr.mxu0 %v4104
    %6081 = vmatpush1.msra.mxu0 %v4103
    %6082 = vmatprep.subr.mxu0 %v4112
    %6083 = vmatpush1.msra.mxu0 %v4111
    %6084 = vmatprep.subr.mxu0 %v4120
    %6085 = vmatpush1.msra.mxu0 %v4119
    %6086 = vmatprep.subr.mxu0 %v4128
    %6087 = vmatpush1.msra.mxu0 %v4127
    %6088 = vmatprep.subr.mxu0 %v4136
    %6089 = vmatpush1.msra.mxu0 %v4135
    %6090 = vmatprep.subr.mxu0 %v4144
    %6091 = vmatpush1.msra.mxu0 %v4143
    %6092 = vmatprep.subr.mxu0 %v4152
    %6093 = vmatpush1.msra.mxu0 %v4151
    %6094 = vmatprep.subr.mxu0 %v4160
    %6095 = vmatpush1.msra.mxu0 %v4159
    %6096 = vmatprep.subr.mxu0 %v4168
    %6097 = vmatpush1.msra.mxu0 %v4167
    %6098 = vmatprep.mubr.f32.mxu0 %v5918
    %6099 = vmatmul.mubr.f32.gmra.mrb[0].mxu0 %v5917
    %v6100 = vpop.f32.mrb[0].mxu0
    %v6101 = vadd.f32 %v5934, %v6100
    %v6102 = vpop.f32.mrb[0].mxu0
    %v6103 = vadd.f32 %v5938, %v6102
    %6104 = vdwg.mxu0
    %6105 = vmatprep.subr.mxu0 %v3922
    %6106 = vmatpush1.msra.mxu0 %v3921
    %6107 = vmatprep.subr.mxu0 %v3930
    %6108 = vmatpush1.msra.mxu0 %v3929
    %6109 = vmatprep.subr.mxu0 %v3938
    %6110 = vmatpush1.msra.mxu0 %v3937
    %6111 = vmatprep.subr.mxu0 %v3946
    %6112 = vmatpush1.msra.mxu0 %v3945
    %6113 = vmatprep.subr.mxu0 %v3954
    %6114 = vmatpush1.msra.mxu0 %v3953
    %6115 = vmatprep.subr.mxu0 %v3962
    %6116 = vmatpush1.msra.mxu0 %v3961
    %6117 = vmatprep.subr.mxu0 %v3970
    %6118 = vmatpush1.msra.mxu0 %v3969
    %6119 = vmatprep.subr.mxu0 %v3978
    %6120 = vmatpush1.msra.mxu0 %v3977
    %6121 = vmatprep.subr.mxu0 %v3986
    %6122 = vmatpush1.msra.mxu0 %v3985
    %6123 = vmatprep.subr.mxu0 %v3994
    %6124 = vmatpush1.msra.mxu0 %v3993
    %6125 = vmatprep.subr.mxu0 %v4002
    %6126 = vmatpush1.msra.mxu0 %v4001
    %6127 = vmatprep.subr.mxu0 %v4010
    %6128 = vmatpush1.msra.mxu0 %v4009
    %6129 = vmatprep.subr.mxu0 %v4018
    %6130 = vmatpush1.msra.mxu0 %v4017
    %6131 = vmatprep.subr.mxu0 %v4026
    %6132 = vmatpush1.msra.mxu0 %v4025
    %6133 = vmatprep.subr.mxu0 %v4034
    %6134 = vmatpush1.msra.mxu0 %v4033
    %6135 = vmatprep.subr.mxu0 %v4042
    %6136 = vmatpush1.msra.mxu0 %v4041
    %6137 = vmatprep.subr.mxu0 %v4050
    %6138 = vmatpush1.msra.mxu0 %v4049
    %6139 = vmatprep.subr.mxu0 %v4058
    %6140 = vmatpush1.msra.mxu0 %v4057
    %6141 = vmatprep.subr.mxu0 %v4066
    %6142 = vmatpush1.msra.mxu0 %v4065
    %6143 = vmatprep.subr.mxu0 %v4074
    %6144 = vmatpush1.msra.mxu0 %v4073
    %6145 = vmatprep.subr.mxu0 %v4082
    %6146 = vmatpush1.msra.mxu0 %v4081
    %6147 = vmatprep.subr.mxu0 %v4090
    %6148 = vmatpush1.msra.mxu0 %v4089
    %6149 = vmatprep.subr.mxu0 %v4098
    %6150 = vmatpush1.msra.mxu0 %v4097
    %6151 = vmatprep.subr.mxu0 %v4106
    %6152 = vmatpush1.msra.mxu0 %v4105
    %6153 = vmatprep.subr.mxu0 %v4114
    %6154 = vmatpush1.msra.mxu0 %v4113
    %6155 = vmatprep.subr.mxu0 %v4122
    %6156 = vmatpush1.msra.mxu0 %v4121
    %6157 = vmatprep.subr.mxu0 %v4130
    %6158 = vmatpush1.msra.mxu0 %v4129
    %6159 = vmatprep.subr.mxu0 %v4138
    %6160 = vmatpush1.msra.mxu0 %v4137
    %6161 = vmatprep.subr.mxu0 %v4146
    %6162 = vmatpush1.msra.mxu0 %v4145
    %6163 = vmatprep.subr.mxu0 %v4154
    %6164 = vmatpush1.msra.mxu0 %v4153
    %6165 = vmatprep.subr.mxu0 %v4162
    %6166 = vmatpush1.msra.mxu0 %v4161
    %6167 = vmatprep.subr.mxu0 %v4170
    %6168 = vmatpush1.msra.mxu0 %v4169
    %6169 = vmatprep.mubr.f32.mxu0 %v5918
    %6170 = vmatmul.mubr.f32.gmra.mrb[0].mxu0 %v5917
    %v6171 = vpop.f32.mrb[0].mxu0
    %v6172 = vadd.f32 %v5942, %v6171
    %v6173 = vpop.f32.mrb[0].mxu0
    %v6174 = vadd.f32 %v5946, %v6173
    %6175 = vdwg.mxu0
    %6176 = vmatprep.subr.mxu0 %v3924
    %6177 = vmatpush1.msra.mxu0 %v3923
    %6178 = vmatprep.subr.mxu0 %v3932
    %6179 = vmatpush1.msra.mxu0 %v3931
    %6180 = vmatprep.subr.mxu0 %v3940
    %6181 = vmatpush1.msra.mxu0 %v3939
    %6182 = vmatprep.subr.mxu0 %v3948
    %6183 = vmatpush1.msra.mxu0 %v3947
    %6184 = vmatprep.subr.mxu0 %v3956
    %6185 = vmatpush1.msra.mxu0 %v3955
    %6186 = vmatprep.subr.mxu0 %v3964
    %6187 = vmatpush1.msra.mxu0 %v3963
    %6188 = vmatprep.subr.mxu0 %v3972
    %6189 = vmatpush1.msra.mxu0 %v3971
    %6190 = vmatprep.subr.mxu0 %v3980
    %6191 = vmatpush1.msra.mxu0 %v3979
    %6192 = vmatprep.subr.mxu0 %v3988
    %6193 = vmatpush1.msra.mxu0 %v3987
    %6194 = vmatprep.subr.mxu0 %v3996
    %6195 = vmatpush1.msra.mxu0 %v3995
    %6196 = vmatprep.subr.mxu0 %v4004
    %6197 = vmatpush1.msra.mxu0 %v4003
    %6198 = vmatprep.subr.mxu0 %v4012
    %6199 = vmatpush1.msra.mxu0 %v4011
    %6200 = vmatprep.subr.mxu0 %v4020
    %6201 = vmatpush1.msra.mxu0 %v4019
    %6202 = vmatprep.subr.mxu0 %v4028
    %6203 = vmatpush1.msra.mxu0 %v4027
    %6204 = vmatprep.subr.mxu0 %v4036
    %6205 = vmatpush1.msra.mxu0 %v4035
    %6206 = vmatprep.subr.mxu0 %v4044
    %6207 = vmatpush1.msra.mxu0 %v4043
    %6208 = vmatprep.subr.mxu0 %v4052
    %6209 = vmatpush1.msra.mxu0 %v4051
    %6210 = vmatprep.subr.mxu0 %v4060
    %6211 = vmatpush1.msra.mxu0 %v4059
    %6212 = vmatprep.subr.mxu0 %v4068
    %6213 = vmatpush1.msra.mxu0 %v4067
    %6214 = vmatprep.subr.mxu0 %v4076
    %6215 = vmatpush1.msra.mxu0 %v4075
    %6216 = vmatprep.subr.mxu0 %v4084
    %6217 = vmatpush1.msra.mxu0 %v4083
    %6218 = vmatprep.subr.mxu0 %v4092
    %6219 = vmatpush1.msra.mxu0 %v4091
    %6220 = vmatprep.subr.mxu0 %v4100
    %6221 = vmatpush1.msra.mxu0 %v4099
    %6222 = vmatprep.subr.mxu0 %v4108
    %6223 = vmatpush1.msra.mxu0 %v4107
    %6224 = vmatprep.subr.mxu0 %v4116
    %6225 = vmatpush1.msra.mxu0 %v4115
    %6226 = vmatprep.subr.mxu0 %v4124
    %6227 = vmatpush1.msra.mxu0 %v4123
    %6228 = vmatprep.subr.mxu0 %v4132
    %6229 = vmatpush1.msra.mxu0 %v4131
    %6230 = vmatprep.subr.mxu0 %v4140
    %6231 = vmatpush1.msra.mxu0 %v4139
    %6232 = vmatprep.subr.mxu0 %v4148
    %6233 = vmatpush1.msra.mxu0 %v4147
    %6234 = vmatprep.subr.mxu0 %v4156
    %6235 = vmatpush1.msra.mxu0 %v4155
    %6236 = vmatprep.subr.mxu0 %v4164
    %6237 = vmatpush1.msra.mxu0 %v4163
    %6238 = vmatprep.subr.mxu0 %v4172
    %6239 = vmatpush1.msra.mxu0 %v4171
    %6240 = vmatprep.mubr.f32.mxu0 %v5918
    %6241 = vmatmul.mubr.f32.gmra.mrb[0].mxu0 %v5917
    %v6242 = vpop.f32.mrb[0].mxu0
    %v6243 = vadd.f32 %v5950, %v6242
    %v6244 = vpop.f32.mrb[0].mxu0
    %v6245 = vadd.f32 %v5954, %v6244
    %6246 = vdwg.mxu0
    %v6247 = vxor.u32 %v6030, 2147483648
    %v6248 = vxor.u32 %v6032, 2147483648
    %v6249 = vmul.f32 %v6247, 1.442695
    %v6250 = vpow.pop %v6249
    %v6251 = vmul.f32 %v6248, 1.442695
    %v6252 = vpow.pop %v6251
    %v6253 = vadd.f32 %v6250, 1.0
    %v6254 = vadd.f32 %v6252, 1.0
    %v6255 = vrcp.pop %v6253
    %v6256 = vmul.f32 1.0, %v6255
    %v6257 = vrcp.pop %v6254
    %v6258 = vmul.f32 1.0, %v6257
    %v6259 = vxor.u32 %v6101, 2147483648
    %v6260 = vxor.u32 %v6103, 2147483648
    %v6261 = vmul.f32 %v6259, 1.442695
    %v6262 = vpow.pop %v6261
    %v6263 = vmul.f32 %v6260, 1.442695
    %v6264 = vpow.pop %v6263
    %v6265 = vadd.f32 %v6262, 1.0
    %v6266 = vadd.f32 %v6264, 1.0
    %v6267 = vrcp.pop %v6265
    %v6268 = vmul.f32 1.0, %v6267
    %v6269 = vrcp.pop %v6266
    %v6270 = vmul.f32 1.0, %v6269
    %v6271 = vtanh.pop %v6172
    %v6272 = vtanh.pop %v6174
    %v6273 = vxor.u32 %v6243, 2147483648
    %v6274 = vxor.u32 %v6245, 2147483648
    %v6275 = vmul.f32 %v6273, 1.442695
    %v6276 = vpow.pop %v6275
    %v6277 = vmul.f32 %v6274, 1.442695
    %v6278 = vpow.pop %v6277
    %v6279 = vadd.f32 %v6276, 1.0
    %v6280 = vadd.f32 %v6278, 1.0
    %v6281 = vrcp.pop %v6279
    %v6282 = vmul.f32 1.0, %v6281
    %v6283 = vrcp.pop %v6280
    %v6284 = vmul.f32 1.0, %v6283
    %v6285 = vmul.f32 %v6268, %v5913
    %v6286 = vmul.f32 %v6270, %v5914
    %v6287 = vmul.f32 %v6256, %v6271
    %v6288 = vmul.f32 %v6258, %v6272
    %v6289 = vadd.f32 %v6285, %v6287
    %v6290 = vadd.f32 %v6286, %v6288
    %v6291 = vtanh.pop %v6289
    %v6292 = vtanh.pop %v6290
    %v6293 = vmul.f32 %v6282, %v6291
    %v6294 = vmul.f32 %v6284, %v6292
    %v6295 = vld [vmem:[%s2305] ss:$8 sm:$0xf]
    %v6296 = vld [vmem:[%s2305] ss:$8 sm:$0xf0]
    %v6297 = vor.u32 %v6295, %v6296
    %v6299 = vlaneseq
    %v6300 = vshrl.u32 %v6299, 7
    %v6301 = vsub.s32 0, %v6300
    %v6302 = vrot.slane %v6297, %v6301
    %v6303 = vlaneseq
    %v6304 = vshrl.u32 %v6303, 7
    %v6305 = vsub.s32 1, %v6304
    %v6306 = vrot.slane %v6297, %v6305
    %v6307 = vlaneseq
    %v6308 = vshrl.u32 %v6307, 7
    %v6309 = vsub.s32 2, %v6308
    %v6310 = vrot.slane %v6297, %v6309
    %v6311 = vlaneseq
    %v6312 = vshrl.u32 %v6311, 7
    %v6313 = vsub.s32 3, %v6312
    %v6314 = vrot.slane %v6297, %v6313
    %v6315 = vlaneseq
    %v6316 = vshrl.u32 %v6315, 7
    %v6317 = vsub.s32 4, %v6316
    %v6318 = vrot.slane %v6297, %v6317
    %v6319 = vlaneseq
    %v6320 = vshrl.u32 %v6319, 7
    %v6321 = vsub.s32 5, %v6320
    %v6322 = vrot.slane %v6297, %v6321
    %v6323 = vlaneseq
    %v6324 = vshrl.u32 %v6323, 7
    %v6325 = vsub.s32 6, %v6324
    %v6326 = vrot.slane %v6297, %v6325
    %v6327 = vlaneseq
    %v6328 = vshrl.u32 %v6327, 7
    %v6329 = vsub.s32 7, %v6328
    %v6330 = vrot.slane %v6297, %v6329
    %6339 = vmatprep.subr.mxu0 %v3918
    %6340 = vmatpush1.msra.mxu0 %v3917
    %6341 = vmatprep.subr.mxu0 %v3926
    %6342 = vmatpush1.msra.mxu0 %v3925
    %6343 = vmatprep.subr.mxu0 %v3934
    %6344 = vmatpush1.msra.mxu0 %v3933
    %6345 = vmatprep.subr.mxu0 %v3942
    %6346 = vmatpush1.msra.mxu0 %v3941
    %6347 = vmatprep.subr.mxu0 %v3950
    %6348 = vmatpush1.msra.mxu0 %v3949
    %6349 = vmatprep.subr.mxu0 %v3958
    %6350 = vmatpush1.msra.mxu0 %v3957
    %6351 = vmatprep.subr.mxu0 %v3966
    %6352 = vmatpush1.msra.mxu0 %v3965
    %6353 = vmatprep.subr.mxu0 %v3974
    %6354 = vmatpush1.msra.mxu0 %v3973
    %6355 = vmatprep.subr.mxu0 %v3982
    %6356 = vmatpush1.msra.mxu0 %v3981
    %6357 = vmatprep.subr.mxu0 %v3990
    %6358 = vmatpush1.msra.mxu0 %v3989
    %6359 = vmatprep.subr.mxu0 %v3998
    %6360 = vmatpush1.msra.mxu0 %v3997
    %6361 = vmatprep.subr.mxu0 %v4006
    %6362 = vmatpush1.msra.mxu0 %v4005
    %6363 = vmatprep.subr.mxu0 %v4014
    %6364 = vmatpush1.msra.mxu0 %v4013
    %6365 = vmatprep.subr.mxu0 %v4022
    %6366 = vmatpush1.msra.mxu0 %v4021
    %6367 = vmatprep.subr.mxu0 %v4030
    %6368 = vmatpush1.msra.mxu0 %v4029
    %6369 = vmatprep.subr.mxu0 %v4038
    %6370 = vmatpush1.msra.mxu0 %v4037
    %6371 = vmatprep.subr.mxu0 %v4046
    %6372 = vmatpush1.msra.mxu0 %v4045
    %6373 = vmatprep.subr.mxu0 %v4054
    %6374 = vmatpush1.msra.mxu0 %v4053
    %6375 = vmatprep.subr.mxu0 %v4062
    %6376 = vmatpush1.msra.mxu0 %v4061
    %6377 = vmatprep.subr.mxu0 %v4070
    %6378 = vmatpush1.msra.mxu0 %v4069
    %6379 = vmatprep.subr.mxu0 %v4078
    %6380 = vmatpush1.msra.mxu0 %v4077
    %6381 = vmatprep.subr.mxu0 %v4086
    %6382 = vmatpush1.msra.mxu0 %v4085
    %6383 = vmatprep.subr.mxu0 %v4094
    %6384 = vmatpush1.msra.mxu0 %v4093
    %6385 = vmatprep.subr.mxu0 %v4102
    %6386 = vmatpush1.msra.mxu0 %v4101
    %6387 = vmatprep.subr.mxu0 %v4110
    %6388 = vmatpush1.msra.mxu0 %v4109
    %6389 = vmatprep.subr.mxu0 %v4118
    %6390 = vmatpush1.msra.mxu0 %v4117
    %6391 = vmatprep.subr.mxu0 %v4126
    %6392 = vmatpush1.msra.mxu0 %v4125
    %6393 = vmatprep.subr.mxu0 %v4134
    %6394 = vmatpush1.msra.mxu0 %v4133
    %6395 = vmatprep.subr.mxu0 %v4142
    %6396 = vmatpush1.msra.mxu0 %v4141
    %6397 = vmatprep.subr.mxu0 %v4150
    %6398 = vmatpush1.msra.mxu0 %v4149
    %6399 = vmatprep.subr.mxu0 %v4158
    %6400 = vmatpush1.msra.mxu0 %v4157
    %6401 = vmatprep.subr.mxu0 %v4166
    %6402 = vmatpush1.msra.mxu0 %v4165
    %6403 = vmatprep.mubr.f32.mxu0 %v6294
    %6404 = vmatmul.mubr.f32.gmra.mrb[0].mxu0 %v6293
    %v6405 = vpop.f32.mrb[0].mxu0
    %v6406 = vadd.f32 %v6302, %v6405
    %v6407 = vpop.f32.mrb[0].mxu0
    %v6408 = vadd.f32 %v6306, %v6407
    %6409 = vdwg.mxu0
    %6410 = vmatprep.subr.mxu0 %v3920
    %6411 = vmatpush1.msra.mxu0 %v3919
    %6412 = vmatprep.subr.mxu0 %v3928
    %6413 = vmatpush1.msra.mxu0 %v3927
    %6414 = vmatprep.subr.mxu0 %v3936
    %6415 = vmatpush1.msra.mxu0 %v3935
    %6416 = vmatprep.subr.mxu0 %v3944
    %6417 = vmatpush1.msra.mxu0 %v3943
    %6418 = vmatprep.subr.mxu0 %v3952
    %6419 = vmatpush1.msra.mxu0 %v3951
    %6420 = vmatprep.subr.mxu0 %v3960
    %6421 = vmatpush1.msra.mxu0 %v3959
    %6422 = vmatprep.subr.mxu0 %v3968
    %6423 = vmatpush1.msra.mxu0 %v3967
    %6424 = vmatprep.subr.mxu0 %v3976
    %6425 = vmatpush1.msra.mxu0 %v3975
    %6426 = vmatprep.subr.mxu0 %v3984
    %6427 = vmatpush1.msra.mxu0 %v3983
    %6428 = vmatprep.subr.mxu0 %v3992
    %6429 = vmatpush1.msra.mxu0 %v3991
    %6430 = vmatprep.subr.mxu0 %v4000
    %6431 = vmatpush1.msra.mxu0 %v3999
    %6432 = vmatprep.subr.mxu0 %v4008
    %6433 = vmatpush1.msra.mxu0 %v4007
    %6434 = vmatprep.subr.mxu0 %v4016
    %6435 = vmatpush1.msra.mxu0 %v4015
    %6436 = vmatprep.subr.mxu0 %v4024
    %6437 = vmatpush1.msra.mxu0 %v4023
    %6438 = vmatprep.subr.mxu0 %v4032
    %6439 = vmatpush1.msra.mxu0 %v4031
    %6440 = vmatprep.subr.mxu0 %v4040
    %6441 = vmatpush1.msra.mxu0 %v4039
    %6442 = vmatprep.subr.mxu0 %v4048
    %6443 = vmatpush1.msra.mxu0 %v4047
    %6444 = vmatprep.subr.mxu0 %v4056
    %6445 = vmatpush1.msra.mxu0 %v4055
    %6446 = vmatprep.subr.mxu0 %v4064
    %6447 = vmatpush1.msra.mxu0 %v4063
    %6448 = vmatprep.subr.mxu0 %v4072
    %6449 = vmatpush1.msra.mxu0 %v4071
    %6450 = vmatprep.subr.mxu0 %v4080
    %6451 = vmatpush1.msra.mxu0 %v4079
    %6452 = vmatprep.subr.mxu0 %v4088
    %6453 = vmatpush1.msra.mxu0 %v4087
    %6454 = vmatprep.subr.mxu0 %v4096
    %6455 = vmatpush1.msra.mxu0 %v4095
    %6456 = vmatprep.subr.mxu0 %v4104
    %6457 = vmatpush1.msra.mxu0 %v4103
    %6458 = vmatprep.subr.mxu0 %v4112
    %6459 = vmatpush1.msra.mxu0 %v4111
    %6460 = vmatprep.subr.mxu0 %v4120
    %6461 = vmatpush1.msra.mxu0 %v4119
    %6462 = vmatprep.subr.mxu0 %v4128
    %6463 = vmatpush1.msra.mxu0 %v4127
    %6464 = vmatprep.subr.mxu0 %v4136
    %6465 = vmatpush1.msra.mxu0 %v4135
    %6466 = vmatprep.subr.mxu0 %v4144
    %6467 = vmatpush1.msra.mxu0 %v4143
    %6468 = vmatprep.subr.mxu0 %v4152
    %6469 = vmatpush1.msra.mxu0 %v4151
    %6470 = vmatprep.subr.mxu0 %v4160
    %6471 = vmatpush1.msra.mxu0 %v4159
    %6472 = vmatprep.subr.mxu0 %v4168
    %6473 = vmatpush1.msra.mxu0 %v4167
    %6474 = vmatprep.mubr.f32.mxu0 %v6294
    %6475 = vmatmul.mubr.f32.gmra.mrb[0].mxu0 %v6293
    %v6476 = vpop.f32.mrb[0].mxu0
    %v6477 = vadd.f32 %v6310, %v6476
    %v6478 = vpop.f32.mrb[0].mxu0
    %v6479 = vadd.f32 %v6314, %v6478
    %6480 = vdwg.mxu0
    %6481 = vmatprep.subr.mxu0 %v3922
    %6482 = vmatpush1.msra.mxu0 %v3921
    %6483 = vmatprep.subr.mxu0 %v3930
    %6484 = vmatpush1.msra.mxu0 %v3929
    %6485 = vmatprep.subr.mxu0 %v3938
    %6486 = vmatpush1.msra.mxu0 %v3937
    %6487 = vmatprep.subr.mxu0 %v3946
    %6488 = vmatpush1.msra.mxu0 %v3945
    %6489 = vmatprep.subr.mxu0 %v3954
    %6490 = vmatpush1.msra.mxu0 %v3953
    %6491 = vmatprep.subr.mxu0 %v3962
    %6492 = vmatpush1.msra.mxu0 %v3961
    %6493 = vmatprep.subr.mxu0 %v3970
    %6494 = vmatpush1.msra.mxu0 %v3969
    %6495 = vmatprep.subr.mxu0 %v3978
    %6496 = vmatpush1.msra.mxu0 %v3977
    %6497 = vmatprep.subr.mxu0 %v3986
    %6498 = vmatpush1.msra.mxu0 %v3985
    %6499 = vmatprep.subr.mxu0 %v3994
    %6500 = vmatpush1.msra.mxu0 %v3993
    %6501 = vmatprep.subr.mxu0 %v4002
    %6502 = vmatpush1.msra.mxu0 %v4001
    %6503 = vmatprep.subr.mxu0 %v4010
    %6504 = vmatpush1.msra.mxu0 %v4009
    %6505 = vmatprep.subr.mxu0 %v4018
    %6506 = vmatpush1.msra.mxu0 %v4017
    %6507 = vmatprep.subr.mxu0 %v4026
    %6508 = vmatpush1.msra.mxu0 %v4025
    %6509 = vmatprep.subr.mxu0 %v4034
    %6510 = vmatpush1.msra.mxu0 %v4033
    %6511 = vmatprep.subr.mxu0 %v4042
    %6512 = vmatpush1.msra.mxu0 %v4041
    %6513 = vmatprep.subr.mxu0 %v4050
    %6514 = vmatpush1.msra.mxu0 %v4049
    %6515 = vmatprep.subr.mxu0 %v4058
    %6516 = vmatpush1.msra.mxu0 %v4057
    %6517 = vmatprep.subr.mxu0 %v4066
    %6518 = vmatpush1.msra.mxu0 %v4065
    %6519 = vmatprep.subr.mxu0 %v4074
    %6520 = vmatpush1.msra.mxu0 %v4073
    %6521 = vmatprep.subr.mxu0 %v4082
    %6522 = vmatpush1.msra.mxu0 %v4081
    %6523 = vmatprep.subr.mxu0 %v4090
    %6524 = vmatpush1.msra.mxu0 %v4089
    %6525 = vmatprep.subr.mxu0 %v4098
    %6526 = vmatpush1.msra.mxu0 %v4097
    %6527 = vmatprep.subr.mxu0 %v4106
    %6528 = vmatpush1.msra.mxu0 %v4105
    %6529 = vmatprep.subr.mxu0 %v4114
    %6530 = vmatpush1.msra.mxu0 %v4113
    %6531 = vmatprep.subr.mxu0 %v4122
    %6532 = vmatpush1.msra.mxu0 %v4121
    %6533 = vmatprep.subr.mxu0 %v4130
    %6534 = vmatpush1.msra.mxu0 %v4129
    %6535 = vmatprep.subr.mxu0 %v4138
    %6536 = vmatpush1.msra.mxu0 %v4137
    %6537 = vmatprep.subr.mxu0 %v4146
    %6538 = vmatpush1.msra.mxu0 %v4145
    %6539 = vmatprep.subr.mxu0 %v4154
    %6540 = vmatpush1.msra.mxu0 %v4153
    %6541 = vmatprep.subr.mxu0 %v4162
    %6542 = vmatpush1.msra.mxu0 %v4161
    %6543 = vmatprep.subr.mxu0 %v4170
    %6544 = vmatpush1.msra.mxu0 %v4169
    %6545 = vmatprep.mubr.f32.mxu0 %v6294
    %6546 = vmatmul.mubr.f32.gmra.mrb[0].mxu0 %v6293
    %v6547 = vpop.f32.mrb[0].mxu0
    %v6548 = vadd.f32 %v6318, %v6547
    %v6549 = vpop.f32.mrb[0].mxu0
    %v6550 = vadd.f32 %v6322, %v6549
    %6551 = vdwg.mxu0
    %6552 = vmatprep.subr.mxu0 %v3924
    %6553 = vmatpush1.msra.mxu0 %v3923
    %6554 = vmatprep.subr.mxu0 %v3932
    %6555 = vmatpush1.msra.mxu0 %v3931
    %6556 = vmatprep.subr.mxu0 %v3940
    %6557 = vmatpush1.msra.mxu0 %v3939
    %6558 = vmatprep.subr.mxu0 %v3948
    %6559 = vmatpush1.msra.mxu0 %v3947
    %6560 = vmatprep.subr.mxu0 %v3956
    %6561 = vmatpush1.msra.mxu0 %v3955
    %6562 = vmatprep.subr.mxu0 %v3964
    %6563 = vmatpush1.msra.mxu0 %v3963
    %6564 = vmatprep.subr.mxu0 %v3972
    %6565 = vmatpush1.msra.mxu0 %v3971
    %6566 = vmatprep.subr.mxu0 %v3980
    %6567 = vmatpush1.msra.mxu0 %v3979
    %6568 = vmatprep.subr.mxu0 %v3988
    %6569 = vmatpush1.msra.mxu0 %v3987
    %6570 = vmatprep.subr.mxu0 %v3996
    %6571 = vmatpush1.msra.mxu0 %v3995
    %6572 = vmatprep.subr.mxu0 %v4004
    %6573 = vmatpush1.msra.mxu0 %v4003
    %6574 = vmatprep.subr.mxu0 %v4012
    %6575 = vmatpush1.msra.mxu0 %v4011
    %6576 = vmatprep.subr.mxu0 %v4020
    %6577 = vmatpush1.msra.mxu0 %v4019
    %6578 = vmatprep.subr.mxu0 %v4028
    %6579 = vmatpush1.msra.mxu0 %v4027
    %6580 = vmatprep.subr.mxu0 %v4036
    %6581 = vmatpush1.msra.mxu0 %v4035
    %6582 = vmatprep.subr.mxu0 %v4044
    %6583 = vmatpush1.msra.mxu0 %v4043
    %6584 = vmatprep.subr.mxu0 %v4052
    %6585 = vmatpush1.msra.mxu0 %v4051
    %6586 = vmatprep.subr.mxu0 %v4060
    %6587 = vmatpush1.msra.mxu0 %v4059
    %6588 = vmatprep.subr.mxu0 %v4068
    %6589 = vmatpush1.msra.mxu0 %v4067
    %6590 = vmatprep.subr.mxu0 %v4076
    %6591 = vmatpush1.msra.mxu0 %v4075
    %6592 = vmatprep.subr.mxu0 %v4084
    %6593 = vmatpush1.msra.mxu0 %v4083
    %6594 = vmatprep.subr.mxu0 %v4092
    %6595 = vmatpush1.msra.mxu0 %v4091
    %6596 = vmatprep.subr.mxu0 %v4100
    %6597 = vmatpush1.msra.mxu0 %v4099
    %6598 = vmatprep.subr.mxu0 %v4108
    %6599 = vmatpush1.msra.mxu0 %v4107
    %6600 = vmatprep.subr.mxu0 %v4116
    %6601 = vmatpush1.msra.mxu0 %v4115
    %6602 = vmatprep.subr.mxu0 %v4124
    %6603 = vmatpush1.msra.mxu0 %v4123
    %6604 = vmatprep.subr.mxu0 %v4132
    %6605 = vmatpush1.msra.mxu0 %v4131
    %6606 = vmatprep.subr.mxu0 %v4140
    %6607 = vmatpush1.msra.mxu0 %v4139
    %6608 = vmatprep.subr.mxu0 %v4148
    %6609 = vmatpush1.msra.mxu0 %v4147
    %6610 = vmatprep.subr.mxu0 %v4156
    %6611 = vmatpush1.msra.mxu0 %v4155
    %6612 = vmatprep.subr.mxu0 %v4164
    %6613 = vmatpush1.msra.mxu0 %v4163
    %6614 = vmatprep.subr.mxu0 %v4172
    %6615 = vmatpush1.msra.mxu0 %v4171
    %6616 = vmatprep.mubr.f32.mxu0 %v6294
    %6617 = vmatmul.mubr.f32.gmra.mrb[0].mxu0 %v6293
    %v6618 = vpop.f32.mrb[0].mxu0
    %v6619 = vadd.f32 %v6326, %v6618
    %v6620 = vpop.f32.mrb[0].mxu0
    %v6621 = vadd.f32 %v6330, %v6620
    %6622 = vdwg.mxu0
    %v6623 = vxor.u32 %v6406, 2147483648
    %v6624 = vxor.u32 %v6408, 2147483648
    %v6625 = vmul.f32 %v6623, 1.442695
    %v6626 = vpow.pop %v6625
    %v6627 = vmul.f32 %v6624, 1.442695
    %v6628 = vpow.pop %v6627
    %v6629 = vadd.f32 %v6626, 1.0
    %v6630 = vadd.f32 %v6628, 1.0
    %v6631 = vrcp.pop %v6629
    %v6632 = vmul.f32 1.0, %v6631
    %v6633 = vrcp.pop %v6630
    %v6634 = vmul.f32 1.0, %v6633
    %v6635 = vxor.u32 %v6477, 2147483648
    %v6636 = vxor.u32 %v6479, 2147483648
    %v6637 = vmul.f32 %v6635, 1.442695
    %v6638 = vpow.pop %v6637
    %v6639 = vmul.f32 %v6636, 1.442695
    %v6640 = vpow.pop %v6639
    %v6641 = vadd.f32 %v6638, 1.0
    %v6642 = vadd.f32 %v6640, 1.0
    %v6643 = vrcp.pop %v6641
    %v6644 = vmul.f32 1.0, %v6643
    %v6645 = vrcp.pop %v6642
    %v6646 = vmul.f32 1.0, %v6645
    %v6647 = vtanh.pop %v6548
    %v6648 = vtanh.pop %v6550
    %v6649 = vxor.u32 %v6619, 2147483648
    %v6650 = vxor.u32 %v6621, 2147483648
    %v6651 = vmul.f32 %v6649, 1.442695
    %v6652 = vpow.pop %v6651
    %v6653 = vmul.f32 %v6650, 1.442695
    %v6654 = vpow.pop %v6653
    %v6655 = vadd.f32 %v6652, 1.0
    %v6656 = vadd.f32 %v6654, 1.0
    %v6657 = vrcp.pop %v6655
    %v6658 = vmul.f32 1.0, %v6657
    %v6659 = vrcp.pop %v6656
    %v6660 = vmul.f32 1.0, %v6659
    %v6661 = vmul.f32 %v6644, %v6289
    %v6662 = vmul.f32 %v6646, %v6290
    %v6663 = vmul.f32 %v6632, %v6647
    %v6664 = vmul.f32 %v6634, %v6648
    %v6665 = vadd.f32 %v6661, %v6663
    %v6666 = vadd.f32 %v6662, %v6664
    %v6667 = vtanh.pop %v6665
    %v6668 = vtanh.pop %v6666
    %v6669 = vmul.f32 %v6658, %v6667
    %v6670 = vmul.f32 %v6660, %v6668
    %v6671 = vld [vmem:[%s2703] ss:$8 sm:$0xf]
    %v6672 = vld [vmem:[%s2703] ss:$8 sm:$0xf0]
    %v6673 = vor.u32 %v6671, %v6672
    %v6675 = vlaneseq
    %v6676 = vshrl.u32 %v6675, 7
    %v6677 = vsub.s32 0, %v6676
    %v6678 = vrot.slane %v6673, %v6677
    %v6679 = vlaneseq
    %v6680 = vshrl.u32 %v6679, 7
    %v6681 = vsub.s32 1, %v6680
    %v6682 = vrot.slane %v6673, %v6681
    %v6683 = vlaneseq
    %v6684 = vshrl.u32 %v6683, 7
    %v6685 = vsub.s32 2, %v6684
    %v6686 = vrot.slane %v6673, %v6685
    %v6687 = vlaneseq
    %v6688 = vshrl.u32 %v6687, 7
    %v6689 = vsub.s32 3, %v6688
    %v6690 = vrot.slane %v6673, %v6689
    %v6691 = vlaneseq
    %v6692 = vshrl.u32 %v6691, 7
    %v6693 = vsub.s32 4, %v6692
    %v6694 = vrot.slane %v6673, %v6693
    %v6695 = vlaneseq
    %v6696 = vshrl.u32 %v6695, 7
    %v6697 = vsub.s32 5, %v6696
    %v6698 = vrot.slane %v6673, %v6697
    %v6699 = vlaneseq
    %v6700 = vshrl.u32 %v6699, 7
    %v6701 = vsub.s32 6, %v6700
    %v6702 = vrot.slane %v6673, %v6701
    %v6703 = vlaneseq
    %v6704 = vshrl.u32 %v6703, 7
    %v6705 = vsub.s32 7, %v6704
    %v6706 = vrot.slane %v6673, %v6705
    %6715 = vmatprep.subr.mxu0 %v3918
    %6716 = vmatpush1.msra.mxu0 %v3917
    %6717 = vmatprep.subr.mxu0 %v3926
    %6718 = vmatpush1.msra.mxu0 %v3925
    %6719 = vmatprep.subr.mxu0 %v3934
    %6720 = vmatpush1.msra.mxu0 %v3933
    %6721 = vmatprep.subr.mxu0 %v3942
    %6722 = vmatpush1.msra.mxu0 %v3941
    %6723 = vmatprep.subr.mxu0 %v3950
    %6724 = vmatpush1.msra.mxu0 %v3949
    %6725 = vmatprep.subr.mxu0 %v3958
    %6726 = vmatpush1.msra.mxu0 %v3957
    %6727 = vmatprep.subr.mxu0 %v3966
    %6728 = vmatpush1.msra.mxu0 %v3965
    %6729 = vmatprep.subr.mxu0 %v3974
    %6730 = vmatpush1.msra.mxu0 %v3973
    %6731 = vmatprep.subr.mxu0 %v3982
    %6732 = vmatpush1.msra.mxu0 %v3981
    %6733 = vmatprep.subr.mxu0 %v3990
    %6734 = vmatpush1.msra.mxu0 %v3989
    %6735 = vmatprep.subr.mxu0 %v3998
    %6736 = vmatpush1.msra.mxu0 %v3997
    %6737 = vmatprep.subr.mxu0 %v4006
    %6738 = vmatpush1.msra.mxu0 %v4005
    %6739 = vmatprep.subr.mxu0 %v4014
    %6740 = vmatpush1.msra.mxu0 %v4013
    %6741 = vmatprep.subr.mxu0 %v4022
    %6742 = vmatpush1.msra.mxu0 %v4021
    %6743 = vmatprep.subr.mxu0 %v4030
    %6744 = vmatpush1.msra.mxu0 %v4029
    %6745 = vmatprep.subr.mxu0 %v4038
    %6746 = vmatpush1.msra.mxu0 %v4037
    %6747 = vmatprep.subr.mxu0 %v4046
    %6748 = vmatpush1.msra.mxu0 %v4045
    %6749 = vmatprep.subr.mxu0 %v4054
    %6750 = vmatpush1.msra.mxu0 %v4053
    %6751 = vmatprep.subr.mxu0 %v4062
    %6752 = vmatpush1.msra.mxu0 %v4061
    %6753 = vmatprep.subr.mxu0 %v4070
    %6754 = vmatpush1.msra.mxu0 %v4069
    %6755 = vmatprep.subr.mxu0 %v4078
    %6756 = vmatpush1.msra.mxu0 %v4077
    %6757 = vmatprep.subr.mxu0 %v4086
    %6758 = vmatpush1.msra.mxu0 %v4085
    %6759 = vmatprep.subr.mxu0 %v4094
    %6760 = vmatpush1.msra.mxu0 %v4093
    %6761 = vmatprep.subr.mxu0 %v4102
    %6762 = vmatpush1.msra.mxu0 %v4101
    %6763 = vmatprep.subr.mxu0 %v4110
    %6764 = vmatpush1.msra.mxu0 %v4109
    %6765 = vmatprep.subr.mxu0 %v4118
    %6766 = vmatpush1.msra.mxu0 %v4117
    %6767 = vmatprep.subr.mxu0 %v4126
    %6768 = vmatpush1.msra.mxu0 %v4125
    %6769 = vmatprep.subr.mxu0 %v4134
    %6770 = vmatpush1.msra.mxu0 %v4133
    %6771 = vmatprep.subr.mxu0 %v4142
    %6772 = vmatpush1.msra.mxu0 %v4141
    %6773 = vmatprep.subr.mxu0 %v4150
    %6774 = vmatpush1.msra.mxu0 %v4149
    %6775 = vmatprep.subr.mxu0 %v4158
    %6776 = vmatpush1.msra.mxu0 %v4157
    %6777 = vmatprep.subr.mxu0 %v4166
    %6778 = vmatpush1.msra.mxu0 %v4165
    %6779 = vmatprep.mubr.f32.mxu0 %v6670
    %6780 = vmatmul.mubr.f32.gmra.mrb[0].mxu0 %v6669
    %v6781 = vpop.f32.mrb[0].mxu0
    %v6782 = vadd.f32 %v6678, %v6781
    %v6783 = vpop.f32.mrb[0].mxu0
    %v6784 = vadd.f32 %v6682, %v6783
    %6785 = vdwg.mxu0
    %6786 = vmatprep.subr.mxu0 %v3920
    %6787 = vmatpush1.msra.mxu0 %v3919
    %6788 = vmatprep.subr.mxu0 %v3928
    %6789 = vmatpush1.msra.mxu0 %v3927
    %6790 = vmatprep.subr.mxu0 %v3936
    %6791 = vmatpush1.msra.mxu0 %v3935
    %6792 = vmatprep.subr.mxu0 %v3944
    %6793 = vmatpush1.msra.mxu0 %v3943
    %6794 = vmatprep.subr.mxu0 %v3952
    %6795 = vmatpush1.msra.mxu0 %v3951
    %6796 = vmatprep.subr.mxu0 %v3960
    %6797 = vmatpush1.msra.mxu0 %v3959
    %6798 = vmatprep.subr.mxu0 %v3968
    %6799 = vmatpush1.msra.mxu0 %v3967
    %6800 = vmatprep.subr.mxu0 %v3976
    %6801 = vmatpush1.msra.mxu0 %v3975
    %6802 = vmatprep.subr.mxu0 %v3984
    %6803 = vmatpush1.msra.mxu0 %v3983
    %6804 = vmatprep.subr.mxu0 %v3992
    %6805 = vmatpush1.msra.mxu0 %v3991
    %6806 = vmatprep.subr.mxu0 %v4000
    %6807 = vmatpush1.msra.mxu0 %v3999
    %6808 = vmatprep.subr.mxu0 %v4008
    %6809 = vmatpush1.msra.mxu0 %v4007
    %6810 = vmatprep.subr.mxu0 %v4016
    %6811 = vmatpush1.msra.mxu0 %v4015
    %6812 = vmatprep.subr.mxu0 %v4024
    %6813 = vmatpush1.msra.mxu0 %v4023
    %6814 = vmatprep.subr.mxu0 %v4032
    %6815 = vmatpush1.msra.mxu0 %v4031
    %6816 = vmatprep.subr.mxu0 %v4040
    %6817 = vmatpush1.msra.mxu0 %v4039
    %6818 = vmatprep.subr.mxu0 %v4048
    %6819 = vmatpush1.msra.mxu0 %v4047
    %6820 = vmatprep.subr.mxu0 %v4056
    %6821 = vmatpush1.msra.mxu0 %v4055
    %6822 = vmatprep.subr.mxu0 %v4064
    %6823 = vmatpush1.msra.mxu0 %v4063
    %6824 = vmatprep.subr.mxu0 %v4072
    %6825 = vmatpush1.msra.mxu0 %v4071
    %6826 = vmatprep.subr.mxu0 %v4080
    %6827 = vmatpush1.msra.mxu0 %v4079
    %6828 = vmatprep.subr.mxu0 %v4088
    %6829 = vmatpush1.msra.mxu0 %v4087
    %6830 = vmatprep.subr.mxu0 %v4096
    %6831 = vmatpush1.msra.mxu0 %v4095
    %6832 = vmatprep.subr.mxu0 %v4104
    %6833 = vmatpush1.msra.mxu0 %v4103
    %6834 = vmatprep.subr.mxu0 %v4112
    %6835 = vmatpush1.msra.mxu0 %v4111
    %6836 = vmatprep.subr.mxu0 %v4120
    %6837 = vmatpush1.msra.mxu0 %v4119
    %6838 = vmatprep.subr.mxu0 %v4128
    %6839 = vmatpush1.msra.mxu0 %v4127
    %6840 = vmatprep.subr.mxu0 %v4136
    %6841 = vmatpush1.msra.mxu0 %v4135
    %6842 = vmatprep.subr.mxu0 %v4144
    %6843 = vmatpush1.msra.mxu0 %v4143
    %6844 = vmatprep.subr.mxu0 %v4152
    %6845 = vmatpush1.msra.mxu0 %v4151
    %6846 = vmatprep.subr.mxu0 %v4160
    %6847 = vmatpush1.msra.mxu0 %v4159
    %6848 = vmatprep.subr.mxu0 %v4168
    %6849 = vmatpush1.msra.mxu0 %v4167
    %6850 = vmatprep.mubr.f32.mxu0 %v6670
    %6851 = vmatmul.mubr.f32.gmra.mrb[0].mxu0 %v6669
    %v6852 = vpop.f32.mrb[0].mxu0
    %v6853 = vadd.f32 %v6686, %v6852
    %v6854 = vpop.f32.mrb[0].mxu0
    %v6855 = vadd.f32 %v6690, %v6854
    %6856 = vdwg.mxu0
    %6857 = vmatprep.subr.mxu0 %v3922
    %6858 = vmatpush1.msra.mxu0 %v3921
    %6859 = vmatprep.subr.mxu0 %v3930
    %6860 = vmatpush1.msra.mxu0 %v3929
    %6861 = vmatprep.subr.mxu0 %v3938
    %6862 = vmatpush1.msra.mxu0 %v3937
    %6863 = vmatprep.subr.mxu0 %v3946
    %6864 = vmatpush1.msra.mxu0 %v3945
    %6865 = vmatprep.subr.mxu0 %v3954
    %6866 = vmatpush1.msra.mxu0 %v3953
    %6867 = vmatprep.subr.mxu0 %v3962
    %6868 = vmatpush1.msra.mxu0 %v3961
    %6869 = vmatprep.subr.mxu0 %v3970
    %6870 = vmatpush1.msra.mxu0 %v3969
    %6871 = vmatprep.subr.mxu0 %v3978
    %6872 = vmatpush1.msra.mxu0 %v3977
    %6873 = vmatprep.subr.mxu0 %v3986
    %6874 = vmatpush1.msra.mxu0 %v3985
    %6875 = vmatprep.subr.mxu0 %v3994
    %6876 = vmatpush1.msra.mxu0 %v3993
    %6877 = vmatprep.subr.mxu0 %v4002
    %6878 = vmatpush1.msra.mxu0 %v4001
    %6879 = vmatprep.subr.mxu0 %v4010
    %6880 = vmatpush1.msra.mxu0 %v4009
    %6881 = vmatprep.subr.mxu0 %v4018
    %6882 = vmatpush1.msra.mxu0 %v4017
    %6883 = vmatprep.subr.mxu0 %v4026
    %6884 = vmatpush1.msra.mxu0 %v4025
    %6885 = vmatprep.subr.mxu0 %v4034
    %6886 = vmatpush1.msra.mxu0 %v4033
    %6887 = vmatprep.subr.mxu0 %v4042
    %6888 = vmatpush1.msra.mxu0 %v4041
    %6889 = vmatprep.subr.mxu0 %v4050
    %6890 = vmatpush1.msra.mxu0 %v4049
    %6891 = vmatprep.subr.mxu0 %v4058
    %6892 = vmatpush1.msra.mxu0 %v4057
    %6893 = vmatprep.subr.mxu0 %v4066
    %6894 = vmatpush1.msra.mxu0 %v4065
    %6895 = vmatprep.subr.mxu0 %v4074
    %6896 = vmatpush1.msra.mxu0 %v4073
    %6897 = vmatprep.subr.mxu0 %v4082
    %6898 = vmatpush1.msra.mxu0 %v4081
    %6899 = vmatprep.subr.mxu0 %v4090
    %6900 = vmatpush1.msra.mxu0 %v4089
    %6901 = vmatprep.subr.mxu0 %v4098
    %6902 = vmatpush1.msra.mxu0 %v4097
    %6903 = vmatprep.subr.mxu0 %v4106
    %6904 = vmatpush1.msra.mxu0 %v4105
    %6905 = vmatprep.subr.mxu0 %v4114
    %6906 = vmatpush1.msra.mxu0 %v4113
    %6907 = vmatprep.subr.mxu0 %v4122
    %6908 = vmatpush1.msra.mxu0 %v4121
    %6909 = vmatprep.subr.mxu0 %v4130
    %6910 = vmatpush1.msra.mxu0 %v4129
    %6911 = vmatprep.subr.mxu0 %v4138
    %6912 = vmatpush1.msra.mxu0 %v4137
    %6913 = vmatprep.subr.mxu0 %v4146
    %6914 = vmatpush1.msra.mxu0 %v4145
    %6915 = vmatprep.subr.mxu0 %v4154
    %6916 = vmatpush1.msra.mxu0 %v4153
    %6917 = vmatprep.subr.mxu0 %v4162
    %6918 = vmatpush1.msra.mxu0 %v4161
    %6919 = vmatprep.subr.mxu0 %v4170
    %6920 = vmatpush1.msra.mxu0 %v4169
    %6921 = vmatprep.mubr.f32.mxu0 %v6670
    %6922 = vmatmul.mubr.f32.gmra.mrb[0].mxu0 %v6669
    %v6923 = vpop.f32.mrb[0].mxu0
    %v6924 = vadd.f32 %v6694, %v6923
    %v6925 = vpop.f32.mrb[0].mxu0
    %v6926 = vadd.f32 %v6698, %v6925
    %6927 = vdwg.mxu0
    %6928 = vmatprep.subr.mxu0 %v3924
    %6929 = vmatpush1.msra.mxu0 %v3923
    %6930 = vmatprep.subr.mxu0 %v3932
    %6931 = vmatpush1.msra.mxu0 %v3931
    %6932 = vmatprep.subr.mxu0 %v3940
    %6933 = vmatpush1.msra.mxu0 %v3939
    %6934 = vmatprep.subr.mxu0 %v3948
    %6935 = vmatpush1.msra.mxu0 %v3947
    %6936 = vmatprep.subr.mxu0 %v3956
    %6937 = vmatpush1.msra.mxu0 %v3955
    %6938 = vmatprep.subr.mxu0 %v3964
    %6939 = vmatpush1.msra.mxu0 %v3963
    %6940 = vmatprep.subr.mxu0 %v3972
    %6941 = vmatpush1.msra.mxu0 %v3971
    %6942 = vmatprep.subr.mxu0 %v3980
    %6943 = vmatpush1.msra.mxu0 %v3979
    %6944 = vmatprep.subr.mxu0 %v3988
    %6945 = vmatpush1.msra.mxu0 %v3987
    %6946 = vmatprep.subr.mxu0 %v3996
    %6947 = vmatpush1.msra.mxu0 %v3995
    %6948 = vmatprep.subr.mxu0 %v4004
    %6949 = vmatpush1.msra.mxu0 %v4003
    %6950 = vmatprep.subr.mxu0 %v4012
    %6951 = vmatpush1.msra.mxu0 %v4011
    %6952 = vmatprep.subr.mxu0 %v4020
    %6953 = vmatpush1.msra.mxu0 %v4019
    %6954 = vmatprep.subr.mxu0 %v4028
    %6955 = vmatpush1.msra.mxu0 %v4027
    %6956 = vmatprep.subr.mxu0 %v4036
    %6957 = vmatpush1.msra.mxu0 %v4035
    %6958 = vmatprep.subr.mxu0 %v4044
    %6959 = vmatpush1.msra.mxu0 %v4043
    %6960 = vmatprep.subr.mxu0 %v4052
    %6961 = vmatpush1.msra.mxu0 %v4051
    %6962 = vmatprep.subr.mxu0 %v4060
    %6963 = vmatpush1.msra.mxu0 %v4059
    %6964 = vmatprep.subr.mxu0 %v4068
    %6965 = vmatpush1.msra.mxu0 %v4067
    %6966 = vmatprep.subr.mxu0 %v4076
    %6967 = vmatpush1.msra.mxu0 %v4075
    %6968 = vmatprep.subr.mxu0 %v4084
    %6969 = vmatpush1.msra.mxu0 %v4083
    %6970 = vmatprep.subr.mxu0 %v4092
    %6971 = vmatpush1.msra.mxu0 %v4091
    %6972 = vmatprep.subr.mxu0 %v4100
    %6973 = vmatpush1.msra.mxu0 %v4099
    %6974 = vmatprep.subr.mxu0 %v4108
    %6975 = vmatpush1.msra.mxu0 %v4107
    %6976 = vmatprep.subr.mxu0 %v4116
    %6977 = vmatpush1.msra.mxu0 %v4115
    %6978 = vmatprep.subr.mxu0 %v4124
    %6979 = vmatpush1.msra.mxu0 %v4123
    %6980 = vmatprep.subr.mxu0 %v4132
    %6981 = vmatpush1.msra.mxu0 %v4131
    %6982 = vmatprep.subr.mxu0 %v4140
    %6983 = vmatpush1.msra.mxu0 %v4139
    %6984 = vmatprep.subr.mxu0 %v4148
    %6985 = vmatpush1.msra.mxu0 %v4147
    %6986 = vmatprep.subr.mxu0 %v4156
    %6987 = vmatpush1.msra.mxu0 %v4155
    %6988 = vmatprep.subr.mxu0 %v4164
    %6989 = vmatpush1.msra.mxu0 %v4163
    %6990 = vmatprep.subr.mxu0 %v4172
    %6991 = vmatpush1.msra.mxu0 %v4171
    %6992 = vmatprep.mubr.f32.mxu0 %v6670
    %6993 = vmatmul.mubr.f32.gmra.mrb[0].mxu0 %v6669
    %v6994 = vpop.f32.mrb[0].mxu0
    %v6995 = vadd.f32 %v6702, %v6994
    %v6996 = vpop.f32.mrb[0].mxu0
    %v6997 = vadd.f32 %v6706, %v6996
    %6998 = vdwg.mxu0
    %v6999 = vxor.u32 %v6782, 2147483648
    %v7000 = vxor.u32 %v6784, 2147483648
    %v7001 = vmul.f32 %v6999, 1.442695
    %v7002 = vpow.pop %v7001
    %v7003 = vmul.f32 %v7000, 1.442695
    %v7004 = vpow.pop %v7003
    %v7005 = vadd.f32 %v7002, 1.0
    %v7006 = vadd.f32 %v7004, 1.0
    %v7007 = vrcp.pop %v7005
    %v7008 = vmul.f32 1.0, %v7007
    %v7009 = vrcp.pop %v7006
    %v7010 = vmul.f32 1.0, %v7009
    %v7011 = vxor.u32 %v6853, 2147483648
    %v7012 = vxor.u32 %v6855, 2147483648
    %v7013 = vmul.f32 %v7011, 1.442695
    %v7014 = vpow.pop %v7013
    %v7015 = vmul.f32 %v7012, 1.442695
    %v7016 = vpow.pop %v7015
    %v7017 = vadd.f32 %v7014, 1.0
    %v7018 = vadd.f32 %v7016, 1.0
    %v7019 = vrcp.pop %v7017
    %v7020 = vmul.f32 1.0, %v7019
    %v7021 = vrcp.pop %v7018
    %v7022 = vmul.f32 1.0, %v7021
    %v7023 = vtanh.pop %v6924
    %v7024 = vtanh.pop %v6926
    %v7025 = vxor.u32 %v6995, 2147483648
    %v7026 = vxor.u32 %v6997, 2147483648
    %v7027 = vmul.f32 %v7025, 1.442695
    %v7028 = vpow.pop %v7027
    %v7029 = vmul.f32 %v7026, 1.442695
    %v7030 = vpow.pop %v7029
    %v7031 = vadd.f32 %v7028, 1.0
    %v7032 = vadd.f32 %v7030, 1.0
    %v7033 = vrcp.pop %v7031
    %v7034 = vmul.f32 1.0, %v7033
    %v7035 = vrcp.pop %v7032
    %v7036 = vmul.f32 1.0, %v7035
    %v7037 = vmul.f32 %v7020, %v6665
    %v7038 = vmul.f32 %v7022, %v6666
    %v7039 = vmul.f32 %v7008, %v7023
    %v7040 = vmul.f32 %v7010, %v7024
    %v7041 = vadd.f32 %v7037, %v7039
    %v7042 = vadd.f32 %v7038, %v7040
    %v7043 = vtanh.pop %v7041
    %v7044 = vtanh.pop %v7042
    %v7045 = vmul.f32 %v7034, %v7043
    %v7046 = vmul.f32 %v7036, %v7044
    %v7047 = vld [vmem:[%s3101] ss:$8 sm:$0xf]
    %v7048 = vld [vmem:[%s3101] ss:$8 sm:$0xf0]
    %v7049 = vor.u32 %v7047, %v7048
    %v7051 = vlaneseq
    %v7052 = vshrl.u32 %v7051, 7
    %v7053 = vsub.s32 0, %v7052
    %v7054 = vrot.slane %v7049, %v7053
    %v7055 = vlaneseq
    %v7056 = vshrl.u32 %v7055, 7
    %v7057 = vsub.s32 1, %v7056
    %v7058 = vrot.slane %v7049, %v7057
    %v7059 = vlaneseq
    %v7060 = vshrl.u32 %v7059, 7
    %v7061 = vsub.s32 2, %v7060
    %v7062 = vrot.slane %v7049, %v7061
    %v7063 = vlaneseq
    %v7064 = vshrl.u32 %v7063, 7
    %v7065 = vsub.s32 3, %v7064
    %v7066 = vrot.slane %v7049, %v7065
    %v7067 = vlaneseq
    %v7068 = vshrl.u32 %v7067, 7
    %v7069 = vsub.s32 4, %v7068
    %v7070 = vrot.slane %v7049, %v7069
    %v7071 = vlaneseq
    %v7072 = vshrl.u32 %v7071, 7
    %v7073 = vsub.s32 5, %v7072
    %v7074 = vrot.slane %v7049, %v7073
    %v7075 = vlaneseq
    %v7076 = vshrl.u32 %v7075, 7
    %v7077 = vsub.s32 6, %v7076
    %v7078 = vrot.slane %v7049, %v7077
    %v7079 = vlaneseq
    %v7080 = vshrl.u32 %v7079, 7
    %v7081 = vsub.s32 7, %v7080
    %v7082 = vrot.slane %v7049, %v7081
    %7091 = vmatprep.subr.mxu0 %v3918
    %7092 = vmatpush1.msra.mxu0 %v3917
    %7093 = vmatprep.subr.mxu0 %v3926
    %7094 = vmatpush1.msra.mxu0 %v3925
    %7095 = vmatprep.subr.mxu0 %v3934
    %7096 = vmatpush1.msra.mxu0 %v3933
    %7097 = vmatprep.subr.mxu0 %v3942
    %7098 = vmatpush1.msra.mxu0 %v3941
    %7099 = vmatprep.subr.mxu0 %v3950
    %7100 = vmatpush1.msra.mxu0 %v3949
    %7101 = vmatprep.subr.mxu0 %v3958
    %7102 = vmatpush1.msra.mxu0 %v3957
    %7103 = vmatprep.subr.mxu0 %v3966
    %7104 = vmatpush1.msra.mxu0 %v3965
    %7105 = vmatprep.subr.mxu0 %v3974
    %7106 = vmatpush1.msra.mxu0 %v3973
    %7107 = vmatprep.subr.mxu0 %v3982
    %7108 = vmatpush1.msra.mxu0 %v3981
    %7109 = vmatprep.subr.mxu0 %v3990
    %7110 = vmatpush1.msra.mxu0 %v3989
    %7111 = vmatprep.subr.mxu0 %v3998
    %7112 = vmatpush1.msra.mxu0 %v3997
    %7113 = vmatprep.subr.mxu0 %v4006
    %7114 = vmatpush1.msra.mxu0 %v4005
    %7115 = vmatprep.subr.mxu0 %v4014
    %7116 = vmatpush1.msra.mxu0 %v4013
    %7117 = vmatprep.subr.mxu0 %v4022
    %7118 = vmatpush1.msra.mxu0 %v4021
    %7119 = vmatprep.subr.mxu0 %v4030
    %7120 = vmatpush1.msra.mxu0 %v4029
    %7121 = vmatprep.subr.mxu0 %v4038
    %7122 = vmatpush1.msra.mxu0 %v4037
    %7123 = vmatprep.subr.mxu0 %v4046
    %7124 = vmatpush1.msra.mxu0 %v4045
    %7125 = vmatprep.subr.mxu0 %v4054
    %7126 = vmatpush1.msra.mxu0 %v4053
    %7127 = vmatprep.subr.mxu0 %v4062
    %7128 = vmatpush1.msra.mxu0 %v4061
    %7129 = vmatprep.subr.mxu0 %v4070
    %7130 = vmatpush1.msra.mxu0 %v4069
    %7131 = vmatprep.subr.mxu0 %v4078
    %7132 = vmatpush1.msra.mxu0 %v4077
    %7133 = vmatprep.subr.mxu0 %v4086
    %7134 = vmatpush1.msra.mxu0 %v4085
    %7135 = vmatprep.subr.mxu0 %v4094
    %7136 = vmatpush1.msra.mxu0 %v4093
    %7137 = vmatprep.subr.mxu0 %v4102
    %7138 = vmatpush1.msra.mxu0 %v4101
    %7139 = vmatprep.subr.mxu0 %v4110
    %7140 = vmatpush1.msra.mxu0 %v4109
    %7141 = vmatprep.subr.mxu0 %v4118
    %7142 = vmatpush1.msra.mxu0 %v4117
    %7143 = vmatprep.subr.mxu0 %v4126
    %7144 = vmatpush1.msra.mxu0 %v4125
    %7145 = vmatprep.subr.mxu0 %v4134
    %7146 = vmatpush1.msra.mxu0 %v4133
    %7147 = vmatprep.subr.mxu0 %v4142
    %7148 = vmatpush1.msra.mxu0 %v4141
    %7149 = vmatprep.subr.mxu0 %v4150
    %7150 = vmatpush1.msra.mxu0 %v4149
    %7151 = vmatprep.subr.mxu0 %v4158
    %7152 = vmatpush1.msra.mxu0 %v4157
    %7153 = vmatprep.subr.mxu0 %v4166
    %7154 = vmatpush1.msra.mxu0 %v4165
    %7155 = vmatprep.mubr.f32.mxu0 %v7046
    %7156 = vmatmul.mubr.f32.gmra.mrb[0].mxu0 %v7045
    %v7157 = vpop.f32.mrb[0].mxu0
    %v7158 = vadd.f32 %v7054, %v7157
    %v7159 = vpop.f32.mrb[0].mxu0
    %v7160 = vadd.f32 %v7058, %v7159
    %7161 = vdwg.mxu0
    %7162 = vmatprep.subr.mxu0 %v3920
    %7163 = vmatpush1.msra.mxu0 %v3919
    %7164 = vmatprep.subr.mxu0 %v3928
    %7165 = vmatpush1.msra.mxu0 %v3927
    %7166 = vmatprep.subr.mxu0 %v3936
    %7167 = vmatpush1.msra.mxu0 %v3935
    %7168 = vmatprep.subr.mxu0 %v3944
    %7169 = vmatpush1.msra.mxu0 %v3943
    %7170 = vmatprep.subr.mxu0 %v3952
    %7171 = vmatpush1.msra.mxu0 %v3951
    %7172 = vmatprep.subr.mxu0 %v3960
    %7173 = vmatpush1.msra.mxu0 %v3959
    %7174 = vmatprep.subr.mxu0 %v3968
    %7175 = vmatpush1.msra.mxu0 %v3967
    %7176 = vmatprep.subr.mxu0 %v3976
    %7177 = vmatpush1.msra.mxu0 %v3975
    %7178 = vmatprep.subr.mxu0 %v3984
    %7179 = vmatpush1.msra.mxu0 %v3983
    %7180 = vmatprep.subr.mxu0 %v3992
    %7181 = vmatpush1.msra.mxu0 %v3991
    %7182 = vmatprep.subr.mxu0 %v4000
    %7183 = vmatpush1.msra.mxu0 %v3999
    %7184 = vmatprep.subr.mxu0 %v4008
    %7185 = vmatpush1.msra.mxu0 %v4007
    %7186 = vmatprep.subr.mxu0 %v4016
    %7187 = vmatpush1.msra.mxu0 %v4015
    %7188 = vmatprep.subr.mxu0 %v4024
    %7189 = vmatpush1.msra.mxu0 %v4023
    %7190 = vmatprep.subr.mxu0 %v4032
    %7191 = vmatpush1.msra.mxu0 %v4031
    %7192 = vmatprep.subr.mxu0 %v4040
    %7193 = vmatpush1.msra.mxu0 %v4039
    %7194 = vmatprep.subr.mxu0 %v4048
    %7195 = vmatpush1.msra.mxu0 %v4047
    %7196 = vmatprep.subr.mxu0 %v4056
    %7197 = vmatpush1.msra.mxu0 %v4055
    %7198 = vmatprep.subr.mxu0 %v4064
    %7199 = vmatpush1.msra.mxu0 %v4063
    %7200 = vmatprep.subr.mxu0 %v4072
    %7201 = vmatpush1.msra.mxu0 %v4071
    %7202 = vmatprep.subr.mxu0 %v4080
    %7203 = vmatpush1.msra.mxu0 %v4079
    %7204 = vmatprep.subr.mxu0 %v4088
    %7205 = vmatpush1.msra.mxu0 %v4087
    %7206 = vmatprep.subr.mxu0 %v4096
    %7207 = vmatpush1.msra.mxu0 %v4095
    %7208 = vmatprep.subr.mxu0 %v4104
    %7209 = vmatpush1.msra.mxu0 %v4103
    %7210 = vmatprep.subr.mxu0 %v4112
    %7211 = vmatpush1.msra.mxu0 %v4111
    %7212 = vmatprep.subr.mxu0 %v4120
    %7213 = vmatpush1.msra.mxu0 %v4119
    %7214 = vmatprep.subr.mxu0 %v4128
    %7215 = vmatpush1.msra.mxu0 %v4127
    %7216 = vmatprep.subr.mxu0 %v4136
    %7217 = vmatpush1.msra.mxu0 %v4135
    %7218 = vmatprep.subr.mxu0 %v4144
    %7219 = vmatpush1.msra.mxu0 %v4143
    %7220 = vmatprep.subr.mxu0 %v4152
    %7221 = vmatpush1.msra.mxu0 %v4151
    %7222 = vmatprep.subr.mxu0 %v4160
    %7223 = vmatpush1.msra.mxu0 %v4159
    %7224 = vmatprep.subr.mxu0 %v4168
    %7225 = vmatpush1.msra.mxu0 %v4167
    %7226 = vmatprep.mubr.f32.mxu0 %v7046
    %7227 = vmatmul.mubr.f32.gmra.mrb[0].mxu0 %v7045
    %v7228 = vpop.f32.mrb[0].mxu0
    %v7229 = vadd.f32 %v7062, %v7228
    %v7230 = vpop.f32.mrb[0].mxu0
    %v7231 = vadd.f32 %v7066, %v7230
    %7232 = vdwg.mxu0
    %7233 = vmatprep.subr.mxu0 %v3922
    %7234 = vmatpush1.msra.mxu0 %v3921
    %7235 = vmatprep.subr.mxu0 %v3930
    %7236 = vmatpush1.msra.mxu0 %v3929
    %7237 = vmatprep.subr.mxu0 %v3938
    %7238 = vmatpush1.msra.mxu0 %v3937
    %7239 = vmatprep.subr.mxu0 %v3946
    %7240 = vmatpush1.msra.mxu0 %v3945
    %7241 = vmatprep.subr.mxu0 %v3954
    %7242 = vmatpush1.msra.mxu0 %v3953
    %7243 = vmatprep.subr.mxu0 %v3962
    %7244 = vmatpush1.msra.mxu0 %v3961
    %7245 = vmatprep.subr.mxu0 %v3970
    %7246 = vmatpush1.msra.mxu0 %v3969
    %7247 = vmatprep.subr.mxu0 %v3978
    %7248 = vmatpush1.msra.mxu0 %v3977
    %7249 = vmatprep.subr.mxu0 %v3986
    %7250 = vmatpush1.msra.mxu0 %v3985
    %7251 = vmatprep.subr.mxu0 %v3994
    %7252 = vmatpush1.msra.mxu0 %v3993
    %7253 = vmatprep.subr.mxu0 %v4002
    %7254 = vmatpush1.msra.mxu0 %v4001
    %7255 = vmatprep.subr.mxu0 %v4010
    %7256 = vmatpush1.msra.mxu0 %v4009
    %7257 = vmatprep.subr.mxu0 %v4018
    %7258 = vmatpush1.msra.mxu0 %v4017
    %7259 = vmatprep.subr.mxu0 %v4026
    %7260 = vmatpush1.msra.mxu0 %v4025
    %7261 = vmatprep.subr.mxu0 %v4034
    %7262 = vmatpush1.msra.mxu0 %v4033
    %7263 = vmatprep.subr.mxu0 %v4042
    %7264 = vmatpush1.msra.mxu0 %v4041
    %7265 = vmatprep.subr.mxu0 %v4050
    %7266 = vmatpush1.msra.mxu0 %v4049
    %7267 = vmatprep.subr.mxu0 %v4058
    %7268 = vmatpush1.msra.mxu0 %v4057
    %7269 = vmatprep.subr.mxu0 %v4066
    %7270 = vmatpush1.msra.mxu0 %v4065
    %7271 = vmatprep.subr.mxu0 %v4074
    %7272 = vmatpush1.msra.mxu0 %v4073
    %7273 = vmatprep.subr.mxu0 %v4082
    %7274 = vmatpush1.msra.mxu0 %v4081
    %7275 = vmatprep.subr.mxu0 %v4090
    %7276 = vmatpush1.msra.mxu0 %v4089
    %7277 = vmatprep.subr.mxu0 %v4098
    %7278 = vmatpush1.msra.mxu0 %v4097
    %7279 = vmatprep.subr.mxu0 %v4106
    %7280 = vmatpush1.msra.mxu0 %v4105
    %7281 = vmatprep.subr.mxu0 %v4114
    %7282 = vmatpush1.msra.mxu0 %v4113
    %7283 = vmatprep.subr.mxu0 %v4122
    %7284 = vmatpush1.msra.mxu0 %v4121
    %7285 = vmatprep.subr.mxu0 %v4130
    %7286 = vmatpush1.msra.mxu0 %v4129
    %7287 = vmatprep.subr.mxu0 %v4138
    %7288 = vmatpush1.msra.mxu0 %v4137
    %7289 = vmatprep.subr.mxu0 %v4146
    %7290 = vmatpush1.msra.mxu0 %v4145
    %7291 = vmatprep.subr.mxu0 %v4154
    %7292 = vmatpush1.msra.mxu0 %v4153
    %7293 = vmatprep.subr.mxu0 %v4162
    %7294 = vmatpush1.msra.mxu0 %v4161
    %7295 = vmatprep.subr.mxu0 %v4170
    %7296 = vmatpush1.msra.mxu0 %v4169
    %7297 = vmatprep.mubr.f32.mxu0 %v7046
    %7298 = vmatmul.mubr.f32.gmra.mrb[0].mxu0 %v7045
    %v7299 = vpop.f32.mrb[0].mxu0
    %v7300 = vadd.f32 %v7070, %v7299
    %v7301 = vpop.f32.mrb[0].mxu0
    %v7302 = vadd.f32 %v7074, %v7301
    %7303 = vdwg.mxu0
    %7304 = vmatprep.subr.mxu0 %v3924
    %7305 = vmatpush1.msra.mxu0 %v3923
    %7306 = vmatprep.subr.mxu0 %v3932
    %7307 = vmatpush1.msra.mxu0 %v3931
    %7308 = vmatprep.subr.mxu0 %v3940
    %7309 = vmatpush1.msra.mxu0 %v3939
    %7310 = vmatprep.subr.mxu0 %v3948
    %7311 = vmatpush1.msra.mxu0 %v3947
    %7312 = vmatprep.subr.mxu0 %v3956
    %7313 = vmatpush1.msra.mxu0 %v3955
    %7314 = vmatprep.subr.mxu0 %v3964
    %7315 = vmatpush1.msra.mxu0 %v3963
    %7316 = vmatprep.subr.mxu0 %v3972
    %7317 = vmatpush1.msra.mxu0 %v3971
    %7318 = vmatprep.subr.mxu0 %v3980
    %7319 = vmatpush1.msra.mxu0 %v3979
    %7320 = vmatprep.subr.mxu0 %v3988
    %7321 = vmatpush1.msra.mxu0 %v3987
    %7322 = vmatprep.subr.mxu0 %v3996
    %7323 = vmatpush1.msra.mxu0 %v3995
    %7324 = vmatprep.subr.mxu0 %v4004
    %7325 = vmatpush1.msra.mxu0 %v4003
    %7326 = vmatprep.subr.mxu0 %v4012
    %7327 = vmatpush1.msra.mxu0 %v4011
    %7328 = vmatprep.subr.mxu0 %v4020
    %7329 = vmatpush1.msra.mxu0 %v4019
    %7330 = vmatprep.subr.mxu0 %v4028
    %7331 = vmatpush1.msra.mxu0 %v4027
    %7332 = vmatprep.subr.mxu0 %v4036
    %7333 = vmatpush1.msra.mxu0 %v4035
    %7334 = vmatprep.subr.mxu0 %v4044
    %7335 = vmatpush1.msra.mxu0 %v4043
    %7336 = vmatprep.subr.mxu0 %v4052
    %7337 = vmatpush1.msra.mxu0 %v4051
    %7338 = vmatprep.subr.mxu0 %v4060
    %7339 = vmatpush1.msra.mxu0 %v4059
    %7340 = vmatprep.subr.mxu0 %v4068
    %7341 = vmatpush1.msra.mxu0 %v4067
    %7342 = vmatprep.subr.mxu0 %v4076
    %7343 = vmatpush1.msra.mxu0 %v4075
    %7344 = vmatprep.subr.mxu0 %v4084
    %7345 = vmatpush1.msra.mxu0 %v4083
    %7346 = vmatprep.subr.mxu0 %v4092
    %7347 = vmatpush1.msra.mxu0 %v4091
    %7348 = vmatprep.subr.mxu0 %v4100
    %7349 = vmatpush1.msra.mxu0 %v4099
    %7350 = vmatprep.subr.mxu0 %v4108
    %7351 = vmatpush1.msra.mxu0 %v4107
    %7352 = vmatprep.subr.mxu0 %v4116
    %7353 = vmatpush1.msra.mxu0 %v4115
    %7354 = vmatprep.subr.mxu0 %v4124
    %7355 = vmatpush1.msra.mxu0 %v4123
    %7356 = vmatprep.subr.mxu0 %v4132
    %7357 = vmatpush1.msra.mxu0 %v4131
    %7358 = vmatprep.subr.mxu0 %v4140
    %7359 = vmatpush1.msra.mxu0 %v4139
    %7360 = vmatprep.subr.mxu0 %v4148
    %7361 = vmatpush1.msra.mxu0 %v4147
    %7362 = vmatprep.subr.mxu0 %v4156
    %7363 = vmatpush1.msra.mxu0 %v4155
    %7364 = vmatprep.subr.mxu0 %v4164
    %7365 = vmatpush1.msra.mxu0 %v4163
    %7366 = vmatprep.subr.mxu0 %v4172
    %7367 = vmatpush1.msra.mxu0 %v4171
    %7368 = vmatprep.mubr.f32.mxu0 %v7046
    %7369 = vmatmul.mubr.f32.gmra.mrb[0].mxu0 %v7045
    %v7370 = vpop.f32.mrb[0].mxu0
    %v7371 = vadd.f32 %v7078, %v7370
    %v7372 = vpop.f32.mrb[0].mxu0
    %v7373 = vadd.f32 %v7082, %v7372
    %7374 = vdwg.mxu0
    %v7375 = vxor.u32 %v7158, 2147483648
    %v7376 = vxor.u32 %v7160, 2147483648
    %v7377 = vmul.f32 %v7375, 1.442695
    %v7378 = vpow.pop %v7377
    %v7379 = vmul.f32 %v7376, 1.442695
    %v7380 = vpow.pop %v7379
    %v7381 = vadd.f32 %v7378, 1.0
    %v7382 = vadd.f32 %v7380, 1.0
    %v7383 = vrcp.pop %v7381
    %v7384 = vmul.f32 1.0, %v7383
    %v7385 = vrcp.pop %v7382
    %v7386 = vmul.f32 1.0, %v7385
    %v7387 = vxor.u32 %v7229, 2147483648
    %v7388 = vxor.u32 %v7231, 2147483648
    %v7389 = vmul.f32 %v7387, 1.442695
    %v7390 = vpow.pop %v7389
    %v7391 = vmul.f32 %v7388, 1.442695
    %v7392 = vpow.pop %v7391
    %v7393 = vadd.f32 %v7390, 1.0
    %v7394 = vadd.f32 %v7392, 1.0
    %v7395 = vrcp.pop %v7393
    %v7396 = vmul.f32 1.0, %v7395
    %v7397 = vrcp.pop %v7394
    %v7398 = vmul.f32 1.0, %v7397
    %v7399 = vtanh.pop %v7300
    %v7400 = vtanh.pop %v7302
    %v7401 = vxor.u32 %v7371, 2147483648
    %v7402 = vxor.u32 %v7373, 2147483648
    %v7403 = vmul.f32 %v7401, 1.442695
    %v7404 = vpow.pop %v7403
    %v7405 = vmul.f32 %v7402, 1.442695
    %v7406 = vpow.pop %v7405
    %v7407 = vadd.f32 %v7404, 1.0
    %v7408 = vadd.f32 %v7406, 1.0
    %v7409 = vrcp.pop %v7407
    %v7410 = vmul.f32 1.0, %v7409
    %v7411 = vrcp.pop %v7408
    %v7412 = vmul.f32 1.0, %v7411
    %v7413 = vmul.f32 %v7396, %v7041
    %v7414 = vmul.f32 %v7398, %v7042
    %v7415 = vmul.f32 %v7384, %v7399
    %v7416 = vmul.f32 %v7386, %v7400
    %v7417 = vadd.f32 %v7413, %v7415
    %v7418 = vadd.f32 %v7414, %v7416
    %v7419 = vtanh.pop %v7417
    %v7420 = vtanh.pop %v7418
    %v7421 = vmul.f32 %v7410, %v7419
    %v7422 = vmul.f32 %v7412, %v7420
    %v7423 = vld [vmem:[%s3499] ss:$8 sm:$0xf]
    %v7424 = vld [vmem:[%s3499] ss:$8 sm:$0xf0]
    %v7425 = vor.u32 %v7423, %v7424
    %v7427 = vlaneseq
    %v7428 = vshrl.u32 %v7427, 7
    %v7429 = vsub.s32 0, %v7428
    %v7430 = vrot.slane %v7425, %v7429
    %v7431 = vlaneseq
    %v7432 = vshrl.u32 %v7431, 7
    %v7433 = vsub.s32 1, %v7432
    %v7434 = vrot.slane %v7425, %v7433
    %v7435 = vlaneseq
    %v7436 = vshrl.u32 %v7435, 7
    %v7437 = vsub.s32 2, %v7436
    %v7438 = vrot.slane %v7425, %v7437
    %v7439 = vlaneseq
    %v7440 = vshrl.u32 %v7439, 7
    %v7441 = vsub.s32 3, %v7440
    %v7442 = vrot.slane %v7425, %v7441
    %v7443 = vlaneseq
    %v7444 = vshrl.u32 %v7443, 7
    %v7445 = vsub.s32 4, %v7444
    %v7446 = vrot.slane %v7425, %v7445
    %v7447 = vlaneseq
    %v7448 = vshrl.u32 %v7447, 7
    %v7449 = vsub.s32 5, %v7448
    %v7450 = vrot.slane %v7425, %v7449
    %v7451 = vlaneseq
    %v7452 = vshrl.u32 %v7451, 7
    %v7453 = vsub.s32 6, %v7452
    %v7454 = vrot.slane %v7425, %v7453
    %v7455 = vlaneseq
    %v7456 = vshrl.u32 %v7455, 7
    %v7457 = vsub.s32 7, %v7456
    %v7458 = vrot.slane %v7425, %v7457
    %7467 = vmatprep.subr.mxu0 %v3918
    %7468 = vmatpush1.msra.mxu0 %v3917
    %7469 = vmatprep.subr.mxu0 %v3926
    %7470 = vmatpush1.msra.mxu0 %v3925
    %7471 = vmatprep.subr.mxu0 %v3934
    %7472 = vmatpush1.msra.mxu0 %v3933
    %7473 = vmatprep.subr.mxu0 %v3942
    %7474 = vmatpush1.msra.mxu0 %v3941
    %7475 = vmatprep.subr.mxu0 %v3950
    %7476 = vmatpush1.msra.mxu0 %v3949
    %7477 = vmatprep.subr.mxu0 %v3958
    %7478 = vmatpush1.msra.mxu0 %v3957
    %7479 = vmatprep.subr.mxu0 %v3966
    %7480 = vmatpush1.msra.mxu0 %v3965
    %7481 = vmatprep.subr.mxu0 %v3974
    %7482 = vmatpush1.msra.mxu0 %v3973
    %7483 = vmatprep.subr.mxu0 %v3982
    %7484 = vmatpush1.msra.mxu0 %v3981
    %7485 = vmatprep.subr.mxu0 %v3990
    %7486 = vmatpush1.msra.mxu0 %v3989
    %7487 = vmatprep.subr.mxu0 %v3998
    %7488 = vmatpush1.msra.mxu0 %v3997
    %7489 = vmatprep.subr.mxu0 %v4006
    %7490 = vmatpush1.msra.mxu0 %v4005
    %7491 = vmatprep.subr.mxu0 %v4014
    %7492 = vmatpush1.msra.mxu0 %v4013
    %7493 = vmatprep.subr.mxu0 %v4022
    %7494 = vmatpush1.msra.mxu0 %v4021
    %7495 = vmatprep.subr.mxu0 %v4030
    %7496 = vmatpush1.msra.mxu0 %v4029
    %7497 = vmatprep.subr.mxu0 %v4038
    %7498 = vmatpush1.msra.mxu0 %v4037
    %7499 = vmatprep.subr.mxu0 %v4046
    %7500 = vmatpush1.msra.mxu0 %v4045
    %7501 = vmatprep.subr.mxu0 %v4054
    %7502 = vmatpush1.msra.mxu0 %v4053
    %7503 = vmatprep.subr.mxu0 %v4062
    %7504 = vmatpush1.msra.mxu0 %v4061
    %7505 = vmatprep.subr.mxu0 %v4070
    %7506 = vmatpush1.msra.mxu0 %v4069
    %7507 = vmatprep.subr.mxu0 %v4078
    %7508 = vmatpush1.msra.mxu0 %v4077
    %7509 = vmatprep.subr.mxu0 %v4086
    %7510 = vmatpush1.msra.mxu0 %v4085
    %7511 = vmatprep.subr.mxu0 %v4094
    %7512 = vmatpush1.msra.mxu0 %v4093
    %7513 = vmatprep.subr.mxu0 %v4102
    %7514 = vmatpush1.msra.mxu0 %v4101
    %7515 = vmatprep.subr.mxu0 %v4110
    %7516 = vmatpush1.msra.mxu0 %v4109
    %7517 = vmatprep.subr.mxu0 %v4118
    %7518 = vmatpush1.msra.mxu0 %v4117
    %7519 = vmatprep.subr.mxu0 %v4126
    %7520 = vmatpush1.msra.mxu0 %v4125
    %7521 = vmatprep.subr.mxu0 %v4134
    %7522 = vmatpush1.msra.mxu0 %v4133
    %7523 = vmatprep.subr.mxu0 %v4142
    %7524 = vmatpush1.msra.mxu0 %v4141
    %7525 = vmatprep.subr.mxu0 %v4150
    %7526 = vmatpush1.msra.mxu0 %v4149
    %7527 = vmatprep.subr.mxu0 %v4158
    %7528 = vmatpush1.msra.mxu0 %v4157
    %7529 = vmatprep.subr.mxu0 %v4166
    %7530 = vmatpush1.msra.mxu0 %v4165
    %7531 = vmatprep.mubr.f32.mxu0 %v7422
    %7532 = vmatmul.mubr.f32.gmra.mrb[0].mxu0 %v7421
    %v7533 = vpop.f32.mrb[0].mxu0
    %v7534 = vadd.f32 %v7430, %v7533
    %v7535 = vpop.f32.mrb[0].mxu0
    %v7536 = vadd.f32 %v7434, %v7535
    %7537 = vdwg.mxu0
    %7538 = vmatprep.subr.mxu0 %v3920
    %7539 = vmatpush1.msra.mxu0 %v3919
    %7540 = vmatprep.subr.mxu0 %v3928
    %7541 = vmatpush1.msra.mxu0 %v3927
    %7542 = vmatprep.subr.mxu0 %v3936
    %7543 = vmatpush1.msra.mxu0 %v3935
    %7544 = vmatprep.subr.mxu0 %v3944
    %7545 = vmatpush1.msra.mxu0 %v3943
    %7546 = vmatprep.subr.mxu0 %v3952
    %7547 = vmatpush1.msra.mxu0 %v3951
    %7548 = vmatprep.subr.mxu0 %v3960
    %7549 = vmatpush1.msra.mxu0 %v3959
    %7550 = vmatprep.subr.mxu0 %v3968
    %7551 = vmatpush1.msra.mxu0 %v3967
    %7552 = vmatprep.subr.mxu0 %v3976
    %7553 = vmatpush1.msra.mxu0 %v3975
    %7554 = vmatprep.subr.mxu0 %v3984
    %7555 = vmatpush1.msra.mxu0 %v3983
    %7556 = vmatprep.subr.mxu0 %v3992
    %7557 = vmatpush1.msra.mxu0 %v3991
    %7558 = vmatprep.subr.mxu0 %v4000
    %7559 = vmatpush1.msra.mxu0 %v3999
    %7560 = vmatprep.subr.mxu0 %v4008
    %7561 = vmatpush1.msra.mxu0 %v4007
    %7562 = vmatprep.subr.mxu0 %v4016
    %7563 = vmatpush1.msra.mxu0 %v4015
    %7564 = vmatprep.subr.mxu0 %v4024
    %7565 = vmatpush1.msra.mxu0 %v4023
    %7566 = vmatprep.subr.mxu0 %v4032
    %7567 = vmatpush1.msra.mxu0 %v4031
    %7568 = vmatprep.subr.mxu0 %v4040
    %7569 = vmatpush1.msra.mxu0 %v4039
    %7570 = vmatprep.subr.mxu0 %v4048
    %7571 = vmatpush1.msra.mxu0 %v4047
    %7572 = vmatprep.subr.mxu0 %v4056
    %7573 = vmatpush1.msra.mxu0 %v4055
    %7574 = vmatprep.subr.mxu0 %v4064
    %7575 = vmatpush1.msra.mxu0 %v4063
    %7576 = vmatprep.subr.mxu0 %v4072
    %7577 = vmatpush1.msra.mxu0 %v4071
    %7578 = vmatprep.subr.mxu0 %v4080
    %7579 = vmatpush1.msra.mxu0 %v4079
    %7580 = vmatprep.subr.mxu0 %v4088
    %7581 = vmatpush1.msra.mxu0 %v4087
    %7582 = vmatprep.subr.mxu0 %v4096
    %7583 = vmatpush1.msra.mxu0 %v4095
    %7584 = vmatprep.subr.mxu0 %v4104
    %7585 = vmatpush1.msra.mxu0 %v4103
    %7586 = vmatprep.subr.mxu0 %v4112
    %7587 = vmatpush1.msra.mxu0 %v4111
    %7588 = vmatprep.subr.mxu0 %v4120
    %7589 = vmatpush1.msra.mxu0 %v4119
    %7590 = vmatprep.subr.mxu0 %v4128
    %7591 = vmatpush1.msra.mxu0 %v4127
    %7592 = vmatprep.subr.mxu0 %v4136
    %7593 = vmatpush1.msra.mxu0 %v4135
    %7594 = vmatprep.subr.mxu0 %v4144
    %7595 = vmatpush1.msra.mxu0 %v4143
    %7596 = vmatprep.subr.mxu0 %v4152
    %7597 = vmatpush1.msra.mxu0 %v4151
    %7598 = vmatprep.subr.mxu0 %v4160
    %7599 = vmatpush1.msra.mxu0 %v4159
    %7600 = vmatprep.subr.mxu0 %v4168
    %7601 = vmatpush1.msra.mxu0 %v4167
    %7602 = vmatprep.mubr.f32.mxu0 %v7422
    %7603 = vmatmul.mubr.f32.gmra.mrb[0].mxu0 %v7421
    %v7604 = vpop.f32.mrb[0].mxu0
    %v7605 = vadd.f32 %v7438, %v7604
    %v7606 = vpop.f32.mrb[0].mxu0
    %v7607 = vadd.f32 %v7442, %v7606
    %7608 = vdwg.mxu0
    %7609 = vmatprep.subr.mxu0 %v3922
    %7610 = vmatpush1.msra.mxu0 %v3921
    %7611 = vmatprep.subr.mxu0 %v3930
    %7612 = vmatpush1.msra.mxu0 %v3929
    %7613 = vmatprep.subr.mxu0 %v3938
    %7614 = vmatpush1.msra.mxu0 %v3937
    %7615 = vmatprep.subr.mxu0 %v3946
    %7616 = vmatpush1.msra.mxu0 %v3945
    %7617 = vmatprep.subr.mxu0 %v3954
    %7618 = vmatpush1.msra.mxu0 %v3953
    %7619 = vmatprep.subr.mxu0 %v3962
    %7620 = vmatpush1.msra.mxu0 %v3961
    %7621 = vmatprep.subr.mxu0 %v3970
    %7622 = vmatpush1.msra.mxu0 %v3969
    %7623 = vmatprep.subr.mxu0 %v3978
    %7624 = vmatpush1.msra.mxu0 %v3977
    %7625 = vmatprep.subr.mxu0 %v3986
    %7626 = vmatpush1.msra.mxu0 %v3985
    %7627 = vmatprep.subr.mxu0 %v3994
    %7628 = vmatpush1.msra.mxu0 %v3993
    %7629 = vmatprep.subr.mxu0 %v4002
    %7630 = vmatpush1.msra.mxu0 %v4001
    %7631 = vmatprep.subr.mxu0 %v4010
    %7632 = vmatpush1.msra.mxu0 %v4009
    %7633 = vmatprep.subr.mxu0 %v4018
    %7634 = vmatpush1.msra.mxu0 %v4017
    %7635 = vmatprep.subr.mxu0 %v4026
    %7636 = vmatpush1.msra.mxu0 %v4025
    %7637 = vmatprep.subr.mxu0 %v4034
    %7638 = vmatpush1.msra.mxu0 %v4033
    %7639 = vmatprep.subr.mxu0 %v4042
    %7640 = vmatpush1.msra.mxu0 %v4041
    %7641 = vmatprep.subr.mxu0 %v4050
    %7642 = vmatpush1.msra.mxu0 %v4049
    %7643 = vmatprep.subr.mxu0 %v4058
    %7644 = vmatpush1.msra.mxu0 %v4057
    %7645 = vmatprep.subr.mxu0 %v4066
    %7646 = vmatpush1.msra.mxu0 %v4065
    %7647 = vmatprep.subr.mxu0 %v4074
    %7648 = vmatpush1.msra.mxu0 %v4073
    %7649 = vmatprep.subr.mxu0 %v4082
    %7650 = vmatpush1.msra.mxu0 %v4081
    %7651 = vmatprep.subr.mxu0 %v4090
    %7652 = vmatpush1.msra.mxu0 %v4089
    %7653 = vmatprep.subr.mxu0 %v4098
    %7654 = vmatpush1.msra.mxu0 %v4097
    %7655 = vmatprep.subr.mxu0 %v4106
    %7656 = vmatpush1.msra.mxu0 %v4105
    %7657 = vmatprep.subr.mxu0 %v4114
    %7658 = vmatpush1.msra.mxu0 %v4113
    %7659 = vmatprep.subr.mxu0 %v4122
    %7660 = vmatpush1.msra.mxu0 %v4121
    %7661 = vmatprep.subr.mxu0 %v4130
    %7662 = vmatpush1.msra.mxu0 %v4129
    %7663 = vmatprep.subr.mxu0 %v4138
    %7664 = vmatpush1.msra.mxu0 %v4137
    %7665 = vmatprep.subr.mxu0 %v4146
    %7666 = vmatpush1.msra.mxu0 %v4145
    %7667 = vmatprep.subr.mxu0 %v4154
    %7668 = vmatpush1.msra.mxu0 %v4153
    %7669 = vmatprep.subr.mxu0 %v4162
    %7670 = vmatpush1.msra.mxu0 %v4161
    %7671 = vmatprep.subr.mxu0 %v4170
    %7672 = vmatpush1.msra.mxu0 %v4169
    %7673 = vmatprep.mubr.f32.mxu0 %v7422
    %7674 = vmatmul.mubr.f32.gmra.mrb[0].mxu0 %v7421
    %v7675 = vpop.f32.mrb[0].mxu0
    %v7676 = vadd.f32 %v7446, %v7675
    %v7677 = vpop.f32.mrb[0].mxu0
    %v7678 = vadd.f32 %v7450, %v7677
    %7679 = vdwg.mxu0
    %7680 = vmatprep.subr.mxu0 %v3924
    %7681 = vmatpush1.msra.mxu0 %v3923
    %7682 = vmatprep.subr.mxu0 %v3932
    %7683 = vmatpush1.msra.mxu0 %v3931
    %7684 = vmatprep.subr.mxu0 %v3940
    %7685 = vmatpush1.msra.mxu0 %v3939
    %7686 = vmatprep.subr.mxu0 %v3948
    %7687 = vmatpush1.msra.mxu0 %v3947
    %7688 = vmatprep.subr.mxu0 %v3956
    %7689 = vmatpush1.msra.mxu0 %v3955
    %7690 = vmatprep.subr.mxu0 %v3964
    %7691 = vmatpush1.msra.mxu0 %v3963
    %7692 = vmatprep.subr.mxu0 %v3972
    %7693 = vmatpush1.msra.mxu0 %v3971
    %7694 = vmatprep.subr.mxu0 %v3980
    %7695 = vmatpush1.msra.mxu0 %v3979
    %7696 = vmatprep.subr.mxu0 %v3988
    %7697 = vmatpush1.msra.mxu0 %v3987
    %7698 = vmatprep.subr.mxu0 %v3996
    %7699 = vmatpush1.msra.mxu0 %v3995
    %7700 = vmatprep.subr.mxu0 %v4004
    %7701 = vmatpush1.msra.mxu0 %v4003
    %7702 = vmatprep.subr.mxu0 %v4012
    %7703 = vmatpush1.msra.mxu0 %v4011
    %7704 = vmatprep.subr.mxu0 %v4020
    %7705 = vmatpush1.msra.mxu0 %v4019
    %7706 = vmatprep.subr.mxu0 %v4028
    %7707 = vmatpush1.msra.mxu0 %v4027
    %7708 = vmatprep.subr.mxu0 %v4036
    %7709 = vmatpush1.msra.mxu0 %v4035
    %7710 = vmatprep.subr.mxu0 %v4044
    %7711 = vmatpush1.msra.mxu0 %v4043
    %7712 = vmatprep.subr.mxu0 %v4052
    %7713 = vmatpush1.msra.mxu0 %v4051
    %7714 = vmatprep.subr.mxu0 %v4060
    %7715 = vmatpush1.msra.mxu0 %v4059
    %7716 = vmatprep.subr.mxu0 %v4068
    %7717 = vmatpush1.msra.mxu0 %v4067
    %7718 = vmatprep.subr.mxu0 %v4076
    %7719 = vmatpush1.msra.mxu0 %v4075
    %7720 = vmatprep.subr.mxu0 %v4084
    %7721 = vmatpush1.msra.mxu0 %v4083
    %7722 = vmatprep.subr.mxu0 %v4092
    %7723 = vmatpush1.msra.mxu0 %v4091
    %7724 = vmatprep.subr.mxu0 %v4100
    %7725 = vmatpush1.msra.mxu0 %v4099
    %7726 = vmatprep.subr.mxu0 %v4108
    %7727 = vmatpush1.msra.mxu0 %v4107
    %7728 = vmatprep.subr.mxu0 %v4116
    %7729 = vmatpush1.msra.mxu0 %v4115
    %7730 = vmatprep.subr.mxu0 %v4124
    %7731 = vmatpush1.msra.mxu0 %v4123
    %7732 = vmatprep.subr.mxu0 %v4132
    %7733 = vmatpush1.msra.mxu0 %v4131
    %7734 = vmatprep.subr.mxu0 %v4140
    %7735 = vmatpush1.msra.mxu0 %v4139
    %7736 = vmatprep.subr.mxu0 %v4148
    %7737 = vmatpush1.msra.mxu0 %v4147
    %7738 = vmatprep.subr.mxu0 %v4156
    %7739 = vmatpush1.msra.mxu0 %v4155
    %7740 = vmatprep.subr.mxu0 %v4164
    %7741 = vmatpush1.msra.mxu0 %v4163
    %7742 = vmatprep.subr.mxu0 %v4172
    %7743 = vmatpush1.msra.mxu0 %v4171
    %7744 = vmatprep.mubr.f32.mxu0 %v7422
    %7745 = vmatmul.mubr.f32.gmra.mrb[0].mxu0 %v7421
    %v7746 = vpop.f32.mrb[0].mxu0
    %v7747 = vadd.f32 %v7454, %v7746
    %v7748 = vpop.f32.mrb[0].mxu0
    %v7749 = vadd.f32 %v7458, %v7748
    %7750 = vdwg.mxu0
    %v7751 = vxor.u32 %v7534, 2147483648
    %v7752 = vxor.u32 %v7536, 2147483648
    %v7753 = vmul.f32 %v7751, 1.442695
    %v7754 = vpow.pop %v7753
    %v7755 = vmul.f32 %v7752, 1.442695
    %v7756 = vpow.pop %v7755
    %v7757 = vadd.f32 %v7754, 1.0
    %v7758 = vadd.f32 %v7756, 1.0
    %v7759 = vrcp.pop %v7757
    %v7760 = vmul.f32 1.0, %v7759
    %v7761 = vrcp.pop %v7758
    %v7762 = vmul.f32 1.0, %v7761
    %v7763 = vxor.u32 %v7605, 2147483648
    %v7764 = vxor.u32 %v7607, 2147483648
    %v7765 = vmul.f32 %v7763, 1.442695
    %v7766 = vpow.pop %v7765
    %v7767 = vmul.f32 %v7764, 1.442695
    %v7768 = vpow.pop %v7767
    %v7769 = vadd.f32 %v7766, 1.0
    %v7770 = vadd.f32 %v7768, 1.0
    %v7771 = vrcp.pop %v7769
    %v7772 = vmul.f32 1.0, %v7771
    %v7773 = vrcp.pop %v7770
    %v7774 = vmul.f32 1.0, %v7773
    %v7775 = vtanh.pop %v7676
    %v7776 = vtanh.pop %v7678
    %v7777 = vxor.u32 %v7747, 2147483648
    %v7778 = vxor.u32 %v7749, 2147483648
    %v7779 = vmul.f32 %v7777, 1.442695
    %v7780 = vpow.pop %v7779
    %v7781 = vmul.f32 %v7778, 1.442695
    %v7782 = vpow.pop %v7781
    %v7783 = vadd.f32 %v7780, 1.0
    %v7784 = vadd.f32 %v7782, 1.0
    %v7785 = vrcp.pop %v7783
    %v7786 = vmul.f32 1.0, %v7785
    %v7787 = vrcp.pop %v7784
    %v7788 = vmul.f32 1.0, %v7787
    %v7789 = vmul.f32 %v7772, %v7417
    %v7790 = vmul.f32 %v7774, %v7418
    %v7791 = vmul.f32 %v7760, %v7775
    %v7792 = vmul.f32 %v7762, %v7776
    %v7793 = vadd.f32 %v7789, %v7791
    %v7794 = vadd.f32 %v7790, %v7792
    %v7795 = vtanh.pop %v7793
    %v7796 = vtanh.pop %v7794
    %v7797 = vmul.f32 %v7786, %v7795
    %v7798 = vmul.f32 %v7788, %v7796
    %v7801 = vcombine.low %v7797, %v7798
    %v7803 = vunpack.c.l.s4 1966171168
    %v7804 = vunpack.c.0.s8 %v7803
    %v7805 = vlaneseq
    %v7806 = vshrl.u32 %v7805, 7
    %v7807 = vsub.s32 %v7804, %v7806
    %v7808 = vrot.slane %v7801, %v7807
    %v7810 = vunpack.c.l.s4 1966171168
    %v7811 = vunpack.c.0.s8 %v7810
    %v7812 = vlaneseq
    %v7813 = vshrl.u32 %v7812, 7
    %v7814 = vsub.s32 %v7811, %v7813
    %v7815 = vrot.slane %v7808, %v7814
    %s7817 = scalar_lea.vmem [#allocation12], 1
    %7818 = vst.msk [vmem:[%s7817] ss:$2 sm:$0x3] %vm1108, %v7815
    %v7821 = vcombine.low %v7793, %v7794
    %v7823 = vunpack.c.l.s4 1966171168
    %v7824 = vunpack.c.0.s8 %v7823
    %v7825 = vlaneseq
    %v7826 = vshrl.u32 %v7825, 7
    %v7827 = vsub.s32 %v7824, %v7826
    %v7828 = vrot.slane %v7821, %v7827
    %v7830 = vunpack.c.l.s4 1966171168
    %v7831 = vunpack.c.0.s8 %v7830
    %v7832 = vlaneseq
    %v7833 = vshrl.u32 %v7832, 7
    %v7834 = vsub.s32 %v7831, %v7833
    %v7835 = vrot.slane %v7828, %v7834
    %s7837 = scalar_lea.vmem [#allocation14], 1
    %7838 = vst.msk [vmem:[%s7837] ss:$2 sm:$0x3] %vm1108, %v7835
    %v7839 = vld [vmem:[%s9] sm:$0xff]
    %v7840 = vld [vmem:[%s9 + $0x8] sm:$0xff]
    %v7841 = vld [vmem:[%s9 + $0x10] sm:$0xff]
    %v7842 = vld [vmem:[%s9 + $0x18] sm:$0xff]
    %v7843 = vld [vmem:[%s9 + $0x20] sm:$0xff]
    %v7844 = vld [vmem:[%s9 + $0x28] sm:$0xff]
    %v7845 = vld [vmem:[%s9 + $0x30] sm:$0xff]
    %v7846 = vld [vmem:[%s9 + $0x38] sm:$0xff]
    %v7847 = vld [vmem:[%s9 + $0x40] sm:$0xff]
    %v7848 = vld [vmem:[%s9 + $0x48] sm:$0xff]
    %v7849 = vld [vmem:[%s9 + $0x50] sm:$0xff]
    %v7850 = vld [vmem:[%s9 + $0x58] sm:$0xff]
    %v7851 = vld [vmem:[%s9 + $0x60] sm:$0xff]
    %v7852 = vld [vmem:[%s9 + $0x68] sm:$0xff]
    %v7853 = vld [vmem:[%s9 + $0x70] sm:$0xff]
    %v7854 = vld [vmem:[%s9 + $0x78] sm:$0xff]
    %v7855 = vld [vmem:[%s9 + $0x80] sm:$0xff]
    %v7856 = vld [vmem:[%s9 + $0x88] sm:$0xff]
    %v7857 = vld [vmem:[%s9 + $0x90] sm:$0xff]
    %v7858 = vld [vmem:[%s9 + $0x98] sm:$0xff]
    %v7859 = vld [vmem:[%s9 + $0xa0] sm:$0xff]
    %v7860 = vld [vmem:[%s9 + $0xa8] sm:$0xff]
    %v7861 = vld [vmem:[%s9 + $0xb0] sm:$0xff]
    %v7862 = vld [vmem:[%s9 + $0xb8] sm:$0xff]
    %v7863 = vld [vmem:[%s9 + $0xc0] sm:$0xff]
    %v7864 = vld [vmem:[%s9 + $0xc8] sm:$0xff]
    %v7865 = vld [vmem:[%s9 + $0xd0] sm:$0xff]
    %v7866 = vld [vmem:[%s9 + $0xd8] sm:$0xff]
    %v7867 = vld [vmem:[%s9 + $0xe0] sm:$0xff]
    %v7868 = vld [vmem:[%s9 + $0xe8] sm:$0xff]
    %v7869 = vld [vmem:[%s9 + $0xf0] sm:$0xff]
    %v7870 = vld [vmem:[%s9 + $0xf8] sm:$0xff]
    %v7871 = vld [vmem:[%s10] sm:$0x1]
    %7872 = vmatprep.subr.mxu0 0.0
    %7873 = vmatpush1.msra.mxu0 %v7839
    %7874 = vmatprep.subr.mxu0 0.0
    %7875 = vmatpush1.msra.mxu0 %v7840
    %7876 = vmatprep.subr.mxu0 0.0
    %7877 = vmatpush1.msra.mxu0 %v7841
    %7878 = vmatprep.subr.mxu0 0.0
    %7879 = vmatpush1.msra.mxu0 %v7842
    %7880 = vmatprep.subr.mxu0 0.0
    %7881 = vmatpush1.msra.mxu0 %v7843
    %7882 = vmatprep.subr.mxu0 0.0
    %7883 = vmatpush1.msra.mxu0 %v7844
    %7884 = vmatprep.subr.mxu0 0.0
    %7885 = vmatpush1.msra.mxu0 %v7845
    %7886 = vmatprep.subr.mxu0 0.0
    %7887 = vmatpush1.msra.mxu0 %v7846
    %7888 = vmatprep.subr.mxu0 0.0
    %7889 = vmatpush1.msra.mxu0 %v7847
    %7890 = vmatprep.subr.mxu0 0.0
    %7891 = vmatpush1.msra.mxu0 %v7848
    %7892 = vmatprep.subr.mxu0 0.0
    %7893 = vmatpush1.msra.mxu0 %v7849
    %7894 = vmatprep.subr.mxu0 0.0
    %7895 = vmatpush1.msra.mxu0 %v7850
    %7896 = vmatprep.subr.mxu0 0.0
    %7897 = vmatpush1.msra.mxu0 %v7851
    %7898 = vmatprep.subr.mxu0 0.0
    %7899 = vmatpush1.msra.mxu0 %v7852
    %7900 = vmatprep.subr.mxu0 0.0
    %7901 = vmatpush1.msra.mxu0 %v7853
    %7902 = vmatprep.subr.mxu0 0.0
    %7903 = vmatpush1.msra.mxu0 %v7854
    %7904 = vmatprep.subr.mxu0 0.0
    %7905 = vmatpush1.msra.mxu0 %v7855
    %7906 = vmatprep.subr.mxu0 0.0
    %7907 = vmatpush1.msra.mxu0 %v7856
    %7908 = vmatprep.subr.mxu0 0.0
    %7909 = vmatpush1.msra.mxu0 %v7857
    %7910 = vmatprep.subr.mxu0 0.0
    %7911 = vmatpush1.msra.mxu0 %v7858
    %7912 = vmatprep.subr.mxu0 0.0
    %7913 = vmatpush1.msra.mxu0 %v7859
    %7914 = vmatprep.subr.mxu0 0.0
    %7915 = vmatpush1.msra.mxu0 %v7860
    %7916 = vmatprep.subr.mxu0 0.0
    %7917 = vmatpush1.msra.mxu0 %v7861
    %7918 = vmatprep.subr.mxu0 0.0
    %7919 = vmatpush1.msra.mxu0 %v7862
    %7920 = vmatprep.subr.mxu0 0.0
    %7921 = vmatpush1.msra.mxu0 %v7863
    %7922 = vmatprep.subr.mxu0 0.0
    %7923 = vmatpush1.msra.mxu0 %v7864
    %7924 = vmatprep.subr.mxu0 0.0
    %7925 = vmatpush1.msra.mxu0 %v7865
    %7926 = vmatprep.subr.mxu0 0.0
    %7927 = vmatpush1.msra.mxu0 %v7866
    %7928 = vmatprep.subr.mxu0 0.0
    %7929 = vmatpush1.msra.mxu0 %v7867
    %7930 = vmatprep.subr.mxu0 0.0
    %7931 = vmatpush1.msra.mxu0 %v7868
    %7932 = vmatprep.subr.mxu0 0.0
    %7933 = vmatpush1.msra.mxu0 %v7869
    %7934 = vmatprep.subr.mxu0 0.0
    %7935 = vmatpush1.msra.mxu0 %v7870
    %7936 = vmatprep.mubr.f32.mxu0 %v7798
    %7937 = vmatmul.mubr.f32.gmra.mrb[0].mxu0 %v7797
    %v7938 = vpop.f32.mrb[0].mxu0
    %v7939 = vadd.f32 %v7871, %v7938
    %v7940 = vpop.f32.mrb[0].mxu0
    %7941 = vdwg.mxu0
    %vm7942 = vcmp.gt.f32.partialorder %v7939, 0.0
    %v7943 = vmul.f32 %v7939, 0.01
    %v7944 = vsel %vm7942, %v7939, %v7943
    %v7945 = vld [vmem:[%s11] sm:$0xff]
    %v7946 = vld [vmem:[%s11 + $0x8] sm:$0xff]
    %v7947 = vld [vmem:[%s11 + $0x10] sm:$0xff]
    %v7948 = vld [vmem:[%s11 + $0x18] sm:$0xff]
    %v7949 = vld [vmem:[#allocation4] sm:$0x1]
    %7951 = vset.pattern.permute.xlu0 0
    %7952 = vperm.xlu0 %7951, %v7949
    %v7953 = vpop.permute.xlu0 %7952
    %v7955 = vlaneseq
    %v7956 = vshrl.u32 %v7955, 7
    %v7957 = vsub.s32 0, %v7956
    %v7958 = vrot.slane %v7953, %v7957
    %vm7959 = vcmask 261120
    %v7961 = vsel %vm7959, %v7944, 0
    %7963 = vmatprep.subr.mxu0 0.0
    %7964 = vmatpush1.msra.mxu0 %v7945
    %7965 = vmatprep.subr.mxu0 0.0
    %7966 = vmatpush1.msra.mxu0 %v7946
    %7967 = vmatprep.subr.mxu0 0.0
    %7968 = vmatpush1.msra.mxu0 %v7947
    %7969 = vmatprep.subr.mxu0 0.0
    %7970 = vmatpush1.msra.mxu0 %v7948
    %7971 = vmatprep.subr.mxu0 0.0
    %7972 = vmatpush1.msra.mxu0 0.0
    %7973 = vmatprep.subr.mxu0 0.0
    %7974 = vmatpush1.msra.mxu0 0.0
    %7975 = vmatprep.subr.mxu0 0.0
    %7976 = vmatpush1.msra.mxu0 0.0
    %7977 = vmatprep.subr.mxu0 0.0
    %7978 = vmatpush1.msra.mxu0 0.0
    %7979 = vmatprep.subr.mxu0 0.0
    %7980 = vmatpush1.msra.mxu0 0.0
    %7981 = vmatprep.subr.mxu0 0.0
    %7982 = vmatpush1.msra.mxu0 0.0
    %7983 = vmatprep.subr.mxu0 0.0
    %7984 = vmatpush1.msra.mxu0 0.0
    %7985 = vmatprep.subr.mxu0 0.0
    %7986 = vmatpush1.msra.mxu0 0.0
    %7987 = vmatprep.subr.mxu0 0.0
    %7988 = vmatpush1.msra.mxu0 0.0
    %7989 = vmatprep.subr.mxu0 0.0
    %7990 = vmatpush1.msra.mxu0 0.0
    %7991 = vmatprep.subr.mxu0 0.0
    %7992 = vmatpush1.msra.mxu0 0.0
    %7993 = vmatprep.subr.mxu0 0.0
    %7994 = vmatpush1.msra.mxu0 0.0
    %7995 = vmatprep.subr.mxu0 0.0
    %7996 = vmatpush1.msra.mxu0 0.0
    %7997 = vmatprep.subr.mxu0 0.0
    %7998 = vmatpush1.msra.mxu0 0.0
    %7999 = vmatprep.subr.mxu0 0.0
    %8000 = vmatpush1.msra.mxu0 0.0
    %8001 = vmatprep.subr.mxu0 0.0
    %8002 = vmatpush1.msra.mxu0 0.0
    %8003 = vmatprep.subr.mxu0 0.0
    %8004 = vmatpush1.msra.mxu0 0.0
    %8005 = vmatprep.subr.mxu0 0.0
    %8006 = vmatpush1.msra.mxu0 0.0
    %8007 = vmatprep.subr.mxu0 0.0
    %8008 = vmatpush1.msra.mxu0 0.0
    %8009 = vmatprep.subr.mxu0 0.0
    %8010 = vmatpush1.msra.mxu0 0.0
    %8011 = vmatprep.subr.mxu0 0.0
    %8012 = vmatpush1.msra.mxu0 0.0
    %8013 = vmatprep.subr.mxu0 0.0
    %8014 = vmatpush1.msra.mxu0 0.0
    %8015 = vmatprep.subr.mxu0 0.0
    %8016 = vmatpush1.msra.mxu0 0.0
    %8017 = vmatprep.subr.mxu0 0.0
    %8018 = vmatpush1.msra.mxu0 0.0
    %8019 = vmatprep.subr.mxu0 0.0
    %8020 = vmatpush1.msra.mxu0 0.0
    %8021 = vmatprep.subr.mxu0 0.0
    %8022 = vmatpush1.msra.mxu0 0.0
    %8023 = vmatprep.subr.mxu0 0.0
    %8024 = vmatpush1.msra.mxu0 0.0
    %8025 = vmatprep.subr.mxu0 0.0
    %8026 = vmatpush1.msra.mxu0 0.0
    %8027 = vmatprep.mubr.f32.mxu0 0.0
    %8028 = vmatmul.mubr.f32.gmra.mrb[0].mxu0 %v7961
    %v8029 = vpop.f32.mrb[0].mxu0
    %v8030 = vadd.f32 %v7958, %v8029
    %v8031 = vpop.f32.mrb[0].mxu0
    %8032 = vdwg.mxu0
    %vm8033 = vcmask 8192
    %8034 = vst.msk [vmem:[#allocation11] sm:$0x1] %vm8033, %v8030
    // Predicated region
    $region66: #{_soh_forward.1} parent=1 // pred_check
      _
    $region67: #{_soh_forward.1} parent=1 // pred_check_branch
      %8036 = sbr.rel (0) target = $region69
    $region68: #{_soh_forward.1} parent=1 // pred_region
      %s8038 = ssub.s32 16, 16
      %8039 = vsyncadd [#allocation7], %s8038
      %s8041 = sshll.u32 [#allocation11], 4
      %s8042 = int_to_ptr.vmem [resolvable:$true] %s8041
      %8044 = dma.vmem_to_hbm [thread:$0]  %s8042, 16, %s13, [#allocation7]
    $region69: #{_soh_forward.1} parent=1 // pred_fallthru
      _
    // Predicated region
    $region70: #{_soh_forward.1} parent=1 // pred_check
      _
    $region71: #{_soh_forward.1} parent=1 // pred_check_branch
      %8046 = sbr.rel (0) target = $region73
    $region72: #{_soh_forward.1} parent=1 // pred_region
      %s8048 = ssub.s32 64, 64
      %8049 = vsyncadd [#allocation13], %s8048
      %s8051 = sshll.u32 [#allocation12], 4
      %s8052 = int_to_ptr.vmem [resolvable:$true] %s8051
      %8054 = dma.vmem_to_hbm [thread:$0]  %s8052, 64, %s14, [#allocation13]
    $region73: #{_soh_forward.1} parent=1 // pred_fallthru
      _
    // Predicated region
    $region74: #{_soh_forward.1} parent=1 // pred_check
      _
    $region75: #{_soh_forward.1} parent=1 // pred_check_branch
      %8056 = sbr.rel (0) target = $region77
    $region76: #{_soh_forward.1} parent=1 // pred_region
      %s8058 = ssub.s32 64, 64
      %8059 = vsyncadd [#allocation13], %s8058
      %s8061 = sshll.u32 [#allocation14], 4
      %s8062 = int_to_ptr.vmem [resolvable:$true] %s8061
      %8064 = dma.vmem_to_hbm [thread:$0]  %s8062, 64, %s15, [#allocation13]
    $region77: #{_soh_forward.1} parent=1 // pred_fallthru
      _
    // Predicated region
    $region78: #{_soh_forward.1} parent=1 // pred_check
      _
    $region79: #{_soh_forward.1} parent=1 // pred_check_branch
      %8066 = sbr.rel (0) target = $region81
    $region80: #{_soh_forward.1} parent=1 // pred_region
      %8067 = dma.done [#allocation7], 16
    $region81: #{_soh_forward.1} parent=1 // pred_fallthru
      _
    // Predicated region
    $region82: #{_soh_forward.1} parent=1 // pred_check
      _
    $region83: #{_soh_forward.1} parent=1 // pred_check_branch
      %8069 = sbr.rel (0) target = $region85
    $region84: #{_soh_forward.1} parent=1 // pred_region
      %8070 = dma.done [#allocation13], 64
    $region85: #{_soh_forward.1} parent=1 // pred_fallthru
      _
    // Predicated region
    $region86: #{_soh_forward.1} parent=1 // pred_check
      _
    $region87: #{_soh_forward.1} parent=1 // pred_check_branch
      %8072 = sbr.rel (0) target = $region89
    $region88: #{_soh_forward.1} parent=1 // pred_region
      %8073 = dma.done [#allocation13], 64
    $region89: #{_soh_forward.1} parent=1 // pred_fallthru
      _
    %8074 = vsyncpa [#allocation6], 1
    %8075 = vsyncpa [#allocation9], 1
    %8076 = vsyncpa [#allocation7], 1
    %8077 = vsyncpa [#allocation13], 1

</llo_original>
